<compile_context>
chip_gen: v7x
topology: tpu7x:2x2x1
jax: 0.10.0
libtpu: 0.0.40
codegen_flags: <defaults>
</compile_context>

<pallas_src>
import functools

import jax
import jax.numpy as jnp
from jax.experimental import pallas as pl
from jax.experimental.pallas import tpu as pltpu

EPS = 1e-5          # BatchNorm3d default eps
NEG_SLOPE = 0.01    # torch.nn.LeakyReLU default negative_slope


def _round_up(x, m):
    return ((x + m - 1) // m) * m


def _conv_cols(x_ref, w_ref, offsets, cols):
    """Conv evaluated on the padded output lattice -> (Cout, cols) f32."""
    acc = None
    for t, off in enumerate(offsets):
        xs = x_ref[0, :, off:off + cols]          # (Cin_p, cols) bf16, static window
        wt = w_ref[t]                             # (Cout, Cin_p) bf16
        d = jnp.dot(wt, xs, preferred_element_type=jnp.float32)
        acc = d if acc is None else acc + d
    return acc


# --------------------------------------------------------------------------
# Phase 1: conv (in-kernel taps) + masked per-batch-element BN statistics.
# --------------------------------------------------------------------------
def _stats_kernel(x_ref, w_ref, mask_ref, s1_ref, s2_ref, *, offsets, cols):
    y = _conv_cols(x_ref, w_ref, offsets, cols)            # (Cout, cols) f32
    yv = y * mask_ref[...]                                  # zero invalid lattice pts
    s1_ref[...] = jnp.sum(yv, axis=1, keepdims=True)[None, :, :]       # (1,Cout,1)
    s2_ref[...] = jnp.sum(yv * yv, axis=1, keepdims=True)[None, :, :]  # (1,Cout,1)


# --------------------------------------------------------------------------
# Phase 2: recompute conv, apply y*scale + shift, then LeakyReLU.
# --------------------------------------------------------------------------
def _apply_kernel(x_ref, w_ref, scale_ref, shift_ref, o_ref, *,
                  offsets, cols, neg_slope):
    y = _conv_cols(x_ref, w_ref, offsets, cols)            # (Cout, cols) f32
    y = y * scale_ref[...] + shift_ref[...]
    if neg_slope is not None:
        y = jnp.where(y >= 0, y, neg_slope * y)
    o_ref[0] = y


def conv_layer_forward(x, weight, gamma, beta, *, padding, stride=1,
                       activation=True):
    """x: (N, Cin, D, H, W); weight: (Cout, Cin, K, K, K)  (PyTorch layouts)."""
    N, Cin, D, H, W = x.shape
    Cout, _, K, _, _ = weight.shape
    Do = (D + 2 * padding - K) // stride + 1
    Ho = (H + 2 * padding - K) // stride + 1
    Wo = (W + 2 * padding - K) // stride + 1
    M = N * Do * Ho * Wo                        # true element count for BN stats

    Dp, Hp, Wp = D + 2 * padding, H + 2 * padding, W + 2 * padding
    HW = Hp * Wp
    LP3 = Dp * HW                               # padded volume, flattened
    COLS = _round_up(LP3, 128)                  # lane-dense matmul/output width
    off_max = (K - 1) * (HW + Wp + 1)
    XCOLS = _round_up(COLS + off_max, 128)      # input slab width (incl. tap halo)
    CIN_P = _round_up(Cin, 8)                   # friendlier contraction depth

    # --- host glue: one bf16 pad+flatten pass (no im2col, no transposes) -----
    x_pad = jnp.pad(x.astype(jnp.bfloat16),
                    ((0, 0), (0, CIN_P - Cin),
                     (padding, padding), (padding, padding), (padding, padding)))
    x_flat = x_pad.reshape(N, CIN_P, LP3)
    x_flat = jnp.pad(x_flat, ((0, 0), (0, 0), (0, XCOLS - LP3)))

    # Weights tap-major (kd, kh, kw), then (Cout, Cin_p); matches `offsets`.
    w_t = jnp.transpose(weight, (2, 3, 4, 0, 1)).reshape(K * K * K, Cout, Cin)
    w_t = jnp.pad(w_t, ((0, 0), (0, 0), (0, CIN_P - Cin))).astype(jnp.bfloat16)

    offsets = tuple(kd * HW + kh * Wp + kw
                    for kd in range(K) for kh in range(K) for kw in range(K))

    # Validity mask over the padded output lattice (stride-aware).
    q = jnp.arange(COLS)
    dq, rq = q // HW, q % HW
    iq, jq = rq // Wp, rq % Wp
    valid = ((dq % stride == 0) & (dq // stride < Do) &
             (iq % stride == 0) & (iq // stride < Ho) &
             (jq % stride == 0) & (jq // stride < Wo))
    mask = valid.astype(jnp.float32).reshape(1, COLS)

    x_spec = pl.BlockSpec((1, CIN_P, XCOLS), lambda n: (n, 0, 0))
    w_spec = pl.BlockSpec((K * K * K, Cout, CIN_P), lambda n: (0, 0, 0))

    # --- phase 1: per-batch-element masked sum / sum-of-squares --------------
    ps1, ps2 = pl.pallas_call(
        functools.partial(_stats_kernel, offsets=offsets, cols=COLS),
        out_shape=(jax.ShapeDtypeStruct((N, Cout, 1), jnp.float32),
                   jax.ShapeDtypeStruct((N, Cout, 1), jnp.float32)),
        grid_spec=pltpu.PrefetchScalarGridSpec(
            num_scalar_prefetch=0, grid=(N,),
            in_specs=[x_spec, w_spec,
                      pl.BlockSpec((1, COLS), lambda n: (0, 0))],
            out_specs=(pl.BlockSpec((1, Cout, 1), lambda n: (n, 0, 0)),
                       pl.BlockSpec((1, Cout, 1), lambda n: (n, 0, 0)))),
        compiler_params=pltpu.CompilerParams(
            dimension_semantics=("parallel",)),
    )(x_flat, w_t, mask)

    # --- tiny host reduction: fold stats into per-channel scale/shift --------
    s1 = jnp.sum(ps1, axis=0)[:, 0]                         # (Cout,)
    s2 = jnp.sum(ps2, axis=0)[:, 0]                         # (Cout,)
    mean = s1 / M
    # E[y^2]-E[y]^2 can cancel catastrophically; clamp so rsqrt stays defined.
    var = jnp.maximum(s2 / M - mean * mean, 0.0)            # biased (training-mode)
    scale = gamma.astype(jnp.float32) * jax.lax.rsqrt(var + EPS)
    shift = beta.astype(jnp.float32) - mean * scale
    scale2d = scale.reshape(Cout, 1)
    shift2d = shift.reshape(Cout, 1)

    # --- phase 2: recompute conv, BN + LeakyReLU, lane-dense NCDHW output ----
    out_full = pl.pallas_call(
        functools.partial(_apply_kernel, offsets=offsets, cols=COLS,
                          neg_slope=NEG_SLOPE if activation else None),
        out_shape=jax.ShapeDtypeStruct((N, Cout, COLS), jnp.float32),
        grid_spec=pltpu.PrefetchScalarGridSpec(
            num_scalar_prefetch=0, grid=(N,),
            in_specs=[x_spec, w_spec,
                      pl.BlockSpec((Cout, 1), lambda n: (0, 0)),
                      pl.BlockSpec((Cout, 1), lambda n: (0, 0))],
            out_specs=pl.BlockSpec((1, Cout, COLS), lambda n: (n, 0, 0))),
        compiler_params=pltpu.CompilerParams(
            dimension_semantics=("parallel",)),
    )(x_flat, w_t, scale2d, shift2d)

    # Strided slice off the lattice padding; already NCDHW order (no transpose).
    out = out_full[:, :, :LP3].reshape(N, Cout, Dp, Hp, Wp)
    out = out[:, :,
              :(Do - 1) * stride + 1:stride,
              :(Ho - 1) * stride + 1:stride,
              :(Wo - 1) * stride + 1:stride]
    return out


def _reference(x, weight, gamma, beta, *, padding, stride=1, activation=True):
    """Pure-JAX reference of the PyTorch forward (training-mode BatchNorm)."""
    y = jax.lax.conv_general_dilated(
        x.astype(jnp.float32), weight.astype(jnp.float32),
        window_strides=(stride,) * 3,
        padding=[(padding, padding)] * 3,
        dimension_numbers=("NCDHW", "OIDHW", "NCDHW"),
        precision=jax.lax.Precision.HIGHEST)
    mean = jnp.mean(y, axis=(0, 2, 3, 4), keepdims=True)
    var = jnp.mean(jnp.square(y - mean), axis=(0, 2, 3, 4), keepdims=True)
    yn = (y - mean) * jax.lax.rsqrt(var + EPS)
    yn = yn * gamma.reshape(1, -1, 1, 1, 1) + beta.reshape(1, -1, 1, 1, 1)
    if activation:
        yn = jnp.where(yn >= 0, yn, NEG_SLOPE * yn)
    return yn


if __name__ == "__main__":
    key = jax.random.PRNGKey(0)
    k1, k2, k3, k4 = jax.random.split(key, 4)

    # Small shapes consistent with ConvLayer(in=4, out=8, kernel=3, padding=1).
    N, Cin, Cout, D, H, W, K, padding, stride = 2, 4, 8, 8, 8, 8, 3, 1, 1

    x = jax.random.normal(k1, (N, Cin, D, H, W), jnp.float32)
    weight = jax.random.normal(k2, (Cout, Cin, K, K, K), jnp.float32) / jnp.sqrt(
        float(Cin * K ** 3))
    gamma = 1.0 + 0.1 * jax.random.normal(k3, (Cout,), jnp.float32)
    beta = 0.05 * jax.random.normal(k4, (Cout,), jnp.float32)

    out = conv_layer_forward(x, weight, gamma, beta,
                             padding=padding, stride=stride)
    out = jax.block_until_ready(out)

    ref = _reference(x, weight, gamma, beta, padding=padding, stride=stride)
    assert out.shape == ref.shape == (N, Cout, D, H, W)
    # Tolerance loosened for bf16 matmul operands (f32 accumulation / epilogue).
    assert jnp.allclose(out, ref, atol=5e-2, rtol=5e-2), float(
        jnp.max(jnp.abs(out - ref)))

    print("KERNEL_OK")
</pallas_src>

<mosaic_0001>
module attributes {stable_mosaic.version = 11 : i64} {
  func.func @_stats_kernel(%arg0: i32, %arg1: memref<1x8x1280xbf16, #tpu.memory_space<vmem>>, %arg2: memref<27x8x8xbf16, #tpu.memory_space<vmem>>, %arg3: memref<1x1024xf32, #tpu.memory_space<vmem>>, %arg4: memref<1x8x1xf32, #tpu.memory_space<vmem>>, %arg5: memref<1x8x1xf32, #tpu.memory_space<vmem>>) attributes {dimension_semantics = [#tpu.dimension_semantics<parallel>], iteration_bounds = array<i64: 2>, scalar_prefetch = 0 : i64, scratch_operands = 0 : i64, tpu.core_type = #tpu.core_type<tc>, window_params = [{transform_indices = @transform_0, window_bounds = array<i64: 1, 8, 1280>}, {pipeline_mode = #tpu.pipeline_mode<synchronous>, transform_indices = @transform_1, window_bounds = array<i64: 27, 8, 8>}, {pipeline_mode = #tpu.pipeline_mode<synchronous>, transform_indices = @transform_2, window_bounds = array<i64: 1, 1024>}, {transform_indices = @transform_3, window_bounds = array<i64: 1, 8, 1>}, {transform_indices = @transform_4, window_bounds = array<i64: 1, 8, 1>}]} {
    %c0 = arith.constant 0 : index
    %c0_0 = arith.constant 0 : index
    %c0_1 = arith.constant 0 : index
    %0 = vector.load %arg1[%c0, %c0_0, %c0_1] : memref<1x8x1280xbf16, #tpu.memory_space<vmem>>, vector<1x8x1024xbf16>
    %1 = vector.shape_cast %0 : vector<1x8x1024xbf16> to vector<8x1024xbf16>
    %c0_2 = arith.constant 0 : index
    %c0_3 = arith.constant 0 : index
    %c0_4 = arith.constant 0 : index
    %2 = vector.load %arg2[%c0_2, %c0_3, %c0_4] : memref<27x8x8xbf16, #tpu.memory_space<vmem>>, vector<1x8x8xbf16>
    %3 = vector.shape_cast %2 : vector<1x8x8xbf16> to vector<8x8xbf16>
    %cst = arith.constant dense<0.000000e+00> : vector<8x1024xf32>
    %4 = tpu.matmul %3, %1, %cst {dimension_numbers = #tpu.dot_dimension_numbers<[1], [0], [0], [1], [0, 0, 1, 1], [], []>} : vector<8x8xbf16>, vector<8x1024xbf16>, vector<8x1024xf32> -> vector<8x1024xf32>
    %c0_5 = arith.constant 0 : index
    %c0_6 = arith.constant 0 : index
    %c1 = arith.constant 1 : index
    %5 = vector.load %arg1[%c0_5, %c0_6, %c1] : memref<1x8x1280xbf16, #tpu.memory_space<vmem>>, vector<1x8x1024xbf16>
    %6 = vector.shape_cast %5 : vector<1x8x1024xbf16> to vector<8x1024xbf16>
    %c1_7 = arith.constant 1 : index
    %c0_8 = arith.constant 0 : index
    %c0_9 = arith.constant 0 : index
    %7 = vector.load %arg2[%c1_7, %c0_8, %c0_9] : memref<27x8x8xbf16, #tpu.memory_space<vmem>>, vector<1x8x8xbf16>
    %8 = vector.shape_cast %7 : vector<1x8x8xbf16> to vector<8x8xbf16>
    %cst_10 = arith.constant dense<0.000000e+00> : vector<8x1024xf32>
    %9 = tpu.matmul %8, %6, %cst_10 {dimension_numbers = #tpu.dot_dimension_numbers<[1], [0], [0], [1], [0, 0, 1, 1], [], []>} : vector<8x8xbf16>, vector<8x1024xbf16>, vector<8x1024xf32> -> vector<8x1024xf32>
    %10 = arith.addf %4, %9 : vector<8x1024xf32>
    %c0_11 = arith.constant 0 : index
    %c0_12 = arith.constant 0 : index
    %c2 = arith.constant 2 : index
    %11 = vector.load %arg1[%c0_11, %c0_12, %c2] : memref<1x8x1280xbf16, #tpu.memory_space<vmem>>, vector<1x8x1024xbf16>
    %12 = vector.shape_cast %11 : vector<1x8x1024xbf16> to vector<8x1024xbf16>
    %c2_13 = arith.constant 2 : index
    %c0_14 = arith.constant 0 : index
    %c0_15 = arith.constant 0 : index
    %13 = vector.load %arg2[%c2_13, %c0_14, %c0_15] : memref<27x8x8xbf16, #tpu.memory_space<vmem>>, vector<1x8x8xbf16>
    %14 = vector.shape_cast %13 : vector<1x8x8xbf16> to vector<8x8xbf16>
    %cst_16 = arith.constant dense<0.000000e+00> : vector<8x1024xf32>
    %15 = tpu.matmul %14, %12, %cst_16 {dimension_numbers = #tpu.dot_dimension_numbers<[1], [0], [0], [1], [0, 0, 1, 1], [], []>} : vector<8x8xbf16>, vector<8x1024xbf16>, vector<8x1024xf32> -> vector<8x1024xf32>
    %16 = arith.addf %10, %15 : vector<8x1024xf32>
    %c0_17 = arith.constant 0 : index
    %c0_18 = arith.constant 0 : index
    %c10 = arith.constant 10 : index
    %17 = vector.load %arg1[%c0_17, %c0_18, %c10] : memref<1x8x1280xbf16, #tpu.memory_space<vmem>>, vector<1x8x1024xbf16>
    %18 = vector.shape_cast %17 : vector<1x8x1024xbf16> to vector<8x1024xbf16>
    %c3 = arith.constant 3 : index
    %c0_19 = arith.constant 0 : index
    %c0_20 = arith.constant 0 : index
    %19 = vector.load %arg2[%c3, %c0_19, %c0_20] : memref<27x8x8xbf16, #tpu.memory_space<vmem>>, vector<1x8x8xbf16>
    %20 = vector.shape_cast %19 : vector<1x8x8xbf16> to vector<8x8xbf16>
    %cst_21 = arith.constant dense<0.000000e+00> : vector<8x1024xf32>
    %21 = tpu.matmul %20, %18, %cst_21 {dimension_numbers = #tpu.dot_dimension_numbers<[1], [0], [0], [1], [0, 0, 1, 1], [], []>} : vector<8x8xbf16>, vector<8x1024xbf16>, vector<8x1024xf32> -> vector<8x1024xf32>
    %22 = arith.addf %16, %21 : vector<8x1024xf32>
    %c0_22 = arith.constant 0 : index
    %c0_23 = arith.constant 0 : index
    %c11 = arith.constant 11 : index
    %23 = vector.load %arg1[%c0_22, %c0_23, %c11] : memref<1x8x1280xbf16, #tpu.memory_space<vmem>>, vector<1x8x1024xbf16>
    %24 = vector.shape_cast %23 : vector<1x8x1024xbf16> to vector<8x1024xbf16>
    %c4 = arith.constant 4 : index
    %c0_24 = arith.constant 0 : index
    %c0_25 = arith.constant 0 : index
    %25 = vector.load %arg2[%c4, %c0_24, %c0_25] : memref<27x8x8xbf16, #tpu.memory_space<vmem>>, vector<1x8x8xbf16>
    %26 = vector.shape_cast %25 : vector<1x8x8xbf16> to vector<8x8xbf16>
    %cst_26 = arith.constant dense<0.000000e+00> : vector<8x1024xf32>
    %27 = tpu.matmul %26, %24, %cst_26 {dimension_numbers = #tpu.dot_dimension_numbers<[1], [0], [0], [1], [0, 0, 1, 1], [], []>} : vector<8x8xbf16>, vector<8x1024xbf16>, vector<8x1024xf32> -> vector<8x1024xf32>
    %28 = arith.addf %22, %27 : vector<8x1024xf32>
    %c0_27 = arith.constant 0 : index
    %c0_28 = arith.constant 0 : index
    %c12 = arith.constant 12 : index
    %29 = vector.load %arg1[%c0_27, %c0_28, %c12] : memref<1x8x1280xbf16, #tpu.memory_space<vmem>>, vector<1x8x1024xbf16>
    %30 = vector.shape_cast %29 : vector<1x8x1024xbf16> to vector<8x1024xbf16>
    %c5 = arith.constant 5 : index
    %c0_29 = arith.constant 0 : index
    %c0_30 = arith.constant 0 : index
    %31 = vector.load %arg2[%c5, %c0_29, %c0_30] : memref<27x8x8xbf16, #tpu.memory_space<vmem>>, vector<1x8x8xbf16>
    %32 = vector.shape_cast %31 : vector<1x8x8xbf16> to vector<8x8xbf16>
    %cst_31 = arith.constant dense<0.000000e+00> : vector<8x1024xf32>
    %33 = tpu.matmul %32, %30, %cst_31 {dimension_numbers = #tpu.dot_dimension_numbers<[1], [0], [0], [1], [0, 0, 1, 1], [], []>} : vector<8x8xbf16>, vector<8x1024xbf16>, vector<8x1024xf32> -> vector<8x1024xf32>
    %34 = arith.addf %28, %33 : vector<8x1024xf32>
    %c0_32 = arith.constant 0 : index
    %c0_33 = arith.constant 0 : index
    %c20 = arith.constant 20 : index
    %35 = vector.load %arg1[%c0_32, %c0_33, %c20] : memref<1x8x1280xbf16, #tpu.memory_space<vmem>>, vector<1x8x1024xbf16>
    %36 = vector.shape_cast %35 : vector<1x8x1024xbf16> to vector<8x1024xbf16>
    %c6 = arith.constant 6 : index
    %c0_34 = arith.constant 0 : index
    %c0_35 = arith.constant 0 : index
    %37 = vector.load %arg2[%c6, %c0_34, %c0_35] : memref<27x8x8xbf16, #tpu.memory_space<vmem>>, vector<1x8x8xbf16>
    %38 = vector.shape_cast %37 : vector<1x8x8xbf16> to vector<8x8xbf16>
    %cst_36 = arith.constant dense<0.000000e+00> : vector<8x1024xf32>
    %39 = tpu.matmul %38, %36, %cst_36 {dimension_numbers = #tpu.dot_dimension_numbers<[1], [0], [0], [1], [0, 0, 1, 1], [], []>} : vector<8x8xbf16>, vector<8x1024xbf16>, vector<8x1024xf32> -> vector<8x1024xf32>
    %40 = arith.addf %34, %39 : vector<8x1024xf32>
    %c0_37 = arith.constant 0 : index
    %c0_38 = arith.constant 0 : index
    %c21 = arith.constant 21 : index
    %41 = vector.load %arg1[%c0_37, %c0_38, %c21] : memref<1x8x1280xbf16, #tpu.memory_space<vmem>>, vector<1x8x1024xbf16>
    %42 = vector.shape_cast %41 : vector<1x8x1024xbf16> to vector<8x1024xbf16>
    %c7 = arith.constant 7 : index
    %c0_39 = arith.constant 0 : index
    %c0_40 = arith.constant 0 : index
    %43 = vector.load %arg2[%c7, %c0_39, %c0_40] : memref<27x8x8xbf16, #tpu.memory_space<vmem>>, vector<1x8x8xbf16>
    %44 = vector.shape_cast %43 : vector<1x8x8xbf16> to vector<8x8xbf16>
    %cst_41 = arith.constant dense<0.000000e+00> : vector<8x1024xf32>
    %45 = tpu.matmul %44, %42, %cst_41 {dimension_numbers = #tpu.dot_dimension_numbers<[1], [0], [0], [1], [0, 0, 1, 1], [], []>} : vector<8x8xbf16>, vector<8x1024xbf16>, vector<8x1024xf32> -> vector<8x1024xf32>
    %46 = arith.addf %40, %45 : vector<8x1024xf32>
    %c0_42 = arith.constant 0 : index
    %c0_43 = arith.constant 0 : index
    %c22 = arith.constant 22 : index
    %47 = vector.load %arg1[%c0_42, %c0_43, %c22] : memref<1x8x1280xbf16, #tpu.memory_space<vmem>>, vector<1x8x1024xbf16>
    %48 = vector.shape_cast %47 : vector<1x8x1024xbf16> to vector<8x1024xbf16>
    %c8 = arith.constant 8 : index
    %c0_44 = arith.constant 0 : index
    %c0_45 = arith.constant 0 : index
    %49 = vector.load %arg2[%c8, %c0_44, %c0_45] : memref<27x8x8xbf16, #tpu.memory_space<vmem>>, vector<1x8x8xbf16>
    %50 = vector.shape_cast %49 : vector<1x8x8xbf16> to vector<8x8xbf16>
    %cst_46 = arith.constant dense<0.000000e+00> : vector<8x1024xf32>
    %51 = tpu.matmul %50, %48, %cst_46 {dimension_numbers = #tpu.dot_dimension_numbers<[1], [0], [0], [1], [0, 0, 1, 1], [], []>} : vector<8x8xbf16>, vector<8x1024xbf16>, vector<8x1024xf32> -> vector<8x1024xf32>
    %52 = arith.addf %46, %51 : vector<8x1024xf32>
    %c0_47 = arith.constant 0 : index
    %c0_48 = arith.constant 0 : index
    %c100 = arith.constant 100 : index
    %53 = vector.load %arg1[%c0_47, %c0_48, %c100] : memref<1x8x1280xbf16, #tpu.memory_space<vmem>>, vector<1x8x1024xbf16>
    %54 = vector.shape_cast %53 : vector<1x8x1024xbf16> to vector<8x1024xbf16>
    %c9 = arith.constant 9 : index
    %c0_49 = arith.constant 0 : index
    %c0_50 = arith.constant 0 : index
    %55 = vector.load %arg2[%c9, %c0_49, %c0_50] : memref<27x8x8xbf16, #tpu.memory_space<vmem>>, vector<1x8x8xbf16>
    %56 = vector.shape_cast %55 : vector<1x8x8xbf16> to vector<8x8xbf16>
    %cst_51 = arith.constant dense<0.000000e+00> : vector<8x1024xf32>
    %57 = tpu.matmul %56, %54, %cst_51 {dimension_numbers = #tpu.dot_dimension_numbers<[1], [0], [0], [1], [0, 0, 1, 1], [], []>} : vector<8x8xbf16>, vector<8x1024xbf16>, vector<8x1024xf32> -> vector<8x1024xf32>
    %58 = arith.addf %52, %57 : vector<8x1024xf32>
    %c0_52 = arith.constant 0 : index
    %c0_53 = arith.constant 0 : index
    %c101 = arith.constant 101 : index
    %59 = vector.load %arg1[%c0_52, %c0_53, %c101] : memref<1x8x1280xbf16, #tpu.memory_space<vmem>>, vector<1x8x1024xbf16>
    %60 = vector.shape_cast %59 : vector<1x8x1024xbf16> to vector<8x1024xbf16>
    %c10_54 = arith.constant 10 : index
    %c0_55 = arith.constant 0 : index
    %c0_56 = arith.constant 0 : index
    %61 = vector.load %arg2[%c10_54, %c0_55, %c0_56] : memref<27x8x8xbf16, #tpu.memory_space<vmem>>, vector<1x8x8xbf16>
    %62 = vector.shape_cast %61 : vector<1x8x8xbf16> to vector<8x8xbf16>
    %cst_57 = arith.constant dense<0.000000e+00> : vector<8x1024xf32>
    %63 = tpu.matmul %62, %60, %cst_57 {dimension_numbers = #tpu.dot_dimension_numbers<[1], [0], [0], [1], [0, 0, 1, 1], [], []>} : vector<8x8xbf16>, vector<8x1024xbf16>, vector<8x1024xf32> -> vector<8x1024xf32>
    %64 = arith.addf %58, %63 : vector<8x1024xf32>
    %c0_58 = arith.constant 0 : index
    %c0_59 = arith.constant 0 : index
    %c102 = arith.constant 102 : index
    %65 = vector.load %arg1[%c0_58, %c0_59, %c102] : memref<1x8x1280xbf16, #tpu.memory_space<vmem>>, vector<1x8x1024xbf16>
    %66 = vector.shape_cast %65 : vector<1x8x1024xbf16> to vector<8x1024xbf16>
    %c11_60 = arith.constant 11 : index
    %c0_61 = arith.constant 0 : index
    %c0_62 = arith.constant 0 : index
    %67 = vector.load %arg2[%c11_60, %c0_61, %c0_62] : memref<27x8x8xbf16, #tpu.memory_space<vmem>>, vector<1x8x8xbf16>
    %68 = vector.shape_cast %67 : vector<1x8x8xbf16> to vector<8x8xbf16>
    %cst_63 = arith.constant dense<0.000000e+00> : vector<8x1024xf32>
    %69 = tpu.matmul %68, %66, %cst_63 {dimension_numbers = #tpu.dot_dimension_numbers<[1], [0], [0], [1], [0, 0, 1, 1], [], []>} : vector<8x8xbf16>, vector<8x1024xbf16>, vector<8x1024xf32> -> vector<8x1024xf32>
    %70 = arith.addf %64, %69 : vector<8x1024xf32>
    %c0_64 = arith.constant 0 : index
    %c0_65 = arith.constant 0 : index
    %c110 = arith.constant 110 : index
    %71 = vector.load %arg1[%c0_64, %c0_65, %c110] : memref<1x8x1280xbf16, #tpu.memory_space<vmem>>, vector<1x8x1024xbf16>
    %72 = vector.shape_cast %71 : vector<1x8x1024xbf16> to vector<8x1024xbf16>
    %c12_66 = arith.constant 12 : index
    %c0_67 = arith.constant 0 : index
    %c0_68 = arith.constant 0 : index
    %73 = vector.load %arg2[%c12_66, %c0_67, %c0_68] : memref<27x8x8xbf16, #tpu.memory_space<vmem>>, vector<1x8x8xbf16>
    %74 = vector.shape_cast %73 : vector<1x8x8xbf16> to vector<8x8xbf16>
    %cst_69 = arith.constant dense<0.000000e+00> : vector<8x1024xf32>
    %75 = tpu.matmul %74, %72, %cst_69 {dimension_numbers = #tpu.dot_dimension_numbers<[1], [0], [0], [1], [0, 0, 1, 1], [], []>} : vector<8x8xbf16>, vector<8x1024xbf16>, vector<8x1024xf32> -> vector<8x1024xf32>
    %76 = arith.addf %70, %75 : vector<8x1024xf32>
    %c0_70 = arith.constant 0 : index
    %c0_71 = arith.constant 0 : index
    %c111 = arith.constant 111 : index
    %77 = vector.load %arg1[%c0_70, %c0_71, %c111] : memref<1x8x1280xbf16, #tpu.memory_space<vmem>>, vector<1x8x1024xbf16>
    %78 = vector.shape_cast %77 : vector<1x8x1024xbf16> to vector<8x1024xbf16>
    %c13 = arith.constant 13 : index
    %c0_72 = arith.constant 0 : index
    %c0_73 = arith.constant 0 : index
    %79 = vector.load %arg2[%c13, %c0_72, %c0_73] : memref<27x8x8xbf16, #tpu.memory_space<vmem>>, vector<1x8x8xbf16>
    %80 = vector.shape_cast %79 : vector<1x8x8xbf16> to vector<8x8xbf16>
    %cst_74 = arith.constant dense<0.000000e+00> : vector<8x1024xf32>
    %81 = tpu.matmul %80, %78, %cst_74 {dimension_numbers = #tpu.dot_dimension_numbers<[1], [0], [0], [1], [0, 0, 1, 1], [], []>} : vector<8x8xbf16>, vector<8x1024xbf16>, vector<8x1024xf32> -> vector<8x1024xf32>
    %82 = arith.addf %76, %81 : vector<8x1024xf32>
    %c0_75 = arith.constant 0 : index
    %c0_76 = arith.constant 0 : index
    %c112 = arith.constant 112 : index
    %83 = vector.load %arg1[%c0_75, %c0_76, %c112] : memref<1x8x1280xbf16, #tpu.memory_space<vmem>>, vector<1x8x1024xbf16>
    %84 = vector.shape_cast %83 : vector<1x8x1024xbf16> to vector<8x1024xbf16>
    %c14 = arith.constant 14 : index
    %c0_77 = arith.constant 0 : index
    %c0_78 = arith.constant 0 : index
    %85 = vector.load %arg2[%c14, %c0_77, %c0_78] : memref<27x8x8xbf16, #tpu.memory_space<vmem>>, vector<1x8x8xbf16>
    %86 = vector.shape_cast %85 : vector<1x8x8xbf16> to vector<8x8xbf16>
    %cst_79 = arith.constant dense<0.000000e+00> : vector<8x1024xf32>
    %87 = tpu.matmul %86, %84, %cst_79 {dimension_numbers = #tpu.dot_dimension_numbers<[1], [0], [0], [1], [0, 0, 1, 1], [], []>} : vector<8x8xbf16>, vector<8x1024xbf16>, vector<8x1024xf32> -> vector<8x1024xf32>
    %88 = arith.addf %82, %87 : vector<8x1024xf32>
    %c0_80 = arith.constant 0 : index
    %c0_81 = arith.constant 0 : index
    %c120 = arith.constant 120 : index
    %89 = vector.load %arg1[%c0_80, %c0_81, %c120] : memref<1x8x1280xbf16, #tpu.memory_space<vmem>>, vector<1x8x1024xbf16>
    %90 = vector.shape_cast %89 : vector<1x8x1024xbf16> to vector<8x1024xbf16>
    %c15 = arith.constant 15 : index
    %c0_82 = arith.constant 0 : index
    %c0_83 = arith.constant 0 : index
    %91 = vector.load %arg2[%c15, %c0_82, %c0_83] : memref<27x8x8xbf16, #tpu.memory_space<vmem>>, vector<1x8x8xbf16>
    %92 = vector.shape_cast %91 : vector<1x8x8xbf16> to vector<8x8xbf16>
    %cst_84 = arith.constant dense<0.000000e+00> : vector<8x1024xf32>
    %93 = tpu.matmul %92, %90, %cst_84 {dimension_numbers = #tpu.dot_dimension_numbers<[1], [0], [0], [1], [0, 0, 1, 1], [], []>} : vector<8x8xbf16>, vector<8x1024xbf16>, vector<8x1024xf32> -> vector<8x1024xf32>
    %94 = arith.addf %88, %93 : vector<8x1024xf32>
    %c0_85 = arith.constant 0 : index
    %c0_86 = arith.constant 0 : index
    %c121 = arith.constant 121 : index
    %95 = vector.load %arg1[%c0_85, %c0_86, %c121] : memref<1x8x1280xbf16, #tpu.memory_space<vmem>>, vector<1x8x1024xbf16>
    %96 = vector.shape_cast %95 : vector<1x8x1024xbf16> to vector<8x1024xbf16>
    %c16 = arith.constant 16 : index
    %c0_87 = arith.constant 0 : index
    %c0_88 = arith.constant 0 : index
    %97 = vector.load %arg2[%c16, %c0_87, %c0_88] : memref<27x8x8xbf16, #tpu.memory_space<vmem>>, vector<1x8x8xbf16>
    %98 = vector.shape_cast %97 : vector<1x8x8xbf16> to vector<8x8xbf16>
    %cst_89 = arith.constant dense<0.000000e+00> : vector<8x1024xf32>
    %99 = tpu.matmul %98, %96, %cst_89 {dimension_numbers = #tpu.dot_dimension_numbers<[1], [0], [0], [1], [0, 0, 1, 1], [], []>} : vector<8x8xbf16>, vector<8x1024xbf16>, vector<8x1024xf32> -> vector<8x1024xf32>
    %100 = arith.addf %94, %99 : vector<8x1024xf32>
    %c0_90 = arith.constant 0 : index
    %c0_91 = arith.constant 0 : index
    %c122 = arith.constant 122 : index
    %101 = vector.load %arg1[%c0_90, %c0_91, %c122] : memref<1x8x1280xbf16, #tpu.memory_space<vmem>>, vector<1x8x1024xbf16>
    %102 = vector.shape_cast %101 : vector<1x8x1024xbf16> to vector<8x1024xbf16>
    %c17 = arith.constant 17 : index
    %c0_92 = arith.constant 0 : index
    %c0_93 = arith.constant 0 : index
    %103 = vector.load %arg2[%c17, %c0_92, %c0_93] : memref<27x8x8xbf16, #tpu.memory_space<vmem>>, vector<1x8x8xbf16>
    %104 = vector.shape_cast %103 : vector<1x8x8xbf16> to vector<8x8xbf16>
    %cst_94 = arith.constant dense<0.000000e+00> : vector<8x1024xf32>
    %105 = tpu.matmul %104, %102, %cst_94 {dimension_numbers = #tpu.dot_dimension_numbers<[1], [0], [0], [1], [0, 0, 1, 1], [], []>} : vector<8x8xbf16>, vector<8x1024xbf16>, vector<8x1024xf32> -> vector<8x1024xf32>
    %106 = arith.addf %100, %105 : vector<8x1024xf32>
    %c0_95 = arith.constant 0 : index
    %c0_96 = arith.constant 0 : index
    %c200 = arith.constant 200 : index
    %107 = vector.load %arg1[%c0_95, %c0_96, %c200] : memref<1x8x1280xbf16, #tpu.memory_space<vmem>>, vector<1x8x1024xbf16>
    %108 = vector.shape_cast %107 : vector<1x8x1024xbf16> to vector<8x1024xbf16>
    %c18 = arith.constant 18 : index
    %c0_97 = arith.constant 0 : index
    %c0_98 = arith.constant 0 : index
    %109 = vector.load %arg2[%c18, %c0_97, %c0_98] : memref<27x8x8xbf16, #tpu.memory_space<vmem>>, vector<1x8x8xbf16>
    %110 = vector.shape_cast %109 : vector<1x8x8xbf16> to vector<8x8xbf16>
    %cst_99 = arith.constant dense<0.000000e+00> : vector<8x1024xf32>
    %111 = tpu.matmul %110, %108, %cst_99 {dimension_numbers = #tpu.dot_dimension_numbers<[1], [0], [0], [1], [0, 0, 1, 1], [], []>} : vector<8x8xbf16>, vector<8x1024xbf16>, vector<8x1024xf32> -> vector<8x1024xf32>
    %112 = arith.addf %106, %111 : vector<8x1024xf32>
    %c0_100 = arith.constant 0 : index
    %c0_101 = arith.constant 0 : index
    %c201 = arith.constant 201 : index
    %113 = vector.load %arg1[%c0_100, %c0_101, %c201] : memref<1x8x1280xbf16, #tpu.memory_space<vmem>>, vector<1x8x1024xbf16>
    %114 = vector.shape_cast %113 : vector<1x8x1024xbf16> to vector<8x1024xbf16>
    %c19 = arith.constant 19 : index
    %c0_102 = arith.constant 0 : index
    %c0_103 = arith.constant 0 : index
    %115 = vector.load %arg2[%c19, %c0_102, %c0_103] : memref<27x8x8xbf16, #tpu.memory_space<vmem>>, vector<1x8x8xbf16>
    %116 = vector.shape_cast %115 : vector<1x8x8xbf16> to vector<8x8xbf16>
    %cst_104 = arith.constant dense<0.000000e+00> : vector<8x1024xf32>
    %117 = tpu.matmul %116, %114, %cst_104 {dimension_numbers = #tpu.dot_dimension_numbers<[1], [0], [0], [1], [0, 0, 1, 1], [], []>} : vector<8x8xbf16>, vector<8x1024xbf16>, vector<8x1024xf32> -> vector<8x1024xf32>
    %118 = arith.addf %112, %117 : vector<8x1024xf32>
    %c0_105 = arith.constant 0 : index
    %c0_106 = arith.constant 0 : index
    %c202 = arith.constant 202 : index
    %119 = vector.load %arg1[%c0_105, %c0_106, %c202] : memref<1x8x1280xbf16, #tpu.memory_space<vmem>>, vector<1x8x1024xbf16>
    %120 = vector.shape_cast %119 : vector<1x8x1024xbf16> to vector<8x1024xbf16>
    %c20_107 = arith.constant 20 : index
    %c0_108 = arith.constant 0 : index
    %c0_109 = arith.constant 0 : index
    %121 = vector.load %arg2[%c20_107, %c0_108, %c0_109] : memref<27x8x8xbf16, #tpu.memory_space<vmem>>, vector<1x8x8xbf16>
    %122 = vector.shape_cast %121 : vector<1x8x8xbf16> to vector<8x8xbf16>
    %cst_110 = arith.constant dense<0.000000e+00> : vector<8x1024xf32>
    %123 = tpu.matmul %122, %120, %cst_110 {dimension_numbers = #tpu.dot_dimension_numbers<[1], [0], [0], [1], [0, 0, 1, 1], [], []>} : vector<8x8xbf16>, vector<8x1024xbf16>, vector<8x1024xf32> -> vector<8x1024xf32>
    %124 = arith.addf %118, %123 : vector<8x1024xf32>
    %c0_111 = arith.constant 0 : index
    %c0_112 = arith.constant 0 : index
    %c210 = arith.constant 210 : index
    %125 = vector.load %arg1[%c0_111, %c0_112, %c210] : memref<1x8x1280xbf16, #tpu.memory_space<vmem>>, vector<1x8x1024xbf16>
    %126 = vector.shape_cast %125 : vector<1x8x1024xbf16> to vector<8x1024xbf16>
    %c21_113 = arith.constant 21 : index
    %c0_114 = arith.constant 0 : index
    %c0_115 = arith.constant 0 : index
    %127 = vector.load %arg2[%c21_113, %c0_114, %c0_115] : memref<27x8x8xbf16, #tpu.memory_space<vmem>>, vector<1x8x8xbf16>
    %128 = vector.shape_cast %127 : vector<1x8x8xbf16> to vector<8x8xbf16>
    %cst_116 = arith.constant dense<0.000000e+00> : vector<8x1024xf32>
    %129 = tpu.matmul %128, %126, %cst_116 {dimension_numbers = #tpu.dot_dimension_numbers<[1], [0], [0], [1], [0, 0, 1, 1], [], []>} : vector<8x8xbf16>, vector<8x1024xbf16>, vector<8x1024xf32> -> vector<8x1024xf32>
    %130 = arith.addf %124, %129 : vector<8x1024xf32>
    %c0_117 = arith.constant 0 : index
    %c0_118 = arith.constant 0 : index
    %c211 = arith.constant 211 : index
    %131 = vector.load %arg1[%c0_117, %c0_118, %c211] : memref<1x8x1280xbf16, #tpu.memory_space<vmem>>, vector<1x8x1024xbf16>
    %132 = vector.shape_cast %131 : vector<1x8x1024xbf16> to vector<8x1024xbf16>
    %c22_119 = arith.constant 22 : index
    %c0_120 = arith.constant 0 : index
    %c0_121 = arith.constant 0 : index
    %133 = vector.load %arg2[%c22_119, %c0_120, %c0_121] : memref<27x8x8xbf16, #tpu.memory_space<vmem>>, vector<1x8x8xbf16>
    %134 = vector.shape_cast %133 : vector<1x8x8xbf16> to vector<8x8xbf16>
    %cst_122 = arith.constant dense<0.000000e+00> : vector<8x1024xf32>
    %135 = tpu.matmul %134, %132, %cst_122 {dimension_numbers = #tpu.dot_dimension_numbers<[1], [0], [0], [1], [0, 0, 1, 1], [], []>} : vector<8x8xbf16>, vector<8x1024xbf16>, vector<8x1024xf32> -> vector<8x1024xf32>
    %136 = arith.addf %130, %135 : vector<8x1024xf32>
    %c0_123 = arith.constant 0 : index
    %c0_124 = arith.constant 0 : index
    %c212 = arith.constant 212 : index
    %137 = vector.load %arg1[%c0_123, %c0_124, %c212] : memref<1x8x1280xbf16, #tpu.memory_space<vmem>>, vector<1x8x1024xbf16>
    %138 = vector.shape_cast %137 : vector<1x8x1024xbf16> to vector<8x1024xbf16>
    %c23 = arith.constant 23 : index
    %c0_125 = arith.constant 0 : index
    %c0_126 = arith.constant 0 : index
    %139 = vector.load %arg2[%c23, %c0_125, %c0_126] : memref<27x8x8xbf16, #tpu.memory_space<vmem>>, vector<1x8x8xbf16>
    %140 = vector.shape_cast %139 : vector<1x8x8xbf16> to vector<8x8xbf16>
    %cst_127 = arith.constant dense<0.000000e+00> : vector<8x1024xf32>
    %141 = tpu.matmul %140, %138, %cst_127 {dimension_numbers = #tpu.dot_dimension_numbers<[1], [0], [0], [1], [0, 0, 1, 1], [], []>} : vector<8x8xbf16>, vector<8x1024xbf16>, vector<8x1024xf32> -> vector<8x1024xf32>
    %142 = arith.addf %136, %141 : vector<8x1024xf32>
    %c0_128 = arith.constant 0 : index
    %c0_129 = arith.constant 0 : index
    %c220 = arith.constant 220 : index
    %143 = vector.load %arg1[%c0_128, %c0_129, %c220] : memref<1x8x1280xbf16, #tpu.memory_space<vmem>>, vector<1x8x1024xbf16>
    %144 = vector.shape_cast %143 : vector<1x8x1024xbf16> to vector<8x1024xbf16>
    %c24 = arith.constant 24 : index
    %c0_130 = arith.constant 0 : index
    %c0_131 = arith.constant 0 : index
    %145 = vector.load %arg2[%c24, %c0_130, %c0_131] : memref<27x8x8xbf16, #tpu.memory_space<vmem>>, vector<1x8x8xbf16>
    %146 = vector.shape_cast %145 : vector<1x8x8xbf16> to vector<8x8xbf16>
    %cst_132 = arith.constant dense<0.000000e+00> : vector<8x1024xf32>
    %147 = tpu.matmul %146, %144, %cst_132 {dimension_numbers = #tpu.dot_dimension_numbers<[1], [0], [0], [1], [0, 0, 1, 1], [], []>} : vector<8x8xbf16>, vector<8x1024xbf16>, vector<8x1024xf32> -> vector<8x1024xf32>
    %148 = arith.addf %142, %147 : vector<8x1024xf32>
    %c0_133 = arith.constant 0 : index
    %c0_134 = arith.constant 0 : index
    %c221 = arith.constant 221 : index
    %149 = vector.load %arg1[%c0_133, %c0_134, %c221] : memref<1x8x1280xbf16, #tpu.memory_space<vmem>>, vector<1x8x1024xbf16>
    %150 = vector.shape_cast %149 : vector<1x8x1024xbf16> to vector<8x1024xbf16>
    %c25 = arith.constant 25 : index
    %c0_135 = arith.constant 0 : index
    %c0_136 = arith.constant 0 : index
    %151 = vector.load %arg2[%c25, %c0_135, %c0_136] : memref<27x8x8xbf16, #tpu.memory_space<vmem>>, vector<1x8x8xbf16>
    %152 = vector.shape_cast %151 : vector<1x8x8xbf16> to vector<8x8xbf16>
    %cst_137 = arith.constant dense<0.000000e+00> : vector<8x1024xf32>
    %153 = tpu.matmul %152, %150, %cst_137 {dimension_numbers = #tpu.dot_dimension_numbers<[1], [0], [0], [1], [0, 0, 1, 1], [], []>} : vector<8x8xbf16>, vector<8x1024xbf16>, vector<8x1024xf32> -> vector<8x1024xf32>
    %154 = arith.addf %148, %153 : vector<8x1024xf32>
    %c0_138 = arith.constant 0 : index
    %c0_139 = arith.constant 0 : index
    %c222 = arith.constant 222 : index
    %155 = vector.load %arg1[%c0_138, %c0_139, %c222] : memref<1x8x1280xbf16, #tpu.memory_space<vmem>>, vector<1x8x1024xbf16>
    %156 = vector.shape_cast %155 : vector<1x8x1024xbf16> to vector<8x1024xbf16>
    %c26 = arith.constant 26 : index
    %c0_140 = arith.constant 0 : index
    %c0_141 = arith.constant 0 : index
    %157 = vector.load %arg2[%c26, %c0_140, %c0_141] : memref<27x8x8xbf16, #tpu.memory_space<vmem>>, vector<1x8x8xbf16>
    %158 = vector.shape_cast %157 : vector<1x8x8xbf16> to vector<8x8xbf16>
    %cst_142 = arith.constant dense<0.000000e+00> : vector<8x1024xf32>
    %159 = tpu.matmul %158, %156, %cst_142 {dimension_numbers = #tpu.dot_dimension_numbers<[1], [0], [0], [1], [0, 0, 1, 1], [], []>} : vector<8x8xbf16>, vector<8x1024xbf16>, vector<8x1024xf32> -> vector<8x1024xf32>
    %160 = arith.addf %154, %159 : vector<8x1024xf32>
    %c0_143 = arith.constant 0 : index
    %c0_144 = arith.constant 0 : index
    %161 = vector.load %arg3[%c0_143, %c0_144] : memref<1x1024xf32, #tpu.memory_space<vmem>>, vector<1x1024xf32>
    %162 = vector.broadcast %161 : vector<1x1024xf32> to vector<8x1024xf32>
    %163 = arith.mulf %160, %162 : vector<8x1024xf32>
    %cst_145 = arith.constant dense<0.000000e+00> : vector<8xf32>
    %164 = vector.multi_reduction <add>, %163, %cst_145 [1] : vector<8x1024xf32> to vector<8xf32>
    %165 = vector.shape_cast %164 : vector<8xf32> to vector<8x1xf32>
    %166 = vector.shape_cast %165 : vector<8x1xf32> to vector<1x8x1xf32>
    %c0_146 = arith.constant 0 : index
    %c0_147 = arith.constant 0 : index
    %c0_148 = arith.constant 0 : index
    %167 = vector.load %arg4[%c0_146, %c0_147, %c0_148] : memref<1x8x1xf32, #tpu.memory_space<vmem>>, vector<1x8x1xf32>
    tpu.vector_store %arg4[%c0_146, %c0_147, %c0_148], %166 {strides = array<i32>} : memref<1x8x1xf32, #tpu.memory_space<vmem>>, vector<1x8x1xf32>,
    %168 = arith.mulf %163, %163 : vector<8x1024xf32>
    %cst_149 = arith.constant dense<0.000000e+00> : vector<8xf32>
    %169 = vector.multi_reduction <add>, %168, %cst_149 [1] : vector<8x1024xf32> to vector<8xf32>
    %170 = vector.shape_cast %169 : vector<8xf32> to vector<8x1xf32>
    %171 = vector.shape_cast %170 : vector<8x1xf32> to vector<1x8x1xf32>
    %c0_150 = arith.constant 0 : index
    %c0_151 = arith.constant 0 : index
    %c0_152 = arith.constant 0 : index
    %172 = vector.load %arg5[%c0_150, %c0_151, %c0_152] : memref<1x8x1xf32, #tpu.memory_space<vmem>>, vector<1x8x1xf32>
    tpu.vector_store %arg5[%c0_150, %c0_151, %c0_152], %171 {strides = array<i32>} : memref<1x8x1xf32, #tpu.memory_space<vmem>>, vector<1x8x1xf32>,
    return
  }
  func.func @transform_0(%arg0: i32) -> (i32, i32, i32) {
    %c0_i32 = arith.constant 0 : i32
    %c0_i32_0 = arith.constant 0 : i32
    %c0_i32_1 = arith.constant 0 : i32
    return %arg0, %c0_i32, %c0_i32_0 : i32, i32, i32
  }
  func.func @transform_1(%arg0: i32) -> (i32, i32, i32) {
    %c0_i32 = arith.constant 0 : i32
    %c0_i32_0 = arith.constant 0 : i32
    %c0_i32_1 = arith.constant 0 : i32
    %c0_i32_2 = arith.constant 0 : i32
    return %c0_i32, %c0_i32_0, %c0_i32_1 : i32, i32, i32
  }
  func.func @transform_2(%arg0: i32) -> (i32, i32) {
    %c0_i32 = arith.constant 0 : i32
    %c0_i32_0 = arith.constant 0 : i32
    %c0_i32_1 = arith.constant 0 : i32
    return %c0_i32, %c0_i32_0 : i32, i32
  }
  func.func @transform_3(%arg0: i32) -> (i32, i32, i32) {
    %c0_i32 = arith.constant 0 : i32
    %c0_i32_0 = arith.constant 0 : i32
    %c0_i32_1 = arith.constant 0 : i32
    return %arg0, %c0_i32, %c0_i32_0 : i32, i32, i32
  }
  func.func @transform_4(%arg0: i32) -> (i32, i32, i32) {
    %c0_i32 = arith.constant 0 : i32
    %c0_i32_0 = arith.constant 0 : i32
    %c0_i32_1 = arith.constant 0 : i32
    return %arg0, %c0_i32, %c0_i32_0 : i32, i32, i32
  }
}

</mosaic_0001>

<llo_original>
// kernel: tpu_custom_call.1
$region0: #{tpu_custom_call.1}
  #allocation0 [shape = 'u32[]', space=smem, size = 0x4, offset = 0x4, fixed_abs, tag = 'smem constant byte address 0x4 - core index']
  #allocation1 [shape = 'u32[144,128]{1,0:T(1,128)}', space=vmem, size = 0x12000, scoped, tag = 'internal scratch']
  %s0 = inlined_call_operand.vmem [shape: bf16[2,8,1280], index: 0, kind: input, shape index: {}]
  %s1 = inlined_call_operand.vmem [shape: bf16[27,8,8], index: 1, kind: input, shape index: {}]
  %s2 = inlined_call_operand.vmem [shape: f32[1,1024], index: 2, kind: input, shape index: {}]
  %s3 = inlined_call_operand.vmem [shape: f32[2,8,1], index: 3, kind: output, shape index: {0}]
  %s4 = inlined_call_operand.vmem [shape: f32[2,8,1], index: 4, kind: output, shape index: {1}]
  %5 = xla_tuple %s3, %s4
  %s6 = sld [smem:[#allocation0]]
  $region53: #{tpu_custom_call.1} parent=0
    _
  %s8 = ssub.s32 1, %s6
  %s9 = scalar_select 0, %s8, %s6
  loop: start=0, step=1, limit=4
  $region2: #{tpu_custom_call.1} parent=0 // loop_pre_header
    _
  $region3: #{tpu_custom_call.1} parent=0 // loop_header
    %s11 = sphi 0, %s15
    %p12 = scmp.ge.s32.totalorder %s11, 4
    %s21 = sphi 0, %s23
    %s24 = sphi 0, %s21
    %s25 = sphi 0, %s24
    %s41 = sphi 0, %s25
    %s45 = sphi 0, %s45
    %s47 = sphi 0, %s45
    %s48 = sphi 0, %s47
    %s62 = sphi 0, %s48
    %s66 = sphi 0, %s66
    %s68 = sphi 0, %s66
    %s69 = sphi 0, %s68
    %s83 = sphi 0, %s69
    %s89 = sphi 0, %s91
    %s92 = sphi 0, %s89
    %s93 = sphi 0, %s92
    %s109 = sphi 0, %s93
    %s115 = sphi 0, %s117
    %s118 = sphi 0, %s115
    %s119 = sphi 0, %s118
    %s135 = sphi 0, %s119
  $region4: #{tpu_custom_call.1} parent=0 // loop_header_branch
    %14 = sbr.rel (%p12) target = $region8
  $region5: #{tpu_custom_call.1} parent=0 // loop_body
    %s16 = ssub.s32 %s11, 1
    %s17 = ssub.s32 %s11, 2
    %s18 = sadd.s32 %s11, 1
    %s19 = ssub.s32 %s11, %s18
    %p20 = scmp.eq.s32.totalorder %s19, 0
    %s22 = sadd.s32 %s21, 1
    %s23 = scalar_select %p20, %s21, %s22
    %p26 = pneg %p20
    %p27 = scmp.eq.s32.totalorder %s11, 1
    %p28 = por %p26, %p27
    %p29 = scmp.ne.s32.totalorder %s21, %s24
    %p30 = scmp.eq.s32.totalorder %s11, 0
    %p31 = por %p29, %p30
    %p32 = scmp.ne.s32.totalorder %s21, %s24
    %p33 = scmp.eq.s32.totalorder %s16, 1
    %p34 = por %p32, %p33
    %p35 = scmp.ne.s32.totalorder %s24, %s25
    %p36 = scmp.eq.s32.totalorder %s16, 0
    %p37 = por %p35, %p36
    %p38 = scmp.ne.s32.totalorder %s24, %s25
    %p39 = scmp.eq.s32.totalorder %s17, 1
    %p40 = por %p38, %p39
    %p42 = scmp.ne.s32.totalorder %s25, %s41
    %p43 = scmp.eq.s32.totalorder %s17, 0
    %p44 = por %p42, %p43
    %s46 = sadd.s32 %s45, 1
    %p49 = scmp.eq.s32.totalorder %s11, 1
    %p50 = scmp.ne.s32.totalorder %s45, %s47
    %p51 = scmp.eq.s32.totalorder %s11, 0
    %p52 = por %p50, %p51
    %p53 = scmp.ne.s32.totalorder %s45, %s47
    %p54 = scmp.eq.s32.totalorder %s16, 1
    %p55 = por %p53, %p54
    %p56 = scmp.ne.s32.totalorder %s47, %s48
    %p57 = scmp.eq.s32.totalorder %s16, 0
    %p58 = por %p56, %p57
    %p59 = scmp.ne.s32.totalorder %s47, %s48
    %p60 = scmp.eq.s32.totalorder %s17, 1
    %p61 = por %p59, %p60
    %p63 = scmp.ne.s32.totalorder %s48, %s62
    %p64 = scmp.eq.s32.totalorder %s17, 0
    %p65 = por %p63, %p64
    %s67 = sadd.s32 %s66, 1
    %p70 = scmp.eq.s32.totalorder %s11, 1
    %p71 = scmp.ne.s32.totalorder %s66, %s68
    %p72 = scmp.eq.s32.totalorder %s11, 0
    %p73 = por %p71, %p72
    %p74 = scmp.ne.s32.totalorder %s66, %s68
    %p75 = scmp.eq.s32.totalorder %s16, 1
    %p76 = por %p74, %p75
    %p77 = scmp.ne.s32.totalorder %s68, %s69
    %p78 = scmp.eq.s32.totalorder %s16, 0
    %p79 = por %p77, %p78
    %p80 = scmp.ne.s32.totalorder %s68, %s69
    %p81 = scmp.eq.s32.totalorder %s17, 1
    %p82 = por %p80, %p81
    %p84 = scmp.ne.s32.totalorder %s69, %s83
    %p85 = scmp.eq.s32.totalorder %s17, 0
    %p86 = por %p84, %p85
    %s87 = ssub.s32 %s11, %s18
    %p88 = scmp.eq.s32.totalorder %s87, 0
    %s90 = sadd.s32 %s89, 1
    %s91 = scalar_select %p88, %s89, %s90
    %p94 = pneg %p88
    %p95 = scmp.eq.s32.totalorder %s11, 1
    %p96 = por %p94, %p95
    %p97 = scmp.ne.s32.totalorder %s89, %s92
    %p98 = scmp.eq.s32.totalorder %s11, 0
    %p99 = por %p97, %p98
    %p100 = scmp.ne.s32.totalorder %s89, %s92
    %p101 = scmp.eq.s32.totalorder %s16, 1
    %p102 = por %p100, %p101
    %p103 = scmp.ne.s32.totalorder %s92, %s93
    %p104 = scmp.eq.s32.totalorder %s16, 0
    %p105 = por %p103, %p104
    %p106 = scmp.ne.s32.totalorder %s92, %s93
    %p107 = scmp.eq.s32.totalorder %s17, 1
    %p108 = por %p106, %p107
    %p110 = scmp.ne.s32.totalorder %s93, %s109
    %p111 = scmp.eq.s32.totalorder %s17, 0
    %p112 = por %p110, %p111
    %s113 = ssub.s32 %s11, %s18
    %p114 = scmp.eq.s32.totalorder %s113, 0
    %s116 = sadd.s32 %s115, 1
    %s117 = scalar_select %p114, %s115, %s116
    %p120 = pneg %p114
    %p121 = scmp.eq.s32.totalorder %s11, 1
    %p122 = por %p120, %p121
    %p123 = scmp.ne.s32.totalorder %s115, %s118
    %p124 = scmp.eq.s32.totalorder %s11, 0
    %p125 = por %p123, %p124
    %p126 = scmp.ne.s32.totalorder %s115, %s118
    %p127 = scmp.eq.s32.totalorder %s16, 1
    %p128 = por %p126, %p127
    %p129 = scmp.ne.s32.totalorder %s118, %s119
    %p130 = scmp.eq.s32.totalorder %s16, 0
    %p131 = por %p129, %p130
    %p132 = scmp.ne.s32.totalorder %s118, %s119
    %p133 = scmp.eq.s32.totalorder %s17, 1
    %p134 = por %p132, %p133
    %p136 = scmp.ne.s32.totalorder %s119, %s135
    %p137 = scmp.eq.s32.totalorder %s17, 0
    %p138 = por %p136, %p137
    %p139 = scmp.le.s32.totalorder 1, %s11
    %p140 = scmp.lt.s32.totalorder %s11, 3
    %p141 = pnand %p139, %p140
    %p142 = pneg %p141
    // Predicated region
    $region9: #{tpu_custom_call.1} parent=5 // pred_check
      _
    $region10: #{tpu_custom_call.1} parent=5 // pred_check_branch
      %144 = sbr.rel (%p141) target = $region12
    $region11: #{tpu_custom_call.1} parent=5 // pred_region
      %s145 = ssub.s32 %s11, 1
      // Predicated region
      $region13: #{tpu_custom_call.1} parent=11 // pred_check
        %p146 = pneg %p58
      $region14: #{tpu_custom_call.1} parent=11 // pred_check_branch
        %148 = sbr.rel (%p146) target = $region16
      $region15: #{tpu_custom_call.1} parent=11 // pred_region
        _
      $region16: #{tpu_custom_call.1} parent=11 // pred_fallthru
        _
      // Predicated region
      $region17: #{tpu_custom_call.1} parent=11 // pred_check
        %p149 = pneg %p79
      $region18: #{tpu_custom_call.1} parent=11 // pred_check_branch
        %151 = sbr.rel (%p149) target = $region20
      $region19: #{tpu_custom_call.1} parent=11 // pred_region
        _
      $region20: #{tpu_custom_call.1} parent=11 // pred_fallthru
        _
    $region12: #{tpu_custom_call.1} parent=5 // pred_fallthru
      _
    %p152 = scmp.lt.s32.totalorder %s11, 2
    // Predicated region
    $region21: #{tpu_custom_call.1} parent=5 // pred_check
      %p153 = pneg %p152
    $region22: #{tpu_custom_call.1} parent=5 // pred_check_branch
      %155 = sbr.rel (%p153) target = $region24
    $region23: #{tpu_custom_call.1} parent=5 // pred_region
      // Predicated region
      $region25: #{tpu_custom_call.1} parent=23 // pred_check
        %p156 = pneg %p31
      $region26: #{tpu_custom_call.1} parent=23 // pred_check_branch
        %158 = sbr.rel (%p156) target = $region28
      $region27: #{tpu_custom_call.1} parent=23 // pred_region
        %p159 = scmp.lt.s32.totalorder %s11, 1
        %s160 = scalar_select %p159, %s11, 1
        %s161 = smul.addr %s160, 10
        %s162 = smul.addr %s161, 4
        %s163 = scalar_lea.vmem %s0, %s162
      $region28: #{tpu_custom_call.1} parent=23 // pred_fallthru
        _
    $region24: #{tpu_custom_call.1} parent=5 // pred_fallthru
      _
    %p164 = scmp.le.s32.totalorder 1, %s11
    %p165 = scmp.lt.s32.totalorder %s11, 3
    %p166 = pnand %p164, %p165
    %p167 = pneg %p166
    // Predicated region
    $region29: #{tpu_custom_call.1} parent=5 // pred_check
      _
    $region30: #{tpu_custom_call.1} parent=5 // pred_check_branch
      %169 = sbr.rel (%p166) target = $region32
    $region31: #{tpu_custom_call.1} parent=5 // pred_region
      %s170 = ssub.s32 %s11, 1
      %p171 = scmp.lt.s32.totalorder %s16, 1
      %s172 = scalar_select %p171, %s16, 1
      %s173 = smul.addr %s172, 10
      %s174 = smul.addr %s173, 4
      %s175 = scalar_lea.vmem %s0, %s174
      %p176 = pneg %p37
      %p177 = pneg %p34
      %p178 = pneg %p58
      %p179 = pneg %p55
      %p180 = pneg %p79
      %p181 = pneg %p76
      %p182 = pneg %p105
      %p183 = pneg %p102
      %p184 = scmp.lt.s32.totalorder %s16, 1
      %s185 = scalar_select %p184, %s16, 1
      %s186 = smul.addr %s185, 8
      %s187 = scalar_lea.vmem %s3, %s186
      %p188 = pneg %p131
      %p189 = pneg %p128
      %p190 = scmp.lt.s32.totalorder %s16, 1
      %s191 = scalar_select %p190, %s16, 1
      %s192 = smul.addr %s191, 8
      %s193 = scalar_lea.vmem %s4, %s192
      %p194 = scmp.lt.s32.totalorder %s16, 1
      %s195 = scalar_select %p194, %s16, 1
      %s196 = smul.addr %s195, 10
      %s197 = smul.addr %s196, 4
      %s198 = scalar_lea.vmem %s0, %s197
      %p199 = scmp.lt.s32.totalorder %s16, 1
      %s200 = scalar_select %p199, %s16, 1
      %s201 = smul.addr %s200, 8
      %s202 = scalar_lea.vmem %s3, %s201
      %p203 = scmp.lt.s32.totalorder %s16, 1
      %s204 = scalar_select %p203, %s16, 1
      %s205 = smul.addr %s204, 8
      %s206 = scalar_lea.vmem %s4, %s205
      %v208 = vld [vmem:[%s198] sm:$0xff]
      %v209 = vld [vmem:[%s198 + $0x8] sm:$0xff]
      %v210 = vld [vmem:[%s198 + $0x10] sm:$0xff]
      %v211 = vld [vmem:[%s198 + $0x18] sm:$0xff]
      %v212 = vld [vmem:[%s1] sm:$0xf]
      %v213 = vld [vmem:[%s198 + $0x20] sm:$0xf]
      %s214 = scalar_lea.vmem %s1, 4
      %v215 = vld [vmem:[%s214] sm:$0xf]
      %v221 = vunpack.c.l.b16 %v208
      %v222 = vunpack.c.h.b16 %v208
      %v223 = vunpack.c.l.b16 %v209
      %v224 = vunpack.c.h.b16 %v209
      %v225 = vunpack.c.l.b16 %v210
      %v226 = vunpack.c.h.b16 %v210
      %v227 = vunpack.c.l.b16 %v211
      %v228 = vunpack.c.h.b16 %v211
      %v229 = vunpack.c.l.b16 %v213
      %v230 = vpack.c.b16 %v221, %v221
      %v231 = vpack.c.b16 %v222, %v222
      %v232 = vpack.c.b16 %v223, %v223
      %v233 = vpack.c.b16 %v224, %v224
      %v234 = vpack.c.b16 %v225, %v225
      %v235 = vpack.c.b16 %v226, %v226
      %v236 = vpack.c.b16 %v227, %v227
      %v237 = vpack.c.b16 %v228, %v228
      %v238 = vpack.c.b16 %v229, %v229
      %239 = vrot.lane.b32.xlu0 %v230, 127
      %v240 = vpop.permute.xlu0 %239
      %241 = vrot.lane.b32.xlu0 %v231, 127
      %v242 = vpop.permute.xlu0 %241
      %243 = vrot.lane.b32.xlu0 %v232, 127
      %v244 = vpop.permute.xlu0 %243
      %245 = vrot.lane.b32.xlu0 %v233, 127
      %v246 = vpop.permute.xlu0 %245
      %247 = vrot.lane.b32.xlu0 %v234, 127
      %v248 = vpop.permute.xlu0 %247
      %249 = vrot.lane.b32.xlu0 %v235, 127
      %v250 = vpop.permute.xlu0 %249
      %251 = vrot.lane.b32.xlu0 %v236, 127
      %v252 = vpop.permute.xlu0 %251
      %253 = vrot.lane.b32.xlu0 %v237, 127
      %v254 = vpop.permute.xlu0 %253
      %255 = vrot.lane.b32.xlu0 %v238, 127
      %v256 = vpop.permute.xlu0 %255
      %vm257 = vcmask 1039360
      %v258 = vsel %vm257, %v240, %v242
      %v259 = vsel %vm257, %v242, %v244
      %v260 = vsel %vm257, %v244, %v246
      %v261 = vsel %vm257, %v246, %v248
      %v262 = vsel %vm257, %v248, %v250
      %v263 = vsel %vm257, %v250, %v252
      %v264 = vsel %vm257, %v252, %v254
      %v265 = vsel %vm257, %v254, %v256
      %vm266 = vcmask 64512
      %v268 = vsel %vm266, %v215, 0
      %vm270 = vcmask 1043456
      %v272 = vsel %vm270, %v258, 0
      %v275 = vsel %vm270, %v259, 0
      %v278 = vsel %vm270, %v260, 0
      %v281 = vsel %vm270, %v261, 0
      %v284 = vsel %vm270, %v262, 0
      %v287 = vsel %vm270, %v263, 0
      %v290 = vsel %vm270, %v264, 0
      %v293 = vsel %vm270, %v265, 0
      %295 = vmatprep.subr.bf16.mxu0 %v275
      %296 = vmatpush1.bf16.msra.mxu0 %v272
      %297 = vmatprep.subr.bf16.mxu0 0
      %298 = vmatpush1.bf16.msra.mxu0 0
      %299 = vmatprep.subr.bf16.mxu0 0
      %300 = vmatpush1.bf16.msra.mxu0 0
      %301 = vmatprep.subr.bf16.mxu0 0
      %302 = vmatpush1.bf16.msra.mxu0 0
      %303 = vmatprep.subr.bf16.mxu0 0
      %304 = vmatpush1.bf16.msra.mxu0 0
      %305 = vmatprep.subr.bf16.mxu0 0
      %306 = vmatpush1.bf16.msra.mxu0 0
      %307 = vmatprep.subr.bf16.mxu0 0
      %308 = vmatpush1.bf16.msra.mxu0 0
      %309 = vmatprep.subr.bf16.mxu0 0
      %310 = vmatpush1.bf16.msra.mxu0 0
      %311 = vmatprep.subr.bf16.mxu0 0
      %312 = vmatpush1.bf16.msra.mxu0 0
      %313 = vmatprep.subr.bf16.mxu0 0
      %314 = vmatpush1.bf16.msra.mxu0 0
      %315 = vmatprep.subr.bf16.mxu0 0
      %316 = vmatpush1.bf16.msra.mxu0 0
      %317 = vmatprep.subr.bf16.mxu0 0
      %318 = vmatpush1.bf16.msra.mxu0 0
      %319 = vmatprep.subr.bf16.mxu0 0
      %320 = vmatpush1.bf16.msra.mxu0 0
      %321 = vmatprep.subr.bf16.mxu0 0
      %322 = vmatpush1.bf16.msra.mxu0 0
      %323 = vmatprep.subr.bf16.mxu0 0
      %324 = vmatpush1.bf16.msra.mxu0 0
      %325 = vmatprep.subr.bf16.mxu0 0
      %326 = vmatpush1.bf16.msra.mxu0 0
      %327 = vmatprep.mubr.bf16.mxu0 0
      %328 = vmatmul.mubr.bf16.gmra.mrb[0].mxu0 %v268
      %v329 = vpop.f32.mrb[0].mxu0
      %v330 = vadd.f32 0.0, %v329
      %v331 = vpop.f32.mrb[0].mxu0
      %v332 = vadd.f32 0.0, %v331
      %v333 = vpop.f32.mrb[0].mxu0
      %v334 = vpop.f32.mrb[0].mxu0
      %335 = vdwg.mxu0
      %336 = vmatprep.subr.bf16.mxu0 %v281
      %337 = vmatpush1.bf16.msra.mxu0 %v278
      %338 = vmatprep.subr.bf16.mxu0 0
      %339 = vmatpush1.bf16.msra.mxu0 0
      %340 = vmatprep.subr.bf16.mxu0 0
      %341 = vmatpush1.bf16.msra.mxu0 0
      %342 = vmatprep.subr.bf16.mxu0 0
      %343 = vmatpush1.bf16.msra.mxu0 0
      %344 = vmatprep.subr.bf16.mxu0 0
      %345 = vmatpush1.bf16.msra.mxu0 0
      %346 = vmatprep.subr.bf16.mxu0 0
      %347 = vmatpush1.bf16.msra.mxu0 0
      %348 = vmatprep.subr.bf16.mxu0 0
      %349 = vmatpush1.bf16.msra.mxu0 0
      %350 = vmatprep.subr.bf16.mxu0 0
      %351 = vmatpush1.bf16.msra.mxu0 0
      %352 = vmatprep.subr.bf16.mxu0 0
      %353 = vmatpush1.bf16.msra.mxu0 0
      %354 = vmatprep.subr.bf16.mxu0 0
      %355 = vmatpush1.bf16.msra.mxu0 0
      %356 = vmatprep.subr.bf16.mxu0 0
      %357 = vmatpush1.bf16.msra.mxu0 0
      %358 = vmatprep.subr.bf16.mxu0 0
      %359 = vmatpush1.bf16.msra.mxu0 0
      %360 = vmatprep.subr.bf16.mxu0 0
      %361 = vmatpush1.bf16.msra.mxu0 0
      %362 = vmatprep.subr.bf16.mxu0 0
      %363 = vmatpush1.bf16.msra.mxu0 0
      %364 = vmatprep.subr.bf16.mxu0 0
      %365 = vmatpush1.bf16.msra.mxu0 0
      %366 = vmatprep.subr.bf16.mxu0 0
      %367 = vmatpush1.bf16.msra.mxu0 0
      %368 = vmatprep.mubr.bf16.mxu0 0
      %369 = vmatmul.mubr.bf16.gmra.mrb[0].mxu0 %v268
      %v370 = vpop.f32.mrb[0].mxu0
      %v371 = vadd.f32 0.0, %v370
      %v372 = vpop.f32.mrb[0].mxu0
      %v373 = vadd.f32 0.0, %v372
      %v374 = vpop.f32.mrb[0].mxu0
      %v375 = vpop.f32.mrb[0].mxu0
      %376 = vdwg.mxu0
      %377 = vmatprep.subr.bf16.mxu0 %v287
      %378 = vmatpush1.bf16.msra.mxu0 %v284
      %379 = vmatprep.subr.bf16.mxu0 0
      %380 = vmatpush1.bf16.msra.mxu0 0
      %381 = vmatprep.subr.bf16.mxu0 0
      %382 = vmatpush1.bf16.msra.mxu0 0
      %383 = vmatprep.subr.bf16.mxu0 0
      %384 = vmatpush1.bf16.msra.mxu0 0
      %385 = vmatprep.subr.bf16.mxu0 0
      %386 = vmatpush1.bf16.msra.mxu0 0
      %387 = vmatprep.subr.bf16.mxu0 0
      %388 = vmatpush1.bf16.msra.mxu0 0
      %389 = vmatprep.subr.bf16.mxu0 0
      %390 = vmatpush1.bf16.msra.mxu0 0
      %391 = vmatprep.subr.bf16.mxu0 0
      %392 = vmatpush1.bf16.msra.mxu0 0
      %393 = vmatprep.subr.bf16.mxu0 0
      %394 = vmatpush1.bf16.msra.mxu0 0
      %395 = vmatprep.subr.bf16.mxu0 0
      %396 = vmatpush1.bf16.msra.mxu0 0
      %397 = vmatprep.subr.bf16.mxu0 0
      %398 = vmatpush1.bf16.msra.mxu0 0
      %399 = vmatprep.subr.bf16.mxu0 0
      %400 = vmatpush1.bf16.msra.mxu0 0
      %401 = vmatprep.subr.bf16.mxu0 0
      %402 = vmatpush1.bf16.msra.mxu0 0
      %403 = vmatprep.subr.bf16.mxu0 0
      %404 = vmatpush1.bf16.msra.mxu0 0
      %405 = vmatprep.subr.bf16.mxu0 0
      %406 = vmatpush1.bf16.msra.mxu0 0
      %407 = vmatprep.subr.bf16.mxu0 0
      %408 = vmatpush1.bf16.msra.mxu0 0
      %409 = vmatprep.mubr.bf16.mxu0 0
      %410 = vmatmul.mubr.bf16.gmra.mrb[0].mxu0 %v268
      %v411 = vpop.f32.mrb[0].mxu0
      %v412 = vadd.f32 0.0, %v411
      %v413 = vpop.f32.mrb[0].mxu0
      %v414 = vadd.f32 0.0, %v413
      %v415 = vpop.f32.mrb[0].mxu0
      %v416 = vpop.f32.mrb[0].mxu0
      %417 = vdwg.mxu0
      %418 = vmatprep.subr.bf16.mxu0 %v293
      %419 = vmatpush1.bf16.msra.mxu0 %v290
      %420 = vmatprep.subr.bf16.mxu0 0
      %421 = vmatpush1.bf16.msra.mxu0 0
      %422 = vmatprep.subr.bf16.mxu0 0
      %423 = vmatpush1.bf16.msra.mxu0 0
      %424 = vmatprep.subr.bf16.mxu0 0
      %425 = vmatpush1.bf16.msra.mxu0 0
      %426 = vmatprep.subr.bf16.mxu0 0
      %427 = vmatpush1.bf16.msra.mxu0 0
      %428 = vmatprep.subr.bf16.mxu0 0
      %429 = vmatpush1.bf16.msra.mxu0 0
      %430 = vmatprep.subr.bf16.mxu0 0
      %431 = vmatpush1.bf16.msra.mxu0 0
      %432 = vmatprep.subr.bf16.mxu0 0
      %433 = vmatpush1.bf16.msra.mxu0 0
      %434 = vmatprep.subr.bf16.mxu0 0
      %435 = vmatpush1.bf16.msra.mxu0 0
      %436 = vmatprep.subr.bf16.mxu0 0
      %437 = vmatpush1.bf16.msra.mxu0 0
      %438 = vmatprep.subr.bf16.mxu0 0
      %439 = vmatpush1.bf16.msra.mxu0 0
      %440 = vmatprep.subr.bf16.mxu0 0
      %441 = vmatpush1.bf16.msra.mxu0 0
      %442 = vmatprep.subr.bf16.mxu0 0
      %443 = vmatpush1.bf16.msra.mxu0 0
      %444 = vmatprep.subr.bf16.mxu0 0
      %445 = vmatpush1.bf16.msra.mxu0 0
      %446 = vmatprep.subr.bf16.mxu0 0
      %447 = vmatpush1.bf16.msra.mxu0 0
      %448 = vmatprep.subr.bf16.mxu0 0
      %449 = vmatpush1.bf16.msra.mxu0 0
      %450 = vmatprep.mubr.bf16.mxu0 0
      %451 = vmatmul.mubr.bf16.gmra.mrb[0].mxu0 %v268
      %v452 = vpop.f32.mrb[0].mxu0
      %v453 = vadd.f32 0.0, %v452
      %v454 = vpop.f32.mrb[0].mxu0
      %v455 = vadd.f32 0.0, %v454
      %v456 = vpop.f32.mrb[0].mxu0
      %v457 = vpop.f32.mrb[0].mxu0
      %458 = vdwg.mxu0
      %v460 = vsel %vm266, %v212, 0
      %v463 = vsel %vm270, %v230, 0
      %v466 = vsel %vm270, %v231, 0
      %v469 = vsel %vm270, %v232, 0
      %v472 = vsel %vm270, %v233, 0
      %v475 = vsel %vm270, %v234, 0
      %v478 = vsel %vm270, %v235, 0
      %v481 = vsel %vm270, %v236, 0
      %v484 = vsel %vm270, %v237, 0
      %486 = vmatprep.subr.bf16.mxu0 %v466
      %487 = vmatpush1.bf16.msra.mxu0 %v463
      %488 = vmatprep.subr.bf16.mxu0 0
      %489 = vmatpush1.bf16.msra.mxu0 0
      %490 = vmatprep.subr.bf16.mxu0 0
      %491 = vmatpush1.bf16.msra.mxu0 0
      %492 = vmatprep.subr.bf16.mxu0 0
      %493 = vmatpush1.bf16.msra.mxu0 0
      %494 = vmatprep.subr.bf16.mxu0 0
      %495 = vmatpush1.bf16.msra.mxu0 0
      %496 = vmatprep.subr.bf16.mxu0 0
      %497 = vmatpush1.bf16.msra.mxu0 0
      %498 = vmatprep.subr.bf16.mxu0 0
      %499 = vmatpush1.bf16.msra.mxu0 0
      %500 = vmatprep.subr.bf16.mxu0 0
      %501 = vmatpush1.bf16.msra.mxu0 0
      %502 = vmatprep.subr.bf16.mxu0 0
      %503 = vmatpush1.bf16.msra.mxu0 0
      %504 = vmatprep.subr.bf16.mxu0 0
      %505 = vmatpush1.bf16.msra.mxu0 0
      %506 = vmatprep.subr.bf16.mxu0 0
      %507 = vmatpush1.bf16.msra.mxu0 0
      %508 = vmatprep.subr.bf16.mxu0 0
      %509 = vmatpush1.bf16.msra.mxu0 0
      %510 = vmatprep.subr.bf16.mxu0 0
      %511 = vmatpush1.bf16.msra.mxu0 0
      %512 = vmatprep.subr.bf16.mxu0 0
      %513 = vmatpush1.bf16.msra.mxu0 0
      %514 = vmatprep.subr.bf16.mxu0 0
      %515 = vmatpush1.bf16.msra.mxu0 0
      %516 = vmatprep.subr.bf16.mxu0 0
      %517 = vmatpush1.bf16.msra.mxu0 0
      %518 = vmatprep.mubr.bf16.mxu0 0
      %519 = vmatmul.mubr.bf16.gmra.mrb[0].mxu0 %v460
      %v520 = vpop.f32.mrb[0].mxu0
      %v521 = vadd.f32 %v330, %v520
      %v522 = vpop.f32.mrb[0].mxu0
      %v523 = vadd.f32 %v332, %v522
      %v524 = vpop.f32.mrb[0].mxu0
      %v525 = vpop.f32.mrb[0].mxu0
      %526 = vdwg.mxu0
      %527 = vmatprep.subr.bf16.mxu0 %v472
      %528 = vmatpush1.bf16.msra.mxu0 %v469
      %529 = vmatprep.subr.bf16.mxu0 0
      %530 = vmatpush1.bf16.msra.mxu0 0
      %531 = vmatprep.subr.bf16.mxu0 0
      %532 = vmatpush1.bf16.msra.mxu0 0
      %533 = vmatprep.subr.bf16.mxu0 0
      %534 = vmatpush1.bf16.msra.mxu0 0
      %535 = vmatprep.subr.bf16.mxu0 0
      %536 = vmatpush1.bf16.msra.mxu0 0
      %537 = vmatprep.subr.bf16.mxu0 0
      %538 = vmatpush1.bf16.msra.mxu0 0
      %539 = vmatprep.subr.bf16.mxu0 0
      %540 = vmatpush1.bf16.msra.mxu0 0
      %541 = vmatprep.subr.bf16.mxu0 0
      %542 = vmatpush1.bf16.msra.mxu0 0
      %543 = vmatprep.subr.bf16.mxu0 0
      %544 = vmatpush1.bf16.msra.mxu0 0
      %545 = vmatprep.subr.bf16.mxu0 0
      %546 = vmatpush1.bf16.msra.mxu0 0
      %547 = vmatprep.subr.bf16.mxu0 0
      %548 = vmatpush1.bf16.msra.mxu0 0
      %549 = vmatprep.subr.bf16.mxu0 0
      %550 = vmatpush1.bf16.msra.mxu0 0
      %551 = vmatprep.subr.bf16.mxu0 0
      %552 = vmatpush1.bf16.msra.mxu0 0
      %553 = vmatprep.subr.bf16.mxu0 0
      %554 = vmatpush1.bf16.msra.mxu0 0
      %555 = vmatprep.subr.bf16.mxu0 0
      %556 = vmatpush1.bf16.msra.mxu0 0
      %557 = vmatprep.subr.bf16.mxu0 0
      %558 = vmatpush1.bf16.msra.mxu0 0
      %559 = vmatprep.mubr.bf16.mxu0 0
      %560 = vmatmul.mubr.bf16.gmra.mrb[0].mxu0 %v460
      %v561 = vpop.f32.mrb[0].mxu0
      %v562 = vadd.f32 %v371, %v561
      %v563 = vpop.f32.mrb[0].mxu0
      %v564 = vadd.f32 %v373, %v563
      %v565 = vpop.f32.mrb[0].mxu0
      %v566 = vpop.f32.mrb[0].mxu0
      %567 = vdwg.mxu0
      %568 = vmatprep.subr.bf16.mxu0 %v478
      %569 = vmatpush1.bf16.msra.mxu0 %v475
      %570 = vmatprep.subr.bf16.mxu0 0
      %571 = vmatpush1.bf16.msra.mxu0 0
      %572 = vmatprep.subr.bf16.mxu0 0
      %573 = vmatpush1.bf16.msra.mxu0 0
      %574 = vmatprep.subr.bf16.mxu0 0
      %575 = vmatpush1.bf16.msra.mxu0 0
      %576 = vmatprep.subr.bf16.mxu0 0
      %577 = vmatpush1.bf16.msra.mxu0 0
      %578 = vmatprep.subr.bf16.mxu0 0
      %579 = vmatpush1.bf16.msra.mxu0 0
      %580 = vmatprep.subr.bf16.mxu0 0
      %581 = vmatpush1.bf16.msra.mxu0 0
      %582 = vmatprep.subr.bf16.mxu0 0
      %583 = vmatpush1.bf16.msra.mxu0 0
      %584 = vmatprep.subr.bf16.mxu0 0
      %585 = vmatpush1.bf16.msra.mxu0 0
      %586 = vmatprep.subr.bf16.mxu0 0
      %587 = vmatpush1.bf16.msra.mxu0 0
      %588 = vmatprep.subr.bf16.mxu0 0
      %589 = vmatpush1.bf16.msra.mxu0 0
      %590 = vmatprep.subr.bf16.mxu0 0
      %591 = vmatpush1.bf16.msra.mxu0 0
      %592 = vmatprep.subr.bf16.mxu0 0
      %593 = vmatpush1.bf16.msra.mxu0 0
      %594 = vmatprep.subr.bf16.mxu0 0
      %595 = vmatpush1.bf16.msra.mxu0 0
      %596 = vmatprep.subr.bf16.mxu0 0
      %597 = vmatpush1.bf16.msra.mxu0 0
      %598 = vmatprep.subr.bf16.mxu0 0
      %599 = vmatpush1.bf16.msra.mxu0 0
      %600 = vmatprep.mubr.bf16.mxu0 0
      %601 = vmatmul.mubr.bf16.gmra.mrb[0].mxu0 %v460
      %v602 = vpop.f32.mrb[0].mxu0
      %v603 = vadd.f32 %v412, %v602
      %v604 = vpop.f32.mrb[0].mxu0
      %v605 = vadd.f32 %v414, %v604
      %v606 = vpop.f32.mrb[0].mxu0
      %v607 = vpop.f32.mrb[0].mxu0
      %608 = vdwg.mxu0
      %609 = vmatprep.subr.bf16.mxu0 %v484
      %610 = vmatpush1.bf16.msra.mxu0 %v481
      %611 = vmatprep.subr.bf16.mxu0 0
      %612 = vmatpush1.bf16.msra.mxu0 0
      %613 = vmatprep.subr.bf16.mxu0 0
      %614 = vmatpush1.bf16.msra.mxu0 0
      %615 = vmatprep.subr.bf16.mxu0 0
      %616 = vmatpush1.bf16.msra.mxu0 0
      %617 = vmatprep.subr.bf16.mxu0 0
      %618 = vmatpush1.bf16.msra.mxu0 0
      %619 = vmatprep.subr.bf16.mxu0 0
      %620 = vmatpush1.bf16.msra.mxu0 0
      %621 = vmatprep.subr.bf16.mxu0 0
      %622 = vmatpush1.bf16.msra.mxu0 0
      %623 = vmatprep.subr.bf16.mxu0 0
      %624 = vmatpush1.bf16.msra.mxu0 0
      %625 = vmatprep.subr.bf16.mxu0 0
      %626 = vmatpush1.bf16.msra.mxu0 0
      %627 = vmatprep.subr.bf16.mxu0 0
      %628 = vmatpush1.bf16.msra.mxu0 0
      %629 = vmatprep.subr.bf16.mxu0 0
      %630 = vmatpush1.bf16.msra.mxu0 0
      %631 = vmatprep.subr.bf16.mxu0 0
      %632 = vmatpush1.bf16.msra.mxu0 0
      %633 = vmatprep.subr.bf16.mxu0 0
      %634 = vmatpush1.bf16.msra.mxu0 0
      %635 = vmatprep.subr.bf16.mxu0 0
      %636 = vmatpush1.bf16.msra.mxu0 0
      %637 = vmatprep.subr.bf16.mxu0 0
      %638 = vmatpush1.bf16.msra.mxu0 0
      %639 = vmatprep.subr.bf16.mxu0 0
      %640 = vmatpush1.bf16.msra.mxu0 0
      %641 = vmatprep.mubr.bf16.mxu0 0
      %642 = vmatmul.mubr.bf16.gmra.mrb[0].mxu0 %v460
      %v643 = vpop.f32.mrb[0].mxu0
      %v644 = vadd.f32 %v453, %v643
      %v645 = vpop.f32.mrb[0].mxu0
      %v646 = vadd.f32 %v455, %v645
      %v647 = vpop.f32.mrb[0].mxu0
      %v648 = vpop.f32.mrb[0].mxu0
      %649 = vdwg.mxu0
      %s650 = scalar_lea.vmem %s1, 8
      %v651 = vld [vmem:[%s650] sm:$0xf]
      %652 = vrot.lane.b32.xlu0 %v230, 126
      %v653 = vpop.permute.xlu0 %652
      %654 = vrot.lane.b32.xlu0 %v231, 126
      %v655 = vpop.permute.xlu0 %654
      %656 = vrot.lane.b32.xlu0 %v232, 126
      %v657 = vpop.permute.xlu0 %656
      %658 = vrot.lane.b32.xlu0 %v233, 126
      %v659 = vpop.permute.xlu0 %658
      %660 = vrot.lane.b32.xlu0 %v234, 126
      %v661 = vpop.permute.xlu0 %660
      %662 = vrot.lane.b32.xlu0 %v235, 126
      %v663 = vpop.permute.xlu0 %662
      %664 = vrot.lane.b32.xlu0 %v236, 126
      %v665 = vpop.permute.xlu0 %664
      %666 = vrot.lane.b32.xlu0 %v237, 126
      %v667 = vpop.permute.xlu0 %666
      %668 = vrot.lane.b32.xlu0 %v238, 126
      %v669 = vpop.permute.xlu0 %668
      %vm670 = vcmask 1031168
      %v671 = vsel %vm670, %v653, %v655
      %v672 = vsel %vm670, %v655, %v657
      %v673 = vsel %vm670, %v657, %v659
      %v674 = vsel %vm670, %v659, %v661
      %v675 = vsel %vm670, %v661, %v663
      %v676 = vsel %vm670, %v663, %v665
      %v677 = vsel %vm670, %v665, %v667
      %v678 = vsel %vm670, %v667, %v669
      %v680 = vsel %vm266, %v651, 0
      %v683 = vsel %vm270, %v671, 0
      %v686 = vsel %vm270, %v672, 0
      %v689 = vsel %vm270, %v673, 0
      %v692 = vsel %vm270, %v674, 0
      %v695 = vsel %vm270, %v675, 0
      %v698 = vsel %vm270, %v676, 0
      %v701 = vsel %vm270, %v677, 0
      %v704 = vsel %vm270, %v678, 0
      %706 = vmatprep.subr.bf16.mxu0 %v686
      %707 = vmatpush1.bf16.msra.mxu0 %v683
      %708 = vmatprep.subr.bf16.mxu0 0
      %709 = vmatpush1.bf16.msra.mxu0 0
      %710 = vmatprep.subr.bf16.mxu0 0
      %711 = vmatpush1.bf16.msra.mxu0 0
      %712 = vmatprep.subr.bf16.mxu0 0
      %713 = vmatpush1.bf16.msra.mxu0 0
      %714 = vmatprep.subr.bf16.mxu0 0
      %715 = vmatpush1.bf16.msra.mxu0 0
      %716 = vmatprep.subr.bf16.mxu0 0
      %717 = vmatpush1.bf16.msra.mxu0 0
      %718 = vmatprep.subr.bf16.mxu0 0
      %719 = vmatpush1.bf16.msra.mxu0 0
      %720 = vmatprep.subr.bf16.mxu0 0
      %721 = vmatpush1.bf16.msra.mxu0 0
      %722 = vmatprep.subr.bf16.mxu0 0
      %723 = vmatpush1.bf16.msra.mxu0 0
      %724 = vmatprep.subr.bf16.mxu0 0
      %725 = vmatpush1.bf16.msra.mxu0 0
      %726 = vmatprep.subr.bf16.mxu0 0
      %727 = vmatpush1.bf16.msra.mxu0 0
      %728 = vmatprep.subr.bf16.mxu0 0
      %729 = vmatpush1.bf16.msra.mxu0 0
      %730 = vmatprep.subr.bf16.mxu0 0
      %731 = vmatpush1.bf16.msra.mxu0 0
      %732 = vmatprep.subr.bf16.mxu0 0
      %733 = vmatpush1.bf16.msra.mxu0 0
      %734 = vmatprep.subr.bf16.mxu0 0
      %735 = vmatpush1.bf16.msra.mxu0 0
      %736 = vmatprep.subr.bf16.mxu0 0
      %737 = vmatpush1.bf16.msra.mxu0 0
      %738 = vmatprep.mubr.bf16.mxu0 0
      %739 = vmatmul.mubr.bf16.gmra.mrb[0].mxu0 %v680
      %v740 = vpop.f32.mrb[0].mxu0
      %v741 = vadd.f32 0.0, %v740
      %v742 = vpop.f32.mrb[0].mxu0
      %v743 = vadd.f32 0.0, %v742
      %v744 = vpop.f32.mrb[0].mxu0
      %v745 = vpop.f32.mrb[0].mxu0
      %746 = vdwg.mxu0
      %747 = vmatprep.subr.bf16.mxu0 %v692
      %748 = vmatpush1.bf16.msra.mxu0 %v689
      %749 = vmatprep.subr.bf16.mxu0 0
      %750 = vmatpush1.bf16.msra.mxu0 0
      %751 = vmatprep.subr.bf16.mxu0 0
      %752 = vmatpush1.bf16.msra.mxu0 0
      %753 = vmatprep.subr.bf16.mxu0 0
      %754 = vmatpush1.bf16.msra.mxu0 0
      %755 = vmatprep.subr.bf16.mxu0 0
      %756 = vmatpush1.bf16.msra.mxu0 0
      %757 = vmatprep.subr.bf16.mxu0 0
      %758 = vmatpush1.bf16.msra.mxu0 0
      %759 = vmatprep.subr.bf16.mxu0 0
      %760 = vmatpush1.bf16.msra.mxu0 0
      %761 = vmatprep.subr.bf16.mxu0 0
      %762 = vmatpush1.bf16.msra.mxu0 0
      %763 = vmatprep.subr.bf16.mxu0 0
      %764 = vmatpush1.bf16.msra.mxu0 0
      %765 = vmatprep.subr.bf16.mxu0 0
      %766 = vmatpush1.bf16.msra.mxu0 0
      %767 = vmatprep.subr.bf16.mxu0 0
      %768 = vmatpush1.bf16.msra.mxu0 0
      %769 = vmatprep.subr.bf16.mxu0 0
      %770 = vmatpush1.bf16.msra.mxu0 0
      %771 = vmatprep.subr.bf16.mxu0 0
      %772 = vmatpush1.bf16.msra.mxu0 0
      %773 = vmatprep.subr.bf16.mxu0 0
      %774 = vmatpush1.bf16.msra.mxu0 0
      %775 = vmatprep.subr.bf16.mxu0 0
      %776 = vmatpush1.bf16.msra.mxu0 0
      %777 = vmatprep.subr.bf16.mxu0 0
      %778 = vmatpush1.bf16.msra.mxu0 0
      %779 = vmatprep.mubr.bf16.mxu0 0
      %780 = vmatmul.mubr.bf16.gmra.mrb[0].mxu0 %v680
      %v781 = vpop.f32.mrb[0].mxu0
      %v782 = vadd.f32 0.0, %v781
      %v783 = vpop.f32.mrb[0].mxu0
      %v784 = vadd.f32 0.0, %v783
      %v785 = vpop.f32.mrb[0].mxu0
      %v786 = vpop.f32.mrb[0].mxu0
      %787 = vdwg.mxu0
      %788 = vmatprep.subr.bf16.mxu0 %v698
      %789 = vmatpush1.bf16.msra.mxu0 %v695
      %790 = vmatprep.subr.bf16.mxu0 0
      %791 = vmatpush1.bf16.msra.mxu0 0
      %792 = vmatprep.subr.bf16.mxu0 0
      %793 = vmatpush1.bf16.msra.mxu0 0
      %794 = vmatprep.subr.bf16.mxu0 0
      %795 = vmatpush1.bf16.msra.mxu0 0
      %796 = vmatprep.subr.bf16.mxu0 0
      %797 = vmatpush1.bf16.msra.mxu0 0
      %798 = vmatprep.subr.bf16.mxu0 0
      %799 = vmatpush1.bf16.msra.mxu0 0
      %800 = vmatprep.subr.bf16.mxu0 0
      %801 = vmatpush1.bf16.msra.mxu0 0
      %802 = vmatprep.subr.bf16.mxu0 0
      %803 = vmatpush1.bf16.msra.mxu0 0
      %804 = vmatprep.subr.bf16.mxu0 0
      %805 = vmatpush1.bf16.msra.mxu0 0
      %806 = vmatprep.subr.bf16.mxu0 0
      %807 = vmatpush1.bf16.msra.mxu0 0
      %808 = vmatprep.subr.bf16.mxu0 0
      %809 = vmatpush1.bf16.msra.mxu0 0
      %810 = vmatprep.subr.bf16.mxu0 0
      %811 = vmatpush1.bf16.msra.mxu0 0
      %812 = vmatprep.subr.bf16.mxu0 0
      %813 = vmatpush1.bf16.msra.mxu0 0
      %814 = vmatprep.subr.bf16.mxu0 0
      %815 = vmatpush1.bf16.msra.mxu0 0
      %816 = vmatprep.subr.bf16.mxu0 0
      %817 = vmatpush1.bf16.msra.mxu0 0
      %818 = vmatprep.subr.bf16.mxu0 0
      %819 = vmatpush1.bf16.msra.mxu0 0
      %820 = vmatprep.mubr.bf16.mxu0 0
      %821 = vmatmul.mubr.bf16.gmra.mrb[0].mxu0 %v680
      %v822 = vpop.f32.mrb[0].mxu0
      %v823 = vadd.f32 0.0, %v822
      %v824 = vpop.f32.mrb[0].mxu0
      %v825 = vadd.f32 0.0, %v824
      %v826 = vpop.f32.mrb[0].mxu0
      %v827 = vpop.f32.mrb[0].mxu0
      %828 = vdwg.mxu0
      %829 = vmatprep.subr.bf16.mxu0 %v704
      %830 = vmatpush1.bf16.msra.mxu0 %v701
      %831 = vmatprep.subr.bf16.mxu0 0
      %832 = vmatpush1.bf16.msra.mxu0 0
      %833 = vmatprep.subr.bf16.mxu0 0
      %834 = vmatpush1.bf16.msra.mxu0 0
      %835 = vmatprep.subr.bf16.mxu0 0
      %836 = vmatpush1.bf16.msra.mxu0 0
      %837 = vmatprep.subr.bf16.mxu0 0
      %838 = vmatpush1.bf16.msra.mxu0 0
      %839 = vmatprep.subr.bf16.mxu0 0
      %840 = vmatpush1.bf16.msra.mxu0 0
      %841 = vmatprep.subr.bf16.mxu0 0
      %842 = vmatpush1.bf16.msra.mxu0 0
      %843 = vmatprep.subr.bf16.mxu0 0
      %844 = vmatpush1.bf16.msra.mxu0 0
      %845 = vmatprep.subr.bf16.mxu0 0
      %846 = vmatpush1.bf16.msra.mxu0 0
      %847 = vmatprep.subr.bf16.mxu0 0
      %848 = vmatpush1.bf16.msra.mxu0 0
      %849 = vmatprep.subr.bf16.mxu0 0
      %850 = vmatpush1.bf16.msra.mxu0 0
      %851 = vmatprep.subr.bf16.mxu0 0
      %852 = vmatpush1.bf16.msra.mxu0 0
      %853 = vmatprep.subr.bf16.mxu0 0
      %854 = vmatpush1.bf16.msra.mxu0 0
      %855 = vmatprep.subr.bf16.mxu0 0
      %856 = vmatpush1.bf16.msra.mxu0 0
      %857 = vmatprep.subr.bf16.mxu0 0
      %858 = vmatpush1.bf16.msra.mxu0 0
      %859 = vmatprep.subr.bf16.mxu0 0
      %860 = vmatpush1.bf16.msra.mxu0 0
      %861 = vmatprep.mubr.bf16.mxu0 0
      %862 = vmatmul.mubr.bf16.gmra.mrb[0].mxu0 %v680
      %v863 = vpop.f32.mrb[0].mxu0
      %v864 = vadd.f32 0.0, %v863
      %v865 = vpop.f32.mrb[0].mxu0
      %v866 = vadd.f32 0.0, %v865
      %v867 = vpop.f32.mrb[0].mxu0
      %v868 = vpop.f32.mrb[0].mxu0
      %869 = vdwg.mxu0
      %v870 = vadd.f32 %v521, %v741
      %v871 = vadd.f32 %v523, %v743
      %v872 = vadd.f32 %v562, %v782
      %v873 = vadd.f32 %v564, %v784
      %v874 = vadd.f32 %v603, %v823
      %v875 = vadd.f32 %v605, %v825
      %v876 = vadd.f32 %v644, %v864
      %v877 = vadd.f32 %v646, %v866
      %s878 = scalar_lea.vmem %s1, 12
      %v879 = vld [vmem:[%s878] sm:$0xf]
      %880 = vrot.lane.b32.xlu0 %v230, 118
      %v881 = vpop.permute.xlu0 %880
      %882 = vrot.lane.b32.xlu0 %v231, 118
      %v883 = vpop.permute.xlu0 %882
      %884 = vrot.lane.b32.xlu0 %v232, 118
      %v885 = vpop.permute.xlu0 %884
      %886 = vrot.lane.b32.xlu0 %v233, 118
      %v887 = vpop.permute.xlu0 %886
      %888 = vrot.lane.b32.xlu0 %v234, 118
      %v889 = vpop.permute.xlu0 %888
      %890 = vrot.lane.b32.xlu0 %v235, 118
      %v891 = vpop.permute.xlu0 %890
      %892 = vrot.lane.b32.xlu0 %v236, 118
      %v893 = vpop.permute.xlu0 %892
      %894 = vrot.lane.b32.xlu0 %v237, 118
      %v895 = vpop.permute.xlu0 %894
      %896 = vrot.lane.b32.xlu0 %v238, 118
      %v897 = vpop.permute.xlu0 %896
      %vm898 = vcmask 965632
      %v899 = vsel %vm898, %v881, %v883
      %v900 = vsel %vm898, %v883, %v885
      %v901 = vsel %vm898, %v885, %v887
      %v902 = vsel %vm898, %v887, %v889
      %v903 = vsel %vm898, %v889, %v891
      %v904 = vsel %vm898, %v891, %v893
      %v905 = vsel %vm898, %v893, %v895
      %v906 = vsel %vm898, %v895, %v897
      %v908 = vsel %vm266, %v879, 0
      %v911 = vsel %vm270, %v899, 0
      %v914 = vsel %vm270, %v900, 0
      %v917 = vsel %vm270, %v901, 0
      %v920 = vsel %vm270, %v902, 0
      %v923 = vsel %vm270, %v903, 0
      %v926 = vsel %vm270, %v904, 0
      %v929 = vsel %vm270, %v905, 0
      %v932 = vsel %vm270, %v906, 0
      %934 = vmatprep.subr.bf16.mxu0 %v914
      %935 = vmatpush1.bf16.msra.mxu0 %v911
      %936 = vmatprep.subr.bf16.mxu0 0
      %937 = vmatpush1.bf16.msra.mxu0 0
      %938 = vmatprep.subr.bf16.mxu0 0
      %939 = vmatpush1.bf16.msra.mxu0 0
      %940 = vmatprep.subr.bf16.mxu0 0
      %941 = vmatpush1.bf16.msra.mxu0 0
      %942 = vmatprep.subr.bf16.mxu0 0
      %943 = vmatpush1.bf16.msra.mxu0 0
      %944 = vmatprep.subr.bf16.mxu0 0
      %945 = vmatpush1.bf16.msra.mxu0 0
      %946 = vmatprep.subr.bf16.mxu0 0
      %947 = vmatpush1.bf16.msra.mxu0 0
      %948 = vmatprep.subr.bf16.mxu0 0
      %949 = vmatpush1.bf16.msra.mxu0 0
      %950 = vmatprep.subr.bf16.mxu0 0
      %951 = vmatpush1.bf16.msra.mxu0 0
      %952 = vmatprep.subr.bf16.mxu0 0
      %953 = vmatpush1.bf16.msra.mxu0 0
      %954 = vmatprep.subr.bf16.mxu0 0
      %955 = vmatpush1.bf16.msra.mxu0 0
      %956 = vmatprep.subr.bf16.mxu0 0
      %957 = vmatpush1.bf16.msra.mxu0 0
      %958 = vmatprep.subr.bf16.mxu0 0
      %959 = vmatpush1.bf16.msra.mxu0 0
      %960 = vmatprep.subr.bf16.mxu0 0
      %961 = vmatpush1.bf16.msra.mxu0 0
      %962 = vmatprep.subr.bf16.mxu0 0
      %963 = vmatpush1.bf16.msra.mxu0 0
      %964 = vmatprep.subr.bf16.mxu0 0
      %965 = vmatpush1.bf16.msra.mxu0 0
      %966 = vmatprep.mubr.bf16.mxu0 0
      %967 = vmatmul.mubr.bf16.gmra.mrb[0].mxu0 %v908
      %v968 = vpop.f32.mrb[0].mxu0
      %v969 = vadd.f32 0.0, %v968
      %v970 = vpop.f32.mrb[0].mxu0
      %v971 = vadd.f32 0.0, %v970
      %v972 = vpop.f32.mrb[0].mxu0
      %v973 = vpop.f32.mrb[0].mxu0
      %974 = vdwg.mxu0
      %975 = vmatprep.subr.bf16.mxu0 %v920
      %976 = vmatpush1.bf16.msra.mxu0 %v917
      %977 = vmatprep.subr.bf16.mxu0 0
      %978 = vmatpush1.bf16.msra.mxu0 0
      %979 = vmatprep.subr.bf16.mxu0 0
      %980 = vmatpush1.bf16.msra.mxu0 0
      %981 = vmatprep.subr.bf16.mxu0 0
      %982 = vmatpush1.bf16.msra.mxu0 0
      %983 = vmatprep.subr.bf16.mxu0 0
      %984 = vmatpush1.bf16.msra.mxu0 0
      %985 = vmatprep.subr.bf16.mxu0 0
      %986 = vmatpush1.bf16.msra.mxu0 0
      %987 = vmatprep.subr.bf16.mxu0 0
      %988 = vmatpush1.bf16.msra.mxu0 0
      %989 = vmatprep.subr.bf16.mxu0 0
      %990 = vmatpush1.bf16.msra.mxu0 0
      %991 = vmatprep.subr.bf16.mxu0 0
      %992 = vmatpush1.bf16.msra.mxu0 0
      %993 = vmatprep.subr.bf16.mxu0 0
      %994 = vmatpush1.bf16.msra.mxu0 0
      %995 = vmatprep.subr.bf16.mxu0 0
      %996 = vmatpush1.bf16.msra.mxu0 0
      %997 = vmatprep.subr.bf16.mxu0 0
      %998 = vmatpush1.bf16.msra.mxu0 0
      %999 = vmatprep.subr.bf16.mxu0 0
      %1000 = vmatpush1.bf16.msra.mxu0 0
      %1001 = vmatprep.subr.bf16.mxu0 0
      %1002 = vmatpush1.bf16.msra.mxu0 0
      %1003 = vmatprep.subr.bf16.mxu0 0
      %1004 = vmatpush1.bf16.msra.mxu0 0
      %1005 = vmatprep.subr.bf16.mxu0 0
      %1006 = vmatpush1.bf16.msra.mxu0 0
      %1007 = vmatprep.mubr.bf16.mxu0 0
      %1008 = vmatmul.mubr.bf16.gmra.mrb[0].mxu0 %v908
      %v1009 = vpop.f32.mrb[0].mxu0
      %v1010 = vadd.f32 0.0, %v1009
      %v1011 = vpop.f32.mrb[0].mxu0
      %v1012 = vadd.f32 0.0, %v1011
      %v1013 = vpop.f32.mrb[0].mxu0
      %v1014 = vpop.f32.mrb[0].mxu0
      %1015 = vdwg.mxu0
      %1016 = vmatprep.subr.bf16.mxu0 %v926
      %1017 = vmatpush1.bf16.msra.mxu0 %v923
      %1018 = vmatprep.subr.bf16.mxu0 0
      %1019 = vmatpush1.bf16.msra.mxu0 0
      %1020 = vmatprep.subr.bf16.mxu0 0
      %1021 = vmatpush1.bf16.msra.mxu0 0
      %1022 = vmatprep.subr.bf16.mxu0 0
      %1023 = vmatpush1.bf16.msra.mxu0 0
      %1024 = vmatprep.subr.bf16.mxu0 0
      %1025 = vmatpush1.bf16.msra.mxu0 0
      %1026 = vmatprep.subr.bf16.mxu0 0
      %1027 = vmatpush1.bf16.msra.mxu0 0
      %1028 = vmatprep.subr.bf16.mxu0 0
      %1029 = vmatpush1.bf16.msra.mxu0 0
      %1030 = vmatprep.subr.bf16.mxu0 0
      %1031 = vmatpush1.bf16.msra.mxu0 0
      %1032 = vmatprep.subr.bf16.mxu0 0
      %1033 = vmatpush1.bf16.msra.mxu0 0
      %1034 = vmatprep.subr.bf16.mxu0 0
      %1035 = vmatpush1.bf16.msra.mxu0 0
      %1036 = vmatprep.subr.bf16.mxu0 0
      %1037 = vmatpush1.bf16.msra.mxu0 0
      %1038 = vmatprep.subr.bf16.mxu0 0
      %1039 = vmatpush1.bf16.msra.mxu0 0
      %1040 = vmatprep.subr.bf16.mxu0 0
      %1041 = vmatpush1.bf16.msra.mxu0 0
      %1042 = vmatprep.subr.bf16.mxu0 0
      %1043 = vmatpush1.bf16.msra.mxu0 0
      %1044 = vmatprep.subr.bf16.mxu0 0
      %1045 = vmatpush1.bf16.msra.mxu0 0
      %1046 = vmatprep.subr.bf16.mxu0 0
      %1047 = vmatpush1.bf16.msra.mxu0 0
      %1048 = vmatprep.mubr.bf16.mxu0 0
      %1049 = vmatmul.mubr.bf16.gmra.mrb[0].mxu0 %v908
      %v1050 = vpop.f32.mrb[0].mxu0
      %v1051 = vadd.f32 0.0, %v1050
      %v1052 = vpop.f32.mrb[0].mxu0
      %v1053 = vadd.f32 0.0, %v1052
      %v1054 = vpop.f32.mrb[0].mxu0
      %v1055 = vpop.f32.mrb[0].mxu0
      %1056 = vdwg.mxu0
      %1057 = vmatprep.subr.bf16.mxu0 %v932
      %1058 = vmatpush1.bf16.msra.mxu0 %v929
      %1059 = vmatprep.subr.bf16.mxu0 0
      %1060 = vmatpush1.bf16.msra.mxu0 0
      %1061 = vmatprep.subr.bf16.mxu0 0
      %1062 = vmatpush1.bf16.msra.mxu0 0
      %1063 = vmatprep.subr.bf16.mxu0 0
      %1064 = vmatpush1.bf16.msra.mxu0 0
      %1065 = vmatprep.subr.bf16.mxu0 0
      %1066 = vmatpush1.bf16.msra.mxu0 0
      %1067 = vmatprep.subr.bf16.mxu0 0
      %1068 = vmatpush1.bf16.msra.mxu0 0
      %1069 = vmatprep.subr.bf16.mxu0 0
      %1070 = vmatpush1.bf16.msra.mxu0 0
      %1071 = vmatprep.subr.bf16.mxu0 0
      %1072 = vmatpush1.bf16.msra.mxu0 0
      %1073 = vmatprep.subr.bf16.mxu0 0
      %1074 = vmatpush1.bf16.msra.mxu0 0
      %1075 = vmatprep.subr.bf16.mxu0 0
      %1076 = vmatpush1.bf16.msra.mxu0 0
      %1077 = vmatprep.subr.bf16.mxu0 0
      %1078 = vmatpush1.bf16.msra.mxu0 0
      %1079 = vmatprep.subr.bf16.mxu0 0
      %1080 = vmatpush1.bf16.msra.mxu0 0
      %1081 = vmatprep.subr.bf16.mxu0 0
      %1082 = vmatpush1.bf16.msra.mxu0 0
      %1083 = vmatprep.subr.bf16.mxu0 0
      %1084 = vmatpush1.bf16.msra.mxu0 0
      %1085 = vmatprep.subr.bf16.mxu0 0
      %1086 = vmatpush1.bf16.msra.mxu0 0
      %1087 = vmatprep.subr.bf16.mxu0 0
      %1088 = vmatpush1.bf16.msra.mxu0 0
      %1089 = vmatprep.mubr.bf16.mxu0 0
      %1090 = vmatmul.mubr.bf16.gmra.mrb[0].mxu0 %v908
      %v1091 = vpop.f32.mrb[0].mxu0
      %v1092 = vadd.f32 0.0, %v1091
      %v1093 = vpop.f32.mrb[0].mxu0
      %v1094 = vadd.f32 0.0, %v1093
      %v1095 = vpop.f32.mrb[0].mxu0
      %v1096 = vpop.f32.mrb[0].mxu0
      %1097 = vdwg.mxu0
      %v1098 = vadd.f32 %v870, %v969
      %v1099 = vadd.f32 %v871, %v971
      %v1100 = vadd.f32 %v872, %v1010
      %v1101 = vadd.f32 %v873, %v1012
      %v1102 = vadd.f32 %v874, %v1051
      %v1103 = vadd.f32 %v875, %v1053
      %v1104 = vadd.f32 %v876, %v1092
      %v1105 = vadd.f32 %v877, %v1094
      %s1106 = scalar_lea.vmem %s1, 16
      %v1107 = vld [vmem:[%s1106] sm:$0xf]
      %1108 = vrot.lane.b32.xlu0 %v230, 117
      %v1109 = vpop.permute.xlu0 %1108
      %1110 = vrot.lane.b32.xlu0 %v231, 117
      %v1111 = vpop.permute.xlu0 %1110
      %1112 = vrot.lane.b32.xlu0 %v232, 117
      %v1113 = vpop.permute.xlu0 %1112
      %1114 = vrot.lane.b32.xlu0 %v233, 117
      %v1115 = vpop.permute.xlu0 %1114
      %1116 = vrot.lane.b32.xlu0 %v234, 117
      %v1117 = vpop.permute.xlu0 %1116
      %1118 = vrot.lane.b32.xlu0 %v235, 117
      %v1119 = vpop.permute.xlu0 %1118
      %1120 = vrot.lane.b32.xlu0 %v236, 117
      %v1121 = vpop.permute.xlu0 %1120
      %1122 = vrot.lane.b32.xlu0 %v237, 117
      %v1123 = vpop.permute.xlu0 %1122
      %1124 = vrot.lane.b32.xlu0 %v238, 117
      %v1125 = vpop.permute.xlu0 %1124
      %vm1126 = vcmask 957440
      %v1127 = vsel %vm1126, %v1109, %v1111
      %v1128 = vsel %vm1126, %v1111, %v1113
      %v1129 = vsel %vm1126, %v1113, %v1115
      %v1130 = vsel %vm1126, %v1115, %v1117
      %v1131 = vsel %vm1126, %v1117, %v1119
      %v1132 = vsel %vm1126, %v1119, %v1121
      %v1133 = vsel %vm1126, %v1121, %v1123
      %v1134 = vsel %vm1126, %v1123, %v1125
      %v1136 = vsel %vm266, %v1107, 0
      %v1139 = vsel %vm270, %v1127, 0
      %v1142 = vsel %vm270, %v1128, 0
      %v1145 = vsel %vm270, %v1129, 0
      %v1148 = vsel %vm270, %v1130, 0
      %v1151 = vsel %vm270, %v1131, 0
      %v1154 = vsel %vm270, %v1132, 0
      %v1157 = vsel %vm270, %v1133, 0
      %v1160 = vsel %vm270, %v1134, 0
      %1162 = vmatprep.subr.bf16.mxu0 %v1142
      %1163 = vmatpush1.bf16.msra.mxu0 %v1139
      %1164 = vmatprep.subr.bf16.mxu0 0
      %1165 = vmatpush1.bf16.msra.mxu0 0
      %1166 = vmatprep.subr.bf16.mxu0 0
      %1167 = vmatpush1.bf16.msra.mxu0 0
      %1168 = vmatprep.subr.bf16.mxu0 0
      %1169 = vmatpush1.bf16.msra.mxu0 0
      %1170 = vmatprep.subr.bf16.mxu0 0
      %1171 = vmatpush1.bf16.msra.mxu0 0
      %1172 = vmatprep.subr.bf16.mxu0 0
      %1173 = vmatpush1.bf16.msra.mxu0 0
      %1174 = vmatprep.subr.bf16.mxu0 0
      %1175 = vmatpush1.bf16.msra.mxu0 0
      %1176 = vmatprep.subr.bf16.mxu0 0
      %1177 = vmatpush1.bf16.msra.mxu0 0
      %1178 = vmatprep.subr.bf16.mxu0 0
      %1179 = vmatpush1.bf16.msra.mxu0 0
      %1180 = vmatprep.subr.bf16.mxu0 0
      %1181 = vmatpush1.bf16.msra.mxu0 0
      %1182 = vmatprep.subr.bf16.mxu0 0
      %1183 = vmatpush1.bf16.msra.mxu0 0
      %1184 = vmatprep.subr.bf16.mxu0 0
      %1185 = vmatpush1.bf16.msra.mxu0 0
      %1186 = vmatprep.subr.bf16.mxu0 0
      %1187 = vmatpush1.bf16.msra.mxu0 0
      %1188 = vmatprep.subr.bf16.mxu0 0
      %1189 = vmatpush1.bf16.msra.mxu0 0
      %1190 = vmatprep.subr.bf16.mxu0 0
      %1191 = vmatpush1.bf16.msra.mxu0 0
      %1192 = vmatprep.subr.bf16.mxu0 0
      %1193 = vmatpush1.bf16.msra.mxu0 0
      %1194 = vmatprep.mubr.bf16.mxu0 0
      %1195 = vmatmul.mubr.bf16.gmra.mrb[0].mxu0 %v1136
      %v1196 = vpop.f32.mrb[0].mxu0
      %v1197 = vadd.f32 0.0, %v1196
      %v1198 = vpop.f32.mrb[0].mxu0
      %v1199 = vadd.f32 0.0, %v1198
      %v1200 = vpop.f32.mrb[0].mxu0
      %v1201 = vpop.f32.mrb[0].mxu0
      %1202 = vdwg.mxu0
      %1203 = vmatprep.subr.bf16.mxu0 %v1148
      %1204 = vmatpush1.bf16.msra.mxu0 %v1145
      %1205 = vmatprep.subr.bf16.mxu0 0
      %1206 = vmatpush1.bf16.msra.mxu0 0
      %1207 = vmatprep.subr.bf16.mxu0 0
      %1208 = vmatpush1.bf16.msra.mxu0 0
      %1209 = vmatprep.subr.bf16.mxu0 0
      %1210 = vmatpush1.bf16.msra.mxu0 0
      %1211 = vmatprep.subr.bf16.mxu0 0
      %1212 = vmatpush1.bf16.msra.mxu0 0
      %1213 = vmatprep.subr.bf16.mxu0 0
      %1214 = vmatpush1.bf16.msra.mxu0 0
      %1215 = vmatprep.subr.bf16.mxu0 0
      %1216 = vmatpush1.bf16.msra.mxu0 0
      %1217 = vmatprep.subr.bf16.mxu0 0
      %1218 = vmatpush1.bf16.msra.mxu0 0
      %1219 = vmatprep.subr.bf16.mxu0 0
      %1220 = vmatpush1.bf16.msra.mxu0 0
      %1221 = vmatprep.subr.bf16.mxu0 0
      %1222 = vmatpush1.bf16.msra.mxu0 0
      %1223 = vmatprep.subr.bf16.mxu0 0
      %1224 = vmatpush1.bf16.msra.mxu0 0
      %1225 = vmatprep.subr.bf16.mxu0 0
      %1226 = vmatpush1.bf16.msra.mxu0 0
      %1227 = vmatprep.subr.bf16.mxu0 0
      %1228 = vmatpush1.bf16.msra.mxu0 0
      %1229 = vmatprep.subr.bf16.mxu0 0
      %1230 = vmatpush1.bf16.msra.mxu0 0
      %1231 = vmatprep.subr.bf16.mxu0 0
      %1232 = vmatpush1.bf16.msra.mxu0 0
      %1233 = vmatprep.subr.bf16.mxu0 0
      %1234 = vmatpush1.bf16.msra.mxu0 0
      %1235 = vmatprep.mubr.bf16.mxu0 0
      %1236 = vmatmul.mubr.bf16.gmra.mrb[0].mxu0 %v1136
      %v1237 = vpop.f32.mrb[0].mxu0
      %v1238 = vadd.f32 0.0, %v1237
      %v1239 = vpop.f32.mrb[0].mxu0
      %v1240 = vadd.f32 0.0, %v1239
      %v1241 = vpop.f32.mrb[0].mxu0
      %v1242 = vpop.f32.mrb[0].mxu0
      %1243 = vdwg.mxu0
      %1244 = vmatprep.subr.bf16.mxu0 %v1154
      %1245 = vmatpush1.bf16.msra.mxu0 %v1151
      %1246 = vmatprep.subr.bf16.mxu0 0
      %1247 = vmatpush1.bf16.msra.mxu0 0
      %1248 = vmatprep.subr.bf16.mxu0 0
      %1249 = vmatpush1.bf16.msra.mxu0 0
      %1250 = vmatprep.subr.bf16.mxu0 0
      %1251 = vmatpush1.bf16.msra.mxu0 0
      %1252 = vmatprep.subr.bf16.mxu0 0
      %1253 = vmatpush1.bf16.msra.mxu0 0
      %1254 = vmatprep.subr.bf16.mxu0 0
      %1255 = vmatpush1.bf16.msra.mxu0 0
      %1256 = vmatprep.subr.bf16.mxu0 0
      %1257 = vmatpush1.bf16.msra.mxu0 0
      %1258 = vmatprep.subr.bf16.mxu0 0
      %1259 = vmatpush1.bf16.msra.mxu0 0
      %1260 = vmatprep.subr.bf16.mxu0 0
      %1261 = vmatpush1.bf16.msra.mxu0 0
      %1262 = vmatprep.subr.bf16.mxu0 0
      %1263 = vmatpush1.bf16.msra.mxu0 0
      %1264 = vmatprep.subr.bf16.mxu0 0
      %1265 = vmatpush1.bf16.msra.mxu0 0
      %1266 = vmatprep.subr.bf16.mxu0 0
      %1267 = vmatpush1.bf16.msra.mxu0 0
      %1268 = vmatprep.subr.bf16.mxu0 0
      %1269 = vmatpush1.bf16.msra.mxu0 0
      %1270 = vmatprep.subr.bf16.mxu0 0
      %1271 = vmatpush1.bf16.msra.mxu0 0
      %1272 = vmatprep.subr.bf16.mxu0 0
      %1273 = vmatpush1.bf16.msra.mxu0 0
      %1274 = vmatprep.subr.bf16.mxu0 0
      %1275 = vmatpush1.bf16.msra.mxu0 0
      %1276 = vmatprep.mubr.bf16.mxu0 0
      %1277 = vmatmul.mubr.bf16.gmra.mrb[0].mxu0 %v1136
      %v1278 = vpop.f32.mrb[0].mxu0
      %v1279 = vadd.f32 0.0, %v1278
      %v1280 = vpop.f32.mrb[0].mxu0
      %v1281 = vadd.f32 0.0, %v1280
      %v1282 = vpop.f32.mrb[0].mxu0
      %v1283 = vpop.f32.mrb[0].mxu0
      %1284 = vdwg.mxu0
      %1285 = vmatprep.subr.bf16.mxu0 %v1160
      %1286 = vmatpush1.bf16.msra.mxu0 %v1157
      %1287 = vmatprep.subr.bf16.mxu0 0
      %1288 = vmatpush1.bf16.msra.mxu0 0
      %1289 = vmatprep.subr.bf16.mxu0 0
      %1290 = vmatpush1.bf16.msra.mxu0 0
      %1291 = vmatprep.subr.bf16.mxu0 0
      %1292 = vmatpush1.bf16.msra.mxu0 0
      %1293 = vmatprep.subr.bf16.mxu0 0
      %1294 = vmatpush1.bf16.msra.mxu0 0
      %1295 = vmatprep.subr.bf16.mxu0 0
      %1296 = vmatpush1.bf16.msra.mxu0 0
      %1297 = vmatprep.subr.bf16.mxu0 0
      %1298 = vmatpush1.bf16.msra.mxu0 0
      %1299 = vmatprep.subr.bf16.mxu0 0
      %1300 = vmatpush1.bf16.msra.mxu0 0
      %1301 = vmatprep.subr.bf16.mxu0 0
      %1302 = vmatpush1.bf16.msra.mxu0 0
      %1303 = vmatprep.subr.bf16.mxu0 0
      %1304 = vmatpush1.bf16.msra.mxu0 0
      %1305 = vmatprep.subr.bf16.mxu0 0
      %1306 = vmatpush1.bf16.msra.mxu0 0
      %1307 = vmatprep.subr.bf16.mxu0 0
      %1308 = vmatpush1.bf16.msra.mxu0 0
      %1309 = vmatprep.subr.bf16.mxu0 0
      %1310 = vmatpush1.bf16.msra.mxu0 0
      %1311 = vmatprep.subr.bf16.mxu0 0
      %1312 = vmatpush1.bf16.msra.mxu0 0
      %1313 = vmatprep.subr.bf16.mxu0 0
      %1314 = vmatpush1.bf16.msra.mxu0 0
      %1315 = vmatprep.subr.bf16.mxu0 0
      %1316 = vmatpush1.bf16.msra.mxu0 0
      %1317 = vmatprep.mubr.bf16.mxu0 0
      %1318 = vmatmul.mubr.bf16.gmra.mrb[0].mxu0 %v1136
      %v1319 = vpop.f32.mrb[0].mxu0
      %v1320 = vadd.f32 0.0, %v1319
      %v1321 = vpop.f32.mrb[0].mxu0
      %v1322 = vadd.f32 0.0, %v1321
      %v1323 = vpop.f32.mrb[0].mxu0
      %v1324 = vpop.f32.mrb[0].mxu0
      %1325 = vdwg.mxu0
      %v1326 = vadd.f32 %v1098, %v1197
      %v1327 = vadd.f32 %v1099, %v1199
      %v1328 = vadd.f32 %v1100, %v1238
      %v1329 = vadd.f32 %v1101, %v1240
      %v1330 = vadd.f32 %v1102, %v1279
      %v1331 = vadd.f32 %v1103, %v1281
      %v1332 = vadd.f32 %v1104, %v1320
      %v1333 = vadd.f32 %v1105, %v1322
      %s1334 = scalar_lea.vmem %s1, 20
      %v1335 = vld [vmem:[%s1334] sm:$0xf]
      %1336 = vrot.lane.b32.xlu0 %v230, 116
      %v1337 = vpop.permute.xlu0 %1336
      %1338 = vrot.lane.b32.xlu0 %v231, 116
      %v1339 = vpop.permute.xlu0 %1338
      %1340 = vrot.lane.b32.xlu0 %v232, 116
      %v1341 = vpop.permute.xlu0 %1340
      %1342 = vrot.lane.b32.xlu0 %v233, 116
      %v1343 = vpop.permute.xlu0 %1342
      %1344 = vrot.lane.b32.xlu0 %v234, 116
      %v1345 = vpop.permute.xlu0 %1344
      %1346 = vrot.lane.b32.xlu0 %v235, 116
      %v1347 = vpop.permute.xlu0 %1346
      %1348 = vrot.lane.b32.xlu0 %v236, 116
      %v1349 = vpop.permute.xlu0 %1348
      %1350 = vrot.lane.b32.xlu0 %v237, 116
      %v1351 = vpop.permute.xlu0 %1350
      %1352 = vrot.lane.b32.xlu0 %v238, 116
      %v1353 = vpop.permute.xlu0 %1352
      %vm1354 = vcmask 949248
      %v1355 = vsel %vm1354, %v1337, %v1339
      %v1356 = vsel %vm1354, %v1339, %v1341
      %v1357 = vsel %vm1354, %v1341, %v1343
      %v1358 = vsel %vm1354, %v1343, %v1345
      %v1359 = vsel %vm1354, %v1345, %v1347
      %v1360 = vsel %vm1354, %v1347, %v1349
      %v1361 = vsel %vm1354, %v1349, %v1351
      %v1362 = vsel %vm1354, %v1351, %v1353
      %v1364 = vsel %vm266, %v1335, 0
      %v1367 = vsel %vm270, %v1355, 0
      %v1370 = vsel %vm270, %v1356, 0
      %v1373 = vsel %vm270, %v1357, 0
      %v1376 = vsel %vm270, %v1358, 0
      %v1379 = vsel %vm270, %v1359, 0
      %v1382 = vsel %vm270, %v1360, 0
      %v1385 = vsel %vm270, %v1361, 0
      %v1388 = vsel %vm270, %v1362, 0
      %1390 = vmatprep.subr.bf16.mxu0 %v1370
      %1391 = vmatpush1.bf16.msra.mxu0 %v1367
      %1392 = vmatprep.subr.bf16.mxu0 0
      %1393 = vmatpush1.bf16.msra.mxu0 0
      %1394 = vmatprep.subr.bf16.mxu0 0
      %1395 = vmatpush1.bf16.msra.mxu0 0
      %1396 = vmatprep.subr.bf16.mxu0 0
      %1397 = vmatpush1.bf16.msra.mxu0 0
      %1398 = vmatprep.subr.bf16.mxu0 0
      %1399 = vmatpush1.bf16.msra.mxu0 0
      %1400 = vmatprep.subr.bf16.mxu0 0
      %1401 = vmatpush1.bf16.msra.mxu0 0
      %1402 = vmatprep.subr.bf16.mxu0 0
      %1403 = vmatpush1.bf16.msra.mxu0 0
      %1404 = vmatprep.subr.bf16.mxu0 0
      %1405 = vmatpush1.bf16.msra.mxu0 0
      %1406 = vmatprep.subr.bf16.mxu0 0
      %1407 = vmatpush1.bf16.msra.mxu0 0
      %1408 = vmatprep.subr.bf16.mxu0 0
      %1409 = vmatpush1.bf16.msra.mxu0 0
      %1410 = vmatprep.subr.bf16.mxu0 0
      %1411 = vmatpush1.bf16.msra.mxu0 0
      %1412 = vmatprep.subr.bf16.mxu0 0
      %1413 = vmatpush1.bf16.msra.mxu0 0
      %1414 = vmatprep.subr.bf16.mxu0 0
      %1415 = vmatpush1.bf16.msra.mxu0 0
      %1416 = vmatprep.subr.bf16.mxu0 0
      %1417 = vmatpush1.bf16.msra.mxu0 0
      %1418 = vmatprep.subr.bf16.mxu0 0
      %1419 = vmatpush1.bf16.msra.mxu0 0
      %1420 = vmatprep.subr.bf16.mxu0 0
      %1421 = vmatpush1.bf16.msra.mxu0 0
      %1422 = vmatprep.mubr.bf16.mxu0 0
      %1423 = vmatmul.mubr.bf16.gmra.mrb[0].mxu0 %v1364
      %v1424 = vpop.f32.mrb[0].mxu0
      %v1425 = vadd.f32 0.0, %v1424
      %v1426 = vpop.f32.mrb[0].mxu0
      %v1427 = vadd.f32 0.0, %v1426
      %v1428 = vpop.f32.mrb[0].mxu0
      %v1429 = vpop.f32.mrb[0].mxu0
      %1430 = vdwg.mxu0
      %1431 = vmatprep.subr.bf16.mxu0 %v1376
      %1432 = vmatpush1.bf16.msra.mxu0 %v1373
      %1433 = vmatprep.subr.bf16.mxu0 0
      %1434 = vmatpush1.bf16.msra.mxu0 0
      %1435 = vmatprep.subr.bf16.mxu0 0
      %1436 = vmatpush1.bf16.msra.mxu0 0
      %1437 = vmatprep.subr.bf16.mxu0 0
      %1438 = vmatpush1.bf16.msra.mxu0 0
      %1439 = vmatprep.subr.bf16.mxu0 0
      %1440 = vmatpush1.bf16.msra.mxu0 0
      %1441 = vmatprep.subr.bf16.mxu0 0
      %1442 = vmatpush1.bf16.msra.mxu0 0
      %1443 = vmatprep.subr.bf16.mxu0 0
      %1444 = vmatpush1.bf16.msra.mxu0 0
      %1445 = vmatprep.subr.bf16.mxu0 0
      %1446 = vmatpush1.bf16.msra.mxu0 0
      %1447 = vmatprep.subr.bf16.mxu0 0
      %1448 = vmatpush1.bf16.msra.mxu0 0
      %1449 = vmatprep.subr.bf16.mxu0 0
      %1450 = vmatpush1.bf16.msra.mxu0 0
      %1451 = vmatprep.subr.bf16.mxu0 0
      %1452 = vmatpush1.bf16.msra.mxu0 0
      %1453 = vmatprep.subr.bf16.mxu0 0
      %1454 = vmatpush1.bf16.msra.mxu0 0
      %1455 = vmatprep.subr.bf16.mxu0 0
      %1456 = vmatpush1.bf16.msra.mxu0 0
      %1457 = vmatprep.subr.bf16.mxu0 0
      %1458 = vmatpush1.bf16.msra.mxu0 0
      %1459 = vmatprep.subr.bf16.mxu0 0
      %1460 = vmatpush1.bf16.msra.mxu0 0
      %1461 = vmatprep.subr.bf16.mxu0 0
      %1462 = vmatpush1.bf16.msra.mxu0 0
      %1463 = vmatprep.mubr.bf16.mxu0 0
      %1464 = vmatmul.mubr.bf16.gmra.mrb[0].mxu0 %v1364
      %v1465 = vpop.f32.mrb[0].mxu0
      %v1466 = vadd.f32 0.0, %v1465
      %v1467 = vpop.f32.mrb[0].mxu0
      %v1468 = vadd.f32 0.0, %v1467
      %v1469 = vpop.f32.mrb[0].mxu0
      %v1470 = vpop.f32.mrb[0].mxu0
      %1471 = vdwg.mxu0
      %1472 = vmatprep.subr.bf16.mxu0 %v1382
      %1473 = vmatpush1.bf16.msra.mxu0 %v1379
      %1474 = vmatprep.subr.bf16.mxu0 0
      %1475 = vmatpush1.bf16.msra.mxu0 0
      %1476 = vmatprep.subr.bf16.mxu0 0
      %1477 = vmatpush1.bf16.msra.mxu0 0
      %1478 = vmatprep.subr.bf16.mxu0 0
      %1479 = vmatpush1.bf16.msra.mxu0 0
      %1480 = vmatprep.subr.bf16.mxu0 0
      %1481 = vmatpush1.bf16.msra.mxu0 0
      %1482 = vmatprep.subr.bf16.mxu0 0
      %1483 = vmatpush1.bf16.msra.mxu0 0
      %1484 = vmatprep.subr.bf16.mxu0 0
      %1485 = vmatpush1.bf16.msra.mxu0 0
      %1486 = vmatprep.subr.bf16.mxu0 0
      %1487 = vmatpush1.bf16.msra.mxu0 0
      %1488 = vmatprep.subr.bf16.mxu0 0
      %1489 = vmatpush1.bf16.msra.mxu0 0
      %1490 = vmatprep.subr.bf16.mxu0 0
      %1491 = vmatpush1.bf16.msra.mxu0 0
      %1492 = vmatprep.subr.bf16.mxu0 0
      %1493 = vmatpush1.bf16.msra.mxu0 0
      %1494 = vmatprep.subr.bf16.mxu0 0
      %1495 = vmatpush1.bf16.msra.mxu0 0
      %1496 = vmatprep.subr.bf16.mxu0 0
      %1497 = vmatpush1.bf16.msra.mxu0 0
      %1498 = vmatprep.subr.bf16.mxu0 0
      %1499 = vmatpush1.bf16.msra.mxu0 0
      %1500 = vmatprep.subr.bf16.mxu0 0
      %1501 = vmatpush1.bf16.msra.mxu0 0
      %1502 = vmatprep.subr.bf16.mxu0 0
      %1503 = vmatpush1.bf16.msra.mxu0 0
      %1504 = vmatprep.mubr.bf16.mxu0 0
      %1505 = vmatmul.mubr.bf16.gmra.mrb[0].mxu0 %v1364
      %v1506 = vpop.f32.mrb[0].mxu0
      %v1507 = vadd.f32 0.0, %v1506
      %v1508 = vpop.f32.mrb[0].mxu0
      %v1509 = vadd.f32 0.0, %v1508
      %v1510 = vpop.f32.mrb[0].mxu0
      %v1511 = vpop.f32.mrb[0].mxu0
      %1512 = vdwg.mxu0
      %1513 = vmatprep.subr.bf16.mxu0 %v1388
      %1514 = vmatpush1.bf16.msra.mxu0 %v1385
      %1515 = vmatprep.subr.bf16.mxu0 0
      %1516 = vmatpush1.bf16.msra.mxu0 0
      %1517 = vmatprep.subr.bf16.mxu0 0
      %1518 = vmatpush1.bf16.msra.mxu0 0
      %1519 = vmatprep.subr.bf16.mxu0 0
      %1520 = vmatpush1.bf16.msra.mxu0 0
      %1521 = vmatprep.subr.bf16.mxu0 0
      %1522 = vmatpush1.bf16.msra.mxu0 0
      %1523 = vmatprep.subr.bf16.mxu0 0
      %1524 = vmatpush1.bf16.msra.mxu0 0
      %1525 = vmatprep.subr.bf16.mxu0 0
      %1526 = vmatpush1.bf16.msra.mxu0 0
      %1527 = vmatprep.subr.bf16.mxu0 0
      %1528 = vmatpush1.bf16.msra.mxu0 0
      %1529 = vmatprep.subr.bf16.mxu0 0
      %1530 = vmatpush1.bf16.msra.mxu0 0
      %1531 = vmatprep.subr.bf16.mxu0 0
      %1532 = vmatpush1.bf16.msra.mxu0 0
      %1533 = vmatprep.subr.bf16.mxu0 0
      %1534 = vmatpush1.bf16.msra.mxu0 0
      %1535 = vmatprep.subr.bf16.mxu0 0
      %1536 = vmatpush1.bf16.msra.mxu0 0
      %1537 = vmatprep.subr.bf16.mxu0 0
      %1538 = vmatpush1.bf16.msra.mxu0 0
      %1539 = vmatprep.subr.bf16.mxu0 0
      %1540 = vmatpush1.bf16.msra.mxu0 0
      %1541 = vmatprep.subr.bf16.mxu0 0
      %1542 = vmatpush1.bf16.msra.mxu0 0
      %1543 = vmatprep.subr.bf16.mxu0 0
      %1544 = vmatpush1.bf16.msra.mxu0 0
      %1545 = vmatprep.mubr.bf16.mxu0 0
      %1546 = vmatmul.mubr.bf16.gmra.mrb[0].mxu0 %v1364
      %v1547 = vpop.f32.mrb[0].mxu0
      %v1548 = vadd.f32 0.0, %v1547
      %v1549 = vpop.f32.mrb[0].mxu0
      %v1550 = vadd.f32 0.0, %v1549
      %v1551 = vpop.f32.mrb[0].mxu0
      %v1552 = vpop.f32.mrb[0].mxu0
      %1553 = vdwg.mxu0
      %v1554 = vadd.f32 %v1326, %v1425
      %v1555 = vadd.f32 %v1327, %v1427
      %v1556 = vadd.f32 %v1328, %v1466
      %v1557 = vadd.f32 %v1329, %v1468
      %v1558 = vadd.f32 %v1330, %v1507
      %v1559 = vadd.f32 %v1331, %v1509
      %v1560 = vadd.f32 %v1332, %v1548
      %v1561 = vadd.f32 %v1333, %v1550
      %s1562 = scalar_lea.vmem %s1, 24
      %v1563 = vld [vmem:[%s1562] sm:$0xf]
      %1564 = vrot.lane.b32.xlu0 %v230, 108
      %v1565 = vpop.permute.xlu0 %1564
      %1566 = vrot.lane.b32.xlu0 %v231, 108
      %v1567 = vpop.permute.xlu0 %1566
      %1568 = vrot.lane.b32.xlu0 %v232, 108
      %v1569 = vpop.permute.xlu0 %1568
      %1570 = vrot.lane.b32.xlu0 %v233, 108
      %v1571 = vpop.permute.xlu0 %1570
      %1572 = vrot.lane.b32.xlu0 %v234, 108
      %v1573 = vpop.permute.xlu0 %1572
      %1574 = vrot.lane.b32.xlu0 %v235, 108
      %v1575 = vpop.permute.xlu0 %1574
      %1576 = vrot.lane.b32.xlu0 %v236, 108
      %v1577 = vpop.permute.xlu0 %1576
      %1578 = vrot.lane.b32.xlu0 %v237, 108
      %v1579 = vpop.permute.xlu0 %1578
      %1580 = vrot.lane.b32.xlu0 %v238, 108
      %v1581 = vpop.permute.xlu0 %1580
      %vm1582 = vcmask 883712
      %v1583 = vsel %vm1582, %v1565, %v1567
      %v1584 = vsel %vm1582, %v1567, %v1569
      %v1585 = vsel %vm1582, %v1569, %v1571
      %v1586 = vsel %vm1582, %v1571, %v1573
      %v1587 = vsel %vm1582, %v1573, %v1575
      %v1588 = vsel %vm1582, %v1575, %v1577
      %v1589 = vsel %vm1582, %v1577, %v1579
      %v1590 = vsel %vm1582, %v1579, %v1581
      %v1592 = vsel %vm266, %v1563, 0
      %v1595 = vsel %vm270, %v1583, 0
      %v1598 = vsel %vm270, %v1584, 0
      %v1601 = vsel %vm270, %v1585, 0
      %v1604 = vsel %vm270, %v1586, 0
      %v1607 = vsel %vm270, %v1587, 0
      %v1610 = vsel %vm270, %v1588, 0
      %v1613 = vsel %vm270, %v1589, 0
      %v1616 = vsel %vm270, %v1590, 0
      %1618 = vmatprep.subr.bf16.mxu0 %v1598
      %1619 = vmatpush1.bf16.msra.mxu0 %v1595
      %1620 = vmatprep.subr.bf16.mxu0 0
      %1621 = vmatpush1.bf16.msra.mxu0 0
      %1622 = vmatprep.subr.bf16.mxu0 0
      %1623 = vmatpush1.bf16.msra.mxu0 0
      %1624 = vmatprep.subr.bf16.mxu0 0
      %1625 = vmatpush1.bf16.msra.mxu0 0
      %1626 = vmatprep.subr.bf16.mxu0 0
      %1627 = vmatpush1.bf16.msra.mxu0 0
      %1628 = vmatprep.subr.bf16.mxu0 0
      %1629 = vmatpush1.bf16.msra.mxu0 0
      %1630 = vmatprep.subr.bf16.mxu0 0
      %1631 = vmatpush1.bf16.msra.mxu0 0
      %1632 = vmatprep.subr.bf16.mxu0 0
      %1633 = vmatpush1.bf16.msra.mxu0 0
      %1634 = vmatprep.subr.bf16.mxu0 0
      %1635 = vmatpush1.bf16.msra.mxu0 0
      %1636 = vmatprep.subr.bf16.mxu0 0
      %1637 = vmatpush1.bf16.msra.mxu0 0
      %1638 = vmatprep.subr.bf16.mxu0 0
      %1639 = vmatpush1.bf16.msra.mxu0 0
      %1640 = vmatprep.subr.bf16.mxu0 0
      %1641 = vmatpush1.bf16.msra.mxu0 0
      %1642 = vmatprep.subr.bf16.mxu0 0
      %1643 = vmatpush1.bf16.msra.mxu0 0
      %1644 = vmatprep.subr.bf16.mxu0 0
      %1645 = vmatpush1.bf16.msra.mxu0 0
      %1646 = vmatprep.subr.bf16.mxu0 0
      %1647 = vmatpush1.bf16.msra.mxu0 0
      %1648 = vmatprep.subr.bf16.mxu0 0
      %1649 = vmatpush1.bf16.msra.mxu0 0
      %1650 = vmatprep.mubr.bf16.mxu0 0
      %1651 = vmatmul.mubr.bf16.gmra.mrb[0].mxu0 %v1592
      %v1652 = vpop.f32.mrb[0].mxu0
      %v1653 = vadd.f32 0.0, %v1652
      %v1654 = vpop.f32.mrb[0].mxu0
      %v1655 = vadd.f32 0.0, %v1654
      %v1656 = vpop.f32.mrb[0].mxu0
      %v1657 = vpop.f32.mrb[0].mxu0
      %1658 = vdwg.mxu0
      %1659 = vmatprep.subr.bf16.mxu0 %v1604
      %1660 = vmatpush1.bf16.msra.mxu0 %v1601
      %1661 = vmatprep.subr.bf16.mxu0 0
      %1662 = vmatpush1.bf16.msra.mxu0 0
      %1663 = vmatprep.subr.bf16.mxu0 0
      %1664 = vmatpush1.bf16.msra.mxu0 0
      %1665 = vmatprep.subr.bf16.mxu0 0
      %1666 = vmatpush1.bf16.msra.mxu0 0
      %1667 = vmatprep.subr.bf16.mxu0 0
      %1668 = vmatpush1.bf16.msra.mxu0 0
      %1669 = vmatprep.subr.bf16.mxu0 0
      %1670 = vmatpush1.bf16.msra.mxu0 0
      %1671 = vmatprep.subr.bf16.mxu0 0
      %1672 = vmatpush1.bf16.msra.mxu0 0
      %1673 = vmatprep.subr.bf16.mxu0 0
      %1674 = vmatpush1.bf16.msra.mxu0 0
      %1675 = vmatprep.subr.bf16.mxu0 0
      %1676 = vmatpush1.bf16.msra.mxu0 0
      %1677 = vmatprep.subr.bf16.mxu0 0
      %1678 = vmatpush1.bf16.msra.mxu0 0
      %1679 = vmatprep.subr.bf16.mxu0 0
      %1680 = vmatpush1.bf16.msra.mxu0 0
      %1681 = vmatprep.subr.bf16.mxu0 0
      %1682 = vmatpush1.bf16.msra.mxu0 0
      %1683 = vmatprep.subr.bf16.mxu0 0
      %1684 = vmatpush1.bf16.msra.mxu0 0
      %1685 = vmatprep.subr.bf16.mxu0 0
      %1686 = vmatpush1.bf16.msra.mxu0 0
      %1687 = vmatprep.subr.bf16.mxu0 0
      %1688 = vmatpush1.bf16.msra.mxu0 0
      %1689 = vmatprep.subr.bf16.mxu0 0
      %1690 = vmatpush1.bf16.msra.mxu0 0
      %1691 = vmatprep.mubr.bf16.mxu0 0
      %1692 = vmatmul.mubr.bf16.gmra.mrb[0].mxu0 %v1592
      %v1693 = vpop.f32.mrb[0].mxu0
      %v1694 = vadd.f32 0.0, %v1693
      %v1695 = vpop.f32.mrb[0].mxu0
      %v1696 = vadd.f32 0.0, %v1695
      %v1697 = vpop.f32.mrb[0].mxu0
      %v1698 = vpop.f32.mrb[0].mxu0
      %1699 = vdwg.mxu0
      %1700 = vmatprep.subr.bf16.mxu0 %v1610
      %1701 = vmatpush1.bf16.msra.mxu0 %v1607
      %1702 = vmatprep.subr.bf16.mxu0 0
      %1703 = vmatpush1.bf16.msra.mxu0 0
      %1704 = vmatprep.subr.bf16.mxu0 0
      %1705 = vmatpush1.bf16.msra.mxu0 0
      %1706 = vmatprep.subr.bf16.mxu0 0
      %1707 = vmatpush1.bf16.msra.mxu0 0
      %1708 = vmatprep.subr.bf16.mxu0 0
      %1709 = vmatpush1.bf16.msra.mxu0 0
      %1710 = vmatprep.subr.bf16.mxu0 0
      %1711 = vmatpush1.bf16.msra.mxu0 0
      %1712 = vmatprep.subr.bf16.mxu0 0
      %1713 = vmatpush1.bf16.msra.mxu0 0
      %1714 = vmatprep.subr.bf16.mxu0 0
      %1715 = vmatpush1.bf16.msra.mxu0 0
      %1716 = vmatprep.subr.bf16.mxu0 0
      %1717 = vmatpush1.bf16.msra.mxu0 0
      %1718 = vmatprep.subr.bf16.mxu0 0
      %1719 = vmatpush1.bf16.msra.mxu0 0
      %1720 = vmatprep.subr.bf16.mxu0 0
      %1721 = vmatpush1.bf16.msra.mxu0 0
      %1722 = vmatprep.subr.bf16.mxu0 0
      %1723 = vmatpush1.bf16.msra.mxu0 0
      %1724 = vmatprep.subr.bf16.mxu0 0
      %1725 = vmatpush1.bf16.msra.mxu0 0
      %1726 = vmatprep.subr.bf16.mxu0 0
      %1727 = vmatpush1.bf16.msra.mxu0 0
      %1728 = vmatprep.subr.bf16.mxu0 0
      %1729 = vmatpush1.bf16.msra.mxu0 0
      %1730 = vmatprep.subr.bf16.mxu0 0
      %1731 = vmatpush1.bf16.msra.mxu0 0
      %1732 = vmatprep.mubr.bf16.mxu0 0
      %1733 = vmatmul.mubr.bf16.gmra.mrb[0].mxu0 %v1592
      %v1734 = vpop.f32.mrb[0].mxu0
      %v1735 = vadd.f32 0.0, %v1734
      %v1736 = vpop.f32.mrb[0].mxu0
      %v1737 = vadd.f32 0.0, %v1736
      %v1738 = vpop.f32.mrb[0].mxu0
      %v1739 = vpop.f32.mrb[0].mxu0
      %1740 = vdwg.mxu0
      %1741 = vmatprep.subr.bf16.mxu0 %v1616
      %1742 = vmatpush1.bf16.msra.mxu0 %v1613
      %1743 = vmatprep.subr.bf16.mxu0 0
      %1744 = vmatpush1.bf16.msra.mxu0 0
      %1745 = vmatprep.subr.bf16.mxu0 0
      %1746 = vmatpush1.bf16.msra.mxu0 0
      %1747 = vmatprep.subr.bf16.mxu0 0
      %1748 = vmatpush1.bf16.msra.mxu0 0
      %1749 = vmatprep.subr.bf16.mxu0 0
      %1750 = vmatpush1.bf16.msra.mxu0 0
      %1751 = vmatprep.subr.bf16.mxu0 0
      %1752 = vmatpush1.bf16.msra.mxu0 0
      %1753 = vmatprep.subr.bf16.mxu0 0
      %1754 = vmatpush1.bf16.msra.mxu0 0
      %1755 = vmatprep.subr.bf16.mxu0 0
      %1756 = vmatpush1.bf16.msra.mxu0 0
      %1757 = vmatprep.subr.bf16.mxu0 0
      %1758 = vmatpush1.bf16.msra.mxu0 0
      %1759 = vmatprep.subr.bf16.mxu0 0
      %1760 = vmatpush1.bf16.msra.mxu0 0
      %1761 = vmatprep.subr.bf16.mxu0 0
      %1762 = vmatpush1.bf16.msra.mxu0 0
      %1763 = vmatprep.subr.bf16.mxu0 0
      %1764 = vmatpush1.bf16.msra.mxu0 0
      %1765 = vmatprep.subr.bf16.mxu0 0
      %1766 = vmatpush1.bf16.msra.mxu0 0
      %1767 = vmatprep.subr.bf16.mxu0 0
      %1768 = vmatpush1.bf16.msra.mxu0 0
      %1769 = vmatprep.subr.bf16.mxu0 0
      %1770 = vmatpush1.bf16.msra.mxu0 0
      %1771 = vmatprep.subr.bf16.mxu0 0
      %1772 = vmatpush1.bf16.msra.mxu0 0
      %1773 = vmatprep.mubr.bf16.mxu0 0
      %1774 = vmatmul.mubr.bf16.gmra.mrb[0].mxu0 %v1592
      %v1775 = vpop.f32.mrb[0].mxu0
      %v1776 = vadd.f32 0.0, %v1775
      %v1777 = vpop.f32.mrb[0].mxu0
      %v1778 = vadd.f32 0.0, %v1777
      %v1779 = vpop.f32.mrb[0].mxu0
      %v1780 = vpop.f32.mrb[0].mxu0
      %1781 = vdwg.mxu0
      %v1782 = vadd.f32 %v1554, %v1653
      %v1783 = vadd.f32 %v1555, %v1655
      %v1784 = vadd.f32 %v1556, %v1694
      %v1785 = vadd.f32 %v1557, %v1696
      %v1786 = vadd.f32 %v1558, %v1735
      %v1787 = vadd.f32 %v1559, %v1737
      %v1788 = vadd.f32 %v1560, %v1776
      %v1789 = vadd.f32 %v1561, %v1778
      %s1790 = scalar_lea.vmem %s1, 28
      %v1791 = vld [vmem:[%s1790] sm:$0xf]
      %1792 = vrot.lane.b32.xlu0 %v230, 107
      %v1793 = vpop.permute.xlu0 %1792
      %1794 = vrot.lane.b32.xlu0 %v231, 107
      %v1795 = vpop.permute.xlu0 %1794
      %1796 = vrot.lane.b32.xlu0 %v232, 107
      %v1797 = vpop.permute.xlu0 %1796
      %1798 = vrot.lane.b32.xlu0 %v233, 107
      %v1799 = vpop.permute.xlu0 %1798
      %1800 = vrot.lane.b32.xlu0 %v234, 107
      %v1801 = vpop.permute.xlu0 %1800
      %1802 = vrot.lane.b32.xlu0 %v235, 107
      %v1803 = vpop.permute.xlu0 %1802
      %1804 = vrot.lane.b32.xlu0 %v236, 107
      %v1805 = vpop.permute.xlu0 %1804
      %1806 = vrot.lane.b32.xlu0 %v237, 107
      %v1807 = vpop.permute.xlu0 %1806
      %1808 = vrot.lane.b32.xlu0 %v238, 107
      %v1809 = vpop.permute.xlu0 %1808
      %vm1810 = vcmask 875520
      %v1811 = vsel %vm1810, %v1793, %v1795
      %v1812 = vsel %vm1810, %v1795, %v1797
      %v1813 = vsel %vm1810, %v1797, %v1799
      %v1814 = vsel %vm1810, %v1799, %v1801
      %v1815 = vsel %vm1810, %v1801, %v1803
      %v1816 = vsel %vm1810, %v1803, %v1805
      %v1817 = vsel %vm1810, %v1805, %v1807
      %v1818 = vsel %vm1810, %v1807, %v1809
      %v1820 = vsel %vm266, %v1791, 0
      %v1823 = vsel %vm270, %v1811, 0
      %v1826 = vsel %vm270, %v1812, 0
      %v1829 = vsel %vm270, %v1813, 0
      %v1832 = vsel %vm270, %v1814, 0
      %v1835 = vsel %vm270, %v1815, 0
      %v1838 = vsel %vm270, %v1816, 0
      %v1841 = vsel %vm270, %v1817, 0
      %v1844 = vsel %vm270, %v1818, 0
      %1846 = vmatprep.subr.bf16.mxu0 %v1826
      %1847 = vmatpush1.bf16.msra.mxu0 %v1823
      %1848 = vmatprep.subr.bf16.mxu0 0
      %1849 = vmatpush1.bf16.msra.mxu0 0
      %1850 = vmatprep.subr.bf16.mxu0 0
      %1851 = vmatpush1.bf16.msra.mxu0 0
      %1852 = vmatprep.subr.bf16.mxu0 0
      %1853 = vmatpush1.bf16.msra.mxu0 0
      %1854 = vmatprep.subr.bf16.mxu0 0
      %1855 = vmatpush1.bf16.msra.mxu0 0
      %1856 = vmatprep.subr.bf16.mxu0 0
      %1857 = vmatpush1.bf16.msra.mxu0 0
      %1858 = vmatprep.subr.bf16.mxu0 0
      %1859 = vmatpush1.bf16.msra.mxu0 0
      %1860 = vmatprep.subr.bf16.mxu0 0
      %1861 = vmatpush1.bf16.msra.mxu0 0
      %1862 = vmatprep.subr.bf16.mxu0 0
      %1863 = vmatpush1.bf16.msra.mxu0 0
      %1864 = vmatprep.subr.bf16.mxu0 0
      %1865 = vmatpush1.bf16.msra.mxu0 0
      %1866 = vmatprep.subr.bf16.mxu0 0
      %1867 = vmatpush1.bf16.msra.mxu0 0
      %1868 = vmatprep.subr.bf16.mxu0 0
      %1869 = vmatpush1.bf16.msra.mxu0 0
      %1870 = vmatprep.subr.bf16.mxu0 0
      %1871 = vmatpush1.bf16.msra.mxu0 0
      %1872 = vmatprep.subr.bf16.mxu0 0
      %1873 = vmatpush1.bf16.msra.mxu0 0
      %1874 = vmatprep.subr.bf16.mxu0 0
      %1875 = vmatpush1.bf16.msra.mxu0 0
      %1876 = vmatprep.subr.bf16.mxu0 0
      %1877 = vmatpush1.bf16.msra.mxu0 0
      %1878 = vmatprep.mubr.bf16.mxu0 0
      %1879 = vmatmul.mubr.bf16.gmra.mrb[0].mxu0 %v1820
      %v1880 = vpop.f32.mrb[0].mxu0
      %v1881 = vadd.f32 0.0, %v1880
      %v1882 = vpop.f32.mrb[0].mxu0
      %v1883 = vadd.f32 0.0, %v1882
      %v1884 = vpop.f32.mrb[0].mxu0
      %v1885 = vpop.f32.mrb[0].mxu0
      %1886 = vdwg.mxu0
      %1887 = vmatprep.subr.bf16.mxu0 %v1832
      %1888 = vmatpush1.bf16.msra.mxu0 %v1829
      %1889 = vmatprep.subr.bf16.mxu0 0
      %1890 = vmatpush1.bf16.msra.mxu0 0
      %1891 = vmatprep.subr.bf16.mxu0 0
      %1892 = vmatpush1.bf16.msra.mxu0 0
      %1893 = vmatprep.subr.bf16.mxu0 0
      %1894 = vmatpush1.bf16.msra.mxu0 0
      %1895 = vmatprep.subr.bf16.mxu0 0
      %1896 = vmatpush1.bf16.msra.mxu0 0
      %1897 = vmatprep.subr.bf16.mxu0 0
      %1898 = vmatpush1.bf16.msra.mxu0 0
      %1899 = vmatprep.subr.bf16.mxu0 0
      %1900 = vmatpush1.bf16.msra.mxu0 0
      %1901 = vmatprep.subr.bf16.mxu0 0
      %1902 = vmatpush1.bf16.msra.mxu0 0
      %1903 = vmatprep.subr.bf16.mxu0 0
      %1904 = vmatpush1.bf16.msra.mxu0 0
      %1905 = vmatprep.subr.bf16.mxu0 0
      %1906 = vmatpush1.bf16.msra.mxu0 0
      %1907 = vmatprep.subr.bf16.mxu0 0
      %1908 = vmatpush1.bf16.msra.mxu0 0
      %1909 = vmatprep.subr.bf16.mxu0 0
      %1910 = vmatpush1.bf16.msra.mxu0 0
      %1911 = vmatprep.subr.bf16.mxu0 0
      %1912 = vmatpush1.bf16.msra.mxu0 0
      %1913 = vmatprep.subr.bf16.mxu0 0
      %1914 = vmatpush1.bf16.msra.mxu0 0
      %1915 = vmatprep.subr.bf16.mxu0 0
      %1916 = vmatpush1.bf16.msra.mxu0 0
      %1917 = vmatprep.subr.bf16.mxu0 0
      %1918 = vmatpush1.bf16.msra.mxu0 0
      %1919 = vmatprep.mubr.bf16.mxu0 0
      %1920 = vmatmul.mubr.bf16.gmra.mrb[0].mxu0 %v1820
      %v1921 = vpop.f32.mrb[0].mxu0
      %v1922 = vadd.f32 0.0, %v1921
      %v1923 = vpop.f32.mrb[0].mxu0
      %v1924 = vadd.f32 0.0, %v1923
      %v1925 = vpop.f32.mrb[0].mxu0
      %v1926 = vpop.f32.mrb[0].mxu0
      %1927 = vdwg.mxu0
      %1928 = vmatprep.subr.bf16.mxu0 %v1838
      %1929 = vmatpush1.bf16.msra.mxu0 %v1835
      %1930 = vmatprep.subr.bf16.mxu0 0
      %1931 = vmatpush1.bf16.msra.mxu0 0
      %1932 = vmatprep.subr.bf16.mxu0 0
      %1933 = vmatpush1.bf16.msra.mxu0 0
      %1934 = vmatprep.subr.bf16.mxu0 0
      %1935 = vmatpush1.bf16.msra.mxu0 0
      %1936 = vmatprep.subr.bf16.mxu0 0
      %1937 = vmatpush1.bf16.msra.mxu0 0
      %1938 = vmatprep.subr.bf16.mxu0 0
      %1939 = vmatpush1.bf16.msra.mxu0 0
      %1940 = vmatprep.subr.bf16.mxu0 0
      %1941 = vmatpush1.bf16.msra.mxu0 0
      %1942 = vmatprep.subr.bf16.mxu0 0
      %1943 = vmatpush1.bf16.msra.mxu0 0
      %1944 = vmatprep.subr.bf16.mxu0 0
      %1945 = vmatpush1.bf16.msra.mxu0 0
      %1946 = vmatprep.subr.bf16.mxu0 0
      %1947 = vmatpush1.bf16.msra.mxu0 0
      %1948 = vmatprep.subr.bf16.mxu0 0
      %1949 = vmatpush1.bf16.msra.mxu0 0
      %1950 = vmatprep.subr.bf16.mxu0 0
      %1951 = vmatpush1.bf16.msra.mxu0 0
      %1952 = vmatprep.subr.bf16.mxu0 0
      %1953 = vmatpush1.bf16.msra.mxu0 0
      %1954 = vmatprep.subr.bf16.mxu0 0
      %1955 = vmatpush1.bf16.msra.mxu0 0
      %1956 = vmatprep.subr.bf16.mxu0 0
      %1957 = vmatpush1.bf16.msra.mxu0 0
      %1958 = vmatprep.subr.bf16.mxu0 0
      %1959 = vmatpush1.bf16.msra.mxu0 0
      %1960 = vmatprep.mubr.bf16.mxu0 0
      %1961 = vmatmul.mubr.bf16.gmra.mrb[0].mxu0 %v1820
      %v1962 = vpop.f32.mrb[0].mxu0
      %v1963 = vadd.f32 0.0, %v1962
      %v1964 = vpop.f32.mrb[0].mxu0
      %v1965 = vadd.f32 0.0, %v1964
      %v1966 = vpop.f32.mrb[0].mxu0
      %v1967 = vpop.f32.mrb[0].mxu0
      %1968 = vdwg.mxu0
      %1969 = vmatprep.subr.bf16.mxu0 %v1844
      %1970 = vmatpush1.bf16.msra.mxu0 %v1841
      %1971 = vmatprep.subr.bf16.mxu0 0
      %1972 = vmatpush1.bf16.msra.mxu0 0
      %1973 = vmatprep.subr.bf16.mxu0 0
      %1974 = vmatpush1.bf16.msra.mxu0 0
      %1975 = vmatprep.subr.bf16.mxu0 0
      %1976 = vmatpush1.bf16.msra.mxu0 0
      %1977 = vmatprep.subr.bf16.mxu0 0
      %1978 = vmatpush1.bf16.msra.mxu0 0
      %1979 = vmatprep.subr.bf16.mxu0 0
      %1980 = vmatpush1.bf16.msra.mxu0 0
      %1981 = vmatprep.subr.bf16.mxu0 0
      %1982 = vmatpush1.bf16.msra.mxu0 0
      %1983 = vmatprep.subr.bf16.mxu0 0
      %1984 = vmatpush1.bf16.msra.mxu0 0
      %1985 = vmatprep.subr.bf16.mxu0 0
      %1986 = vmatpush1.bf16.msra.mxu0 0
      %1987 = vmatprep.subr.bf16.mxu0 0
      %1988 = vmatpush1.bf16.msra.mxu0 0
      %1989 = vmatprep.subr.bf16.mxu0 0
      %1990 = vmatpush1.bf16.msra.mxu0 0
      %1991 = vmatprep.subr.bf16.mxu0 0
      %1992 = vmatpush1.bf16.msra.mxu0 0
      %1993 = vmatprep.subr.bf16.mxu0 0
      %1994 = vmatpush1.bf16.msra.mxu0 0
      %1995 = vmatprep.subr.bf16.mxu0 0
      %1996 = vmatpush1.bf16.msra.mxu0 0
      %1997 = vmatprep.subr.bf16.mxu0 0
      %1998 = vmatpush1.bf16.msra.mxu0 0
      %1999 = vmatprep.subr.bf16.mxu0 0
      %2000 = vmatpush1.bf16.msra.mxu0 0
      %2001 = vmatprep.mubr.bf16.mxu0 0
      %2002 = vmatmul.mubr.bf16.gmra.mrb[0].mxu0 %v1820
      %v2003 = vpop.f32.mrb[0].mxu0
      %v2004 = vadd.f32 0.0, %v2003
      %v2005 = vpop.f32.mrb[0].mxu0
      %v2006 = vadd.f32 0.0, %v2005
      %v2007 = vpop.f32.mrb[0].mxu0
      %v2008 = vpop.f32.mrb[0].mxu0
      %2009 = vdwg.mxu0
      %v2010 = vadd.f32 %v1782, %v1881
      %v2011 = vadd.f32 %v1783, %v1883
      %v2012 = vadd.f32 %v1784, %v1922
      %v2013 = vadd.f32 %v1785, %v1924
      %v2014 = vadd.f32 %v1786, %v1963
      %v2015 = vadd.f32 %v1787, %v1965
      %v2016 = vadd.f32 %v1788, %v2004
      %v2017 = vadd.f32 %v1789, %v2006
      %s2018 = scalar_lea.vmem %s1, 32
      %v2019 = vld [vmem:[%s2018] sm:$0xf]
      %2020 = vrot.lane.b32.xlu0 %v230, 106
      %v2021 = vpop.permute.xlu0 %2020
      %2022 = vrot.lane.b32.xlu0 %v231, 106
      %v2023 = vpop.permute.xlu0 %2022
      %2024 = vrot.lane.b32.xlu0 %v232, 106
      %v2025 = vpop.permute.xlu0 %2024
      %2026 = vrot.lane.b32.xlu0 %v233, 106
      %v2027 = vpop.permute.xlu0 %2026
      %2028 = vrot.lane.b32.xlu0 %v234, 106
      %v2029 = vpop.permute.xlu0 %2028
      %2030 = vrot.lane.b32.xlu0 %v235, 106
      %v2031 = vpop.permute.xlu0 %2030
      %2032 = vrot.lane.b32.xlu0 %v236, 106
      %v2033 = vpop.permute.xlu0 %2032
      %2034 = vrot.lane.b32.xlu0 %v237, 106
      %v2035 = vpop.permute.xlu0 %2034
      %2036 = vrot.lane.b32.xlu0 %v238, 106
      %v2037 = vpop.permute.xlu0 %2036
      %vm2038 = vcmask 867328
      %v2039 = vsel %vm2038, %v2021, %v2023
      %v2040 = vsel %vm2038, %v2023, %v2025
      %v2041 = vsel %vm2038, %v2025, %v2027
      %v2042 = vsel %vm2038, %v2027, %v2029
      %v2043 = vsel %vm2038, %v2029, %v2031
      %v2044 = vsel %vm2038, %v2031, %v2033
      %v2045 = vsel %vm2038, %v2033, %v2035
      %v2046 = vsel %vm2038, %v2035, %v2037
      %v2048 = vsel %vm266, %v2019, 0
      %v2051 = vsel %vm270, %v2039, 0
      %v2054 = vsel %vm270, %v2040, 0
      %v2057 = vsel %vm270, %v2041, 0
      %v2060 = vsel %vm270, %v2042, 0
      %v2063 = vsel %vm270, %v2043, 0
      %v2066 = vsel %vm270, %v2044, 0
      %v2069 = vsel %vm270, %v2045, 0
      %v2072 = vsel %vm270, %v2046, 0
      %2074 = vmatprep.subr.bf16.mxu0 %v2054
      %2075 = vmatpush1.bf16.msra.mxu0 %v2051
      %2076 = vmatprep.subr.bf16.mxu0 0
      %2077 = vmatpush1.bf16.msra.mxu0 0
      %2078 = vmatprep.subr.bf16.mxu0 0
      %2079 = vmatpush1.bf16.msra.mxu0 0
      %2080 = vmatprep.subr.bf16.mxu0 0
      %2081 = vmatpush1.bf16.msra.mxu0 0
      %2082 = vmatprep.subr.bf16.mxu0 0
      %2083 = vmatpush1.bf16.msra.mxu0 0
      %2084 = vmatprep.subr.bf16.mxu0 0
      %2085 = vmatpush1.bf16.msra.mxu0 0
      %2086 = vmatprep.subr.bf16.mxu0 0
      %2087 = vmatpush1.bf16.msra.mxu0 0
      %2088 = vmatprep.subr.bf16.mxu0 0
      %2089 = vmatpush1.bf16.msra.mxu0 0
      %2090 = vmatprep.subr.bf16.mxu0 0
      %2091 = vmatpush1.bf16.msra.mxu0 0
      %2092 = vmatprep.subr.bf16.mxu0 0
      %2093 = vmatpush1.bf16.msra.mxu0 0
      %2094 = vmatprep.subr.bf16.mxu0 0
      %2095 = vmatpush1.bf16.msra.mxu0 0
      %2096 = vmatprep.subr.bf16.mxu0 0
      %2097 = vmatpush1.bf16.msra.mxu0 0
      %2098 = vmatprep.subr.bf16.mxu0 0
      %2099 = vmatpush1.bf16.msra.mxu0 0
      %2100 = vmatprep.subr.bf16.mxu0 0
      %2101 = vmatpush1.bf16.msra.mxu0 0
      %2102 = vmatprep.subr.bf16.mxu0 0
      %2103 = vmatpush1.bf16.msra.mxu0 0
      %2104 = vmatprep.subr.bf16.mxu0 0
      %2105 = vmatpush1.bf16.msra.mxu0 0
      %2106 = vmatprep.mubr.bf16.mxu0 0
      %2107 = vmatmul.mubr.bf16.gmra.mrb[0].mxu0 %v2048
      %v2108 = vpop.f32.mrb[0].mxu0
      %v2109 = vadd.f32 0.0, %v2108
      %v2110 = vpop.f32.mrb[0].mxu0
      %v2111 = vadd.f32 0.0, %v2110
      %v2112 = vpop.f32.mrb[0].mxu0
      %v2113 = vpop.f32.mrb[0].mxu0
      %2114 = vdwg.mxu0
      %2115 = vmatprep.subr.bf16.mxu0 %v2060
      %2116 = vmatpush1.bf16.msra.mxu0 %v2057
      %2117 = vmatprep.subr.bf16.mxu0 0
      %2118 = vmatpush1.bf16.msra.mxu0 0
      %2119 = vmatprep.subr.bf16.mxu0 0
      %2120 = vmatpush1.bf16.msra.mxu0 0
      %2121 = vmatprep.subr.bf16.mxu0 0
      %2122 = vmatpush1.bf16.msra.mxu0 0
      %2123 = vmatprep.subr.bf16.mxu0 0
      %2124 = vmatpush1.bf16.msra.mxu0 0
      %2125 = vmatprep.subr.bf16.mxu0 0
      %2126 = vmatpush1.bf16.msra.mxu0 0
      %2127 = vmatprep.subr.bf16.mxu0 0
      %2128 = vmatpush1.bf16.msra.mxu0 0
      %2129 = vmatprep.subr.bf16.mxu0 0
      %2130 = vmatpush1.bf16.msra.mxu0 0
      %2131 = vmatprep.subr.bf16.mxu0 0
      %2132 = vmatpush1.bf16.msra.mxu0 0
      %2133 = vmatprep.subr.bf16.mxu0 0
      %2134 = vmatpush1.bf16.msra.mxu0 0
      %2135 = vmatprep.subr.bf16.mxu0 0
      %2136 = vmatpush1.bf16.msra.mxu0 0
      %2137 = vmatprep.subr.bf16.mxu0 0
      %2138 = vmatpush1.bf16.msra.mxu0 0
      %2139 = vmatprep.subr.bf16.mxu0 0
      %2140 = vmatpush1.bf16.msra.mxu0 0
      %2141 = vmatprep.subr.bf16.mxu0 0
      %2142 = vmatpush1.bf16.msra.mxu0 0
      %2143 = vmatprep.subr.bf16.mxu0 0
      %2144 = vmatpush1.bf16.msra.mxu0 0
      %2145 = vmatprep.subr.bf16.mxu0 0
      %2146 = vmatpush1.bf16.msra.mxu0 0
      %2147 = vmatprep.mubr.bf16.mxu0 0
      %2148 = vmatmul.mubr.bf16.gmra.mrb[0].mxu0 %v2048
      %v2149 = vpop.f32.mrb[0].mxu0
      %v2150 = vadd.f32 0.0, %v2149
      %v2151 = vpop.f32.mrb[0].mxu0
      %v2152 = vadd.f32 0.0, %v2151
      %v2153 = vpop.f32.mrb[0].mxu0
      %v2154 = vpop.f32.mrb[0].mxu0
      %2155 = vdwg.mxu0
      %2156 = vmatprep.subr.bf16.mxu0 %v2066
      %2157 = vmatpush1.bf16.msra.mxu0 %v2063
      %2158 = vmatprep.subr.bf16.mxu0 0
      %2159 = vmatpush1.bf16.msra.mxu0 0
      %2160 = vmatprep.subr.bf16.mxu0 0
      %2161 = vmatpush1.bf16.msra.mxu0 0
      %2162 = vmatprep.subr.bf16.mxu0 0
      %2163 = vmatpush1.bf16.msra.mxu0 0
      %2164 = vmatprep.subr.bf16.mxu0 0
      %2165 = vmatpush1.bf16.msra.mxu0 0
      %2166 = vmatprep.subr.bf16.mxu0 0
      %2167 = vmatpush1.bf16.msra.mxu0 0
      %2168 = vmatprep.subr.bf16.mxu0 0
      %2169 = vmatpush1.bf16.msra.mxu0 0
      %2170 = vmatprep.subr.bf16.mxu0 0
      %2171 = vmatpush1.bf16.msra.mxu0 0
      %2172 = vmatprep.subr.bf16.mxu0 0
      %2173 = vmatpush1.bf16.msra.mxu0 0
      %2174 = vmatprep.subr.bf16.mxu0 0
      %2175 = vmatpush1.bf16.msra.mxu0 0
      %2176 = vmatprep.subr.bf16.mxu0 0
      %2177 = vmatpush1.bf16.msra.mxu0 0
      %2178 = vmatprep.subr.bf16.mxu0 0
      %2179 = vmatpush1.bf16.msra.mxu0 0
      %2180 = vmatprep.subr.bf16.mxu0 0
      %2181 = vmatpush1.bf16.msra.mxu0 0
      %2182 = vmatprep.subr.bf16.mxu0 0
      %2183 = vmatpush1.bf16.msra.mxu0 0
      %2184 = vmatprep.subr.bf16.mxu0 0
      %2185 = vmatpush1.bf16.msra.mxu0 0
      %2186 = vmatprep.subr.bf16.mxu0 0
      %2187 = vmatpush1.bf16.msra.mxu0 0
      %2188 = vmatprep.mubr.bf16.mxu0 0
      %2189 = vmatmul.mubr.bf16.gmra.mrb[0].mxu0 %v2048
      %v2190 = vpop.f32.mrb[0].mxu0
      %v2191 = vadd.f32 0.0, %v2190
      %v2192 = vpop.f32.mrb[0].mxu0
      %v2193 = vadd.f32 0.0, %v2192
      %v2194 = vpop.f32.mrb[0].mxu0
      %v2195 = vpop.f32.mrb[0].mxu0
      %2196 = vdwg.mxu0
      %2197 = vmatprep.subr.bf16.mxu0 %v2072
      %2198 = vmatpush1.bf16.msra.mxu0 %v2069
      %2199 = vmatprep.subr.bf16.mxu0 0
      %2200 = vmatpush1.bf16.msra.mxu0 0
      %2201 = vmatprep.subr.bf16.mxu0 0
      %2202 = vmatpush1.bf16.msra.mxu0 0
      %2203 = vmatprep.subr.bf16.mxu0 0
      %2204 = vmatpush1.bf16.msra.mxu0 0
      %2205 = vmatprep.subr.bf16.mxu0 0
      %2206 = vmatpush1.bf16.msra.mxu0 0
      %2207 = vmatprep.subr.bf16.mxu0 0
      %2208 = vmatpush1.bf16.msra.mxu0 0
      %2209 = vmatprep.subr.bf16.mxu0 0
      %2210 = vmatpush1.bf16.msra.mxu0 0
      %2211 = vmatprep.subr.bf16.mxu0 0
      %2212 = vmatpush1.bf16.msra.mxu0 0
      %2213 = vmatprep.subr.bf16.mxu0 0
      %2214 = vmatpush1.bf16.msra.mxu0 0
      %2215 = vmatprep.subr.bf16.mxu0 0
      %2216 = vmatpush1.bf16.msra.mxu0 0
      %2217 = vmatprep.subr.bf16.mxu0 0
      %2218 = vmatpush1.bf16.msra.mxu0 0
      %2219 = vmatprep.subr.bf16.mxu0 0
      %2220 = vmatpush1.bf16.msra.mxu0 0
      %2221 = vmatprep.subr.bf16.mxu0 0
      %2222 = vmatpush1.bf16.msra.mxu0 0
      %2223 = vmatprep.subr.bf16.mxu0 0
      %2224 = vmatpush1.bf16.msra.mxu0 0
      %2225 = vmatprep.subr.bf16.mxu0 0
      %2226 = vmatpush1.bf16.msra.mxu0 0
      %2227 = vmatprep.subr.bf16.mxu0 0
      %2228 = vmatpush1.bf16.msra.mxu0 0
      %2229 = vmatprep.mubr.bf16.mxu0 0
      %2230 = vmatmul.mubr.bf16.gmra.mrb[0].mxu0 %v2048
      %v2231 = vpop.f32.mrb[0].mxu0
      %v2232 = vadd.f32 0.0, %v2231
      %v2233 = vpop.f32.mrb[0].mxu0
      %v2234 = vadd.f32 0.0, %v2233
      %v2235 = vpop.f32.mrb[0].mxu0
      %v2236 = vpop.f32.mrb[0].mxu0
      %2237 = vdwg.mxu0
      %v2238 = vadd.f32 %v2010, %v2109
      %v2239 = vadd.f32 %v2011, %v2111
      %v2240 = vadd.f32 %v2012, %v2150
      %v2241 = vadd.f32 %v2013, %v2152
      %v2242 = vadd.f32 %v2014, %v2191
      %v2243 = vadd.f32 %v2015, %v2193
      %v2244 = vadd.f32 %v2016, %v2232
      %v2245 = vadd.f32 %v2017, %v2234
      %s2246 = scalar_lea.vmem %s1, 36
      %v2247 = vld [vmem:[%s2246] sm:$0xf]
      %2248 = vrot.lane.b32.xlu0 %v230, 28
      %v2249 = vpop.permute.xlu0 %2248
      %2250 = vrot.lane.b32.xlu0 %v231, 28
      %v2251 = vpop.permute.xlu0 %2250
      %2252 = vrot.lane.b32.xlu0 %v232, 28
      %v2253 = vpop.permute.xlu0 %2252
      %2254 = vrot.lane.b32.xlu0 %v233, 28
      %v2255 = vpop.permute.xlu0 %2254
      %2256 = vrot.lane.b32.xlu0 %v234, 28
      %v2257 = vpop.permute.xlu0 %2256
      %2258 = vrot.lane.b32.xlu0 %v235, 28
      %v2259 = vpop.permute.xlu0 %2258
      %2260 = vrot.lane.b32.xlu0 %v236, 28
      %v2261 = vpop.permute.xlu0 %2260
      %2262 = vrot.lane.b32.xlu0 %v237, 28
      %v2263 = vpop.permute.xlu0 %2262
      %2264 = vrot.lane.b32.xlu0 %v238, 28
      %v2265 = vpop.permute.xlu0 %2264
      %vm2266 = vcmask 228352
      %v2267 = vsel %vm2266, %v2249, %v2251
      %v2268 = vsel %vm2266, %v2251, %v2253
      %v2269 = vsel %vm2266, %v2253, %v2255
      %v2270 = vsel %vm2266, %v2255, %v2257
      %v2271 = vsel %vm2266, %v2257, %v2259
      %v2272 = vsel %vm2266, %v2259, %v2261
      %v2273 = vsel %vm2266, %v2261, %v2263
      %v2274 = vsel %vm2266, %v2263, %v2265
      %v2276 = vsel %vm266, %v2247, 0
      %v2279 = vsel %vm270, %v2267, 0
      %v2282 = vsel %vm270, %v2268, 0
      %v2285 = vsel %vm270, %v2269, 0
      %v2288 = vsel %vm270, %v2270, 0
      %v2291 = vsel %vm270, %v2271, 0
      %v2294 = vsel %vm270, %v2272, 0
      %v2297 = vsel %vm270, %v2273, 0
      %v2300 = vsel %vm270, %v2274, 0
      %2302 = vmatprep.subr.bf16.mxu0 %v2282
      %2303 = vmatpush1.bf16.msra.mxu0 %v2279
      %2304 = vmatprep.subr.bf16.mxu0 0
      %2305 = vmatpush1.bf16.msra.mxu0 0
      %2306 = vmatprep.subr.bf16.mxu0 0
      %2307 = vmatpush1.bf16.msra.mxu0 0
      %2308 = vmatprep.subr.bf16.mxu0 0
      %2309 = vmatpush1.bf16.msra.mxu0 0
      %2310 = vmatprep.subr.bf16.mxu0 0
      %2311 = vmatpush1.bf16.msra.mxu0 0
      %2312 = vmatprep.subr.bf16.mxu0 0
      %2313 = vmatpush1.bf16.msra.mxu0 0
      %2314 = vmatprep.subr.bf16.mxu0 0
      %2315 = vmatpush1.bf16.msra.mxu0 0
      %2316 = vmatprep.subr.bf16.mxu0 0
      %2317 = vmatpush1.bf16.msra.mxu0 0
      %2318 = vmatprep.subr.bf16.mxu0 0
      %2319 = vmatpush1.bf16.msra.mxu0 0
      %2320 = vmatprep.subr.bf16.mxu0 0
      %2321 = vmatpush1.bf16.msra.mxu0 0
      %2322 = vmatprep.subr.bf16.mxu0 0
      %2323 = vmatpush1.bf16.msra.mxu0 0
      %2324 = vmatprep.subr.bf16.mxu0 0
      %2325 = vmatpush1.bf16.msra.mxu0 0
      %2326 = vmatprep.subr.bf16.mxu0 0
      %2327 = vmatpush1.bf16.msra.mxu0 0
      %2328 = vmatprep.subr.bf16.mxu0 0
      %2329 = vmatpush1.bf16.msra.mxu0 0
      %2330 = vmatprep.subr.bf16.mxu0 0
      %2331 = vmatpush1.bf16.msra.mxu0 0
      %2332 = vmatprep.subr.bf16.mxu0 0
      %2333 = vmatpush1.bf16.msra.mxu0 0
      %2334 = vmatprep.mubr.bf16.mxu0 0
      %2335 = vmatmul.mubr.bf16.gmra.mrb[0].mxu0 %v2276
      %v2336 = vpop.f32.mrb[0].mxu0
      %v2337 = vadd.f32 0.0, %v2336
      %v2338 = vpop.f32.mrb[0].mxu0
      %v2339 = vadd.f32 0.0, %v2338
      %v2340 = vpop.f32.mrb[0].mxu0
      %v2341 = vpop.f32.mrb[0].mxu0
      %2342 = vdwg.mxu0
      %2343 = vmatprep.subr.bf16.mxu0 %v2288
      %2344 = vmatpush1.bf16.msra.mxu0 %v2285
      %2345 = vmatprep.subr.bf16.mxu0 0
      %2346 = vmatpush1.bf16.msra.mxu0 0
      %2347 = vmatprep.subr.bf16.mxu0 0
      %2348 = vmatpush1.bf16.msra.mxu0 0
      %2349 = vmatprep.subr.bf16.mxu0 0
      %2350 = vmatpush1.bf16.msra.mxu0 0
      %2351 = vmatprep.subr.bf16.mxu0 0
      %2352 = vmatpush1.bf16.msra.mxu0 0
      %2353 = vmatprep.subr.bf16.mxu0 0
      %2354 = vmatpush1.bf16.msra.mxu0 0
      %2355 = vmatprep.subr.bf16.mxu0 0
      %2356 = vmatpush1.bf16.msra.mxu0 0
      %2357 = vmatprep.subr.bf16.mxu0 0
      %2358 = vmatpush1.bf16.msra.mxu0 0
      %2359 = vmatprep.subr.bf16.mxu0 0
      %2360 = vmatpush1.bf16.msra.mxu0 0
      %2361 = vmatprep.subr.bf16.mxu0 0
      %2362 = vmatpush1.bf16.msra.mxu0 0
      %2363 = vmatprep.subr.bf16.mxu0 0
      %2364 = vmatpush1.bf16.msra.mxu0 0
      %2365 = vmatprep.subr.bf16.mxu0 0
      %2366 = vmatpush1.bf16.msra.mxu0 0
      %2367 = vmatprep.subr.bf16.mxu0 0
      %2368 = vmatpush1.bf16.msra.mxu0 0
      %2369 = vmatprep.subr.bf16.mxu0 0
      %2370 = vmatpush1.bf16.msra.mxu0 0
      %2371 = vmatprep.subr.bf16.mxu0 0
      %2372 = vmatpush1.bf16.msra.mxu0 0
      %2373 = vmatprep.subr.bf16.mxu0 0
      %2374 = vmatpush1.bf16.msra.mxu0 0
      %2375 = vmatprep.mubr.bf16.mxu0 0
      %2376 = vmatmul.mubr.bf16.gmra.mrb[0].mxu0 %v2276
      %v2377 = vpop.f32.mrb[0].mxu0
      %v2378 = vadd.f32 0.0, %v2377
      %v2379 = vpop.f32.mrb[0].mxu0
      %v2380 = vadd.f32 0.0, %v2379
      %v2381 = vpop.f32.mrb[0].mxu0
      %v2382 = vpop.f32.mrb[0].mxu0
      %2383 = vdwg.mxu0
      %2384 = vmatprep.subr.bf16.mxu0 %v2294
      %2385 = vmatpush1.bf16.msra.mxu0 %v2291
      %2386 = vmatprep.subr.bf16.mxu0 0
      %2387 = vmatpush1.bf16.msra.mxu0 0
      %2388 = vmatprep.subr.bf16.mxu0 0
      %2389 = vmatpush1.bf16.msra.mxu0 0
      %2390 = vmatprep.subr.bf16.mxu0 0
      %2391 = vmatpush1.bf16.msra.mxu0 0
      %2392 = vmatprep.subr.bf16.mxu0 0
      %2393 = vmatpush1.bf16.msra.mxu0 0
      %2394 = vmatprep.subr.bf16.mxu0 0
      %2395 = vmatpush1.bf16.msra.mxu0 0
      %2396 = vmatprep.subr.bf16.mxu0 0
      %2397 = vmatpush1.bf16.msra.mxu0 0
      %2398 = vmatprep.subr.bf16.mxu0 0
      %2399 = vmatpush1.bf16.msra.mxu0 0
      %2400 = vmatprep.subr.bf16.mxu0 0
      %2401 = vmatpush1.bf16.msra.mxu0 0
      %2402 = vmatprep.subr.bf16.mxu0 0
      %2403 = vmatpush1.bf16.msra.mxu0 0
      %2404 = vmatprep.subr.bf16.mxu0 0
      %2405 = vmatpush1.bf16.msra.mxu0 0
      %2406 = vmatprep.subr.bf16.mxu0 0
      %2407 = vmatpush1.bf16.msra.mxu0 0
      %2408 = vmatprep.subr.bf16.mxu0 0
      %2409 = vmatpush1.bf16.msra.mxu0 0
      %2410 = vmatprep.subr.bf16.mxu0 0
      %2411 = vmatpush1.bf16.msra.mxu0 0
      %2412 = vmatprep.subr.bf16.mxu0 0
      %2413 = vmatpush1.bf16.msra.mxu0 0
      %2414 = vmatprep.subr.bf16.mxu0 0
      %2415 = vmatpush1.bf16.msra.mxu0 0
      %2416 = vmatprep.mubr.bf16.mxu0 0
      %2417 = vmatmul.mubr.bf16.gmra.mrb[0].mxu0 %v2276
      %v2418 = vpop.f32.mrb[0].mxu0
      %v2419 = vadd.f32 0.0, %v2418
      %v2420 = vpop.f32.mrb[0].mxu0
      %v2421 = vadd.f32 0.0, %v2420
      %v2422 = vpop.f32.mrb[0].mxu0
      %v2423 = vpop.f32.mrb[0].mxu0
      %2424 = vdwg.mxu0
      %2425 = vmatprep.subr.bf16.mxu0 %v2300
      %2426 = vmatpush1.bf16.msra.mxu0 %v2297
      %2427 = vmatprep.subr.bf16.mxu0 0
      %2428 = vmatpush1.bf16.msra.mxu0 0
      %2429 = vmatprep.subr.bf16.mxu0 0
      %2430 = vmatpush1.bf16.msra.mxu0 0
      %2431 = vmatprep.subr.bf16.mxu0 0
      %2432 = vmatpush1.bf16.msra.mxu0 0
      %2433 = vmatprep.subr.bf16.mxu0 0
      %2434 = vmatpush1.bf16.msra.mxu0 0
      %2435 = vmatprep.subr.bf16.mxu0 0
      %2436 = vmatpush1.bf16.msra.mxu0 0
      %2437 = vmatprep.subr.bf16.mxu0 0
      %2438 = vmatpush1.bf16.msra.mxu0 0
      %2439 = vmatprep.subr.bf16.mxu0 0
      %2440 = vmatpush1.bf16.msra.mxu0 0
      %2441 = vmatprep.subr.bf16.mxu0 0
      %2442 = vmatpush1.bf16.msra.mxu0 0
      %2443 = vmatprep.subr.bf16.mxu0 0
      %2444 = vmatpush1.bf16.msra.mxu0 0
      %2445 = vmatprep.subr.bf16.mxu0 0
      %2446 = vmatpush1.bf16.msra.mxu0 0
      %2447 = vmatprep.subr.bf16.mxu0 0
      %2448 = vmatpush1.bf16.msra.mxu0 0
      %2449 = vmatprep.subr.bf16.mxu0 0
      %2450 = vmatpush1.bf16.msra.mxu0 0
      %2451 = vmatprep.subr.bf16.mxu0 0
      %2452 = vmatpush1.bf16.msra.mxu0 0
      %2453 = vmatprep.subr.bf16.mxu0 0
      %2454 = vmatpush1.bf16.msra.mxu0 0
      %2455 = vmatprep.subr.bf16.mxu0 0
      %2456 = vmatpush1.bf16.msra.mxu0 0
      %2457 = vmatprep.mubr.bf16.mxu0 0
      %2458 = vmatmul.mubr.bf16.gmra.mrb[0].mxu0 %v2276
      %v2459 = vpop.f32.mrb[0].mxu0
      %v2460 = vadd.f32 0.0, %v2459
      %v2461 = vpop.f32.mrb[0].mxu0
      %v2462 = vadd.f32 0.0, %v2461
      %v2463 = vpop.f32.mrb[0].mxu0
      %v2464 = vpop.f32.mrb[0].mxu0
      %2465 = vdwg.mxu0
      %v2466 = vadd.f32 %v2238, %v2337
      %v2467 = vadd.f32 %v2239, %v2339
      %v2468 = vadd.f32 %v2240, %v2378
      %v2469 = vadd.f32 %v2241, %v2380
      %v2470 = vadd.f32 %v2242, %v2419
      %v2471 = vadd.f32 %v2243, %v2421
      %v2472 = vadd.f32 %v2244, %v2460
      %v2473 = vadd.f32 %v2245, %v2462
      %s2474 = scalar_lea.vmem %s1, 40
      %v2475 = vld [vmem:[%s2474] sm:$0xf]
      %2476 = vrot.lane.b32.xlu0 %v230, 27
      %v2477 = vpop.permute.xlu0 %2476
      %2478 = vrot.lane.b32.xlu0 %v231, 27
      %v2479 = vpop.permute.xlu0 %2478
      %2480 = vrot.lane.b32.xlu0 %v232, 27
      %v2481 = vpop.permute.xlu0 %2480
      %2482 = vrot.lane.b32.xlu0 %v233, 27
      %v2483 = vpop.permute.xlu0 %2482
      %2484 = vrot.lane.b32.xlu0 %v234, 27
      %v2485 = vpop.permute.xlu0 %2484
      %2486 = vrot.lane.b32.xlu0 %v235, 27
      %v2487 = vpop.permute.xlu0 %2486
      %2488 = vrot.lane.b32.xlu0 %v236, 27
      %v2489 = vpop.permute.xlu0 %2488
      %2490 = vrot.lane.b32.xlu0 %v237, 27
      %v2491 = vpop.permute.xlu0 %2490
      %2492 = vrot.lane.b32.xlu0 %v238, 27
      %v2493 = vpop.permute.xlu0 %2492
      %vm2494 = vcmask 220160
      %v2495 = vsel %vm2494, %v2477, %v2479
      %v2496 = vsel %vm2494, %v2479, %v2481
      %v2497 = vsel %vm2494, %v2481, %v2483
      %v2498 = vsel %vm2494, %v2483, %v2485
      %v2499 = vsel %vm2494, %v2485, %v2487
      %v2500 = vsel %vm2494, %v2487, %v2489
      %v2501 = vsel %vm2494, %v2489, %v2491
      %v2502 = vsel %vm2494, %v2491, %v2493
      %v2504 = vsel %vm266, %v2475, 0
      %v2507 = vsel %vm270, %v2495, 0
      %v2510 = vsel %vm270, %v2496, 0
      %v2513 = vsel %vm270, %v2497, 0
      %v2516 = vsel %vm270, %v2498, 0
      %v2519 = vsel %vm270, %v2499, 0
      %v2522 = vsel %vm270, %v2500, 0
      %v2525 = vsel %vm270, %v2501, 0
      %v2528 = vsel %vm270, %v2502, 0
      %2530 = vmatprep.subr.bf16.mxu0 %v2510
      %2531 = vmatpush1.bf16.msra.mxu0 %v2507
      %2532 = vmatprep.subr.bf16.mxu0 0
      %2533 = vmatpush1.bf16.msra.mxu0 0
      %2534 = vmatprep.subr.bf16.mxu0 0
      %2535 = vmatpush1.bf16.msra.mxu0 0
      %2536 = vmatprep.subr.bf16.mxu0 0
      %2537 = vmatpush1.bf16.msra.mxu0 0
      %2538 = vmatprep.subr.bf16.mxu0 0
      %2539 = vmatpush1.bf16.msra.mxu0 0
      %2540 = vmatprep.subr.bf16.mxu0 0
      %2541 = vmatpush1.bf16.msra.mxu0 0
      %2542 = vmatprep.subr.bf16.mxu0 0
      %2543 = vmatpush1.bf16.msra.mxu0 0
      %2544 = vmatprep.subr.bf16.mxu0 0
      %2545 = vmatpush1.bf16.msra.mxu0 0
      %2546 = vmatprep.subr.bf16.mxu0 0
      %2547 = vmatpush1.bf16.msra.mxu0 0
      %2548 = vmatprep.subr.bf16.mxu0 0
      %2549 = vmatpush1.bf16.msra.mxu0 0
      %2550 = vmatprep.subr.bf16.mxu0 0
      %2551 = vmatpush1.bf16.msra.mxu0 0
      %2552 = vmatprep.subr.bf16.mxu0 0
      %2553 = vmatpush1.bf16.msra.mxu0 0
      %2554 = vmatprep.subr.bf16.mxu0 0
      %2555 = vmatpush1.bf16.msra.mxu0 0
      %2556 = vmatprep.subr.bf16.mxu0 0
      %2557 = vmatpush1.bf16.msra.mxu0 0
      %2558 = vmatprep.subr.bf16.mxu0 0
      %2559 = vmatpush1.bf16.msra.mxu0 0
      %2560 = vmatprep.subr.bf16.mxu0 0
      %2561 = vmatpush1.bf16.msra.mxu0 0
      %2562 = vmatprep.mubr.bf16.mxu0 0
      %2563 = vmatmul.mubr.bf16.gmra.mrb[0].mxu0 %v2504
      %v2564 = vpop.f32.mrb[0].mxu0
      %v2565 = vadd.f32 0.0, %v2564
      %v2566 = vpop.f32.mrb[0].mxu0
      %v2567 = vadd.f32 0.0, %v2566
      %v2568 = vpop.f32.mrb[0].mxu0
      %v2569 = vpop.f32.mrb[0].mxu0
      %2570 = vdwg.mxu0
      %2571 = vmatprep.subr.bf16.mxu0 %v2516
      %2572 = vmatpush1.bf16.msra.mxu0 %v2513
      %2573 = vmatprep.subr.bf16.mxu0 0
      %2574 = vmatpush1.bf16.msra.mxu0 0
      %2575 = vmatprep.subr.bf16.mxu0 0
      %2576 = vmatpush1.bf16.msra.mxu0 0
      %2577 = vmatprep.subr.bf16.mxu0 0
      %2578 = vmatpush1.bf16.msra.mxu0 0
      %2579 = vmatprep.subr.bf16.mxu0 0
      %2580 = vmatpush1.bf16.msra.mxu0 0
      %2581 = vmatprep.subr.bf16.mxu0 0
      %2582 = vmatpush1.bf16.msra.mxu0 0
      %2583 = vmatprep.subr.bf16.mxu0 0
      %2584 = vmatpush1.bf16.msra.mxu0 0
      %2585 = vmatprep.subr.bf16.mxu0 0
      %2586 = vmatpush1.bf16.msra.mxu0 0
      %2587 = vmatprep.subr.bf16.mxu0 0
      %2588 = vmatpush1.bf16.msra.mxu0 0
      %2589 = vmatprep.subr.bf16.mxu0 0
      %2590 = vmatpush1.bf16.msra.mxu0 0
      %2591 = vmatprep.subr.bf16.mxu0 0
      %2592 = vmatpush1.bf16.msra.mxu0 0
      %2593 = vmatprep.subr.bf16.mxu0 0
      %2594 = vmatpush1.bf16.msra.mxu0 0
      %2595 = vmatprep.subr.bf16.mxu0 0
      %2596 = vmatpush1.bf16.msra.mxu0 0
      %2597 = vmatprep.subr.bf16.mxu0 0
      %2598 = vmatpush1.bf16.msra.mxu0 0
      %2599 = vmatprep.subr.bf16.mxu0 0
      %2600 = vmatpush1.bf16.msra.mxu0 0
      %2601 = vmatprep.subr.bf16.mxu0 0
      %2602 = vmatpush1.bf16.msra.mxu0 0
      %2603 = vmatprep.mubr.bf16.mxu0 0
      %2604 = vmatmul.mubr.bf16.gmra.mrb[0].mxu0 %v2504
      %v2605 = vpop.f32.mrb[0].mxu0
      %v2606 = vadd.f32 0.0, %v2605
      %v2607 = vpop.f32.mrb[0].mxu0
      %v2608 = vadd.f32 0.0, %v2607
      %v2609 = vpop.f32.mrb[0].mxu0
      %v2610 = vpop.f32.mrb[0].mxu0
      %2611 = vdwg.mxu0
      %2612 = vmatprep.subr.bf16.mxu0 %v2522
      %2613 = vmatpush1.bf16.msra.mxu0 %v2519
      %2614 = vmatprep.subr.bf16.mxu0 0
      %2615 = vmatpush1.bf16.msra.mxu0 0
      %2616 = vmatprep.subr.bf16.mxu0 0
      %2617 = vmatpush1.bf16.msra.mxu0 0
      %2618 = vmatprep.subr.bf16.mxu0 0
      %2619 = vmatpush1.bf16.msra.mxu0 0
      %2620 = vmatprep.subr.bf16.mxu0 0
      %2621 = vmatpush1.bf16.msra.mxu0 0
      %2622 = vmatprep.subr.bf16.mxu0 0
      %2623 = vmatpush1.bf16.msra.mxu0 0
      %2624 = vmatprep.subr.bf16.mxu0 0
      %2625 = vmatpush1.bf16.msra.mxu0 0
      %2626 = vmatprep.subr.bf16.mxu0 0
      %2627 = vmatpush1.bf16.msra.mxu0 0
      %2628 = vmatprep.subr.bf16.mxu0 0
      %2629 = vmatpush1.bf16.msra.mxu0 0
      %2630 = vmatprep.subr.bf16.mxu0 0
      %2631 = vmatpush1.bf16.msra.mxu0 0
      %2632 = vmatprep.subr.bf16.mxu0 0
      %2633 = vmatpush1.bf16.msra.mxu0 0
      %2634 = vmatprep.subr.bf16.mxu0 0
      %2635 = vmatpush1.bf16.msra.mxu0 0
      %2636 = vmatprep.subr.bf16.mxu0 0
      %2637 = vmatpush1.bf16.msra.mxu0 0
      %2638 = vmatprep.subr.bf16.mxu0 0
      %2639 = vmatpush1.bf16.msra.mxu0 0
      %2640 = vmatprep.subr.bf16.mxu0 0
      %2641 = vmatpush1.bf16.msra.mxu0 0
      %2642 = vmatprep.subr.bf16.mxu0 0
      %2643 = vmatpush1.bf16.msra.mxu0 0
      %2644 = vmatprep.mubr.bf16.mxu0 0
      %2645 = vmatmul.mubr.bf16.gmra.mrb[0].mxu0 %v2504
      %v2646 = vpop.f32.mrb[0].mxu0
      %v2647 = vadd.f32 0.0, %v2646
      %v2648 = vpop.f32.mrb[0].mxu0
      %v2649 = vadd.f32 0.0, %v2648
      %v2650 = vpop.f32.mrb[0].mxu0
      %v2651 = vpop.f32.mrb[0].mxu0
      %2652 = vdwg.mxu0
      %2653 = vmatprep.subr.bf16.mxu0 %v2528
      %2654 = vmatpush1.bf16.msra.mxu0 %v2525
      %2655 = vmatprep.subr.bf16.mxu0 0
      %2656 = vmatpush1.bf16.msra.mxu0 0
      %2657 = vmatprep.subr.bf16.mxu0 0
      %2658 = vmatpush1.bf16.msra.mxu0 0
      %2659 = vmatprep.subr.bf16.mxu0 0
      %2660 = vmatpush1.bf16.msra.mxu0 0
      %2661 = vmatprep.subr.bf16.mxu0 0
      %2662 = vmatpush1.bf16.msra.mxu0 0
      %2663 = vmatprep.subr.bf16.mxu0 0
      %2664 = vmatpush1.bf16.msra.mxu0 0
      %2665 = vmatprep.subr.bf16.mxu0 0
      %2666 = vmatpush1.bf16.msra.mxu0 0
      %2667 = vmatprep.subr.bf16.mxu0 0
      %2668 = vmatpush1.bf16.msra.mxu0 0
      %2669 = vmatprep.subr.bf16.mxu0 0
      %2670 = vmatpush1.bf16.msra.mxu0 0
      %2671 = vmatprep.subr.bf16.mxu0 0
      %2672 = vmatpush1.bf16.msra.mxu0 0
      %2673 = vmatprep.subr.bf16.mxu0 0
      %2674 = vmatpush1.bf16.msra.mxu0 0
      %2675 = vmatprep.subr.bf16.mxu0 0
      %2676 = vmatpush1.bf16.msra.mxu0 0
      %2677 = vmatprep.subr.bf16.mxu0 0
      %2678 = vmatpush1.bf16.msra.mxu0 0
      %2679 = vmatprep.subr.bf16.mxu0 0
      %2680 = vmatpush1.bf16.msra.mxu0 0
      %2681 = vmatprep.subr.bf16.mxu0 0
      %2682 = vmatpush1.bf16.msra.mxu0 0
      %2683 = vmatprep.subr.bf16.mxu0 0
      %2684 = vmatpush1.bf16.msra.mxu0 0
      %2685 = vmatprep.mubr.bf16.mxu0 0
      %2686 = vmatmul.mubr.bf16.gmra.mrb[0].mxu0 %v2504
      %v2687 = vpop.f32.mrb[0].mxu0
      %v2688 = vadd.f32 0.0, %v2687
      %v2689 = vpop.f32.mrb[0].mxu0
      %v2690 = vadd.f32 0.0, %v2689
      %v2691 = vpop.f32.mrb[0].mxu0
      %v2692 = vpop.f32.mrb[0].mxu0
      %2693 = vdwg.mxu0
      %v2694 = vadd.f32 %v2466, %v2565
      %v2695 = vadd.f32 %v2467, %v2567
      %v2696 = vadd.f32 %v2468, %v2606
      %v2697 = vadd.f32 %v2469, %v2608
      %v2698 = vadd.f32 %v2470, %v2647
      %v2699 = vadd.f32 %v2471, %v2649
      %v2700 = vadd.f32 %v2472, %v2688
      %v2701 = vadd.f32 %v2473, %v2690
      %s2702 = scalar_lea.vmem %s1, 44
      %v2703 = vld [vmem:[%s2702] sm:$0xf]
      %2704 = vrot.lane.b32.xlu0 %v230, 26
      %v2705 = vpop.permute.xlu0 %2704
      %2706 = vrot.lane.b32.xlu0 %v231, 26
      %v2707 = vpop.permute.xlu0 %2706
      %2708 = vrot.lane.b32.xlu0 %v232, 26
      %v2709 = vpop.permute.xlu0 %2708
      %2710 = vrot.lane.b32.xlu0 %v233, 26
      %v2711 = vpop.permute.xlu0 %2710
      %2712 = vrot.lane.b32.xlu0 %v234, 26
      %v2713 = vpop.permute.xlu0 %2712
      %2714 = vrot.lane.b32.xlu0 %v235, 26
      %v2715 = vpop.permute.xlu0 %2714
      %2716 = vrot.lane.b32.xlu0 %v236, 26
      %v2717 = vpop.permute.xlu0 %2716
      %2718 = vrot.lane.b32.xlu0 %v237, 26
      %v2719 = vpop.permute.xlu0 %2718
      %2720 = vrot.lane.b32.xlu0 %v238, 26
      %v2721 = vpop.permute.xlu0 %2720
      %vm2722 = vcmask 211968
      %v2723 = vsel %vm2722, %v2705, %v2707
      %v2724 = vsel %vm2722, %v2707, %v2709
      %v2725 = vsel %vm2722, %v2709, %v2711
      %v2726 = vsel %vm2722, %v2711, %v2713
      %v2727 = vsel %vm2722, %v2713, %v2715
      %v2728 = vsel %vm2722, %v2715, %v2717
      %v2729 = vsel %vm2722, %v2717, %v2719
      %v2730 = vsel %vm2722, %v2719, %v2721
      %v2732 = vsel %vm266, %v2703, 0
      %v2735 = vsel %vm270, %v2723, 0
      %v2738 = vsel %vm270, %v2724, 0
      %v2741 = vsel %vm270, %v2725, 0
      %v2744 = vsel %vm270, %v2726, 0
      %v2747 = vsel %vm270, %v2727, 0
      %v2750 = vsel %vm270, %v2728, 0
      %v2753 = vsel %vm270, %v2729, 0
      %v2756 = vsel %vm270, %v2730, 0
      %2758 = vmatprep.subr.bf16.mxu0 %v2738
      %2759 = vmatpush1.bf16.msra.mxu0 %v2735
      %2760 = vmatprep.subr.bf16.mxu0 0
      %2761 = vmatpush1.bf16.msra.mxu0 0
      %2762 = vmatprep.subr.bf16.mxu0 0
      %2763 = vmatpush1.bf16.msra.mxu0 0
      %2764 = vmatprep.subr.bf16.mxu0 0
      %2765 = vmatpush1.bf16.msra.mxu0 0
      %2766 = vmatprep.subr.bf16.mxu0 0
      %2767 = vmatpush1.bf16.msra.mxu0 0
      %2768 = vmatprep.subr.bf16.mxu0 0
      %2769 = vmatpush1.bf16.msra.mxu0 0
      %2770 = vmatprep.subr.bf16.mxu0 0
      %2771 = vmatpush1.bf16.msra.mxu0 0
      %2772 = vmatprep.subr.bf16.mxu0 0
      %2773 = vmatpush1.bf16.msra.mxu0 0
      %2774 = vmatprep.subr.bf16.mxu0 0
      %2775 = vmatpush1.bf16.msra.mxu0 0
      %2776 = vmatprep.subr.bf16.mxu0 0
      %2777 = vmatpush1.bf16.msra.mxu0 0
      %2778 = vmatprep.subr.bf16.mxu0 0
      %2779 = vmatpush1.bf16.msra.mxu0 0
      %2780 = vmatprep.subr.bf16.mxu0 0
      %2781 = vmatpush1.bf16.msra.mxu0 0
      %2782 = vmatprep.subr.bf16.mxu0 0
      %2783 = vmatpush1.bf16.msra.mxu0 0
      %2784 = vmatprep.subr.bf16.mxu0 0
      %2785 = vmatpush1.bf16.msra.mxu0 0
      %2786 = vmatprep.subr.bf16.mxu0 0
      %2787 = vmatpush1.bf16.msra.mxu0 0
      %2788 = vmatprep.subr.bf16.mxu0 0
      %2789 = vmatpush1.bf16.msra.mxu0 0
      %2790 = vmatprep.mubr.bf16.mxu0 0
      %2791 = vmatmul.mubr.bf16.gmra.mrb[0].mxu0 %v2732
      %v2792 = vpop.f32.mrb[0].mxu0
      %v2793 = vadd.f32 0.0, %v2792
      %v2794 = vpop.f32.mrb[0].mxu0
      %v2795 = vadd.f32 0.0, %v2794
      %v2796 = vpop.f32.mrb[0].mxu0
      %v2797 = vpop.f32.mrb[0].mxu0
      %2798 = vdwg.mxu0
      %2799 = vmatprep.subr.bf16.mxu0 %v2744
      %2800 = vmatpush1.bf16.msra.mxu0 %v2741
      %2801 = vmatprep.subr.bf16.mxu0 0
      %2802 = vmatpush1.bf16.msra.mxu0 0
      %2803 = vmatprep.subr.bf16.mxu0 0
      %2804 = vmatpush1.bf16.msra.mxu0 0
      %2805 = vmatprep.subr.bf16.mxu0 0
      %2806 = vmatpush1.bf16.msra.mxu0 0
      %2807 = vmatprep.subr.bf16.mxu0 0
      %2808 = vmatpush1.bf16.msra.mxu0 0
      %2809 = vmatprep.subr.bf16.mxu0 0
      %2810 = vmatpush1.bf16.msra.mxu0 0
      %2811 = vmatprep.subr.bf16.mxu0 0
      %2812 = vmatpush1.bf16.msra.mxu0 0
      %2813 = vmatprep.subr.bf16.mxu0 0
      %2814 = vmatpush1.bf16.msra.mxu0 0
      %2815 = vmatprep.subr.bf16.mxu0 0
      %2816 = vmatpush1.bf16.msra.mxu0 0
      %2817 = vmatprep.subr.bf16.mxu0 0
      %2818 = vmatpush1.bf16.msra.mxu0 0
      %2819 = vmatprep.subr.bf16.mxu0 0
      %2820 = vmatpush1.bf16.msra.mxu0 0
      %2821 = vmatprep.subr.bf16.mxu0 0
      %2822 = vmatpush1.bf16.msra.mxu0 0
      %2823 = vmatprep.subr.bf16.mxu0 0
      %2824 = vmatpush1.bf16.msra.mxu0 0
      %2825 = vmatprep.subr.bf16.mxu0 0
      %2826 = vmatpush1.bf16.msra.mxu0 0
      %2827 = vmatprep.subr.bf16.mxu0 0
      %2828 = vmatpush1.bf16.msra.mxu0 0
      %2829 = vmatprep.subr.bf16.mxu0 0
      %2830 = vmatpush1.bf16.msra.mxu0 0
      %2831 = vmatprep.mubr.bf16.mxu0 0
      %2832 = vmatmul.mubr.bf16.gmra.mrb[0].mxu0 %v2732
      %v2833 = vpop.f32.mrb[0].mxu0
      %v2834 = vadd.f32 0.0, %v2833
      %v2835 = vpop.f32.mrb[0].mxu0
      %v2836 = vadd.f32 0.0, %v2835
      %v2837 = vpop.f32.mrb[0].mxu0
      %v2838 = vpop.f32.mrb[0].mxu0
      %2839 = vdwg.mxu0
      %2840 = vmatprep.subr.bf16.mxu0 %v2750
      %2841 = vmatpush1.bf16.msra.mxu0 %v2747
      %2842 = vmatprep.subr.bf16.mxu0 0
      %2843 = vmatpush1.bf16.msra.mxu0 0
      %2844 = vmatprep.subr.bf16.mxu0 0
      %2845 = vmatpush1.bf16.msra.mxu0 0
      %2846 = vmatprep.subr.bf16.mxu0 0
      %2847 = vmatpush1.bf16.msra.mxu0 0
      %2848 = vmatprep.subr.bf16.mxu0 0
      %2849 = vmatpush1.bf16.msra.mxu0 0
      %2850 = vmatprep.subr.bf16.mxu0 0
      %2851 = vmatpush1.bf16.msra.mxu0 0
      %2852 = vmatprep.subr.bf16.mxu0 0
      %2853 = vmatpush1.bf16.msra.mxu0 0
      %2854 = vmatprep.subr.bf16.mxu0 0
      %2855 = vmatpush1.bf16.msra.mxu0 0
      %2856 = vmatprep.subr.bf16.mxu0 0
      %2857 = vmatpush1.bf16.msra.mxu0 0
      %2858 = vmatprep.subr.bf16.mxu0 0
      %2859 = vmatpush1.bf16.msra.mxu0 0
      %2860 = vmatprep.subr.bf16.mxu0 0
      %2861 = vmatpush1.bf16.msra.mxu0 0
      %2862 = vmatprep.subr.bf16.mxu0 0
      %2863 = vmatpush1.bf16.msra.mxu0 0
      %2864 = vmatprep.subr.bf16.mxu0 0
      %2865 = vmatpush1.bf16.msra.mxu0 0
      %2866 = vmatprep.subr.bf16.mxu0 0
      %2867 = vmatpush1.bf16.msra.mxu0 0
      %2868 = vmatprep.subr.bf16.mxu0 0
      %2869 = vmatpush1.bf16.msra.mxu0 0
      %2870 = vmatprep.subr.bf16.mxu0 0
      %2871 = vmatpush1.bf16.msra.mxu0 0
      %2872 = vmatprep.mubr.bf16.mxu0 0
      %2873 = vmatmul.mubr.bf16.gmra.mrb[0].mxu0 %v2732
      %v2874 = vpop.f32.mrb[0].mxu0
      %v2875 = vadd.f32 0.0, %v2874
      %v2876 = vpop.f32.mrb[0].mxu0
      %v2877 = vadd.f32 0.0, %v2876
      %v2878 = vpop.f32.mrb[0].mxu0
      %v2879 = vpop.f32.mrb[0].mxu0
      %2880 = vdwg.mxu0
      %2881 = vmatprep.subr.bf16.mxu0 %v2756
      %2882 = vmatpush1.bf16.msra.mxu0 %v2753
      %2883 = vmatprep.subr.bf16.mxu0 0
      %2884 = vmatpush1.bf16.msra.mxu0 0
      %2885 = vmatprep.subr.bf16.mxu0 0
      %2886 = vmatpush1.bf16.msra.mxu0 0
      %2887 = vmatprep.subr.bf16.mxu0 0
      %2888 = vmatpush1.bf16.msra.mxu0 0
      %2889 = vmatprep.subr.bf16.mxu0 0
      %2890 = vmatpush1.bf16.msra.mxu0 0
      %2891 = vmatprep.subr.bf16.mxu0 0
      %2892 = vmatpush1.bf16.msra.mxu0 0
      %2893 = vmatprep.subr.bf16.mxu0 0
      %2894 = vmatpush1.bf16.msra.mxu0 0
      %2895 = vmatprep.subr.bf16.mxu0 0
      %2896 = vmatpush1.bf16.msra.mxu0 0
      %2897 = vmatprep.subr.bf16.mxu0 0
      %2898 = vmatpush1.bf16.msra.mxu0 0
      %2899 = vmatprep.subr.bf16.mxu0 0
      %2900 = vmatpush1.bf16.msra.mxu0 0
      %2901 = vmatprep.subr.bf16.mxu0 0
      %2902 = vmatpush1.bf16.msra.mxu0 0
      %2903 = vmatprep.subr.bf16.mxu0 0
      %2904 = vmatpush1.bf16.msra.mxu0 0
      %2905 = vmatprep.subr.bf16.mxu0 0
      %2906 = vmatpush1.bf16.msra.mxu0 0
      %2907 = vmatprep.subr.bf16.mxu0 0
      %2908 = vmatpush1.bf16.msra.mxu0 0
      %2909 = vmatprep.subr.bf16.mxu0 0
      %2910 = vmatpush1.bf16.msra.mxu0 0
      %2911 = vmatprep.subr.bf16.mxu0 0
      %2912 = vmatpush1.bf16.msra.mxu0 0
      %2913 = vmatprep.mubr.bf16.mxu0 0
      %2914 = vmatmul.mubr.bf16.gmra.mrb[0].mxu0 %v2732
      %v2915 = vpop.f32.mrb[0].mxu0
      %v2916 = vadd.f32 0.0, %v2915
      %v2917 = vpop.f32.mrb[0].mxu0
      %v2918 = vadd.f32 0.0, %v2917
      %v2919 = vpop.f32.mrb[0].mxu0
      %v2920 = vpop.f32.mrb[0].mxu0
      %2921 = vdwg.mxu0
      %v2922 = vadd.f32 %v2694, %v2793
      %v2923 = vadd.f32 %v2695, %v2795
      %v2924 = vadd.f32 %v2696, %v2834
      %v2925 = vadd.f32 %v2697, %v2836
      %v2926 = vadd.f32 %v2698, %v2875
      %v2927 = vadd.f32 %v2699, %v2877
      %v2928 = vadd.f32 %v2700, %v2916
      %v2929 = vadd.f32 %v2701, %v2918
      %s2930 = scalar_lea.vmem %s1, 48
      %v2931 = vld [vmem:[%s2930] sm:$0xf]
      %2932 = vrot.lane.b32.xlu0 %v230, 18
      %v2933 = vpop.permute.xlu0 %2932
      %2934 = vrot.lane.b32.xlu0 %v231, 18
      %v2935 = vpop.permute.xlu0 %2934
      %2936 = vrot.lane.b32.xlu0 %v232, 18
      %v2937 = vpop.permute.xlu0 %2936
      %2938 = vrot.lane.b32.xlu0 %v233, 18
      %v2939 = vpop.permute.xlu0 %2938
      %2940 = vrot.lane.b32.xlu0 %v234, 18
      %v2941 = vpop.permute.xlu0 %2940
      %2942 = vrot.lane.b32.xlu0 %v235, 18
      %v2943 = vpop.permute.xlu0 %2942
      %2944 = vrot.lane.b32.xlu0 %v236, 18
      %v2945 = vpop.permute.xlu0 %2944
      %2946 = vrot.lane.b32.xlu0 %v237, 18
      %v2947 = vpop.permute.xlu0 %2946
      %2948 = vrot.lane.b32.xlu0 %v238, 18
      %v2949 = vpop.permute.xlu0 %2948
      %vm2950 = vcmask 146432
      %v2951 = vsel %vm2950, %v2933, %v2935
      %v2952 = vsel %vm2950, %v2935, %v2937
      %v2953 = vsel %vm2950, %v2937, %v2939
      %v2954 = vsel %vm2950, %v2939, %v2941
      %v2955 = vsel %vm2950, %v2941, %v2943
      %v2956 = vsel %vm2950, %v2943, %v2945
      %v2957 = vsel %vm2950, %v2945, %v2947
      %v2958 = vsel %vm2950, %v2947, %v2949
      %v2960 = vsel %vm266, %v2931, 0
      %v2963 = vsel %vm270, %v2951, 0
      %v2966 = vsel %vm270, %v2952, 0
      %v2969 = vsel %vm270, %v2953, 0
      %v2972 = vsel %vm270, %v2954, 0
      %v2975 = vsel %vm270, %v2955, 0
      %v2978 = vsel %vm270, %v2956, 0
      %v2981 = vsel %vm270, %v2957, 0
      %v2984 = vsel %vm270, %v2958, 0
      %2986 = vmatprep.subr.bf16.mxu0 %v2966
      %2987 = vmatpush1.bf16.msra.mxu0 %v2963
      %2988 = vmatprep.subr.bf16.mxu0 0
      %2989 = vmatpush1.bf16.msra.mxu0 0
      %2990 = vmatprep.subr.bf16.mxu0 0
      %2991 = vmatpush1.bf16.msra.mxu0 0
      %2992 = vmatprep.subr.bf16.mxu0 0
      %2993 = vmatpush1.bf16.msra.mxu0 0
      %2994 = vmatprep.subr.bf16.mxu0 0
      %2995 = vmatpush1.bf16.msra.mxu0 0
      %2996 = vmatprep.subr.bf16.mxu0 0
      %2997 = vmatpush1.bf16.msra.mxu0 0
      %2998 = vmatprep.subr.bf16.mxu0 0
      %2999 = vmatpush1.bf16.msra.mxu0 0
      %3000 = vmatprep.subr.bf16.mxu0 0
      %3001 = vmatpush1.bf16.msra.mxu0 0
      %3002 = vmatprep.subr.bf16.mxu0 0
      %3003 = vmatpush1.bf16.msra.mxu0 0
      %3004 = vmatprep.subr.bf16.mxu0 0
      %3005 = vmatpush1.bf16.msra.mxu0 0
      %3006 = vmatprep.subr.bf16.mxu0 0
      %3007 = vmatpush1.bf16.msra.mxu0 0
      %3008 = vmatprep.subr.bf16.mxu0 0
      %3009 = vmatpush1.bf16.msra.mxu0 0
      %3010 = vmatprep.subr.bf16.mxu0 0
      %3011 = vmatpush1.bf16.msra.mxu0 0
      %3012 = vmatprep.subr.bf16.mxu0 0
      %3013 = vmatpush1.bf16.msra.mxu0 0
      %3014 = vmatprep.subr.bf16.mxu0 0
      %3015 = vmatpush1.bf16.msra.mxu0 0
      %3016 = vmatprep.subr.bf16.mxu0 0
      %3017 = vmatpush1.bf16.msra.mxu0 0
      %3018 = vmatprep.mubr.bf16.mxu0 0
      %3019 = vmatmul.mubr.bf16.gmra.mrb[0].mxu0 %v2960
      %v3020 = vpop.f32.mrb[0].mxu0
      %v3021 = vadd.f32 0.0, %v3020
      %v3022 = vpop.f32.mrb[0].mxu0
      %v3023 = vadd.f32 0.0, %v3022
      %v3024 = vpop.f32.mrb[0].mxu0
      %v3025 = vpop.f32.mrb[0].mxu0
      %3026 = vdwg.mxu0
      %3027 = vmatprep.subr.bf16.mxu0 %v2972
      %3028 = vmatpush1.bf16.msra.mxu0 %v2969
      %3029 = vmatprep.subr.bf16.mxu0 0
      %3030 = vmatpush1.bf16.msra.mxu0 0
      %3031 = vmatprep.subr.bf16.mxu0 0
      %3032 = vmatpush1.bf16.msra.mxu0 0
      %3033 = vmatprep.subr.bf16.mxu0 0
      %3034 = vmatpush1.bf16.msra.mxu0 0
      %3035 = vmatprep.subr.bf16.mxu0 0
      %3036 = vmatpush1.bf16.msra.mxu0 0
      %3037 = vmatprep.subr.bf16.mxu0 0
      %3038 = vmatpush1.bf16.msra.mxu0 0
      %3039 = vmatprep.subr.bf16.mxu0 0
      %3040 = vmatpush1.bf16.msra.mxu0 0
      %3041 = vmatprep.subr.bf16.mxu0 0
      %3042 = vmatpush1.bf16.msra.mxu0 0
      %3043 = vmatprep.subr.bf16.mxu0 0
      %3044 = vmatpush1.bf16.msra.mxu0 0
      %3045 = vmatprep.subr.bf16.mxu0 0
      %3046 = vmatpush1.bf16.msra.mxu0 0
      %3047 = vmatprep.subr.bf16.mxu0 0
      %3048 = vmatpush1.bf16.msra.mxu0 0
      %3049 = vmatprep.subr.bf16.mxu0 0
      %3050 = vmatpush1.bf16.msra.mxu0 0
      %3051 = vmatprep.subr.bf16.mxu0 0
      %3052 = vmatpush1.bf16.msra.mxu0 0
      %3053 = vmatprep.subr.bf16.mxu0 0
      %3054 = vmatpush1.bf16.msra.mxu0 0
      %3055 = vmatprep.subr.bf16.mxu0 0
      %3056 = vmatpush1.bf16.msra.mxu0 0
      %3057 = vmatprep.subr.bf16.mxu0 0
      %3058 = vmatpush1.bf16.msra.mxu0 0
      %3059 = vmatprep.mubr.bf16.mxu0 0
      %3060 = vmatmul.mubr.bf16.gmra.mrb[0].mxu0 %v2960
      %v3061 = vpop.f32.mrb[0].mxu0
      %v3062 = vadd.f32 0.0, %v3061
      %v3063 = vpop.f32.mrb[0].mxu0
      %v3064 = vadd.f32 0.0, %v3063
      %v3065 = vpop.f32.mrb[0].mxu0
      %v3066 = vpop.f32.mrb[0].mxu0
      %3067 = vdwg.mxu0
      %3068 = vmatprep.subr.bf16.mxu0 %v2978
      %3069 = vmatpush1.bf16.msra.mxu0 %v2975
      %3070 = vmatprep.subr.bf16.mxu0 0
      %3071 = vmatpush1.bf16.msra.mxu0 0
      %3072 = vmatprep.subr.bf16.mxu0 0
      %3073 = vmatpush1.bf16.msra.mxu0 0
      %3074 = vmatprep.subr.bf16.mxu0 0
      %3075 = vmatpush1.bf16.msra.mxu0 0
      %3076 = vmatprep.subr.bf16.mxu0 0
      %3077 = vmatpush1.bf16.msra.mxu0 0
      %3078 = vmatprep.subr.bf16.mxu0 0
      %3079 = vmatpush1.bf16.msra.mxu0 0
      %3080 = vmatprep.subr.bf16.mxu0 0
      %3081 = vmatpush1.bf16.msra.mxu0 0
      %3082 = vmatprep.subr.bf16.mxu0 0
      %3083 = vmatpush1.bf16.msra.mxu0 0
      %3084 = vmatprep.subr.bf16.mxu0 0
      %3085 = vmatpush1.bf16.msra.mxu0 0
      %3086 = vmatprep.subr.bf16.mxu0 0
      %3087 = vmatpush1.bf16.msra.mxu0 0
      %3088 = vmatprep.subr.bf16.mxu0 0
      %3089 = vmatpush1.bf16.msra.mxu0 0
      %3090 = vmatprep.subr.bf16.mxu0 0
      %3091 = vmatpush1.bf16.msra.mxu0 0
      %3092 = vmatprep.subr.bf16.mxu0 0
      %3093 = vmatpush1.bf16.msra.mxu0 0
      %3094 = vmatprep.subr.bf16.mxu0 0
      %3095 = vmatpush1.bf16.msra.mxu0 0
      %3096 = vmatprep.subr.bf16.mxu0 0
      %3097 = vmatpush1.bf16.msra.mxu0 0
      %3098 = vmatprep.subr.bf16.mxu0 0
      %3099 = vmatpush1.bf16.msra.mxu0 0
      %3100 = vmatprep.mubr.bf16.mxu0 0
      %3101 = vmatmul.mubr.bf16.gmra.mrb[0].mxu0 %v2960
      %v3102 = vpop.f32.mrb[0].mxu0
      %v3103 = vadd.f32 0.0, %v3102
      %v3104 = vpop.f32.mrb[0].mxu0
      %v3105 = vadd.f32 0.0, %v3104
      %v3106 = vpop.f32.mrb[0].mxu0
      %v3107 = vpop.f32.mrb[0].mxu0
      %3108 = vdwg.mxu0
      %3109 = vmatprep.subr.bf16.mxu0 %v2984
      %3110 = vmatpush1.bf16.msra.mxu0 %v2981
      %3111 = vmatprep.subr.bf16.mxu0 0
      %3112 = vmatpush1.bf16.msra.mxu0 0
      %3113 = vmatprep.subr.bf16.mxu0 0
      %3114 = vmatpush1.bf16.msra.mxu0 0
      %3115 = vmatprep.subr.bf16.mxu0 0
      %3116 = vmatpush1.bf16.msra.mxu0 0
      %3117 = vmatprep.subr.bf16.mxu0 0
      %3118 = vmatpush1.bf16.msra.mxu0 0
      %3119 = vmatprep.subr.bf16.mxu0 0
      %3120 = vmatpush1.bf16.msra.mxu0 0
      %3121 = vmatprep.subr.bf16.mxu0 0
      %3122 = vmatpush1.bf16.msra.mxu0 0
      %3123 = vmatprep.subr.bf16.mxu0 0
      %3124 = vmatpush1.bf16.msra.mxu0 0
      %3125 = vmatprep.subr.bf16.mxu0 0
      %3126 = vmatpush1.bf16.msra.mxu0 0
      %3127 = vmatprep.subr.bf16.mxu0 0
      %3128 = vmatpush1.bf16.msra.mxu0 0
      %3129 = vmatprep.subr.bf16.mxu0 0
      %3130 = vmatpush1.bf16.msra.mxu0 0
      %3131 = vmatprep.subr.bf16.mxu0 0
      %3132 = vmatpush1.bf16.msra.mxu0 0
      %3133 = vmatprep.subr.bf16.mxu0 0
      %3134 = vmatpush1.bf16.msra.mxu0 0
      %3135 = vmatprep.subr.bf16.mxu0 0
      %3136 = vmatpush1.bf16.msra.mxu0 0
      %3137 = vmatprep.subr.bf16.mxu0 0
      %3138 = vmatpush1.bf16.msra.mxu0 0
      %3139 = vmatprep.subr.bf16.mxu0 0
      %3140 = vmatpush1.bf16.msra.mxu0 0
      %3141 = vmatprep.mubr.bf16.mxu0 0
      %3142 = vmatmul.mubr.bf16.gmra.mrb[0].mxu0 %v2960
      %v3143 = vpop.f32.mrb[0].mxu0
      %v3144 = vadd.f32 0.0, %v3143
      %v3145 = vpop.f32.mrb[0].mxu0
      %v3146 = vadd.f32 0.0, %v3145
      %v3147 = vpop.f32.mrb[0].mxu0
      %v3148 = vpop.f32.mrb[0].mxu0
      %3149 = vdwg.mxu0
      %v3150 = vadd.f32 %v2922, %v3021
      %v3151 = vadd.f32 %v2923, %v3023
      %v3152 = vadd.f32 %v2924, %v3062
      %v3153 = vadd.f32 %v2925, %v3064
      %v3154 = vadd.f32 %v2926, %v3103
      %v3155 = vadd.f32 %v2927, %v3105
      %v3156 = vadd.f32 %v2928, %v3144
      %v3157 = vadd.f32 %v2929, %v3146
      %s3158 = scalar_lea.vmem %s1, 52
      %v3159 = vld [vmem:[%s3158] sm:$0xf]
      %3160 = vrot.lane.b32.xlu0 %v230, 17
      %v3161 = vpop.permute.xlu0 %3160
      %3162 = vrot.lane.b32.xlu0 %v231, 17
      %v3163 = vpop.permute.xlu0 %3162
      %3164 = vrot.lane.b32.xlu0 %v232, 17
      %v3165 = vpop.permute.xlu0 %3164
      %3166 = vrot.lane.b32.xlu0 %v233, 17
      %v3167 = vpop.permute.xlu0 %3166
      %3168 = vrot.lane.b32.xlu0 %v234, 17
      %v3169 = vpop.permute.xlu0 %3168
      %3170 = vrot.lane.b32.xlu0 %v235, 17
      %v3171 = vpop.permute.xlu0 %3170
      %3172 = vrot.lane.b32.xlu0 %v236, 17
      %v3173 = vpop.permute.xlu0 %3172
      %3174 = vrot.lane.b32.xlu0 %v237, 17
      %v3175 = vpop.permute.xlu0 %3174
      %3176 = vrot.lane.b32.xlu0 %v238, 17
      %v3177 = vpop.permute.xlu0 %3176
      %vm3178 = vcmask 138240
      %v3179 = vsel %vm3178, %v3161, %v3163
      %v3180 = vsel %vm3178, %v3163, %v3165
      %v3181 = vsel %vm3178, %v3165, %v3167
      %v3182 = vsel %vm3178, %v3167, %v3169
      %v3183 = vsel %vm3178, %v3169, %v3171
      %v3184 = vsel %vm3178, %v3171, %v3173
      %v3185 = vsel %vm3178, %v3173, %v3175
      %v3186 = vsel %vm3178, %v3175, %v3177
      %v3188 = vsel %vm266, %v3159, 0
      %v3191 = vsel %vm270, %v3179, 0
      %v3194 = vsel %vm270, %v3180, 0
      %v3197 = vsel %vm270, %v3181, 0
      %v3200 = vsel %vm270, %v3182, 0
      %v3203 = vsel %vm270, %v3183, 0
      %v3206 = vsel %vm270, %v3184, 0
      %v3209 = vsel %vm270, %v3185, 0
      %v3212 = vsel %vm270, %v3186, 0
      %3214 = vmatprep.subr.bf16.mxu0 %v3194
      %3215 = vmatpush1.bf16.msra.mxu0 %v3191
      %3216 = vmatprep.subr.bf16.mxu0 0
      %3217 = vmatpush1.bf16.msra.mxu0 0
      %3218 = vmatprep.subr.bf16.mxu0 0
      %3219 = vmatpush1.bf16.msra.mxu0 0
      %3220 = vmatprep.subr.bf16.mxu0 0
      %3221 = vmatpush1.bf16.msra.mxu0 0
      %3222 = vmatprep.subr.bf16.mxu0 0
      %3223 = vmatpush1.bf16.msra.mxu0 0
      %3224 = vmatprep.subr.bf16.mxu0 0
      %3225 = vmatpush1.bf16.msra.mxu0 0
      %3226 = vmatprep.subr.bf16.mxu0 0
      %3227 = vmatpush1.bf16.msra.mxu0 0
      %3228 = vmatprep.subr.bf16.mxu0 0
      %3229 = vmatpush1.bf16.msra.mxu0 0
      %3230 = vmatprep.subr.bf16.mxu0 0
      %3231 = vmatpush1.bf16.msra.mxu0 0
      %3232 = vmatprep.subr.bf16.mxu0 0
      %3233 = vmatpush1.bf16.msra.mxu0 0
      %3234 = vmatprep.subr.bf16.mxu0 0
      %3235 = vmatpush1.bf16.msra.mxu0 0
      %3236 = vmatprep.subr.bf16.mxu0 0
      %3237 = vmatpush1.bf16.msra.mxu0 0
      %3238 = vmatprep.subr.bf16.mxu0 0
      %3239 = vmatpush1.bf16.msra.mxu0 0
      %3240 = vmatprep.subr.bf16.mxu0 0
      %3241 = vmatpush1.bf16.msra.mxu0 0
      %3242 = vmatprep.subr.bf16.mxu0 0
      %3243 = vmatpush1.bf16.msra.mxu0 0
      %3244 = vmatprep.subr.bf16.mxu0 0
      %3245 = vmatpush1.bf16.msra.mxu0 0
      %3246 = vmatprep.mubr.bf16.mxu0 0
      %3247 = vmatmul.mubr.bf16.gmra.mrb[0].mxu0 %v3188
      %v3248 = vpop.f32.mrb[0].mxu0
      %v3249 = vadd.f32 0.0, %v3248
      %v3250 = vpop.f32.mrb[0].mxu0
      %v3251 = vadd.f32 0.0, %v3250
      %v3252 = vpop.f32.mrb[0].mxu0
      %v3253 = vpop.f32.mrb[0].mxu0
      %3254 = vdwg.mxu0
      %3255 = vmatprep.subr.bf16.mxu0 %v3200
      %3256 = vmatpush1.bf16.msra.mxu0 %v3197
      %3257 = vmatprep.subr.bf16.mxu0 0
      %3258 = vmatpush1.bf16.msra.mxu0 0
      %3259 = vmatprep.subr.bf16.mxu0 0
      %3260 = vmatpush1.bf16.msra.mxu0 0
      %3261 = vmatprep.subr.bf16.mxu0 0
      %3262 = vmatpush1.bf16.msra.mxu0 0
      %3263 = vmatprep.subr.bf16.mxu0 0
      %3264 = vmatpush1.bf16.msra.mxu0 0
      %3265 = vmatprep.subr.bf16.mxu0 0
      %3266 = vmatpush1.bf16.msra.mxu0 0
      %3267 = vmatprep.subr.bf16.mxu0 0
      %3268 = vmatpush1.bf16.msra.mxu0 0
      %3269 = vmatprep.subr.bf16.mxu0 0
      %3270 = vmatpush1.bf16.msra.mxu0 0
      %3271 = vmatprep.subr.bf16.mxu0 0
      %3272 = vmatpush1.bf16.msra.mxu0 0
      %3273 = vmatprep.subr.bf16.mxu0 0
      %3274 = vmatpush1.bf16.msra.mxu0 0
      %3275 = vmatprep.subr.bf16.mxu0 0
      %3276 = vmatpush1.bf16.msra.mxu0 0
      %3277 = vmatprep.subr.bf16.mxu0 0
      %3278 = vmatpush1.bf16.msra.mxu0 0
      %3279 = vmatprep.subr.bf16.mxu0 0
      %3280 = vmatpush1.bf16.msra.mxu0 0
      %3281 = vmatprep.subr.bf16.mxu0 0
      %3282 = vmatpush1.bf16.msra.mxu0 0
      %3283 = vmatprep.subr.bf16.mxu0 0
      %3284 = vmatpush1.bf16.msra.mxu0 0
      %3285 = vmatprep.subr.bf16.mxu0 0
      %3286 = vmatpush1.bf16.msra.mxu0 0
      %3287 = vmatprep.mubr.bf16.mxu0 0
      %3288 = vmatmul.mubr.bf16.gmra.mrb[0].mxu0 %v3188
      %v3289 = vpop.f32.mrb[0].mxu0
      %v3290 = vadd.f32 0.0, %v3289
      %v3291 = vpop.f32.mrb[0].mxu0
      %v3292 = vadd.f32 0.0, %v3291
      %v3293 = vpop.f32.mrb[0].mxu0
      %v3294 = vpop.f32.mrb[0].mxu0
      %3295 = vdwg.mxu0
      %3296 = vmatprep.subr.bf16.mxu0 %v3206
      %3297 = vmatpush1.bf16.msra.mxu0 %v3203
      %3298 = vmatprep.subr.bf16.mxu0 0
      %3299 = vmatpush1.bf16.msra.mxu0 0
      %3300 = vmatprep.subr.bf16.mxu0 0
      %3301 = vmatpush1.bf16.msra.mxu0 0
      %3302 = vmatprep.subr.bf16.mxu0 0
      %3303 = vmatpush1.bf16.msra.mxu0 0
      %3304 = vmatprep.subr.bf16.mxu0 0
      %3305 = vmatpush1.bf16.msra.mxu0 0
      %3306 = vmatprep.subr.bf16.mxu0 0
      %3307 = vmatpush1.bf16.msra.mxu0 0
      %3308 = vmatprep.subr.bf16.mxu0 0
      %3309 = vmatpush1.bf16.msra.mxu0 0
      %3310 = vmatprep.subr.bf16.mxu0 0
      %3311 = vmatpush1.bf16.msra.mxu0 0
      %3312 = vmatprep.subr.bf16.mxu0 0
      %3313 = vmatpush1.bf16.msra.mxu0 0
      %3314 = vmatprep.subr.bf16.mxu0 0
      %3315 = vmatpush1.bf16.msra.mxu0 0
      %3316 = vmatprep.subr.bf16.mxu0 0
      %3317 = vmatpush1.bf16.msra.mxu0 0
      %3318 = vmatprep.subr.bf16.mxu0 0
      %3319 = vmatpush1.bf16.msra.mxu0 0
      %3320 = vmatprep.subr.bf16.mxu0 0
      %3321 = vmatpush1.bf16.msra.mxu0 0
      %3322 = vmatprep.subr.bf16.mxu0 0
      %3323 = vmatpush1.bf16.msra.mxu0 0
      %3324 = vmatprep.subr.bf16.mxu0 0
      %3325 = vmatpush1.bf16.msra.mxu0 0
      %3326 = vmatprep.subr.bf16.mxu0 0
      %3327 = vmatpush1.bf16.msra.mxu0 0
      %3328 = vmatprep.mubr.bf16.mxu0 0
      %3329 = vmatmul.mubr.bf16.gmra.mrb[0].mxu0 %v3188
      %v3330 = vpop.f32.mrb[0].mxu0
      %v3331 = vadd.f32 0.0, %v3330
      %v3332 = vpop.f32.mrb[0].mxu0
      %v3333 = vadd.f32 0.0, %v3332
      %v3334 = vpop.f32.mrb[0].mxu0
      %v3335 = vpop.f32.mrb[0].mxu0
      %3336 = vdwg.mxu0
      %3337 = vmatprep.subr.bf16.mxu0 %v3212
      %3338 = vmatpush1.bf16.msra.mxu0 %v3209
      %3339 = vmatprep.subr.bf16.mxu0 0
      %3340 = vmatpush1.bf16.msra.mxu0 0
      %3341 = vmatprep.subr.bf16.mxu0 0
      %3342 = vmatpush1.bf16.msra.mxu0 0
      %3343 = vmatprep.subr.bf16.mxu0 0
      %3344 = vmatpush1.bf16.msra.mxu0 0
      %3345 = vmatprep.subr.bf16.mxu0 0
      %3346 = vmatpush1.bf16.msra.mxu0 0
      %3347 = vmatprep.subr.bf16.mxu0 0
      %3348 = vmatpush1.bf16.msra.mxu0 0
      %3349 = vmatprep.subr.bf16.mxu0 0
      %3350 = vmatpush1.bf16.msra.mxu0 0
      %3351 = vmatprep.subr.bf16.mxu0 0
      %3352 = vmatpush1.bf16.msra.mxu0 0
      %3353 = vmatprep.subr.bf16.mxu0 0
      %3354 = vmatpush1.bf16.msra.mxu0 0
      %3355 = vmatprep.subr.bf16.mxu0 0
      %3356 = vmatpush1.bf16.msra.mxu0 0
      %3357 = vmatprep.subr.bf16.mxu0 0
      %3358 = vmatpush1.bf16.msra.mxu0 0
      %3359 = vmatprep.subr.bf16.mxu0 0
      %3360 = vmatpush1.bf16.msra.mxu0 0
      %3361 = vmatprep.subr.bf16.mxu0 0
      %3362 = vmatpush1.bf16.msra.mxu0 0
      %3363 = vmatprep.subr.bf16.mxu0 0
      %3364 = vmatpush1.bf16.msra.mxu0 0
      %3365 = vmatprep.subr.bf16.mxu0 0
      %3366 = vmatpush1.bf16.msra.mxu0 0
      %3367 = vmatprep.subr.bf16.mxu0 0
      %3368 = vmatpush1.bf16.msra.mxu0 0
      %3369 = vmatprep.mubr.bf16.mxu0 0
      %3370 = vmatmul.mubr.bf16.gmra.mrb[0].mxu0 %v3188
      %v3371 = vpop.f32.mrb[0].mxu0
      %v3372 = vadd.f32 0.0, %v3371
      %v3373 = vpop.f32.mrb[0].mxu0
      %v3374 = vadd.f32 0.0, %v3373
      %v3375 = vpop.f32.mrb[0].mxu0
      %v3376 = vpop.f32.mrb[0].mxu0
      %3377 = vdwg.mxu0
      %v3378 = vadd.f32 %v3150, %v3249
      %v3379 = vadd.f32 %v3151, %v3251
      %v3380 = vadd.f32 %v3152, %v3290
      %v3381 = vadd.f32 %v3153, %v3292
      %v3382 = vadd.f32 %v3154, %v3331
      %v3383 = vadd.f32 %v3155, %v3333
      %v3384 = vadd.f32 %v3156, %v3372
      %v3385 = vadd.f32 %v3157, %v3374
      %s3386 = scalar_lea.vmem %s1, 56
      %v3387 = vld [vmem:[%s3386] sm:$0xf]
      %3388 = vrot.lane.b32.xlu0 %v230, 16
      %v3389 = vpop.permute.xlu0 %3388
      %3390 = vrot.lane.b32.xlu0 %v231, 16
      %v3391 = vpop.permute.xlu0 %3390
      %3392 = vrot.lane.b32.xlu0 %v232, 16
      %v3393 = vpop.permute.xlu0 %3392
      %3394 = vrot.lane.b32.xlu0 %v233, 16
      %v3395 = vpop.permute.xlu0 %3394
      %3396 = vrot.lane.b32.xlu0 %v234, 16
      %v3397 = vpop.permute.xlu0 %3396
      %3398 = vrot.lane.b32.xlu0 %v235, 16
      %v3399 = vpop.permute.xlu0 %3398
      %3400 = vrot.lane.b32.xlu0 %v236, 16
      %v3401 = vpop.permute.xlu0 %3400
      %3402 = vrot.lane.b32.xlu0 %v237, 16
      %v3403 = vpop.permute.xlu0 %3402
      %3404 = vrot.lane.b32.xlu0 %v238, 16
      %v3405 = vpop.permute.xlu0 %3404
      %vm3406 = vcmask 130048
      %v3407 = vsel %vm3406, %v3389, %v3391
      %v3408 = vsel %vm3406, %v3391, %v3393
      %v3409 = vsel %vm3406, %v3393, %v3395
      %v3410 = vsel %vm3406, %v3395, %v3397
      %v3411 = vsel %vm3406, %v3397, %v3399
      %v3412 = vsel %vm3406, %v3399, %v3401
      %v3413 = vsel %vm3406, %v3401, %v3403
      %v3414 = vsel %vm3406, %v3403, %v3405
      %v3416 = vsel %vm266, %v3387, 0
      %v3419 = vsel %vm270, %v3407, 0
      %v3422 = vsel %vm270, %v3408, 0
      %v3425 = vsel %vm270, %v3409, 0
      %v3428 = vsel %vm270, %v3410, 0
      %v3431 = vsel %vm270, %v3411, 0
      %v3434 = vsel %vm270, %v3412, 0
      %v3437 = vsel %vm270, %v3413, 0
      %v3440 = vsel %vm270, %v3414, 0
      %3442 = vmatprep.subr.bf16.mxu0 %v3422
      %3443 = vmatpush1.bf16.msra.mxu0 %v3419
      %3444 = vmatprep.subr.bf16.mxu0 0
      %3445 = vmatpush1.bf16.msra.mxu0 0
      %3446 = vmatprep.subr.bf16.mxu0 0
      %3447 = vmatpush1.bf16.msra.mxu0 0
      %3448 = vmatprep.subr.bf16.mxu0 0
      %3449 = vmatpush1.bf16.msra.mxu0 0
      %3450 = vmatprep.subr.bf16.mxu0 0
      %3451 = vmatpush1.bf16.msra.mxu0 0
      %3452 = vmatprep.subr.bf16.mxu0 0
      %3453 = vmatpush1.bf16.msra.mxu0 0
      %3454 = vmatprep.subr.bf16.mxu0 0
      %3455 = vmatpush1.bf16.msra.mxu0 0
      %3456 = vmatprep.subr.bf16.mxu0 0
      %3457 = vmatpush1.bf16.msra.mxu0 0
      %3458 = vmatprep.subr.bf16.mxu0 0
      %3459 = vmatpush1.bf16.msra.mxu0 0
      %3460 = vmatprep.subr.bf16.mxu0 0
      %3461 = vmatpush1.bf16.msra.mxu0 0
      %3462 = vmatprep.subr.bf16.mxu0 0
      %3463 = vmatpush1.bf16.msra.mxu0 0
      %3464 = vmatprep.subr.bf16.mxu0 0
      %3465 = vmatpush1.bf16.msra.mxu0 0
      %3466 = vmatprep.subr.bf16.mxu0 0
      %3467 = vmatpush1.bf16.msra.mxu0 0
      %3468 = vmatprep.subr.bf16.mxu0 0
      %3469 = vmatpush1.bf16.msra.mxu0 0
      %3470 = vmatprep.subr.bf16.mxu0 0
      %3471 = vmatpush1.bf16.msra.mxu0 0
      %3472 = vmatprep.subr.bf16.mxu0 0
      %3473 = vmatpush1.bf16.msra.mxu0 0
      %3474 = vmatprep.mubr.bf16.mxu0 0
      %3475 = vmatmul.mubr.bf16.gmra.mrb[0].mxu0 %v3416
      %v3476 = vpop.f32.mrb[0].mxu0
      %v3477 = vadd.f32 0.0, %v3476
      %v3478 = vpop.f32.mrb[0].mxu0
      %v3479 = vadd.f32 0.0, %v3478
      %v3480 = vpop.f32.mrb[0].mxu0
      %v3481 = vpop.f32.mrb[0].mxu0
      %3482 = vdwg.mxu0
      %3483 = vmatprep.subr.bf16.mxu0 %v3428
      %3484 = vmatpush1.bf16.msra.mxu0 %v3425
      %3485 = vmatprep.subr.bf16.mxu0 0
      %3486 = vmatpush1.bf16.msra.mxu0 0
      %3487 = vmatprep.subr.bf16.mxu0 0
      %3488 = vmatpush1.bf16.msra.mxu0 0
      %3489 = vmatprep.subr.bf16.mxu0 0
      %3490 = vmatpush1.bf16.msra.mxu0 0
      %3491 = vmatprep.subr.bf16.mxu0 0
      %3492 = vmatpush1.bf16.msra.mxu0 0
      %3493 = vmatprep.subr.bf16.mxu0 0
      %3494 = vmatpush1.bf16.msra.mxu0 0
      %3495 = vmatprep.subr.bf16.mxu0 0
      %3496 = vmatpush1.bf16.msra.mxu0 0
      %3497 = vmatprep.subr.bf16.mxu0 0
      %3498 = vmatpush1.bf16.msra.mxu0 0
      %3499 = vmatprep.subr.bf16.mxu0 0
      %3500 = vmatpush1.bf16.msra.mxu0 0
      %3501 = vmatprep.subr.bf16.mxu0 0
      %3502 = vmatpush1.bf16.msra.mxu0 0
      %3503 = vmatprep.subr.bf16.mxu0 0
      %3504 = vmatpush1.bf16.msra.mxu0 0
      %3505 = vmatprep.subr.bf16.mxu0 0
      %3506 = vmatpush1.bf16.msra.mxu0 0
      %3507 = vmatprep.subr.bf16.mxu0 0
      %3508 = vmatpush1.bf16.msra.mxu0 0
      %3509 = vmatprep.subr.bf16.mxu0 0
      %3510 = vmatpush1.bf16.msra.mxu0 0
      %3511 = vmatprep.subr.bf16.mxu0 0
      %3512 = vmatpush1.bf16.msra.mxu0 0
      %3513 = vmatprep.subr.bf16.mxu0 0
      %3514 = vmatpush1.bf16.msra.mxu0 0
      %3515 = vmatprep.mubr.bf16.mxu0 0
      %3516 = vmatmul.mubr.bf16.gmra.mrb[0].mxu0 %v3416
      %v3517 = vpop.f32.mrb[0].mxu0
      %v3518 = vadd.f32 0.0, %v3517
      %v3519 = vpop.f32.mrb[0].mxu0
      %v3520 = vadd.f32 0.0, %v3519
      %v3521 = vpop.f32.mrb[0].mxu0
      %v3522 = vpop.f32.mrb[0].mxu0
      %3523 = vdwg.mxu0
      %3524 = vmatprep.subr.bf16.mxu0 %v3434
      %3525 = vmatpush1.bf16.msra.mxu0 %v3431
      %3526 = vmatprep.subr.bf16.mxu0 0
      %3527 = vmatpush1.bf16.msra.mxu0 0
      %3528 = vmatprep.subr.bf16.mxu0 0
      %3529 = vmatpush1.bf16.msra.mxu0 0
      %3530 = vmatprep.subr.bf16.mxu0 0
      %3531 = vmatpush1.bf16.msra.mxu0 0
      %3532 = vmatprep.subr.bf16.mxu0 0
      %3533 = vmatpush1.bf16.msra.mxu0 0
      %3534 = vmatprep.subr.bf16.mxu0 0
      %3535 = vmatpush1.bf16.msra.mxu0 0
      %3536 = vmatprep.subr.bf16.mxu0 0
      %3537 = vmatpush1.bf16.msra.mxu0 0
      %3538 = vmatprep.subr.bf16.mxu0 0
      %3539 = vmatpush1.bf16.msra.mxu0 0
      %3540 = vmatprep.subr.bf16.mxu0 0
      %3541 = vmatpush1.bf16.msra.mxu0 0
      %3542 = vmatprep.subr.bf16.mxu0 0
      %3543 = vmatpush1.bf16.msra.mxu0 0
      %3544 = vmatprep.subr.bf16.mxu0 0
      %3545 = vmatpush1.bf16.msra.mxu0 0
      %3546 = vmatprep.subr.bf16.mxu0 0
      %3547 = vmatpush1.bf16.msra.mxu0 0
      %3548 = vmatprep.subr.bf16.mxu0 0
      %3549 = vmatpush1.bf16.msra.mxu0 0
      %3550 = vmatprep.subr.bf16.mxu0 0
      %3551 = vmatpush1.bf16.msra.mxu0 0
      %3552 = vmatprep.subr.bf16.mxu0 0
      %3553 = vmatpush1.bf16.msra.mxu0 0
      %3554 = vmatprep.subr.bf16.mxu0 0
      %3555 = vmatpush1.bf16.msra.mxu0 0
      %3556 = vmatprep.mubr.bf16.mxu0 0
      %3557 = vmatmul.mubr.bf16.gmra.mrb[0].mxu0 %v3416
      %v3558 = vpop.f32.mrb[0].mxu0
      %v3559 = vadd.f32 0.0, %v3558
      %v3560 = vpop.f32.mrb[0].mxu0
      %v3561 = vadd.f32 0.0, %v3560
      %v3562 = vpop.f32.mrb[0].mxu0
      %v3563 = vpop.f32.mrb[0].mxu0
      %3564 = vdwg.mxu0
      %3565 = vmatprep.subr.bf16.mxu0 %v3440
      %3566 = vmatpush1.bf16.msra.mxu0 %v3437
      %3567 = vmatprep.subr.bf16.mxu0 0
      %3568 = vmatpush1.bf16.msra.mxu0 0
      %3569 = vmatprep.subr.bf16.mxu0 0
      %3570 = vmatpush1.bf16.msra.mxu0 0
      %3571 = vmatprep.subr.bf16.mxu0 0
      %3572 = vmatpush1.bf16.msra.mxu0 0
      %3573 = vmatprep.subr.bf16.mxu0 0
      %3574 = vmatpush1.bf16.msra.mxu0 0
      %3575 = vmatprep.subr.bf16.mxu0 0
      %3576 = vmatpush1.bf16.msra.mxu0 0
      %3577 = vmatprep.subr.bf16.mxu0 0
      %3578 = vmatpush1.bf16.msra.mxu0 0
      %3579 = vmatprep.subr.bf16.mxu0 0
      %3580 = vmatpush1.bf16.msra.mxu0 0
      %3581 = vmatprep.subr.bf16.mxu0 0
      %3582 = vmatpush1.bf16.msra.mxu0 0
      %3583 = vmatprep.subr.bf16.mxu0 0
      %3584 = vmatpush1.bf16.msra.mxu0 0
      %3585 = vmatprep.subr.bf16.mxu0 0
      %3586 = vmatpush1.bf16.msra.mxu0 0
      %3587 = vmatprep.subr.bf16.mxu0 0
      %3588 = vmatpush1.bf16.msra.mxu0 0
      %3589 = vmatprep.subr.bf16.mxu0 0
      %3590 = vmatpush1.bf16.msra.mxu0 0
      %3591 = vmatprep.subr.bf16.mxu0 0
      %3592 = vmatpush1.bf16.msra.mxu0 0
      %3593 = vmatprep.subr.bf16.mxu0 0
      %3594 = vmatpush1.bf16.msra.mxu0 0
      %3595 = vmatprep.subr.bf16.mxu0 0
      %3596 = vmatpush1.bf16.msra.mxu0 0
      %3597 = vmatprep.mubr.bf16.mxu0 0
      %3598 = vmatmul.mubr.bf16.gmra.mrb[0].mxu0 %v3416
      %v3599 = vpop.f32.mrb[0].mxu0
      %v3600 = vadd.f32 0.0, %v3599
      %v3601 = vpop.f32.mrb[0].mxu0
      %v3602 = vadd.f32 0.0, %v3601
      %v3603 = vpop.f32.mrb[0].mxu0
      %v3604 = vpop.f32.mrb[0].mxu0
      %3605 = vdwg.mxu0
      %v3606 = vadd.f32 %v3378, %v3477
      %v3607 = vadd.f32 %v3379, %v3479
      %v3608 = vadd.f32 %v3380, %v3518
      %v3609 = vadd.f32 %v3381, %v3520
      %v3610 = vadd.f32 %v3382, %v3559
      %v3611 = vadd.f32 %v3383, %v3561
      %v3612 = vadd.f32 %v3384, %v3600
      %v3613 = vadd.f32 %v3385, %v3602
      %s3614 = scalar_lea.vmem %s1, 60
      %v3615 = vld [vmem:[%s3614] sm:$0xf]
      %3616 = vrot.lane.b32.xlu0 %v230, 8
      %v3617 = vpop.permute.xlu0 %3616
      %3618 = vrot.lane.b32.xlu0 %v231, 8
      %v3619 = vpop.permute.xlu0 %3618
      %3620 = vrot.lane.b32.xlu0 %v232, 8
      %v3621 = vpop.permute.xlu0 %3620
      %3622 = vrot.lane.b32.xlu0 %v233, 8
      %v3623 = vpop.permute.xlu0 %3622
      %3624 = vrot.lane.b32.xlu0 %v234, 8
      %v3625 = vpop.permute.xlu0 %3624
      %3626 = vrot.lane.b32.xlu0 %v235, 8
      %v3627 = vpop.permute.xlu0 %3626
      %3628 = vrot.lane.b32.xlu0 %v236, 8
      %v3629 = vpop.permute.xlu0 %3628
      %3630 = vrot.lane.b32.xlu0 %v237, 8
      %v3631 = vpop.permute.xlu0 %3630
      %3632 = vrot.lane.b32.xlu0 %v238, 8
      %v3633 = vpop.permute.xlu0 %3632
      %vm3634 = vcmask 64512
      %v3635 = vsel %vm3634, %v3617, %v3619
      %v3636 = vsel %vm3634, %v3619, %v3621
      %v3637 = vsel %vm3634, %v3621, %v3623
      %v3638 = vsel %vm3634, %v3623, %v3625
      %v3639 = vsel %vm3634, %v3625, %v3627
      %v3640 = vsel %vm3634, %v3627, %v3629
      %v3641 = vsel %vm3634, %v3629, %v3631
      %v3642 = vsel %vm3634, %v3631, %v3633
      %v3644 = vsel %vm266, %v3615, 0
      %v3647 = vsel %vm270, %v3635, 0
      %v3650 = vsel %vm270, %v3636, 0
      %v3653 = vsel %vm270, %v3637, 0
      %v3656 = vsel %vm270, %v3638, 0
      %v3659 = vsel %vm270, %v3639, 0
      %v3662 = vsel %vm270, %v3640, 0
      %v3665 = vsel %vm270, %v3641, 0
      %v3668 = vsel %vm270, %v3642, 0
      %3670 = vmatprep.subr.bf16.mxu0 %v3650
      %3671 = vmatpush1.bf16.msra.mxu0 %v3647
      %3672 = vmatprep.subr.bf16.mxu0 0
      %3673 = vmatpush1.bf16.msra.mxu0 0
      %3674 = vmatprep.subr.bf16.mxu0 0
      %3675 = vmatpush1.bf16.msra.mxu0 0
      %3676 = vmatprep.subr.bf16.mxu0 0
      %3677 = vmatpush1.bf16.msra.mxu0 0
      %3678 = vmatprep.subr.bf16.mxu0 0
      %3679 = vmatpush1.bf16.msra.mxu0 0
      %3680 = vmatprep.subr.bf16.mxu0 0
      %3681 = vmatpush1.bf16.msra.mxu0 0
      %3682 = vmatprep.subr.bf16.mxu0 0
      %3683 = vmatpush1.bf16.msra.mxu0 0
      %3684 = vmatprep.subr.bf16.mxu0 0
      %3685 = vmatpush1.bf16.msra.mxu0 0
      %3686 = vmatprep.subr.bf16.mxu0 0
      %3687 = vmatpush1.bf16.msra.mxu0 0
      %3688 = vmatprep.subr.bf16.mxu0 0
      %3689 = vmatpush1.bf16.msra.mxu0 0
      %3690 = vmatprep.subr.bf16.mxu0 0
      %3691 = vmatpush1.bf16.msra.mxu0 0
      %3692 = vmatprep.subr.bf16.mxu0 0
      %3693 = vmatpush1.bf16.msra.mxu0 0
      %3694 = vmatprep.subr.bf16.mxu0 0
      %3695 = vmatpush1.bf16.msra.mxu0 0
      %3696 = vmatprep.subr.bf16.mxu0 0
      %3697 = vmatpush1.bf16.msra.mxu0 0
      %3698 = vmatprep.subr.bf16.mxu0 0
      %3699 = vmatpush1.bf16.msra.mxu0 0
      %3700 = vmatprep.subr.bf16.mxu0 0
      %3701 = vmatpush1.bf16.msra.mxu0 0
      %3702 = vmatprep.mubr.bf16.mxu0 0
      %3703 = vmatmul.mubr.bf16.gmra.mrb[0].mxu0 %v3644
      %v3704 = vpop.f32.mrb[0].mxu0
      %v3705 = vadd.f32 0.0, %v3704
      %v3706 = vpop.f32.mrb[0].mxu0
      %v3707 = vadd.f32 0.0, %v3706
      %v3708 = vpop.f32.mrb[0].mxu0
      %v3709 = vpop.f32.mrb[0].mxu0
      %3710 = vdwg.mxu0
      %3711 = vmatprep.subr.bf16.mxu0 %v3656
      %3712 = vmatpush1.bf16.msra.mxu0 %v3653
      %3713 = vmatprep.subr.bf16.mxu0 0
      %3714 = vmatpush1.bf16.msra.mxu0 0
      %3715 = vmatprep.subr.bf16.mxu0 0
      %3716 = vmatpush1.bf16.msra.mxu0 0
      %3717 = vmatprep.subr.bf16.mxu0 0
      %3718 = vmatpush1.bf16.msra.mxu0 0
      %3719 = vmatprep.subr.bf16.mxu0 0
      %3720 = vmatpush1.bf16.msra.mxu0 0
      %3721 = vmatprep.subr.bf16.mxu0 0
      %3722 = vmatpush1.bf16.msra.mxu0 0
      %3723 = vmatprep.subr.bf16.mxu0 0
      %3724 = vmatpush1.bf16.msra.mxu0 0
      %3725 = vmatprep.subr.bf16.mxu0 0
      %3726 = vmatpush1.bf16.msra.mxu0 0
      %3727 = vmatprep.subr.bf16.mxu0 0
      %3728 = vmatpush1.bf16.msra.mxu0 0
      %3729 = vmatprep.subr.bf16.mxu0 0
      %3730 = vmatpush1.bf16.msra.mxu0 0
      %3731 = vmatprep.subr.bf16.mxu0 0
      %3732 = vmatpush1.bf16.msra.mxu0 0
      %3733 = vmatprep.subr.bf16.mxu0 0
      %3734 = vmatpush1.bf16.msra.mxu0 0
      %3735 = vmatprep.subr.bf16.mxu0 0
      %3736 = vmatpush1.bf16.msra.mxu0 0
      %3737 = vmatprep.subr.bf16.mxu0 0
      %3738 = vmatpush1.bf16.msra.mxu0 0
      %3739 = vmatprep.subr.bf16.mxu0 0
      %3740 = vmatpush1.bf16.msra.mxu0 0
      %3741 = vmatprep.subr.bf16.mxu0 0
      %3742 = vmatpush1.bf16.msra.mxu0 0
      %3743 = vmatprep.mubr.bf16.mxu0 0
      %3744 = vmatmul.mubr.bf16.gmra.mrb[0].mxu0 %v3644
      %v3745 = vpop.f32.mrb[0].mxu0
      %v3746 = vadd.f32 0.0, %v3745
      %v3747 = vpop.f32.mrb[0].mxu0
      %v3748 = vadd.f32 0.0, %v3747
      %v3749 = vpop.f32.mrb[0].mxu0
      %v3750 = vpop.f32.mrb[0].mxu0
      %3751 = vdwg.mxu0
      %3752 = vmatprep.subr.bf16.mxu0 %v3662
      %3753 = vmatpush1.bf16.msra.mxu0 %v3659
      %3754 = vmatprep.subr.bf16.mxu0 0
      %3755 = vmatpush1.bf16.msra.mxu0 0
      %3756 = vmatprep.subr.bf16.mxu0 0
      %3757 = vmatpush1.bf16.msra.mxu0 0
      %3758 = vmatprep.subr.bf16.mxu0 0
      %3759 = vmatpush1.bf16.msra.mxu0 0
      %3760 = vmatprep.subr.bf16.mxu0 0
      %3761 = vmatpush1.bf16.msra.mxu0 0
      %3762 = vmatprep.subr.bf16.mxu0 0
      %3763 = vmatpush1.bf16.msra.mxu0 0
      %3764 = vmatprep.subr.bf16.mxu0 0
      %3765 = vmatpush1.bf16.msra.mxu0 0
      %3766 = vmatprep.subr.bf16.mxu0 0
      %3767 = vmatpush1.bf16.msra.mxu0 0
      %3768 = vmatprep.subr.bf16.mxu0 0
      %3769 = vmatpush1.bf16.msra.mxu0 0
      %3770 = vmatprep.subr.bf16.mxu0 0
      %3771 = vmatpush1.bf16.msra.mxu0 0
      %3772 = vmatprep.subr.bf16.mxu0 0
      %3773 = vmatpush1.bf16.msra.mxu0 0
      %3774 = vmatprep.subr.bf16.mxu0 0
      %3775 = vmatpush1.bf16.msra.mxu0 0
      %3776 = vmatprep.subr.bf16.mxu0 0
      %3777 = vmatpush1.bf16.msra.mxu0 0
      %3778 = vmatprep.subr.bf16.mxu0 0
      %3779 = vmatpush1.bf16.msra.mxu0 0
      %3780 = vmatprep.subr.bf16.mxu0 0
      %3781 = vmatpush1.bf16.msra.mxu0 0
      %3782 = vmatprep.subr.bf16.mxu0 0
      %3783 = vmatpush1.bf16.msra.mxu0 0
      %3784 = vmatprep.mubr.bf16.mxu0 0
      %3785 = vmatmul.mubr.bf16.gmra.mrb[0].mxu0 %v3644
      %v3786 = vpop.f32.mrb[0].mxu0
      %v3787 = vadd.f32 0.0, %v3786
      %v3788 = vpop.f32.mrb[0].mxu0
      %v3789 = vadd.f32 0.0, %v3788
      %v3790 = vpop.f32.mrb[0].mxu0
      %v3791 = vpop.f32.mrb[0].mxu0
      %3792 = vdwg.mxu0
      %3793 = vmatprep.subr.bf16.mxu0 %v3668
      %3794 = vmatpush1.bf16.msra.mxu0 %v3665
      %3795 = vmatprep.subr.bf16.mxu0 0
      %3796 = vmatpush1.bf16.msra.mxu0 0
      %3797 = vmatprep.subr.bf16.mxu0 0
      %3798 = vmatpush1.bf16.msra.mxu0 0
      %3799 = vmatprep.subr.bf16.mxu0 0
      %3800 = vmatpush1.bf16.msra.mxu0 0
      %3801 = vmatprep.subr.bf16.mxu0 0
      %3802 = vmatpush1.bf16.msra.mxu0 0
      %3803 = vmatprep.subr.bf16.mxu0 0
      %3804 = vmatpush1.bf16.msra.mxu0 0
      %3805 = vmatprep.subr.bf16.mxu0 0
      %3806 = vmatpush1.bf16.msra.mxu0 0
      %3807 = vmatprep.subr.bf16.mxu0 0
      %3808 = vmatpush1.bf16.msra.mxu0 0
      %3809 = vmatprep.subr.bf16.mxu0 0
      %3810 = vmatpush1.bf16.msra.mxu0 0
      %3811 = vmatprep.subr.bf16.mxu0 0
      %3812 = vmatpush1.bf16.msra.mxu0 0
      %3813 = vmatprep.subr.bf16.mxu0 0
      %3814 = vmatpush1.bf16.msra.mxu0 0
      %3815 = vmatprep.subr.bf16.mxu0 0
      %3816 = vmatpush1.bf16.msra.mxu0 0
      %3817 = vmatprep.subr.bf16.mxu0 0
      %3818 = vmatpush1.bf16.msra.mxu0 0
      %3819 = vmatprep.subr.bf16.mxu0 0
      %3820 = vmatpush1.bf16.msra.mxu0 0
      %3821 = vmatprep.subr.bf16.mxu0 0
      %3822 = vmatpush1.bf16.msra.mxu0 0
      %3823 = vmatprep.subr.bf16.mxu0 0
      %3824 = vmatpush1.bf16.msra.mxu0 0
      %3825 = vmatprep.mubr.bf16.mxu0 0
      %3826 = vmatmul.mubr.bf16.gmra.mrb[0].mxu0 %v3644
      %v3827 = vpop.f32.mrb[0].mxu0
      %v3828 = vadd.f32 0.0, %v3827
      %v3829 = vpop.f32.mrb[0].mxu0
      %v3830 = vadd.f32 0.0, %v3829
      %v3831 = vpop.f32.mrb[0].mxu0
      %v3832 = vpop.f32.mrb[0].mxu0
      %3833 = vdwg.mxu0
      %v3834 = vadd.f32 %v3606, %v3705
      %v3835 = vadd.f32 %v3607, %v3707
      %v3836 = vadd.f32 %v3608, %v3746
      %v3837 = vadd.f32 %v3609, %v3748
      %v3838 = vadd.f32 %v3610, %v3787
      %v3839 = vadd.f32 %v3611, %v3789
      %v3840 = vadd.f32 %v3612, %v3828
      %v3841 = vadd.f32 %v3613, %v3830
      %s3842 = scalar_lea.vmem %s1, 64
      %v3843 = vld [vmem:[%s3842] sm:$0xf]
      %3844 = vrot.lane.b32.xlu0 %v230, 7
      %v3845 = vpop.permute.xlu0 %3844
      %3846 = vrot.lane.b32.xlu0 %v231, 7
      %v3847 = vpop.permute.xlu0 %3846
      %3848 = vrot.lane.b32.xlu0 %v232, 7
      %v3849 = vpop.permute.xlu0 %3848
      %3850 = vrot.lane.b32.xlu0 %v233, 7
      %v3851 = vpop.permute.xlu0 %3850
      %3852 = vrot.lane.b32.xlu0 %v234, 7
      %v3853 = vpop.permute.xlu0 %3852
      %3854 = vrot.lane.b32.xlu0 %v235, 7
      %v3855 = vpop.permute.xlu0 %3854
      %3856 = vrot.lane.b32.xlu0 %v236, 7
      %v3857 = vpop.permute.xlu0 %3856
      %3858 = vrot.lane.b32.xlu0 %v237, 7
      %v3859 = vpop.permute.xlu0 %3858
      %3860 = vrot.lane.b32.xlu0 %v238, 7
      %v3861 = vpop.permute.xlu0 %3860
      %vm3862 = vcmask 56320
      %v3863 = vsel %vm3862, %v3845, %v3847
      %v3864 = vsel %vm3862, %v3847, %v3849
      %v3865 = vsel %vm3862, %v3849, %v3851
      %v3866 = vsel %vm3862, %v3851, %v3853
      %v3867 = vsel %vm3862, %v3853, %v3855
      %v3868 = vsel %vm3862, %v3855, %v3857
      %v3869 = vsel %vm3862, %v3857, %v3859
      %v3870 = vsel %vm3862, %v3859, %v3861
      %v3872 = vsel %vm266, %v3843, 0
      %v3875 = vsel %vm270, %v3863, 0
      %v3878 = vsel %vm270, %v3864, 0
      %v3881 = vsel %vm270, %v3865, 0
      %v3884 = vsel %vm270, %v3866, 0
      %v3887 = vsel %vm270, %v3867, 0
      %v3890 = vsel %vm270, %v3868, 0
      %v3893 = vsel %vm270, %v3869, 0
      %v3896 = vsel %vm270, %v3870, 0
      %3898 = vmatprep.subr.bf16.mxu0 %v3878
      %3899 = vmatpush1.bf16.msra.mxu0 %v3875
      %3900 = vmatprep.subr.bf16.mxu0 0
      %3901 = vmatpush1.bf16.msra.mxu0 0
      %3902 = vmatprep.subr.bf16.mxu0 0
      %3903 = vmatpush1.bf16.msra.mxu0 0
      %3904 = vmatprep.subr.bf16.mxu0 0
      %3905 = vmatpush1.bf16.msra.mxu0 0
      %3906 = vmatprep.subr.bf16.mxu0 0
      %3907 = vmatpush1.bf16.msra.mxu0 0
      %3908 = vmatprep.subr.bf16.mxu0 0
      %3909 = vmatpush1.bf16.msra.mxu0 0
      %3910 = vmatprep.subr.bf16.mxu0 0
      %3911 = vmatpush1.bf16.msra.mxu0 0
      %3912 = vmatprep.subr.bf16.mxu0 0
      %3913 = vmatpush1.bf16.msra.mxu0 0
      %3914 = vmatprep.subr.bf16.mxu0 0
      %3915 = vmatpush1.bf16.msra.mxu0 0
      %3916 = vmatprep.subr.bf16.mxu0 0
      %3917 = vmatpush1.bf16.msra.mxu0 0
      %3918 = vmatprep.subr.bf16.mxu0 0
      %3919 = vmatpush1.bf16.msra.mxu0 0
      %3920 = vmatprep.subr.bf16.mxu0 0
      %3921 = vmatpush1.bf16.msra.mxu0 0
      %3922 = vmatprep.subr.bf16.mxu0 0
      %3923 = vmatpush1.bf16.msra.mxu0 0
      %3924 = vmatprep.subr.bf16.mxu0 0
      %3925 = vmatpush1.bf16.msra.mxu0 0
      %3926 = vmatprep.subr.bf16.mxu0 0
      %3927 = vmatpush1.bf16.msra.mxu0 0
      %3928 = vmatprep.subr.bf16.mxu0 0
      %3929 = vmatpush1.bf16.msra.mxu0 0
      %3930 = vmatprep.mubr.bf16.mxu0 0
      %3931 = vmatmul.mubr.bf16.gmra.mrb[0].mxu0 %v3872
      %v3932 = vpop.f32.mrb[0].mxu0
      %v3933 = vadd.f32 0.0, %v3932
      %v3934 = vpop.f32.mrb[0].mxu0
      %v3935 = vadd.f32 0.0, %v3934
      %v3936 = vpop.f32.mrb[0].mxu0
      %v3937 = vpop.f32.mrb[0].mxu0
      %3938 = vdwg.mxu0
      %3939 = vmatprep.subr.bf16.mxu0 %v3884
      %3940 = vmatpush1.bf16.msra.mxu0 %v3881
      %3941 = vmatprep.subr.bf16.mxu0 0
      %3942 = vmatpush1.bf16.msra.mxu0 0
      %3943 = vmatprep.subr.bf16.mxu0 0
      %3944 = vmatpush1.bf16.msra.mxu0 0
      %3945 = vmatprep.subr.bf16.mxu0 0
      %3946 = vmatpush1.bf16.msra.mxu0 0
      %3947 = vmatprep.subr.bf16.mxu0 0
      %3948 = vmatpush1.bf16.msra.mxu0 0
      %3949 = vmatprep.subr.bf16.mxu0 0
      %3950 = vmatpush1.bf16.msra.mxu0 0
      %3951 = vmatprep.subr.bf16.mxu0 0
      %3952 = vmatpush1.bf16.msra.mxu0 0
      %3953 = vmatprep.subr.bf16.mxu0 0
      %3954 = vmatpush1.bf16.msra.mxu0 0
      %3955 = vmatprep.subr.bf16.mxu0 0
      %3956 = vmatpush1.bf16.msra.mxu0 0
      %3957 = vmatprep.subr.bf16.mxu0 0
      %3958 = vmatpush1.bf16.msra.mxu0 0
      %3959 = vmatprep.subr.bf16.mxu0 0
      %3960 = vmatpush1.bf16.msra.mxu0 0
      %3961 = vmatprep.subr.bf16.mxu0 0
      %3962 = vmatpush1.bf16.msra.mxu0 0
      %3963 = vmatprep.subr.bf16.mxu0 0
      %3964 = vmatpush1.bf16.msra.mxu0 0
      %3965 = vmatprep.subr.bf16.mxu0 0
      %3966 = vmatpush1.bf16.msra.mxu0 0
      %3967 = vmatprep.subr.bf16.mxu0 0
      %3968 = vmatpush1.bf16.msra.mxu0 0
      %3969 = vmatprep.subr.bf16.mxu0 0
      %3970 = vmatpush1.bf16.msra.mxu0 0
      %3971 = vmatprep.mubr.bf16.mxu0 0
      %3972 = vmatmul.mubr.bf16.gmra.mrb[0].mxu0 %v3872
      %v3973 = vpop.f32.mrb[0].mxu0
      %v3974 = vadd.f32 0.0, %v3973
      %v3975 = vpop.f32.mrb[0].mxu0
      %v3976 = vadd.f32 0.0, %v3975
      %v3977 = vpop.f32.mrb[0].mxu0
      %v3978 = vpop.f32.mrb[0].mxu0
      %3979 = vdwg.mxu0
      %3980 = vmatprep.subr.bf16.mxu0 %v3890
      %3981 = vmatpush1.bf16.msra.mxu0 %v3887
      %3982 = vmatprep.subr.bf16.mxu0 0
      %3983 = vmatpush1.bf16.msra.mxu0 0
      %3984 = vmatprep.subr.bf16.mxu0 0
      %3985 = vmatpush1.bf16.msra.mxu0 0
      %3986 = vmatprep.subr.bf16.mxu0 0
      %3987 = vmatpush1.bf16.msra.mxu0 0
      %3988 = vmatprep.subr.bf16.mxu0 0
      %3989 = vmatpush1.bf16.msra.mxu0 0
      %3990 = vmatprep.subr.bf16.mxu0 0
      %3991 = vmatpush1.bf16.msra.mxu0 0
      %3992 = vmatprep.subr.bf16.mxu0 0
      %3993 = vmatpush1.bf16.msra.mxu0 0
      %3994 = vmatprep.subr.bf16.mxu0 0
      %3995 = vmatpush1.bf16.msra.mxu0 0
      %3996 = vmatprep.subr.bf16.mxu0 0
      %3997 = vmatpush1.bf16.msra.mxu0 0
      %3998 = vmatprep.subr.bf16.mxu0 0
      %3999 = vmatpush1.bf16.msra.mxu0 0
      %4000 = vmatprep.subr.bf16.mxu0 0
      %4001 = vmatpush1.bf16.msra.mxu0 0
      %4002 = vmatprep.subr.bf16.mxu0 0
      %4003 = vmatpush1.bf16.msra.mxu0 0
      %4004 = vmatprep.subr.bf16.mxu0 0
      %4005 = vmatpush1.bf16.msra.mxu0 0
      %4006 = vmatprep.subr.bf16.mxu0 0
      %4007 = vmatpush1.bf16.msra.mxu0 0
      %4008 = vmatprep.subr.bf16.mxu0 0
      %4009 = vmatpush1.bf16.msra.mxu0 0
      %4010 = vmatprep.subr.bf16.mxu0 0
      %4011 = vmatpush1.bf16.msra.mxu0 0
      %4012 = vmatprep.mubr.bf16.mxu0 0
      %4013 = vmatmul.mubr.bf16.gmra.mrb[0].mxu0 %v3872
      %v4014 = vpop.f32.mrb[0].mxu0
      %v4015 = vadd.f32 0.0, %v4014
      %v4016 = vpop.f32.mrb[0].mxu0
      %v4017 = vadd.f32 0.0, %v4016
      %v4018 = vpop.f32.mrb[0].mxu0
      %v4019 = vpop.f32.mrb[0].mxu0
      %4020 = vdwg.mxu0
      %4021 = vmatprep.subr.bf16.mxu0 %v3896
      %4022 = vmatpush1.bf16.msra.mxu0 %v3893
      %4023 = vmatprep.subr.bf16.mxu0 0
      %4024 = vmatpush1.bf16.msra.mxu0 0
      %4025 = vmatprep.subr.bf16.mxu0 0
      %4026 = vmatpush1.bf16.msra.mxu0 0
      %4027 = vmatprep.subr.bf16.mxu0 0
      %4028 = vmatpush1.bf16.msra.mxu0 0
      %4029 = vmatprep.subr.bf16.mxu0 0
      %4030 = vmatpush1.bf16.msra.mxu0 0
      %4031 = vmatprep.subr.bf16.mxu0 0
      %4032 = vmatpush1.bf16.msra.mxu0 0
      %4033 = vmatprep.subr.bf16.mxu0 0
      %4034 = vmatpush1.bf16.msra.mxu0 0
      %4035 = vmatprep.subr.bf16.mxu0 0
      %4036 = vmatpush1.bf16.msra.mxu0 0
      %4037 = vmatprep.subr.bf16.mxu0 0
      %4038 = vmatpush1.bf16.msra.mxu0 0
      %4039 = vmatprep.subr.bf16.mxu0 0
      %4040 = vmatpush1.bf16.msra.mxu0 0
      %4041 = vmatprep.subr.bf16.mxu0 0
      %4042 = vmatpush1.bf16.msra.mxu0 0
      %4043 = vmatprep.subr.bf16.mxu0 0
      %4044 = vmatpush1.bf16.msra.mxu0 0
      %4045 = vmatprep.subr.bf16.mxu0 0
      %4046 = vmatpush1.bf16.msra.mxu0 0
      %4047 = vmatprep.subr.bf16.mxu0 0
      %4048 = vmatpush1.bf16.msra.mxu0 0
      %4049 = vmatprep.subr.bf16.mxu0 0
      %4050 = vmatpush1.bf16.msra.mxu0 0
      %4051 = vmatprep.subr.bf16.mxu0 0
      %4052 = vmatpush1.bf16.msra.mxu0 0
      %4053 = vmatprep.mubr.bf16.mxu0 0
      %4054 = vmatmul.mubr.bf16.gmra.mrb[0].mxu0 %v3872
      %v4055 = vpop.f32.mrb[0].mxu0
      %v4056 = vadd.f32 0.0, %v4055
      %v4057 = vpop.f32.mrb[0].mxu0
      %v4058 = vadd.f32 0.0, %v4057
      %v4059 = vpop.f32.mrb[0].mxu0
      %v4060 = vpop.f32.mrb[0].mxu0
      %4061 = vdwg.mxu0
      %v4062 = vadd.f32 %v3834, %v3933
      %v4063 = vadd.f32 %v3835, %v3935
      %v4064 = vadd.f32 %v3836, %v3974
      %v4065 = vadd.f32 %v3837, %v3976
      %v4066 = vadd.f32 %v3838, %v4015
      %v4067 = vadd.f32 %v3839, %v4017
      %v4068 = vadd.f32 %v3840, %v4056
      %v4069 = vadd.f32 %v3841, %v4058
      %s4070 = scalar_lea.vmem %s1, 68
      %v4071 = vld [vmem:[%s4070] sm:$0xf]
      %4072 = vrot.lane.b32.xlu0 %v230, 6
      %v4073 = vpop.permute.xlu0 %4072
      %4074 = vrot.lane.b32.xlu0 %v231, 6
      %v4075 = vpop.permute.xlu0 %4074
      %4076 = vrot.lane.b32.xlu0 %v232, 6
      %v4077 = vpop.permute.xlu0 %4076
      %4078 = vrot.lane.b32.xlu0 %v233, 6
      %v4079 = vpop.permute.xlu0 %4078
      %4080 = vrot.lane.b32.xlu0 %v234, 6
      %v4081 = vpop.permute.xlu0 %4080
      %4082 = vrot.lane.b32.xlu0 %v235, 6
      %v4083 = vpop.permute.xlu0 %4082
      %4084 = vrot.lane.b32.xlu0 %v236, 6
      %v4085 = vpop.permute.xlu0 %4084
      %4086 = vrot.lane.b32.xlu0 %v237, 6
      %v4087 = vpop.permute.xlu0 %4086
      %4088 = vrot.lane.b32.xlu0 %v238, 6
      %v4089 = vpop.permute.xlu0 %4088
      %vm4090 = vcmask 48128
      %v4091 = vsel %vm4090, %v4073, %v4075
      %v4092 = vsel %vm4090, %v4075, %v4077
      %v4093 = vsel %vm4090, %v4077, %v4079
      %v4094 = vsel %vm4090, %v4079, %v4081
      %v4095 = vsel %vm4090, %v4081, %v4083
      %v4096 = vsel %vm4090, %v4083, %v4085
      %v4097 = vsel %vm4090, %v4085, %v4087
      %v4098 = vsel %vm4090, %v4087, %v4089
      %v4100 = vsel %vm266, %v4071, 0
      %v4103 = vsel %vm270, %v4091, 0
      %v4106 = vsel %vm270, %v4092, 0
      %v4109 = vsel %vm270, %v4093, 0
      %v4112 = vsel %vm270, %v4094, 0
      %v4115 = vsel %vm270, %v4095, 0
      %v4118 = vsel %vm270, %v4096, 0
      %v4121 = vsel %vm270, %v4097, 0
      %v4124 = vsel %vm270, %v4098, 0
      %4126 = vmatprep.subr.bf16.mxu0 %v4106
      %4127 = vmatpush1.bf16.msra.mxu0 %v4103
      %4128 = vmatprep.subr.bf16.mxu0 0
      %4129 = vmatpush1.bf16.msra.mxu0 0
      %4130 = vmatprep.subr.bf16.mxu0 0
      %4131 = vmatpush1.bf16.msra.mxu0 0
      %4132 = vmatprep.subr.bf16.mxu0 0
      %4133 = vmatpush1.bf16.msra.mxu0 0
      %4134 = vmatprep.subr.bf16.mxu0 0
      %4135 = vmatpush1.bf16.msra.mxu0 0
      %4136 = vmatprep.subr.bf16.mxu0 0
      %4137 = vmatpush1.bf16.msra.mxu0 0
      %4138 = vmatprep.subr.bf16.mxu0 0
      %4139 = vmatpush1.bf16.msra.mxu0 0
      %4140 = vmatprep.subr.bf16.mxu0 0
      %4141 = vmatpush1.bf16.msra.mxu0 0
      %4142 = vmatprep.subr.bf16.mxu0 0
      %4143 = vmatpush1.bf16.msra.mxu0 0
      %4144 = vmatprep.subr.bf16.mxu0 0
      %4145 = vmatpush1.bf16.msra.mxu0 0
      %4146 = vmatprep.subr.bf16.mxu0 0
      %4147 = vmatpush1.bf16.msra.mxu0 0
      %4148 = vmatprep.subr.bf16.mxu0 0
      %4149 = vmatpush1.bf16.msra.mxu0 0
      %4150 = vmatprep.subr.bf16.mxu0 0
      %4151 = vmatpush1.bf16.msra.mxu0 0
      %4152 = vmatprep.subr.bf16.mxu0 0
      %4153 = vmatpush1.bf16.msra.mxu0 0
      %4154 = vmatprep.subr.bf16.mxu0 0
      %4155 = vmatpush1.bf16.msra.mxu0 0
      %4156 = vmatprep.subr.bf16.mxu0 0
      %4157 = vmatpush1.bf16.msra.mxu0 0
      %4158 = vmatprep.mubr.bf16.mxu0 0
      %4159 = vmatmul.mubr.bf16.gmra.mrb[0].mxu0 %v4100
      %v4160 = vpop.f32.mrb[0].mxu0
      %v4161 = vadd.f32 0.0, %v4160
      %v4162 = vpop.f32.mrb[0].mxu0
      %v4163 = vadd.f32 0.0, %v4162
      %v4164 = vpop.f32.mrb[0].mxu0
      %v4165 = vpop.f32.mrb[0].mxu0
      %4166 = vdwg.mxu0
      %4167 = vmatprep.subr.bf16.mxu0 %v4112
      %4168 = vmatpush1.bf16.msra.mxu0 %v4109
      %4169 = vmatprep.subr.bf16.mxu0 0
      %4170 = vmatpush1.bf16.msra.mxu0 0
      %4171 = vmatprep.subr.bf16.mxu0 0
      %4172 = vmatpush1.bf16.msra.mxu0 0
      %4173 = vmatprep.subr.bf16.mxu0 0
      %4174 = vmatpush1.bf16.msra.mxu0 0
      %4175 = vmatprep.subr.bf16.mxu0 0
      %4176 = vmatpush1.bf16.msra.mxu0 0
      %4177 = vmatprep.subr.bf16.mxu0 0
      %4178 = vmatpush1.bf16.msra.mxu0 0
      %4179 = vmatprep.subr.bf16.mxu0 0
      %4180 = vmatpush1.bf16.msra.mxu0 0
      %4181 = vmatprep.subr.bf16.mxu0 0
      %4182 = vmatpush1.bf16.msra.mxu0 0
      %4183 = vmatprep.subr.bf16.mxu0 0
      %4184 = vmatpush1.bf16.msra.mxu0 0
      %4185 = vmatprep.subr.bf16.mxu0 0
      %4186 = vmatpush1.bf16.msra.mxu0 0
      %4187 = vmatprep.subr.bf16.mxu0 0
      %4188 = vmatpush1.bf16.msra.mxu0 0
      %4189 = vmatprep.subr.bf16.mxu0 0
      %4190 = vmatpush1.bf16.msra.mxu0 0
      %4191 = vmatprep.subr.bf16.mxu0 0
      %4192 = vmatpush1.bf16.msra.mxu0 0
      %4193 = vmatprep.subr.bf16.mxu0 0
      %4194 = vmatpush1.bf16.msra.mxu0 0
      %4195 = vmatprep.subr.bf16.mxu0 0
      %4196 = vmatpush1.bf16.msra.mxu0 0
      %4197 = vmatprep.subr.bf16.mxu0 0
      %4198 = vmatpush1.bf16.msra.mxu0 0
      %4199 = vmatprep.mubr.bf16.mxu0 0
      %4200 = vmatmul.mubr.bf16.gmra.mrb[0].mxu0 %v4100
      %v4201 = vpop.f32.mrb[0].mxu0
      %v4202 = vadd.f32 0.0, %v4201
      %v4203 = vpop.f32.mrb[0].mxu0
      %v4204 = vadd.f32 0.0, %v4203
      %v4205 = vpop.f32.mrb[0].mxu0
      %v4206 = vpop.f32.mrb[0].mxu0
      %4207 = vdwg.mxu0
      %4208 = vmatprep.subr.bf16.mxu0 %v4118
      %4209 = vmatpush1.bf16.msra.mxu0 %v4115
      %4210 = vmatprep.subr.bf16.mxu0 0
      %4211 = vmatpush1.bf16.msra.mxu0 0
      %4212 = vmatprep.subr.bf16.mxu0 0
      %4213 = vmatpush1.bf16.msra.mxu0 0
      %4214 = vmatprep.subr.bf16.mxu0 0
      %4215 = vmatpush1.bf16.msra.mxu0 0
      %4216 = vmatprep.subr.bf16.mxu0 0
      %4217 = vmatpush1.bf16.msra.mxu0 0
      %4218 = vmatprep.subr.bf16.mxu0 0
      %4219 = vmatpush1.bf16.msra.mxu0 0
      %4220 = vmatprep.subr.bf16.mxu0 0
      %4221 = vmatpush1.bf16.msra.mxu0 0
      %4222 = vmatprep.subr.bf16.mxu0 0
      %4223 = vmatpush1.bf16.msra.mxu0 0
      %4224 = vmatprep.subr.bf16.mxu0 0
      %4225 = vmatpush1.bf16.msra.mxu0 0
      %4226 = vmatprep.subr.bf16.mxu0 0
      %4227 = vmatpush1.bf16.msra.mxu0 0
      %4228 = vmatprep.subr.bf16.mxu0 0
      %4229 = vmatpush1.bf16.msra.mxu0 0
      %4230 = vmatprep.subr.bf16.mxu0 0
      %4231 = vmatpush1.bf16.msra.mxu0 0
      %4232 = vmatprep.subr.bf16.mxu0 0
      %4233 = vmatpush1.bf16.msra.mxu0 0
      %4234 = vmatprep.subr.bf16.mxu0 0
      %4235 = vmatpush1.bf16.msra.mxu0 0
      %4236 = vmatprep.subr.bf16.mxu0 0
      %4237 = vmatpush1.bf16.msra.mxu0 0
      %4238 = vmatprep.subr.bf16.mxu0 0
      %4239 = vmatpush1.bf16.msra.mxu0 0
      %4240 = vmatprep.mubr.bf16.mxu0 0
      %4241 = vmatmul.mubr.bf16.gmra.mrb[0].mxu0 %v4100
      %v4242 = vpop.f32.mrb[0].mxu0
      %v4243 = vadd.f32 0.0, %v4242
      %v4244 = vpop.f32.mrb[0].mxu0
      %v4245 = vadd.f32 0.0, %v4244
      %v4246 = vpop.f32.mrb[0].mxu0
      %v4247 = vpop.f32.mrb[0].mxu0
      %4248 = vdwg.mxu0
      %4249 = vmatprep.subr.bf16.mxu0 %v4124
      %4250 = vmatpush1.bf16.msra.mxu0 %v4121
      %4251 = vmatprep.subr.bf16.mxu0 0
      %4252 = vmatpush1.bf16.msra.mxu0 0
      %4253 = vmatprep.subr.bf16.mxu0 0
      %4254 = vmatpush1.bf16.msra.mxu0 0
      %4255 = vmatprep.subr.bf16.mxu0 0
      %4256 = vmatpush1.bf16.msra.mxu0 0
      %4257 = vmatprep.subr.bf16.mxu0 0
      %4258 = vmatpush1.bf16.msra.mxu0 0
      %4259 = vmatprep.subr.bf16.mxu0 0
      %4260 = vmatpush1.bf16.msra.mxu0 0
      %4261 = vmatprep.subr.bf16.mxu0 0
      %4262 = vmatpush1.bf16.msra.mxu0 0
      %4263 = vmatprep.subr.bf16.mxu0 0
      %4264 = vmatpush1.bf16.msra.mxu0 0
      %4265 = vmatprep.subr.bf16.mxu0 0
      %4266 = vmatpush1.bf16.msra.mxu0 0
      %4267 = vmatprep.subr.bf16.mxu0 0
      %4268 = vmatpush1.bf16.msra.mxu0 0
      %4269 = vmatprep.subr.bf16.mxu0 0
      %4270 = vmatpush1.bf16.msra.mxu0 0
      %4271 = vmatprep.subr.bf16.mxu0 0
      %4272 = vmatpush1.bf16.msra.mxu0 0
      %4273 = vmatprep.subr.bf16.mxu0 0
      %4274 = vmatpush1.bf16.msra.mxu0 0
      %4275 = vmatprep.subr.bf16.mxu0 0
      %4276 = vmatpush1.bf16.msra.mxu0 0
      %4277 = vmatprep.subr.bf16.mxu0 0
      %4278 = vmatpush1.bf16.msra.mxu0 0
      %4279 = vmatprep.subr.bf16.mxu0 0
      %4280 = vmatpush1.bf16.msra.mxu0 0
      %4281 = vmatprep.mubr.bf16.mxu0 0
      %4282 = vmatmul.mubr.bf16.gmra.mrb[0].mxu0 %v4100
      %v4283 = vpop.f32.mrb[0].mxu0
      %v4284 = vadd.f32 0.0, %v4283
      %v4285 = vpop.f32.mrb[0].mxu0
      %v4286 = vadd.f32 0.0, %v4285
      %v4287 = vpop.f32.mrb[0].mxu0
      %v4288 = vpop.f32.mrb[0].mxu0
      %4289 = vdwg.mxu0
      %v4290 = vadd.f32 %v4062, %v4161
      %v4291 = vadd.f32 %v4063, %v4163
      %v4292 = vadd.f32 %v4064, %v4202
      %v4293 = vadd.f32 %v4065, %v4204
      %v4294 = vadd.f32 %v4066, %v4243
      %v4295 = vadd.f32 %v4067, %v4245
      %v4296 = vadd.f32 %v4068, %v4284
      %v4297 = vadd.f32 %v4069, %v4286
      %v4298 = vld [vmem:[%s198 + $0x4] sm:$0xff]
      %v4299 = vld [vmem:[%s198 + $0xc] sm:$0xff]
      %v4300 = vld [vmem:[%s198 + $0x14] sm:$0xff]
      %v4301 = vld [vmem:[%s198 + $0x1c] sm:$0xff]
      %v4302 = vld [vmem:[%s198 + $0x24] sm:$0xf]
      %s4303 = scalar_lea.vmem %s1, 72
      %v4304 = vld [vmem:[%s4303] sm:$0xf]
      %v4310 = vunpack.c.l.b16 %v4298
      %v4311 = vunpack.c.h.b16 %v4298
      %v4312 = vunpack.c.l.b16 %v4299
      %v4313 = vunpack.c.h.b16 %v4299
      %v4314 = vunpack.c.l.b16 %v4300
      %v4315 = vunpack.c.h.b16 %v4300
      %v4316 = vunpack.c.l.b16 %v4301
      %v4317 = vunpack.c.h.b16 %v4301
      %v4318 = vunpack.c.l.b16 %v4302
      %v4319 = vpack.c.b16 %v4310, %v4310
      %v4320 = vpack.c.b16 %v4311, %v4311
      %v4321 = vpack.c.b16 %v4312, %v4312
      %v4322 = vpack.c.b16 %v4313, %v4313
      %v4323 = vpack.c.b16 %v4314, %v4314
      %v4324 = vpack.c.b16 %v4315, %v4315
      %v4325 = vpack.c.b16 %v4316, %v4316
      %v4326 = vpack.c.b16 %v4317, %v4317
      %v4327 = vpack.c.b16 %v4318, %v4318
      %4328 = vrot.lane.b32.xlu0 %v4319, 56
      %v4329 = vpop.permute.xlu0 %4328
      %4330 = vrot.lane.b32.xlu0 %v4320, 56
      %v4331 = vpop.permute.xlu0 %4330
      %4332 = vrot.lane.b32.xlu0 %v4321, 56
      %v4333 = vpop.permute.xlu0 %4332
      %4334 = vrot.lane.b32.xlu0 %v4322, 56
      %v4335 = vpop.permute.xlu0 %4334
      %4336 = vrot.lane.b32.xlu0 %v4323, 56
      %v4337 = vpop.permute.xlu0 %4336
      %4338 = vrot.lane.b32.xlu0 %v4324, 56
      %v4339 = vpop.permute.xlu0 %4338
      %4340 = vrot.lane.b32.xlu0 %v4325, 56
      %v4341 = vpop.permute.xlu0 %4340
      %4342 = vrot.lane.b32.xlu0 %v4326, 56
      %v4343 = vpop.permute.xlu0 %4342
      %4344 = vrot.lane.b32.xlu0 %v4327, 56
      %v4345 = vpop.permute.xlu0 %4344
      %vm4346 = vcmask 457728
      %v4347 = vsel %vm4346, %v4329, %v4331
      %v4348 = vsel %vm4346, %v4331, %v4333
      %v4349 = vsel %vm4346, %v4333, %v4335
      %v4350 = vsel %vm4346, %v4335, %v4337
      %v4351 = vsel %vm4346, %v4337, %v4339
      %v4352 = vsel %vm4346, %v4339, %v4341
      %v4353 = vsel %vm4346, %v4341, %v4343
      %v4354 = vsel %vm4346, %v4343, %v4345
      %v4356 = vsel %vm266, %v4304, 0
      %v4359 = vsel %vm270, %v4347, 0
      %v4362 = vsel %vm270, %v4348, 0
      %v4365 = vsel %vm270, %v4349, 0
      %v4368 = vsel %vm270, %v4350, 0
      %v4371 = vsel %vm270, %v4351, 0
      %v4374 = vsel %vm270, %v4352, 0
      %v4377 = vsel %vm270, %v4353, 0
      %v4380 = vsel %vm270, %v4354, 0
      %4382 = vmatprep.subr.bf16.mxu0 %v4362
      %4383 = vmatpush1.bf16.msra.mxu0 %v4359
      %4384 = vmatprep.subr.bf16.mxu0 0
      %4385 = vmatpush1.bf16.msra.mxu0 0
      %4386 = vmatprep.subr.bf16.mxu0 0
      %4387 = vmatpush1.bf16.msra.mxu0 0
      %4388 = vmatprep.subr.bf16.mxu0 0
      %4389 = vmatpush1.bf16.msra.mxu0 0
      %4390 = vmatprep.subr.bf16.mxu0 0
      %4391 = vmatpush1.bf16.msra.mxu0 0
      %4392 = vmatprep.subr.bf16.mxu0 0
      %4393 = vmatpush1.bf16.msra.mxu0 0
      %4394 = vmatprep.subr.bf16.mxu0 0
      %4395 = vmatpush1.bf16.msra.mxu0 0
      %4396 = vmatprep.subr.bf16.mxu0 0
      %4397 = vmatpush1.bf16.msra.mxu0 0
      %4398 = vmatprep.subr.bf16.mxu0 0
      %4399 = vmatpush1.bf16.msra.mxu0 0
      %4400 = vmatprep.subr.bf16.mxu0 0
      %4401 = vmatpush1.bf16.msra.mxu0 0
      %4402 = vmatprep.subr.bf16.mxu0 0
      %4403 = vmatpush1.bf16.msra.mxu0 0
      %4404 = vmatprep.subr.bf16.mxu0 0
      %4405 = vmatpush1.bf16.msra.mxu0 0
      %4406 = vmatprep.subr.bf16.mxu0 0
      %4407 = vmatpush1.bf16.msra.mxu0 0
      %4408 = vmatprep.subr.bf16.mxu0 0
      %4409 = vmatpush1.bf16.msra.mxu0 0
      %4410 = vmatprep.subr.bf16.mxu0 0
      %4411 = vmatpush1.bf16.msra.mxu0 0
      %4412 = vmatprep.subr.bf16.mxu0 0
      %4413 = vmatpush1.bf16.msra.mxu0 0
      %4414 = vmatprep.mubr.bf16.mxu0 0
      %4415 = vmatmul.mubr.bf16.gmra.mrb[0].mxu0 %v4356
      %v4416 = vpop.f32.mrb[0].mxu0
      %v4417 = vadd.f32 0.0, %v4416
      %v4418 = vpop.f32.mrb[0].mxu0
      %v4419 = vadd.f32 0.0, %v4418
      %v4420 = vpop.f32.mrb[0].mxu0
      %v4421 = vpop.f32.mrb[0].mxu0
      %4422 = vdwg.mxu0
      %4423 = vmatprep.subr.bf16.mxu0 %v4368
      %4424 = vmatpush1.bf16.msra.mxu0 %v4365
      %4425 = vmatprep.subr.bf16.mxu0 0
      %4426 = vmatpush1.bf16.msra.mxu0 0
      %4427 = vmatprep.subr.bf16.mxu0 0
      %4428 = vmatpush1.bf16.msra.mxu0 0
      %4429 = vmatprep.subr.bf16.mxu0 0
      %4430 = vmatpush1.bf16.msra.mxu0 0
      %4431 = vmatprep.subr.bf16.mxu0 0
      %4432 = vmatpush1.bf16.msra.mxu0 0
      %4433 = vmatprep.subr.bf16.mxu0 0
      %4434 = vmatpush1.bf16.msra.mxu0 0
      %4435 = vmatprep.subr.bf16.mxu0 0
      %4436 = vmatpush1.bf16.msra.mxu0 0
      %4437 = vmatprep.subr.bf16.mxu0 0
      %4438 = vmatpush1.bf16.msra.mxu0 0
      %4439 = vmatprep.subr.bf16.mxu0 0
      %4440 = vmatpush1.bf16.msra.mxu0 0
      %4441 = vmatprep.subr.bf16.mxu0 0
      %4442 = vmatpush1.bf16.msra.mxu0 0
      %4443 = vmatprep.subr.bf16.mxu0 0
      %4444 = vmatpush1.bf16.msra.mxu0 0
      %4445 = vmatprep.subr.bf16.mxu0 0
      %4446 = vmatpush1.bf16.msra.mxu0 0
      %4447 = vmatprep.subr.bf16.mxu0 0
      %4448 = vmatpush1.bf16.msra.mxu0 0
      %4449 = vmatprep.subr.bf16.mxu0 0
      %4450 = vmatpush1.bf16.msra.mxu0 0
      %4451 = vmatprep.subr.bf16.mxu0 0
      %4452 = vmatpush1.bf16.msra.mxu0 0
      %4453 = vmatprep.subr.bf16.mxu0 0
      %4454 = vmatpush1.bf16.msra.mxu0 0
      %4455 = vmatprep.mubr.bf16.mxu0 0
      %4456 = vmatmul.mubr.bf16.gmra.mrb[0].mxu0 %v4356
      %v4457 = vpop.f32.mrb[0].mxu0
      %v4458 = vadd.f32 0.0, %v4457
      %v4459 = vpop.f32.mrb[0].mxu0
      %v4460 = vadd.f32 0.0, %v4459
      %v4461 = vpop.f32.mrb[0].mxu0
      %v4462 = vpop.f32.mrb[0].mxu0
      %4463 = vdwg.mxu0
      %4464 = vmatprep.subr.bf16.mxu0 %v4374
      %4465 = vmatpush1.bf16.msra.mxu0 %v4371
      %4466 = vmatprep.subr.bf16.mxu0 0
      %4467 = vmatpush1.bf16.msra.mxu0 0
      %4468 = vmatprep.subr.bf16.mxu0 0
      %4469 = vmatpush1.bf16.msra.mxu0 0
      %4470 = vmatprep.subr.bf16.mxu0 0
      %4471 = vmatpush1.bf16.msra.mxu0 0
      %4472 = vmatprep.subr.bf16.mxu0 0
      %4473 = vmatpush1.bf16.msra.mxu0 0
      %4474 = vmatprep.subr.bf16.mxu0 0
      %4475 = vmatpush1.bf16.msra.mxu0 0
      %4476 = vmatprep.subr.bf16.mxu0 0
      %4477 = vmatpush1.bf16.msra.mxu0 0
      %4478 = vmatprep.subr.bf16.mxu0 0
      %4479 = vmatpush1.bf16.msra.mxu0 0
      %4480 = vmatprep.subr.bf16.mxu0 0
      %4481 = vmatpush1.bf16.msra.mxu0 0
      %4482 = vmatprep.subr.bf16.mxu0 0
      %4483 = vmatpush1.bf16.msra.mxu0 0
      %4484 = vmatprep.subr.bf16.mxu0 0
      %4485 = vmatpush1.bf16.msra.mxu0 0
      %4486 = vmatprep.subr.bf16.mxu0 0
      %4487 = vmatpush1.bf16.msra.mxu0 0
      %4488 = vmatprep.subr.bf16.mxu0 0
      %4489 = vmatpush1.bf16.msra.mxu0 0
      %4490 = vmatprep.subr.bf16.mxu0 0
      %4491 = vmatpush1.bf16.msra.mxu0 0
      %4492 = vmatprep.subr.bf16.mxu0 0
      %4493 = vmatpush1.bf16.msra.mxu0 0
      %4494 = vmatprep.subr.bf16.mxu0 0
      %4495 = vmatpush1.bf16.msra.mxu0 0
      %4496 = vmatprep.mubr.bf16.mxu0 0
      %4497 = vmatmul.mubr.bf16.gmra.mrb[0].mxu0 %v4356
      %v4498 = vpop.f32.mrb[0].mxu0
      %v4499 = vadd.f32 0.0, %v4498
      %v4500 = vpop.f32.mrb[0].mxu0
      %v4501 = vadd.f32 0.0, %v4500
      %v4502 = vpop.f32.mrb[0].mxu0
      %v4503 = vpop.f32.mrb[0].mxu0
      %4504 = vdwg.mxu0
      %4505 = vmatprep.subr.bf16.mxu0 %v4380
      %4506 = vmatpush1.bf16.msra.mxu0 %v4377
      %4507 = vmatprep.subr.bf16.mxu0 0
      %4508 = vmatpush1.bf16.msra.mxu0 0
      %4509 = vmatprep.subr.bf16.mxu0 0
      %4510 = vmatpush1.bf16.msra.mxu0 0
      %4511 = vmatprep.subr.bf16.mxu0 0
      %4512 = vmatpush1.bf16.msra.mxu0 0
      %4513 = vmatprep.subr.bf16.mxu0 0
      %4514 = vmatpush1.bf16.msra.mxu0 0
      %4515 = vmatprep.subr.bf16.mxu0 0
      %4516 = vmatpush1.bf16.msra.mxu0 0
      %4517 = vmatprep.subr.bf16.mxu0 0
      %4518 = vmatpush1.bf16.msra.mxu0 0
      %4519 = vmatprep.subr.bf16.mxu0 0
      %4520 = vmatpush1.bf16.msra.mxu0 0
      %4521 = vmatprep.subr.bf16.mxu0 0
      %4522 = vmatpush1.bf16.msra.mxu0 0
      %4523 = vmatprep.subr.bf16.mxu0 0
      %4524 = vmatpush1.bf16.msra.mxu0 0
      %4525 = vmatprep.subr.bf16.mxu0 0
      %4526 = vmatpush1.bf16.msra.mxu0 0
      %4527 = vmatprep.subr.bf16.mxu0 0
      %4528 = vmatpush1.bf16.msra.mxu0 0
      %4529 = vmatprep.subr.bf16.mxu0 0
      %4530 = vmatpush1.bf16.msra.mxu0 0
      %4531 = vmatprep.subr.bf16.mxu0 0
      %4532 = vmatpush1.bf16.msra.mxu0 0
      %4533 = vmatprep.subr.bf16.mxu0 0
      %4534 = vmatpush1.bf16.msra.mxu0 0
      %4535 = vmatprep.subr.bf16.mxu0 0
      %4536 = vmatpush1.bf16.msra.mxu0 0
      %4537 = vmatprep.mubr.bf16.mxu0 0
      %4538 = vmatmul.mubr.bf16.gmra.mrb[0].mxu0 %v4356
      %v4539 = vpop.f32.mrb[0].mxu0
      %v4540 = vadd.f32 0.0, %v4539
      %v4541 = vpop.f32.mrb[0].mxu0
      %v4542 = vadd.f32 0.0, %v4541
      %v4543 = vpop.f32.mrb[0].mxu0
      %v4544 = vpop.f32.mrb[0].mxu0
      %4545 = vdwg.mxu0
      %v4546 = vadd.f32 %v4290, %v4417
      %v4547 = vadd.f32 %v4291, %v4419
      %v4548 = vadd.f32 %v4292, %v4458
      %v4549 = vadd.f32 %v4293, %v4460
      %v4550 = vadd.f32 %v4294, %v4499
      %v4551 = vadd.f32 %v4295, %v4501
      %v4552 = vadd.f32 %v4296, %v4540
      %v4553 = vadd.f32 %v4297, %v4542
      %s4554 = scalar_lea.vmem %s1, 76
      %v4555 = vld [vmem:[%s4554] sm:$0xf]
      %4556 = vrot.lane.b32.xlu0 %v4319, 55
      %v4557 = vpop.permute.xlu0 %4556
      %4558 = vrot.lane.b32.xlu0 %v4320, 55
      %v4559 = vpop.permute.xlu0 %4558
      %4560 = vrot.lane.b32.xlu0 %v4321, 55
      %v4561 = vpop.permute.xlu0 %4560
      %4562 = vrot.lane.b32.xlu0 %v4322, 55
      %v4563 = vpop.permute.xlu0 %4562
      %4564 = vrot.lane.b32.xlu0 %v4323, 55
      %v4565 = vpop.permute.xlu0 %4564
      %4566 = vrot.lane.b32.xlu0 %v4324, 55
      %v4567 = vpop.permute.xlu0 %4566
      %4568 = vrot.lane.b32.xlu0 %v4325, 55
      %v4569 = vpop.permute.xlu0 %4568
      %4570 = vrot.lane.b32.xlu0 %v4326, 55
      %v4571 = vpop.permute.xlu0 %4570
      %4572 = vrot.lane.b32.xlu0 %v4327, 55
      %v4573 = vpop.permute.xlu0 %4572
      %vm4574 = vcmask 449536
      %v4575 = vsel %vm4574, %v4557, %v4559
      %v4576 = vsel %vm4574, %v4559, %v4561
      %v4577 = vsel %vm4574, %v4561, %v4563
      %v4578 = vsel %vm4574, %v4563, %v4565
      %v4579 = vsel %vm4574, %v4565, %v4567
      %v4580 = vsel %vm4574, %v4567, %v4569
      %v4581 = vsel %vm4574, %v4569, %v4571
      %v4582 = vsel %vm4574, %v4571, %v4573
      %v4584 = vsel %vm266, %v4555, 0
      %v4587 = vsel %vm270, %v4575, 0
      %v4590 = vsel %vm270, %v4576, 0
      %v4593 = vsel %vm270, %v4577, 0
      %v4596 = vsel %vm270, %v4578, 0
      %v4599 = vsel %vm270, %v4579, 0
      %v4602 = vsel %vm270, %v4580, 0
      %v4605 = vsel %vm270, %v4581, 0
      %v4608 = vsel %vm270, %v4582, 0
      %4610 = vmatprep.subr.bf16.mxu0 %v4590
      %4611 = vmatpush1.bf16.msra.mxu0 %v4587
      %4612 = vmatprep.subr.bf16.mxu0 0
      %4613 = vmatpush1.bf16.msra.mxu0 0
      %4614 = vmatprep.subr.bf16.mxu0 0
      %4615 = vmatpush1.bf16.msra.mxu0 0
      %4616 = vmatprep.subr.bf16.mxu0 0
      %4617 = vmatpush1.bf16.msra.mxu0 0
      %4618 = vmatprep.subr.bf16.mxu0 0
      %4619 = vmatpush1.bf16.msra.mxu0 0
      %4620 = vmatprep.subr.bf16.mxu0 0
      %4621 = vmatpush1.bf16.msra.mxu0 0
      %4622 = vmatprep.subr.bf16.mxu0 0
      %4623 = vmatpush1.bf16.msra.mxu0 0
      %4624 = vmatprep.subr.bf16.mxu0 0
      %4625 = vmatpush1.bf16.msra.mxu0 0
      %4626 = vmatprep.subr.bf16.mxu0 0
      %4627 = vmatpush1.bf16.msra.mxu0 0
      %4628 = vmatprep.subr.bf16.mxu0 0
      %4629 = vmatpush1.bf16.msra.mxu0 0
      %4630 = vmatprep.subr.bf16.mxu0 0
      %4631 = vmatpush1.bf16.msra.mxu0 0
      %4632 = vmatprep.subr.bf16.mxu0 0
      %4633 = vmatpush1.bf16.msra.mxu0 0
      %4634 = vmatprep.subr.bf16.mxu0 0
      %4635 = vmatpush1.bf16.msra.mxu0 0
      %4636 = vmatprep.subr.bf16.mxu0 0
      %4637 = vmatpush1.bf16.msra.mxu0 0
      %4638 = vmatprep.subr.bf16.mxu0 0
      %4639 = vmatpush1.bf16.msra.mxu0 0
      %4640 = vmatprep.subr.bf16.mxu0 0
      %4641 = vmatpush1.bf16.msra.mxu0 0
      %4642 = vmatprep.mubr.bf16.mxu0 0
      %4643 = vmatmul.mubr.bf16.gmra.mrb[0].mxu0 %v4584
      %v4644 = vpop.f32.mrb[0].mxu0
      %v4645 = vadd.f32 0.0, %v4644
      %v4646 = vpop.f32.mrb[0].mxu0
      %v4647 = vadd.f32 0.0, %v4646
      %v4648 = vpop.f32.mrb[0].mxu0
      %v4649 = vpop.f32.mrb[0].mxu0
      %4650 = vdwg.mxu0
      %4651 = vmatprep.subr.bf16.mxu0 %v4596
      %4652 = vmatpush1.bf16.msra.mxu0 %v4593
      %4653 = vmatprep.subr.bf16.mxu0 0
      %4654 = vmatpush1.bf16.msra.mxu0 0
      %4655 = vmatprep.subr.bf16.mxu0 0
      %4656 = vmatpush1.bf16.msra.mxu0 0
      %4657 = vmatprep.subr.bf16.mxu0 0
      %4658 = vmatpush1.bf16.msra.mxu0 0
      %4659 = vmatprep.subr.bf16.mxu0 0
      %4660 = vmatpush1.bf16.msra.mxu0 0
      %4661 = vmatprep.subr.bf16.mxu0 0
      %4662 = vmatpush1.bf16.msra.mxu0 0
      %4663 = vmatprep.subr.bf16.mxu0 0
      %4664 = vmatpush1.bf16.msra.mxu0 0
      %4665 = vmatprep.subr.bf16.mxu0 0
      %4666 = vmatpush1.bf16.msra.mxu0 0
      %4667 = vmatprep.subr.bf16.mxu0 0
      %4668 = vmatpush1.bf16.msra.mxu0 0
      %4669 = vmatprep.subr.bf16.mxu0 0
      %4670 = vmatpush1.bf16.msra.mxu0 0
      %4671 = vmatprep.subr.bf16.mxu0 0
      %4672 = vmatpush1.bf16.msra.mxu0 0
      %4673 = vmatprep.subr.bf16.mxu0 0
      %4674 = vmatpush1.bf16.msra.mxu0 0
      %4675 = vmatprep.subr.bf16.mxu0 0
      %4676 = vmatpush1.bf16.msra.mxu0 0
      %4677 = vmatprep.subr.bf16.mxu0 0
      %4678 = vmatpush1.bf16.msra.mxu0 0
      %4679 = vmatprep.subr.bf16.mxu0 0
      %4680 = vmatpush1.bf16.msra.mxu0 0
      %4681 = vmatprep.subr.bf16.mxu0 0
      %4682 = vmatpush1.bf16.msra.mxu0 0
      %4683 = vmatprep.mubr.bf16.mxu0 0
      %4684 = vmatmul.mubr.bf16.gmra.mrb[0].mxu0 %v4584
      %v4685 = vpop.f32.mrb[0].mxu0
      %v4686 = vadd.f32 0.0, %v4685
      %v4687 = vpop.f32.mrb[0].mxu0
      %v4688 = vadd.f32 0.0, %v4687
      %v4689 = vpop.f32.mrb[0].mxu0
      %v4690 = vpop.f32.mrb[0].mxu0
      %4691 = vdwg.mxu0
      %4692 = vmatprep.subr.bf16.mxu0 %v4602
      %4693 = vmatpush1.bf16.msra.mxu0 %v4599
      %4694 = vmatprep.subr.bf16.mxu0 0
      %4695 = vmatpush1.bf16.msra.mxu0 0
      %4696 = vmatprep.subr.bf16.mxu0 0
      %4697 = vmatpush1.bf16.msra.mxu0 0
      %4698 = vmatprep.subr.bf16.mxu0 0
      %4699 = vmatpush1.bf16.msra.mxu0 0
      %4700 = vmatprep.subr.bf16.mxu0 0
      %4701 = vmatpush1.bf16.msra.mxu0 0
      %4702 = vmatprep.subr.bf16.mxu0 0
      %4703 = vmatpush1.bf16.msra.mxu0 0
      %4704 = vmatprep.subr.bf16.mxu0 0
      %4705 = vmatpush1.bf16.msra.mxu0 0
      %4706 = vmatprep.subr.bf16.mxu0 0
      %4707 = vmatpush1.bf16.msra.mxu0 0
      %4708 = vmatprep.subr.bf16.mxu0 0
      %4709 = vmatpush1.bf16.msra.mxu0 0
      %4710 = vmatprep.subr.bf16.mxu0 0
      %4711 = vmatpush1.bf16.msra.mxu0 0
      %4712 = vmatprep.subr.bf16.mxu0 0
      %4713 = vmatpush1.bf16.msra.mxu0 0
      %4714 = vmatprep.subr.bf16.mxu0 0
      %4715 = vmatpush1.bf16.msra.mxu0 0
      %4716 = vmatprep.subr.bf16.mxu0 0
      %4717 = vmatpush1.bf16.msra.mxu0 0
      %4718 = vmatprep.subr.bf16.mxu0 0
      %4719 = vmatpush1.bf16.msra.mxu0 0
      %4720 = vmatprep.subr.bf16.mxu0 0
      %4721 = vmatpush1.bf16.msra.mxu0 0
      %4722 = vmatprep.subr.bf16.mxu0 0
      %4723 = vmatpush1.bf16.msra.mxu0 0
      %4724 = vmatprep.mubr.bf16.mxu0 0
      %4725 = vmatmul.mubr.bf16.gmra.mrb[0].mxu0 %v4584
      %v4726 = vpop.f32.mrb[0].mxu0
      %v4727 = vadd.f32 0.0, %v4726
      %v4728 = vpop.f32.mrb[0].mxu0
      %v4729 = vadd.f32 0.0, %v4728
      %v4730 = vpop.f32.mrb[0].mxu0
      %v4731 = vpop.f32.mrb[0].mxu0
      %4732 = vdwg.mxu0
      %4733 = vmatprep.subr.bf16.mxu0 %v4608
      %4734 = vmatpush1.bf16.msra.mxu0 %v4605
      %4735 = vmatprep.subr.bf16.mxu0 0
      %4736 = vmatpush1.bf16.msra.mxu0 0
      %4737 = vmatprep.subr.bf16.mxu0 0
      %4738 = vmatpush1.bf16.msra.mxu0 0
      %4739 = vmatprep.subr.bf16.mxu0 0
      %4740 = vmatpush1.bf16.msra.mxu0 0
      %4741 = vmatprep.subr.bf16.mxu0 0
      %4742 = vmatpush1.bf16.msra.mxu0 0
      %4743 = vmatprep.subr.bf16.mxu0 0
      %4744 = vmatpush1.bf16.msra.mxu0 0
      %4745 = vmatprep.subr.bf16.mxu0 0
      %4746 = vmatpush1.bf16.msra.mxu0 0
      %4747 = vmatprep.subr.bf16.mxu0 0
      %4748 = vmatpush1.bf16.msra.mxu0 0
      %4749 = vmatprep.subr.bf16.mxu0 0
      %4750 = vmatpush1.bf16.msra.mxu0 0
      %4751 = vmatprep.subr.bf16.mxu0 0
      %4752 = vmatpush1.bf16.msra.mxu0 0
      %4753 = vmatprep.subr.bf16.mxu0 0
      %4754 = vmatpush1.bf16.msra.mxu0 0
      %4755 = vmatprep.subr.bf16.mxu0 0
      %4756 = vmatpush1.bf16.msra.mxu0 0
      %4757 = vmatprep.subr.bf16.mxu0 0
      %4758 = vmatpush1.bf16.msra.mxu0 0
      %4759 = vmatprep.subr.bf16.mxu0 0
      %4760 = vmatpush1.bf16.msra.mxu0 0
      %4761 = vmatprep.subr.bf16.mxu0 0
      %4762 = vmatpush1.bf16.msra.mxu0 0
      %4763 = vmatprep.subr.bf16.mxu0 0
      %4764 = vmatpush1.bf16.msra.mxu0 0
      %4765 = vmatprep.mubr.bf16.mxu0 0
      %4766 = vmatmul.mubr.bf16.gmra.mrb[0].mxu0 %v4584
      %v4767 = vpop.f32.mrb[0].mxu0
      %v4768 = vadd.f32 0.0, %v4767
      %v4769 = vpop.f32.mrb[0].mxu0
      %v4770 = vadd.f32 0.0, %v4769
      %v4771 = vpop.f32.mrb[0].mxu0
      %v4772 = vpop.f32.mrb[0].mxu0
      %4773 = vdwg.mxu0
      %v4774 = vadd.f32 %v4546, %v4645
      %v4775 = vadd.f32 %v4547, %v4647
      %v4776 = vadd.f32 %v4548, %v4686
      %v4777 = vadd.f32 %v4549, %v4688
      %v4778 = vadd.f32 %v4550, %v4727
      %v4779 = vadd.f32 %v4551, %v4729
      %v4780 = vadd.f32 %v4552, %v4768
      %v4781 = vadd.f32 %v4553, %v4770
      %s4782 = scalar_lea.vmem %s1, 80
      %v4783 = vld [vmem:[%s4782] sm:$0xf]
      %4784 = vrot.lane.b32.xlu0 %v4319, 54
      %v4785 = vpop.permute.xlu0 %4784
      %4786 = vrot.lane.b32.xlu0 %v4320, 54
      %v4787 = vpop.permute.xlu0 %4786
      %4788 = vrot.lane.b32.xlu0 %v4321, 54
      %v4789 = vpop.permute.xlu0 %4788
      %4790 = vrot.lane.b32.xlu0 %v4322, 54
      %v4791 = vpop.permute.xlu0 %4790
      %4792 = vrot.lane.b32.xlu0 %v4323, 54
      %v4793 = vpop.permute.xlu0 %4792
      %4794 = vrot.lane.b32.xlu0 %v4324, 54
      %v4795 = vpop.permute.xlu0 %4794
      %4796 = vrot.lane.b32.xlu0 %v4325, 54
      %v4797 = vpop.permute.xlu0 %4796
      %4798 = vrot.lane.b32.xlu0 %v4326, 54
      %v4799 = vpop.permute.xlu0 %4798
      %4800 = vrot.lane.b32.xlu0 %v4327, 54
      %v4801 = vpop.permute.xlu0 %4800
      %vm4802 = vcmask 441344
      %v4803 = vsel %vm4802, %v4785, %v4787
      %v4804 = vsel %vm4802, %v4787, %v4789
      %v4805 = vsel %vm4802, %v4789, %v4791
      %v4806 = vsel %vm4802, %v4791, %v4793
      %v4807 = vsel %vm4802, %v4793, %v4795
      %v4808 = vsel %vm4802, %v4795, %v4797
      %v4809 = vsel %vm4802, %v4797, %v4799
      %v4810 = vsel %vm4802, %v4799, %v4801
      %v4812 = vsel %vm266, %v4783, 0
      %v4815 = vsel %vm270, %v4803, 0
      %v4818 = vsel %vm270, %v4804, 0
      %v4821 = vsel %vm270, %v4805, 0
      %v4824 = vsel %vm270, %v4806, 0
      %v4827 = vsel %vm270, %v4807, 0
      %v4830 = vsel %vm270, %v4808, 0
      %v4833 = vsel %vm270, %v4809, 0
      %v4836 = vsel %vm270, %v4810, 0
      %4838 = vmatprep.subr.bf16.mxu0 %v4818
      %4839 = vmatpush1.bf16.msra.mxu0 %v4815
      %4840 = vmatprep.subr.bf16.mxu0 0
      %4841 = vmatpush1.bf16.msra.mxu0 0
      %4842 = vmatprep.subr.bf16.mxu0 0
      %4843 = vmatpush1.bf16.msra.mxu0 0
      %4844 = vmatprep.subr.bf16.mxu0 0
      %4845 = vmatpush1.bf16.msra.mxu0 0
      %4846 = vmatprep.subr.bf16.mxu0 0
      %4847 = vmatpush1.bf16.msra.mxu0 0
      %4848 = vmatprep.subr.bf16.mxu0 0
      %4849 = vmatpush1.bf16.msra.mxu0 0
      %4850 = vmatprep.subr.bf16.mxu0 0
      %4851 = vmatpush1.bf16.msra.mxu0 0
      %4852 = vmatprep.subr.bf16.mxu0 0
      %4853 = vmatpush1.bf16.msra.mxu0 0
      %4854 = vmatprep.subr.bf16.mxu0 0
      %4855 = vmatpush1.bf16.msra.mxu0 0
      %4856 = vmatprep.subr.bf16.mxu0 0
      %4857 = vmatpush1.bf16.msra.mxu0 0
      %4858 = vmatprep.subr.bf16.mxu0 0
      %4859 = vmatpush1.bf16.msra.mxu0 0
      %4860 = vmatprep.subr.bf16.mxu0 0
      %4861 = vmatpush1.bf16.msra.mxu0 0
      %4862 = vmatprep.subr.bf16.mxu0 0
      %4863 = vmatpush1.bf16.msra.mxu0 0
      %4864 = vmatprep.subr.bf16.mxu0 0
      %4865 = vmatpush1.bf16.msra.mxu0 0
      %4866 = vmatprep.subr.bf16.mxu0 0
      %4867 = vmatpush1.bf16.msra.mxu0 0
      %4868 = vmatprep.subr.bf16.mxu0 0
      %4869 = vmatpush1.bf16.msra.mxu0 0
      %4870 = vmatprep.mubr.bf16.mxu0 0
      %4871 = vmatmul.mubr.bf16.gmra.mrb[0].mxu0 %v4812
      %v4872 = vpop.f32.mrb[0].mxu0
      %v4873 = vadd.f32 0.0, %v4872
      %v4874 = vpop.f32.mrb[0].mxu0
      %v4875 = vadd.f32 0.0, %v4874
      %v4876 = vpop.f32.mrb[0].mxu0
      %v4877 = vpop.f32.mrb[0].mxu0
      %4878 = vdwg.mxu0
      %4879 = vmatprep.subr.bf16.mxu0 %v4824
      %4880 = vmatpush1.bf16.msra.mxu0 %v4821
      %4881 = vmatprep.subr.bf16.mxu0 0
      %4882 = vmatpush1.bf16.msra.mxu0 0
      %4883 = vmatprep.subr.bf16.mxu0 0
      %4884 = vmatpush1.bf16.msra.mxu0 0
      %4885 = vmatprep.subr.bf16.mxu0 0
      %4886 = vmatpush1.bf16.msra.mxu0 0
      %4887 = vmatprep.subr.bf16.mxu0 0
      %4888 = vmatpush1.bf16.msra.mxu0 0
      %4889 = vmatprep.subr.bf16.mxu0 0
      %4890 = vmatpush1.bf16.msra.mxu0 0
      %4891 = vmatprep.subr.bf16.mxu0 0
      %4892 = vmatpush1.bf16.msra.mxu0 0
      %4893 = vmatprep.subr.bf16.mxu0 0
      %4894 = vmatpush1.bf16.msra.mxu0 0
      %4895 = vmatprep.subr.bf16.mxu0 0
      %4896 = vmatpush1.bf16.msra.mxu0 0
      %4897 = vmatprep.subr.bf16.mxu0 0
      %4898 = vmatpush1.bf16.msra.mxu0 0
      %4899 = vmatprep.subr.bf16.mxu0 0
      %4900 = vmatpush1.bf16.msra.mxu0 0
      %4901 = vmatprep.subr.bf16.mxu0 0
      %4902 = vmatpush1.bf16.msra.mxu0 0
      %4903 = vmatprep.subr.bf16.mxu0 0
      %4904 = vmatpush1.bf16.msra.mxu0 0
      %4905 = vmatprep.subr.bf16.mxu0 0
      %4906 = vmatpush1.bf16.msra.mxu0 0
      %4907 = vmatprep.subr.bf16.mxu0 0
      %4908 = vmatpush1.bf16.msra.mxu0 0
      %4909 = vmatprep.subr.bf16.mxu0 0
      %4910 = vmatpush1.bf16.msra.mxu0 0
      %4911 = vmatprep.mubr.bf16.mxu0 0
      %4912 = vmatmul.mubr.bf16.gmra.mrb[0].mxu0 %v4812
      %v4913 = vpop.f32.mrb[0].mxu0
      %v4914 = vadd.f32 0.0, %v4913
      %v4915 = vpop.f32.mrb[0].mxu0
      %v4916 = vadd.f32 0.0, %v4915
      %v4917 = vpop.f32.mrb[0].mxu0
      %v4918 = vpop.f32.mrb[0].mxu0
      %4919 = vdwg.mxu0
      %4920 = vmatprep.subr.bf16.mxu0 %v4830
      %4921 = vmatpush1.bf16.msra.mxu0 %v4827
      %4922 = vmatprep.subr.bf16.mxu0 0
      %4923 = vmatpush1.bf16.msra.mxu0 0
      %4924 = vmatprep.subr.bf16.mxu0 0
      %4925 = vmatpush1.bf16.msra.mxu0 0
      %4926 = vmatprep.subr.bf16.mxu0 0
      %4927 = vmatpush1.bf16.msra.mxu0 0
      %4928 = vmatprep.subr.bf16.mxu0 0
      %4929 = vmatpush1.bf16.msra.mxu0 0
      %4930 = vmatprep.subr.bf16.mxu0 0
      %4931 = vmatpush1.bf16.msra.mxu0 0
      %4932 = vmatprep.subr.bf16.mxu0 0
      %4933 = vmatpush1.bf16.msra.mxu0 0
      %4934 = vmatprep.subr.bf16.mxu0 0
      %4935 = vmatpush1.bf16.msra.mxu0 0
      %4936 = vmatprep.subr.bf16.mxu0 0
      %4937 = vmatpush1.bf16.msra.mxu0 0
      %4938 = vmatprep.subr.bf16.mxu0 0
      %4939 = vmatpush1.bf16.msra.mxu0 0
      %4940 = vmatprep.subr.bf16.mxu0 0
      %4941 = vmatpush1.bf16.msra.mxu0 0
      %4942 = vmatprep.subr.bf16.mxu0 0
      %4943 = vmatpush1.bf16.msra.mxu0 0
      %4944 = vmatprep.subr.bf16.mxu0 0
      %4945 = vmatpush1.bf16.msra.mxu0 0
      %4946 = vmatprep.subr.bf16.mxu0 0
      %4947 = vmatpush1.bf16.msra.mxu0 0
      %4948 = vmatprep.subr.bf16.mxu0 0
      %4949 = vmatpush1.bf16.msra.mxu0 0
      %4950 = vmatprep.subr.bf16.mxu0 0
      %4951 = vmatpush1.bf16.msra.mxu0 0
      %4952 = vmatprep.mubr.bf16.mxu0 0
      %4953 = vmatmul.mubr.bf16.gmra.mrb[0].mxu0 %v4812
      %v4954 = vpop.f32.mrb[0].mxu0
      %v4955 = vadd.f32 0.0, %v4954
      %v4956 = vpop.f32.mrb[0].mxu0
      %v4957 = vadd.f32 0.0, %v4956
      %v4958 = vpop.f32.mrb[0].mxu0
      %v4959 = vpop.f32.mrb[0].mxu0
      %4960 = vdwg.mxu0
      %4961 = vmatprep.subr.bf16.mxu0 %v4836
      %4962 = vmatpush1.bf16.msra.mxu0 %v4833
      %4963 = vmatprep.subr.bf16.mxu0 0
      %4964 = vmatpush1.bf16.msra.mxu0 0
      %4965 = vmatprep.subr.bf16.mxu0 0
      %4966 = vmatpush1.bf16.msra.mxu0 0
      %4967 = vmatprep.subr.bf16.mxu0 0
      %4968 = vmatpush1.bf16.msra.mxu0 0
      %4969 = vmatprep.subr.bf16.mxu0 0
      %4970 = vmatpush1.bf16.msra.mxu0 0
      %4971 = vmatprep.subr.bf16.mxu0 0
      %4972 = vmatpush1.bf16.msra.mxu0 0
      %4973 = vmatprep.subr.bf16.mxu0 0
      %4974 = vmatpush1.bf16.msra.mxu0 0
      %4975 = vmatprep.subr.bf16.mxu0 0
      %4976 = vmatpush1.bf16.msra.mxu0 0
      %4977 = vmatprep.subr.bf16.mxu0 0
      %4978 = vmatpush1.bf16.msra.mxu0 0
      %4979 = vmatprep.subr.bf16.mxu0 0
      %4980 = vmatpush1.bf16.msra.mxu0 0
      %4981 = vmatprep.subr.bf16.mxu0 0
      %4982 = vmatpush1.bf16.msra.mxu0 0
      %4983 = vmatprep.subr.bf16.mxu0 0
      %4984 = vmatpush1.bf16.msra.mxu0 0
      %4985 = vmatprep.subr.bf16.mxu0 0
      %4986 = vmatpush1.bf16.msra.mxu0 0
      %4987 = vmatprep.subr.bf16.mxu0 0
      %4988 = vmatpush1.bf16.msra.mxu0 0
      %4989 = vmatprep.subr.bf16.mxu0 0
      %4990 = vmatpush1.bf16.msra.mxu0 0
      %4991 = vmatprep.subr.bf16.mxu0 0
      %4992 = vmatpush1.bf16.msra.mxu0 0
      %4993 = vmatprep.mubr.bf16.mxu0 0
      %4994 = vmatmul.mubr.bf16.gmra.mrb[0].mxu0 %v4812
      %v4995 = vpop.f32.mrb[0].mxu0
      %v4996 = vadd.f32 0.0, %v4995
      %v4997 = vpop.f32.mrb[0].mxu0
      %v4998 = vadd.f32 0.0, %v4997
      %v4999 = vpop.f32.mrb[0].mxu0
      %v5000 = vpop.f32.mrb[0].mxu0
      %5001 = vdwg.mxu0
      %v5002 = vadd.f32 %v4774, %v4873
      %v5003 = vadd.f32 %v4775, %v4875
      %v5004 = vadd.f32 %v4776, %v4914
      %v5005 = vadd.f32 %v4777, %v4916
      %v5006 = vadd.f32 %v4778, %v4955
      %v5007 = vadd.f32 %v4779, %v4957
      %v5008 = vadd.f32 %v4780, %v4996
      %v5009 = vadd.f32 %v4781, %v4998
      %s5010 = scalar_lea.vmem %s1, 84
      %v5011 = vld [vmem:[%s5010] sm:$0xf]
      %5012 = vrot.lane.b32.xlu0 %v4319, 46
      %v5013 = vpop.permute.xlu0 %5012
      %5014 = vrot.lane.b32.xlu0 %v4320, 46
      %v5015 = vpop.permute.xlu0 %5014
      %5016 = vrot.lane.b32.xlu0 %v4321, 46
      %v5017 = vpop.permute.xlu0 %5016
      %5018 = vrot.lane.b32.xlu0 %v4322, 46
      %v5019 = vpop.permute.xlu0 %5018
      %5020 = vrot.lane.b32.xlu0 %v4323, 46
      %v5021 = vpop.permute.xlu0 %5020
      %5022 = vrot.lane.b32.xlu0 %v4324, 46
      %v5023 = vpop.permute.xlu0 %5022
      %5024 = vrot.lane.b32.xlu0 %v4325, 46
      %v5025 = vpop.permute.xlu0 %5024
      %5026 = vrot.lane.b32.xlu0 %v4326, 46
      %v5027 = vpop.permute.xlu0 %5026
      %5028 = vrot.lane.b32.xlu0 %v4327, 46
      %v5029 = vpop.permute.xlu0 %5028
      %vm5030 = vcmask 375808
      %v5031 = vsel %vm5030, %v5013, %v5015
      %v5032 = vsel %vm5030, %v5015, %v5017
      %v5033 = vsel %vm5030, %v5017, %v5019
      %v5034 = vsel %vm5030, %v5019, %v5021
      %v5035 = vsel %vm5030, %v5021, %v5023
      %v5036 = vsel %vm5030, %v5023, %v5025
      %v5037 = vsel %vm5030, %v5025, %v5027
      %v5038 = vsel %vm5030, %v5027, %v5029
      %v5040 = vsel %vm266, %v5011, 0
      %v5043 = vsel %vm270, %v5031, 0
      %v5046 = vsel %vm270, %v5032, 0
      %v5049 = vsel %vm270, %v5033, 0
      %v5052 = vsel %vm270, %v5034, 0
      %v5055 = vsel %vm270, %v5035, 0
      %v5058 = vsel %vm270, %v5036, 0
      %v5061 = vsel %vm270, %v5037, 0
      %v5064 = vsel %vm270, %v5038, 0
      %5066 = vmatprep.subr.bf16.mxu0 %v5046
      %5067 = vmatpush1.bf16.msra.mxu0 %v5043
      %5068 = vmatprep.subr.bf16.mxu0 0
      %5069 = vmatpush1.bf16.msra.mxu0 0
      %5070 = vmatprep.subr.bf16.mxu0 0
      %5071 = vmatpush1.bf16.msra.mxu0 0
      %5072 = vmatprep.subr.bf16.mxu0 0
      %5073 = vmatpush1.bf16.msra.mxu0 0
      %5074 = vmatprep.subr.bf16.mxu0 0
      %5075 = vmatpush1.bf16.msra.mxu0 0
      %5076 = vmatprep.subr.bf16.mxu0 0
      %5077 = vmatpush1.bf16.msra.mxu0 0
      %5078 = vmatprep.subr.bf16.mxu0 0
      %5079 = vmatpush1.bf16.msra.mxu0 0
      %5080 = vmatprep.subr.bf16.mxu0 0
      %5081 = vmatpush1.bf16.msra.mxu0 0
      %5082 = vmatprep.subr.bf16.mxu0 0
      %5083 = vmatpush1.bf16.msra.mxu0 0
      %5084 = vmatprep.subr.bf16.mxu0 0
      %5085 = vmatpush1.bf16.msra.mxu0 0
      %5086 = vmatprep.subr.bf16.mxu0 0
      %5087 = vmatpush1.bf16.msra.mxu0 0
      %5088 = vmatprep.subr.bf16.mxu0 0
      %5089 = vmatpush1.bf16.msra.mxu0 0
      %5090 = vmatprep.subr.bf16.mxu0 0
      %5091 = vmatpush1.bf16.msra.mxu0 0
      %5092 = vmatprep.subr.bf16.mxu0 0
      %5093 = vmatpush1.bf16.msra.mxu0 0
      %5094 = vmatprep.subr.bf16.mxu0 0
      %5095 = vmatpush1.bf16.msra.mxu0 0
      %5096 = vmatprep.subr.bf16.mxu0 0
      %5097 = vmatpush1.bf16.msra.mxu0 0
      %5098 = vmatprep.mubr.bf16.mxu0 0
      %5099 = vmatmul.mubr.bf16.gmra.mrb[0].mxu0 %v5040
      %v5100 = vpop.f32.mrb[0].mxu0
      %v5101 = vadd.f32 0.0, %v5100
      %v5102 = vpop.f32.mrb[0].mxu0
      %v5103 = vadd.f32 0.0, %v5102
      %v5104 = vpop.f32.mrb[0].mxu0
      %v5105 = vpop.f32.mrb[0].mxu0
      %5106 = vdwg.mxu0
      %5107 = vmatprep.subr.bf16.mxu0 %v5052
      %5108 = vmatpush1.bf16.msra.mxu0 %v5049
      %5109 = vmatprep.subr.bf16.mxu0 0
      %5110 = vmatpush1.bf16.msra.mxu0 0
      %5111 = vmatprep.subr.bf16.mxu0 0
      %5112 = vmatpush1.bf16.msra.mxu0 0
      %5113 = vmatprep.subr.bf16.mxu0 0
      %5114 = vmatpush1.bf16.msra.mxu0 0
      %5115 = vmatprep.subr.bf16.mxu0 0
      %5116 = vmatpush1.bf16.msra.mxu0 0
      %5117 = vmatprep.subr.bf16.mxu0 0
      %5118 = vmatpush1.bf16.msra.mxu0 0
      %5119 = vmatprep.subr.bf16.mxu0 0
      %5120 = vmatpush1.bf16.msra.mxu0 0
      %5121 = vmatprep.subr.bf16.mxu0 0
      %5122 = vmatpush1.bf16.msra.mxu0 0
      %5123 = vmatprep.subr.bf16.mxu0 0
      %5124 = vmatpush1.bf16.msra.mxu0 0
      %5125 = vmatprep.subr.bf16.mxu0 0
      %5126 = vmatpush1.bf16.msra.mxu0 0
      %5127 = vmatprep.subr.bf16.mxu0 0
      %5128 = vmatpush1.bf16.msra.mxu0 0
      %5129 = vmatprep.subr.bf16.mxu0 0
      %5130 = vmatpush1.bf16.msra.mxu0 0
      %5131 = vmatprep.subr.bf16.mxu0 0
      %5132 = vmatpush1.bf16.msra.mxu0 0
      %5133 = vmatprep.subr.bf16.mxu0 0
      %5134 = vmatpush1.bf16.msra.mxu0 0
      %5135 = vmatprep.subr.bf16.mxu0 0
      %5136 = vmatpush1.bf16.msra.mxu0 0
      %5137 = vmatprep.subr.bf16.mxu0 0
      %5138 = vmatpush1.bf16.msra.mxu0 0
      %5139 = vmatprep.mubr.bf16.mxu0 0
      %5140 = vmatmul.mubr.bf16.gmra.mrb[0].mxu0 %v5040
      %v5141 = vpop.f32.mrb[0].mxu0
      %v5142 = vadd.f32 0.0, %v5141
      %v5143 = vpop.f32.mrb[0].mxu0
      %v5144 = vadd.f32 0.0, %v5143
      %v5145 = vpop.f32.mrb[0].mxu0
      %v5146 = vpop.f32.mrb[0].mxu0
      %5147 = vdwg.mxu0
      %5148 = vmatprep.subr.bf16.mxu0 %v5058
      %5149 = vmatpush1.bf16.msra.mxu0 %v5055
      %5150 = vmatprep.subr.bf16.mxu0 0
      %5151 = vmatpush1.bf16.msra.mxu0 0
      %5152 = vmatprep.subr.bf16.mxu0 0
      %5153 = vmatpush1.bf16.msra.mxu0 0
      %5154 = vmatprep.subr.bf16.mxu0 0
      %5155 = vmatpush1.bf16.msra.mxu0 0
      %5156 = vmatprep.subr.bf16.mxu0 0
      %5157 = vmatpush1.bf16.msra.mxu0 0
      %5158 = vmatprep.subr.bf16.mxu0 0
      %5159 = vmatpush1.bf16.msra.mxu0 0
      %5160 = vmatprep.subr.bf16.mxu0 0
      %5161 = vmatpush1.bf16.msra.mxu0 0
      %5162 = vmatprep.subr.bf16.mxu0 0
      %5163 = vmatpush1.bf16.msra.mxu0 0
      %5164 = vmatprep.subr.bf16.mxu0 0
      %5165 = vmatpush1.bf16.msra.mxu0 0
      %5166 = vmatprep.subr.bf16.mxu0 0
      %5167 = vmatpush1.bf16.msra.mxu0 0
      %5168 = vmatprep.subr.bf16.mxu0 0
      %5169 = vmatpush1.bf16.msra.mxu0 0
      %5170 = vmatprep.subr.bf16.mxu0 0
      %5171 = vmatpush1.bf16.msra.mxu0 0
      %5172 = vmatprep.subr.bf16.mxu0 0
      %5173 = vmatpush1.bf16.msra.mxu0 0
      %5174 = vmatprep.subr.bf16.mxu0 0
      %5175 = vmatpush1.bf16.msra.mxu0 0
      %5176 = vmatprep.subr.bf16.mxu0 0
      %5177 = vmatpush1.bf16.msra.mxu0 0
      %5178 = vmatprep.subr.bf16.mxu0 0
      %5179 = vmatpush1.bf16.msra.mxu0 0
      %5180 = vmatprep.mubr.bf16.mxu0 0
      %5181 = vmatmul.mubr.bf16.gmra.mrb[0].mxu0 %v5040
      %v5182 = vpop.f32.mrb[0].mxu0
      %v5183 = vadd.f32 0.0, %v5182
      %v5184 = vpop.f32.mrb[0].mxu0
      %v5185 = vadd.f32 0.0, %v5184
      %v5186 = vpop.f32.mrb[0].mxu0
      %v5187 = vpop.f32.mrb[0].mxu0
      %5188 = vdwg.mxu0
      %5189 = vmatprep.subr.bf16.mxu0 %v5064
      %5190 = vmatpush1.bf16.msra.mxu0 %v5061
      %5191 = vmatprep.subr.bf16.mxu0 0
      %5192 = vmatpush1.bf16.msra.mxu0 0
      %5193 = vmatprep.subr.bf16.mxu0 0
      %5194 = vmatpush1.bf16.msra.mxu0 0
      %5195 = vmatprep.subr.bf16.mxu0 0
      %5196 = vmatpush1.bf16.msra.mxu0 0
      %5197 = vmatprep.subr.bf16.mxu0 0
      %5198 = vmatpush1.bf16.msra.mxu0 0
      %5199 = vmatprep.subr.bf16.mxu0 0
      %5200 = vmatpush1.bf16.msra.mxu0 0
      %5201 = vmatprep.subr.bf16.mxu0 0
      %5202 = vmatpush1.bf16.msra.mxu0 0
      %5203 = vmatprep.subr.bf16.mxu0 0
      %5204 = vmatpush1.bf16.msra.mxu0 0
      %5205 = vmatprep.subr.bf16.mxu0 0
      %5206 = vmatpush1.bf16.msra.mxu0 0
      %5207 = vmatprep.subr.bf16.mxu0 0
      %5208 = vmatpush1.bf16.msra.mxu0 0
      %5209 = vmatprep.subr.bf16.mxu0 0
      %5210 = vmatpush1.bf16.msra.mxu0 0
      %5211 = vmatprep.subr.bf16.mxu0 0
      %5212 = vmatpush1.bf16.msra.mxu0 0
      %5213 = vmatprep.subr.bf16.mxu0 0
      %5214 = vmatpush1.bf16.msra.mxu0 0
      %5215 = vmatprep.subr.bf16.mxu0 0
      %5216 = vmatpush1.bf16.msra.mxu0 0
      %5217 = vmatprep.subr.bf16.mxu0 0
      %5218 = vmatpush1.bf16.msra.mxu0 0
      %5219 = vmatprep.subr.bf16.mxu0 0
      %5220 = vmatpush1.bf16.msra.mxu0 0
      %5221 = vmatprep.mubr.bf16.mxu0 0
      %5222 = vmatmul.mubr.bf16.gmra.mrb[0].mxu0 %v5040
      %v5223 = vpop.f32.mrb[0].mxu0
      %v5224 = vadd.f32 0.0, %v5223
      %v5225 = vpop.f32.mrb[0].mxu0
      %v5226 = vadd.f32 0.0, %v5225
      %v5227 = vpop.f32.mrb[0].mxu0
      %v5228 = vpop.f32.mrb[0].mxu0
      %5229 = vdwg.mxu0
      %v5230 = vadd.f32 %v5002, %v5101
      %v5231 = vadd.f32 %v5003, %v5103
      %v5232 = vadd.f32 %v5004, %v5142
      %v5233 = vadd.f32 %v5005, %v5144
      %v5234 = vadd.f32 %v5006, %v5183
      %v5235 = vadd.f32 %v5007, %v5185
      %v5236 = vadd.f32 %v5008, %v5224
      %v5237 = vadd.f32 %v5009, %v5226
      %s5238 = scalar_lea.vmem %s1, 88
      %v5239 = vld [vmem:[%s5238] sm:$0xf]
      %5240 = vrot.lane.b32.xlu0 %v4319, 45
      %v5241 = vpop.permute.xlu0 %5240
      %5242 = vrot.lane.b32.xlu0 %v4320, 45
      %v5243 = vpop.permute.xlu0 %5242
      %5244 = vrot.lane.b32.xlu0 %v4321, 45
      %v5245 = vpop.permute.xlu0 %5244
      %5246 = vrot.lane.b32.xlu0 %v4322, 45
      %v5247 = vpop.permute.xlu0 %5246
      %5248 = vrot.lane.b32.xlu0 %v4323, 45
      %v5249 = vpop.permute.xlu0 %5248
      %5250 = vrot.lane.b32.xlu0 %v4324, 45
      %v5251 = vpop.permute.xlu0 %5250
      %5252 = vrot.lane.b32.xlu0 %v4325, 45
      %v5253 = vpop.permute.xlu0 %5252
      %5254 = vrot.lane.b32.xlu0 %v4326, 45
      %v5255 = vpop.permute.xlu0 %5254
      %5256 = vrot.lane.b32.xlu0 %v4327, 45
      %v5257 = vpop.permute.xlu0 %5256
      %vm5258 = vcmask 367616
      %v5259 = vsel %vm5258, %v5241, %v5243
      %v5260 = vsel %vm5258, %v5243, %v5245
      %v5261 = vsel %vm5258, %v5245, %v5247
      %v5262 = vsel %vm5258, %v5247, %v5249
      %v5263 = vsel %vm5258, %v5249, %v5251
      %v5264 = vsel %vm5258, %v5251, %v5253
      %v5265 = vsel %vm5258, %v5253, %v5255
      %v5266 = vsel %vm5258, %v5255, %v5257
      %v5268 = vsel %vm266, %v5239, 0
      %v5271 = vsel %vm270, %v5259, 0
      %v5274 = vsel %vm270, %v5260, 0
      %v5277 = vsel %vm270, %v5261, 0
      %v5280 = vsel %vm270, %v5262, 0
      %v5283 = vsel %vm270, %v5263, 0
      %v5286 = vsel %vm270, %v5264, 0
      %v5289 = vsel %vm270, %v5265, 0
      %v5292 = vsel %vm270, %v5266, 0
      %5294 = vmatprep.subr.bf16.mxu0 %v5274
      %5295 = vmatpush1.bf16.msra.mxu0 %v5271
      %5296 = vmatprep.subr.bf16.mxu0 0
      %5297 = vmatpush1.bf16.msra.mxu0 0
      %5298 = vmatprep.subr.bf16.mxu0 0
      %5299 = vmatpush1.bf16.msra.mxu0 0
      %5300 = vmatprep.subr.bf16.mxu0 0
      %5301 = vmatpush1.bf16.msra.mxu0 0
      %5302 = vmatprep.subr.bf16.mxu0 0
      %5303 = vmatpush1.bf16.msra.mxu0 0
      %5304 = vmatprep.subr.bf16.mxu0 0
      %5305 = vmatpush1.bf16.msra.mxu0 0
      %5306 = vmatprep.subr.bf16.mxu0 0
      %5307 = vmatpush1.bf16.msra.mxu0 0
      %5308 = vmatprep.subr.bf16.mxu0 0
      %5309 = vmatpush1.bf16.msra.mxu0 0
      %5310 = vmatprep.subr.bf16.mxu0 0
      %5311 = vmatpush1.bf16.msra.mxu0 0
      %5312 = vmatprep.subr.bf16.mxu0 0
      %5313 = vmatpush1.bf16.msra.mxu0 0
      %5314 = vmatprep.subr.bf16.mxu0 0
      %5315 = vmatpush1.bf16.msra.mxu0 0
      %5316 = vmatprep.subr.bf16.mxu0 0
      %5317 = vmatpush1.bf16.msra.mxu0 0
      %5318 = vmatprep.subr.bf16.mxu0 0
      %5319 = vmatpush1.bf16.msra.mxu0 0
      %5320 = vmatprep.subr.bf16.mxu0 0
      %5321 = vmatpush1.bf16.msra.mxu0 0
      %5322 = vmatprep.subr.bf16.mxu0 0
      %5323 = vmatpush1.bf16.msra.mxu0 0
      %5324 = vmatprep.subr.bf16.mxu0 0
      %5325 = vmatpush1.bf16.msra.mxu0 0
      %5326 = vmatprep.mubr.bf16.mxu0 0
      %5327 = vmatmul.mubr.bf16.gmra.mrb[0].mxu0 %v5268
      %v5328 = vpop.f32.mrb[0].mxu0
      %v5329 = vadd.f32 0.0, %v5328
      %v5330 = vpop.f32.mrb[0].mxu0
      %v5331 = vadd.f32 0.0, %v5330
      %v5332 = vpop.f32.mrb[0].mxu0
      %v5333 = vpop.f32.mrb[0].mxu0
      %5334 = vdwg.mxu0
      %5335 = vmatprep.subr.bf16.mxu0 %v5280
      %5336 = vmatpush1.bf16.msra.mxu0 %v5277
      %5337 = vmatprep.subr.bf16.mxu0 0
      %5338 = vmatpush1.bf16.msra.mxu0 0
      %5339 = vmatprep.subr.bf16.mxu0 0
      %5340 = vmatpush1.bf16.msra.mxu0 0
      %5341 = vmatprep.subr.bf16.mxu0 0
      %5342 = vmatpush1.bf16.msra.mxu0 0
      %5343 = vmatprep.subr.bf16.mxu0 0
      %5344 = vmatpush1.bf16.msra.mxu0 0
      %5345 = vmatprep.subr.bf16.mxu0 0
      %5346 = vmatpush1.bf16.msra.mxu0 0
      %5347 = vmatprep.subr.bf16.mxu0 0
      %5348 = vmatpush1.bf16.msra.mxu0 0
      %5349 = vmatprep.subr.bf16.mxu0 0
      %5350 = vmatpush1.bf16.msra.mxu0 0
      %5351 = vmatprep.subr.bf16.mxu0 0
      %5352 = vmatpush1.bf16.msra.mxu0 0
      %5353 = vmatprep.subr.bf16.mxu0 0
      %5354 = vmatpush1.bf16.msra.mxu0 0
      %5355 = vmatprep.subr.bf16.mxu0 0
      %5356 = vmatpush1.bf16.msra.mxu0 0
      %5357 = vmatprep.subr.bf16.mxu0 0
      %5358 = vmatpush1.bf16.msra.mxu0 0
      %5359 = vmatprep.subr.bf16.mxu0 0
      %5360 = vmatpush1.bf16.msra.mxu0 0
      %5361 = vmatprep.subr.bf16.mxu0 0
      %5362 = vmatpush1.bf16.msra.mxu0 0
      %5363 = vmatprep.subr.bf16.mxu0 0
      %5364 = vmatpush1.bf16.msra.mxu0 0
      %5365 = vmatprep.subr.bf16.mxu0 0
      %5366 = vmatpush1.bf16.msra.mxu0 0
      %5367 = vmatprep.mubr.bf16.mxu0 0
      %5368 = vmatmul.mubr.bf16.gmra.mrb[0].mxu0 %v5268
      %v5369 = vpop.f32.mrb[0].mxu0
      %v5370 = vadd.f32 0.0, %v5369
      %v5371 = vpop.f32.mrb[0].mxu0
      %v5372 = vadd.f32 0.0, %v5371
      %v5373 = vpop.f32.mrb[0].mxu0
      %v5374 = vpop.f32.mrb[0].mxu0
      %5375 = vdwg.mxu0
      %5376 = vmatprep.subr.bf16.mxu0 %v5286
      %5377 = vmatpush1.bf16.msra.mxu0 %v5283
      %5378 = vmatprep.subr.bf16.mxu0 0
      %5379 = vmatpush1.bf16.msra.mxu0 0
      %5380 = vmatprep.subr.bf16.mxu0 0
      %5381 = vmatpush1.bf16.msra.mxu0 0
      %5382 = vmatprep.subr.bf16.mxu0 0
      %5383 = vmatpush1.bf16.msra.mxu0 0
      %5384 = vmatprep.subr.bf16.mxu0 0
      %5385 = vmatpush1.bf16.msra.mxu0 0
      %5386 = vmatprep.subr.bf16.mxu0 0
      %5387 = vmatpush1.bf16.msra.mxu0 0
      %5388 = vmatprep.subr.bf16.mxu0 0
      %5389 = vmatpush1.bf16.msra.mxu0 0
      %5390 = vmatprep.subr.bf16.mxu0 0
      %5391 = vmatpush1.bf16.msra.mxu0 0
      %5392 = vmatprep.subr.bf16.mxu0 0
      %5393 = vmatpush1.bf16.msra.mxu0 0
      %5394 = vmatprep.subr.bf16.mxu0 0
      %5395 = vmatpush1.bf16.msra.mxu0 0
      %5396 = vmatprep.subr.bf16.mxu0 0
      %5397 = vmatpush1.bf16.msra.mxu0 0
      %5398 = vmatprep.subr.bf16.mxu0 0
      %5399 = vmatpush1.bf16.msra.mxu0 0
      %5400 = vmatprep.subr.bf16.mxu0 0
      %5401 = vmatpush1.bf16.msra.mxu0 0
      %5402 = vmatprep.subr.bf16.mxu0 0
      %5403 = vmatpush1.bf16.msra.mxu0 0
      %5404 = vmatprep.subr.bf16.mxu0 0
      %5405 = vmatpush1.bf16.msra.mxu0 0
      %5406 = vmatprep.subr.bf16.mxu0 0
      %5407 = vmatpush1.bf16.msra.mxu0 0
      %5408 = vmatprep.mubr.bf16.mxu0 0
      %5409 = vmatmul.mubr.bf16.gmra.mrb[0].mxu0 %v5268
      %v5410 = vpop.f32.mrb[0].mxu0
      %v5411 = vadd.f32 0.0, %v5410
      %v5412 = vpop.f32.mrb[0].mxu0
      %v5413 = vadd.f32 0.0, %v5412
      %v5414 = vpop.f32.mrb[0].mxu0
      %v5415 = vpop.f32.mrb[0].mxu0
      %5416 = vdwg.mxu0
      %5417 = vmatprep.subr.bf16.mxu0 %v5292
      %5418 = vmatpush1.bf16.msra.mxu0 %v5289
      %5419 = vmatprep.subr.bf16.mxu0 0
      %5420 = vmatpush1.bf16.msra.mxu0 0
      %5421 = vmatprep.subr.bf16.mxu0 0
      %5422 = vmatpush1.bf16.msra.mxu0 0
      %5423 = vmatprep.subr.bf16.mxu0 0
      %5424 = vmatpush1.bf16.msra.mxu0 0
      %5425 = vmatprep.subr.bf16.mxu0 0
      %5426 = vmatpush1.bf16.msra.mxu0 0
      %5427 = vmatprep.subr.bf16.mxu0 0
      %5428 = vmatpush1.bf16.msra.mxu0 0
      %5429 = vmatprep.subr.bf16.mxu0 0
      %5430 = vmatpush1.bf16.msra.mxu0 0
      %5431 = vmatprep.subr.bf16.mxu0 0
      %5432 = vmatpush1.bf16.msra.mxu0 0
      %5433 = vmatprep.subr.bf16.mxu0 0
      %5434 = vmatpush1.bf16.msra.mxu0 0
      %5435 = vmatprep.subr.bf16.mxu0 0
      %5436 = vmatpush1.bf16.msra.mxu0 0
      %5437 = vmatprep.subr.bf16.mxu0 0
      %5438 = vmatpush1.bf16.msra.mxu0 0
      %5439 = vmatprep.subr.bf16.mxu0 0
      %5440 = vmatpush1.bf16.msra.mxu0 0
      %5441 = vmatprep.subr.bf16.mxu0 0
      %5442 = vmatpush1.bf16.msra.mxu0 0
      %5443 = vmatprep.subr.bf16.mxu0 0
      %5444 = vmatpush1.bf16.msra.mxu0 0
      %5445 = vmatprep.subr.bf16.mxu0 0
      %5446 = vmatpush1.bf16.msra.mxu0 0
      %5447 = vmatprep.subr.bf16.mxu0 0
      %5448 = vmatpush1.bf16.msra.mxu0 0
      %5449 = vmatprep.mubr.bf16.mxu0 0
      %5450 = vmatmul.mubr.bf16.gmra.mrb[0].mxu0 %v5268
      %v5451 = vpop.f32.mrb[0].mxu0
      %v5452 = vadd.f32 0.0, %v5451
      %v5453 = vpop.f32.mrb[0].mxu0
      %v5454 = vadd.f32 0.0, %v5453
      %v5455 = vpop.f32.mrb[0].mxu0
      %v5456 = vpop.f32.mrb[0].mxu0
      %5457 = vdwg.mxu0
      %v5458 = vadd.f32 %v5230, %v5329
      %v5459 = vadd.f32 %v5231, %v5331
      %v5460 = vadd.f32 %v5232, %v5370
      %v5461 = vadd.f32 %v5233, %v5372
      %v5462 = vadd.f32 %v5234, %v5411
      %v5463 = vadd.f32 %v5235, %v5413
      %v5464 = vadd.f32 %v5236, %v5452
      %v5465 = vadd.f32 %v5237, %v5454
      %s5466 = scalar_lea.vmem %s1, 92
      %v5467 = vld [vmem:[%s5466] sm:$0xf]
      %5468 = vrot.lane.b32.xlu0 %v4319, 44
      %v5469 = vpop.permute.xlu0 %5468
      %5470 = vrot.lane.b32.xlu0 %v4320, 44
      %v5471 = vpop.permute.xlu0 %5470
      %5472 = vrot.lane.b32.xlu0 %v4321, 44
      %v5473 = vpop.permute.xlu0 %5472
      %5474 = vrot.lane.b32.xlu0 %v4322, 44
      %v5475 = vpop.permute.xlu0 %5474
      %5476 = vrot.lane.b32.xlu0 %v4323, 44
      %v5477 = vpop.permute.xlu0 %5476
      %5478 = vrot.lane.b32.xlu0 %v4324, 44
      %v5479 = vpop.permute.xlu0 %5478
      %5480 = vrot.lane.b32.xlu0 %v4325, 44
      %v5481 = vpop.permute.xlu0 %5480
      %5482 = vrot.lane.b32.xlu0 %v4326, 44
      %v5483 = vpop.permute.xlu0 %5482
      %5484 = vrot.lane.b32.xlu0 %v4327, 44
      %v5485 = vpop.permute.xlu0 %5484
      %vm5486 = vcmask 359424
      %v5487 = vsel %vm5486, %v5469, %v5471
      %v5488 = vsel %vm5486, %v5471, %v5473
      %v5489 = vsel %vm5486, %v5473, %v5475
      %v5490 = vsel %vm5486, %v5475, %v5477
      %v5491 = vsel %vm5486, %v5477, %v5479
      %v5492 = vsel %vm5486, %v5479, %v5481
      %v5493 = vsel %vm5486, %v5481, %v5483
      %v5494 = vsel %vm5486, %v5483, %v5485
      %v5496 = vsel %vm266, %v5467, 0
      %v5499 = vsel %vm270, %v5487, 0
      %v5502 = vsel %vm270, %v5488, 0
      %v5505 = vsel %vm270, %v5489, 0
      %v5508 = vsel %vm270, %v5490, 0
      %v5511 = vsel %vm270, %v5491, 0
      %v5514 = vsel %vm270, %v5492, 0
      %v5517 = vsel %vm270, %v5493, 0
      %v5520 = vsel %vm270, %v5494, 0
      %5522 = vmatprep.subr.bf16.mxu0 %v5502
      %5523 = vmatpush1.bf16.msra.mxu0 %v5499
      %5524 = vmatprep.subr.bf16.mxu0 0
      %5525 = vmatpush1.bf16.msra.mxu0 0
      %5526 = vmatprep.subr.bf16.mxu0 0
      %5527 = vmatpush1.bf16.msra.mxu0 0
      %5528 = vmatprep.subr.bf16.mxu0 0
      %5529 = vmatpush1.bf16.msra.mxu0 0
      %5530 = vmatprep.subr.bf16.mxu0 0
      %5531 = vmatpush1.bf16.msra.mxu0 0
      %5532 = vmatprep.subr.bf16.mxu0 0
      %5533 = vmatpush1.bf16.msra.mxu0 0
      %5534 = vmatprep.subr.bf16.mxu0 0
      %5535 = vmatpush1.bf16.msra.mxu0 0
      %5536 = vmatprep.subr.bf16.mxu0 0
      %5537 = vmatpush1.bf16.msra.mxu0 0
      %5538 = vmatprep.subr.bf16.mxu0 0
      %5539 = vmatpush1.bf16.msra.mxu0 0
      %5540 = vmatprep.subr.bf16.mxu0 0
      %5541 = vmatpush1.bf16.msra.mxu0 0
      %5542 = vmatprep.subr.bf16.mxu0 0
      %5543 = vmatpush1.bf16.msra.mxu0 0
      %5544 = vmatprep.subr.bf16.mxu0 0
      %5545 = vmatpush1.bf16.msra.mxu0 0
      %5546 = vmatprep.subr.bf16.mxu0 0
      %5547 = vmatpush1.bf16.msra.mxu0 0
      %5548 = vmatprep.subr.bf16.mxu0 0
      %5549 = vmatpush1.bf16.msra.mxu0 0
      %5550 = vmatprep.subr.bf16.mxu0 0
      %5551 = vmatpush1.bf16.msra.mxu0 0
      %5552 = vmatprep.subr.bf16.mxu0 0
      %5553 = vmatpush1.bf16.msra.mxu0 0
      %5554 = vmatprep.mubr.bf16.mxu0 0
      %5555 = vmatmul.mubr.bf16.gmra.mrb[0].mxu0 %v5496
      %v5556 = vpop.f32.mrb[0].mxu0
      %v5557 = vadd.f32 0.0, %v5556
      %v5558 = vpop.f32.mrb[0].mxu0
      %v5559 = vadd.f32 0.0, %v5558
      %v5560 = vpop.f32.mrb[0].mxu0
      %v5561 = vpop.f32.mrb[0].mxu0
      %5562 = vdwg.mxu0
      %5563 = vmatprep.subr.bf16.mxu0 %v5508
      %5564 = vmatpush1.bf16.msra.mxu0 %v5505
      %5565 = vmatprep.subr.bf16.mxu0 0
      %5566 = vmatpush1.bf16.msra.mxu0 0
      %5567 = vmatprep.subr.bf16.mxu0 0
      %5568 = vmatpush1.bf16.msra.mxu0 0
      %5569 = vmatprep.subr.bf16.mxu0 0
      %5570 = vmatpush1.bf16.msra.mxu0 0
      %5571 = vmatprep.subr.bf16.mxu0 0
      %5572 = vmatpush1.bf16.msra.mxu0 0
      %5573 = vmatprep.subr.bf16.mxu0 0
      %5574 = vmatpush1.bf16.msra.mxu0 0
      %5575 = vmatprep.subr.bf16.mxu0 0
      %5576 = vmatpush1.bf16.msra.mxu0 0
      %5577 = vmatprep.subr.bf16.mxu0 0
      %5578 = vmatpush1.bf16.msra.mxu0 0
      %5579 = vmatprep.subr.bf16.mxu0 0
      %5580 = vmatpush1.bf16.msra.mxu0 0
      %5581 = vmatprep.subr.bf16.mxu0 0
      %5582 = vmatpush1.bf16.msra.mxu0 0
      %5583 = vmatprep.subr.bf16.mxu0 0
      %5584 = vmatpush1.bf16.msra.mxu0 0
      %5585 = vmatprep.subr.bf16.mxu0 0
      %5586 = vmatpush1.bf16.msra.mxu0 0
      %5587 = vmatprep.subr.bf16.mxu0 0
      %5588 = vmatpush1.bf16.msra.mxu0 0
      %5589 = vmatprep.subr.bf16.mxu0 0
      %5590 = vmatpush1.bf16.msra.mxu0 0
      %5591 = vmatprep.subr.bf16.mxu0 0
      %5592 = vmatpush1.bf16.msra.mxu0 0
      %5593 = vmatprep.subr.bf16.mxu0 0
      %5594 = vmatpush1.bf16.msra.mxu0 0
      %5595 = vmatprep.mubr.bf16.mxu0 0
      %5596 = vmatmul.mubr.bf16.gmra.mrb[0].mxu0 %v5496
      %v5597 = vpop.f32.mrb[0].mxu0
      %v5598 = vadd.f32 0.0, %v5597
      %v5599 = vpop.f32.mrb[0].mxu0
      %v5600 = vadd.f32 0.0, %v5599
      %v5601 = vpop.f32.mrb[0].mxu0
      %v5602 = vpop.f32.mrb[0].mxu0
      %5603 = vdwg.mxu0
      %5604 = vmatprep.subr.bf16.mxu0 %v5514
      %5605 = vmatpush1.bf16.msra.mxu0 %v5511
      %5606 = vmatprep.subr.bf16.mxu0 0
      %5607 = vmatpush1.bf16.msra.mxu0 0
      %5608 = vmatprep.subr.bf16.mxu0 0
      %5609 = vmatpush1.bf16.msra.mxu0 0
      %5610 = vmatprep.subr.bf16.mxu0 0
      %5611 = vmatpush1.bf16.msra.mxu0 0
      %5612 = vmatprep.subr.bf16.mxu0 0
      %5613 = vmatpush1.bf16.msra.mxu0 0
      %5614 = vmatprep.subr.bf16.mxu0 0
      %5615 = vmatpush1.bf16.msra.mxu0 0
      %5616 = vmatprep.subr.bf16.mxu0 0
      %5617 = vmatpush1.bf16.msra.mxu0 0
      %5618 = vmatprep.subr.bf16.mxu0 0
      %5619 = vmatpush1.bf16.msra.mxu0 0
      %5620 = vmatprep.subr.bf16.mxu0 0
      %5621 = vmatpush1.bf16.msra.mxu0 0
      %5622 = vmatprep.subr.bf16.mxu0 0
      %5623 = vmatpush1.bf16.msra.mxu0 0
      %5624 = vmatprep.subr.bf16.mxu0 0
      %5625 = vmatpush1.bf16.msra.mxu0 0
      %5626 = vmatprep.subr.bf16.mxu0 0
      %5627 = vmatpush1.bf16.msra.mxu0 0
      %5628 = vmatprep.subr.bf16.mxu0 0
      %5629 = vmatpush1.bf16.msra.mxu0 0
      %5630 = vmatprep.subr.bf16.mxu0 0
      %5631 = vmatpush1.bf16.msra.mxu0 0
      %5632 = vmatprep.subr.bf16.mxu0 0
      %5633 = vmatpush1.bf16.msra.mxu0 0
      %5634 = vmatprep.subr.bf16.mxu0 0
      %5635 = vmatpush1.bf16.msra.mxu0 0
      %5636 = vmatprep.mubr.bf16.mxu0 0
      %5637 = vmatmul.mubr.bf16.gmra.mrb[0].mxu0 %v5496
      %v5638 = vpop.f32.mrb[0].mxu0
      %v5639 = vadd.f32 0.0, %v5638
      %v5640 = vpop.f32.mrb[0].mxu0
      %v5641 = vadd.f32 0.0, %v5640
      %v5642 = vpop.f32.mrb[0].mxu0
      %v5643 = vpop.f32.mrb[0].mxu0
      %5644 = vdwg.mxu0
      %5645 = vmatprep.subr.bf16.mxu0 %v5520
      %5646 = vmatpush1.bf16.msra.mxu0 %v5517
      %5647 = vmatprep.subr.bf16.mxu0 0
      %5648 = vmatpush1.bf16.msra.mxu0 0
      %5649 = vmatprep.subr.bf16.mxu0 0
      %5650 = vmatpush1.bf16.msra.mxu0 0
      %5651 = vmatprep.subr.bf16.mxu0 0
      %5652 = vmatpush1.bf16.msra.mxu0 0
      %5653 = vmatprep.subr.bf16.mxu0 0
      %5654 = vmatpush1.bf16.msra.mxu0 0
      %5655 = vmatprep.subr.bf16.mxu0 0
      %5656 = vmatpush1.bf16.msra.mxu0 0
      %5657 = vmatprep.subr.bf16.mxu0 0
      %5658 = vmatpush1.bf16.msra.mxu0 0
      %5659 = vmatprep.subr.bf16.mxu0 0
      %5660 = vmatpush1.bf16.msra.mxu0 0
      %5661 = vmatprep.subr.bf16.mxu0 0
      %5662 = vmatpush1.bf16.msra.mxu0 0
      %5663 = vmatprep.subr.bf16.mxu0 0
      %5664 = vmatpush1.bf16.msra.mxu0 0
      %5665 = vmatprep.subr.bf16.mxu0 0
      %5666 = vmatpush1.bf16.msra.mxu0 0
      %5667 = vmatprep.subr.bf16.mxu0 0
      %5668 = vmatpush1.bf16.msra.mxu0 0
      %5669 = vmatprep.subr.bf16.mxu0 0
      %5670 = vmatpush1.bf16.msra.mxu0 0
      %5671 = vmatprep.subr.bf16.mxu0 0
      %5672 = vmatpush1.bf16.msra.mxu0 0
      %5673 = vmatprep.subr.bf16.mxu0 0
      %5674 = vmatpush1.bf16.msra.mxu0 0
      %5675 = vmatprep.subr.bf16.mxu0 0
      %5676 = vmatpush1.bf16.msra.mxu0 0
      %5677 = vmatprep.mubr.bf16.mxu0 0
      %5678 = vmatmul.mubr.bf16.gmra.mrb[0].mxu0 %v5496
      %v5679 = vpop.f32.mrb[0].mxu0
      %v5680 = vadd.f32 0.0, %v5679
      %v5681 = vpop.f32.mrb[0].mxu0
      %v5682 = vadd.f32 0.0, %v5681
      %v5683 = vpop.f32.mrb[0].mxu0
      %v5684 = vpop.f32.mrb[0].mxu0
      %5685 = vdwg.mxu0
      %v5686 = vadd.f32 %v5458, %v5557
      %v5687 = vadd.f32 %v5459, %v5559
      %v5688 = vadd.f32 %v5460, %v5598
      %v5689 = vadd.f32 %v5461, %v5600
      %v5690 = vadd.f32 %v5462, %v5639
      %v5691 = vadd.f32 %v5463, %v5641
      %v5692 = vadd.f32 %v5464, %v5680
      %v5693 = vadd.f32 %v5465, %v5682
      %s5694 = scalar_lea.vmem %s1, 96
      %v5695 = vld [vmem:[%s5694] sm:$0xf]
      %5696 = vrot.lane.b32.xlu0 %v4319, 36
      %v5697 = vpop.permute.xlu0 %5696
      %5698 = vrot.lane.b32.xlu0 %v4320, 36
      %v5699 = vpop.permute.xlu0 %5698
      %5700 = vrot.lane.b32.xlu0 %v4321, 36
      %v5701 = vpop.permute.xlu0 %5700
      %5702 = vrot.lane.b32.xlu0 %v4322, 36
      %v5703 = vpop.permute.xlu0 %5702
      %5704 = vrot.lane.b32.xlu0 %v4323, 36
      %v5705 = vpop.permute.xlu0 %5704
      %5706 = vrot.lane.b32.xlu0 %v4324, 36
      %v5707 = vpop.permute.xlu0 %5706
      %5708 = vrot.lane.b32.xlu0 %v4325, 36
      %v5709 = vpop.permute.xlu0 %5708
      %5710 = vrot.lane.b32.xlu0 %v4326, 36
      %v5711 = vpop.permute.xlu0 %5710
      %5712 = vrot.lane.b32.xlu0 %v4327, 36
      %v5713 = vpop.permute.xlu0 %5712
      %vm5714 = vcmask 293888
      %v5715 = vsel %vm5714, %v5697, %v5699
      %v5716 = vsel %vm5714, %v5699, %v5701
      %v5717 = vsel %vm5714, %v5701, %v5703
      %v5718 = vsel %vm5714, %v5703, %v5705
      %v5719 = vsel %vm5714, %v5705, %v5707
      %v5720 = vsel %vm5714, %v5707, %v5709
      %v5721 = vsel %vm5714, %v5709, %v5711
      %v5722 = vsel %vm5714, %v5711, %v5713
      %v5724 = vsel %vm266, %v5695, 0
      %v5727 = vsel %vm270, %v5715, 0
      %v5730 = vsel %vm270, %v5716, 0
      %v5733 = vsel %vm270, %v5717, 0
      %v5736 = vsel %vm270, %v5718, 0
      %v5739 = vsel %vm270, %v5719, 0
      %v5742 = vsel %vm270, %v5720, 0
      %v5745 = vsel %vm270, %v5721, 0
      %v5748 = vsel %vm270, %v5722, 0
      %5750 = vmatprep.subr.bf16.mxu0 %v5730
      %5751 = vmatpush1.bf16.msra.mxu0 %v5727
      %5752 = vmatprep.subr.bf16.mxu0 0
      %5753 = vmatpush1.bf16.msra.mxu0 0
      %5754 = vmatprep.subr.bf16.mxu0 0
      %5755 = vmatpush1.bf16.msra.mxu0 0
      %5756 = vmatprep.subr.bf16.mxu0 0
      %5757 = vmatpush1.bf16.msra.mxu0 0
      %5758 = vmatprep.subr.bf16.mxu0 0
      %5759 = vmatpush1.bf16.msra.mxu0 0
      %5760 = vmatprep.subr.bf16.mxu0 0
      %5761 = vmatpush1.bf16.msra.mxu0 0
      %5762 = vmatprep.subr.bf16.mxu0 0
      %5763 = vmatpush1.bf16.msra.mxu0 0
      %5764 = vmatprep.subr.bf16.mxu0 0
      %5765 = vmatpush1.bf16.msra.mxu0 0
      %5766 = vmatprep.subr.bf16.mxu0 0
      %5767 = vmatpush1.bf16.msra.mxu0 0
      %5768 = vmatprep.subr.bf16.mxu0 0
      %5769 = vmatpush1.bf16.msra.mxu0 0
      %5770 = vmatprep.subr.bf16.mxu0 0
      %5771 = vmatpush1.bf16.msra.mxu0 0
      %5772 = vmatprep.subr.bf16.mxu0 0
      %5773 = vmatpush1.bf16.msra.mxu0 0
      %5774 = vmatprep.subr.bf16.mxu0 0
      %5775 = vmatpush1.bf16.msra.mxu0 0
      %5776 = vmatprep.subr.bf16.mxu0 0
      %5777 = vmatpush1.bf16.msra.mxu0 0
      %5778 = vmatprep.subr.bf16.mxu0 0
      %5779 = vmatpush1.bf16.msra.mxu0 0
      %5780 = vmatprep.subr.bf16.mxu0 0
      %5781 = vmatpush1.bf16.msra.mxu0 0
      %5782 = vmatprep.mubr.bf16.mxu0 0
      %5783 = vmatmul.mubr.bf16.gmra.mrb[0].mxu0 %v5724
      %v5784 = vpop.f32.mrb[0].mxu0
      %v5785 = vadd.f32 0.0, %v5784
      %v5786 = vpop.f32.mrb[0].mxu0
      %v5787 = vadd.f32 0.0, %v5786
      %v5788 = vpop.f32.mrb[0].mxu0
      %v5789 = vpop.f32.mrb[0].mxu0
      %5790 = vdwg.mxu0
      %5791 = vmatprep.subr.bf16.mxu0 %v5736
      %5792 = vmatpush1.bf16.msra.mxu0 %v5733
      %5793 = vmatprep.subr.bf16.mxu0 0
      %5794 = vmatpush1.bf16.msra.mxu0 0
      %5795 = vmatprep.subr.bf16.mxu0 0
      %5796 = vmatpush1.bf16.msra.mxu0 0
      %5797 = vmatprep.subr.bf16.mxu0 0
      %5798 = vmatpush1.bf16.msra.mxu0 0
      %5799 = vmatprep.subr.bf16.mxu0 0
      %5800 = vmatpush1.bf16.msra.mxu0 0
      %5801 = vmatprep.subr.bf16.mxu0 0
      %5802 = vmatpush1.bf16.msra.mxu0 0
      %5803 = vmatprep.subr.bf16.mxu0 0
      %5804 = vmatpush1.bf16.msra.mxu0 0
      %5805 = vmatprep.subr.bf16.mxu0 0
      %5806 = vmatpush1.bf16.msra.mxu0 0
      %5807 = vmatprep.subr.bf16.mxu0 0
      %5808 = vmatpush1.bf16.msra.mxu0 0
      %5809 = vmatprep.subr.bf16.mxu0 0
      %5810 = vmatpush1.bf16.msra.mxu0 0
      %5811 = vmatprep.subr.bf16.mxu0 0
      %5812 = vmatpush1.bf16.msra.mxu0 0
      %5813 = vmatprep.subr.bf16.mxu0 0
      %5814 = vmatpush1.bf16.msra.mxu0 0
      %5815 = vmatprep.subr.bf16.mxu0 0
      %5816 = vmatpush1.bf16.msra.mxu0 0
      %5817 = vmatprep.subr.bf16.mxu0 0
      %5818 = vmatpush1.bf16.msra.mxu0 0
      %5819 = vmatprep.subr.bf16.mxu0 0
      %5820 = vmatpush1.bf16.msra.mxu0 0
      %5821 = vmatprep.subr.bf16.mxu0 0
      %5822 = vmatpush1.bf16.msra.mxu0 0
      %5823 = vmatprep.mubr.bf16.mxu0 0
      %5824 = vmatmul.mubr.bf16.gmra.mrb[0].mxu0 %v5724
      %v5825 = vpop.f32.mrb[0].mxu0
      %v5826 = vadd.f32 0.0, %v5825
      %v5827 = vpop.f32.mrb[0].mxu0
      %v5828 = vadd.f32 0.0, %v5827
      %v5829 = vpop.f32.mrb[0].mxu0
      %v5830 = vpop.f32.mrb[0].mxu0
      %5831 = vdwg.mxu0
      %5832 = vmatprep.subr.bf16.mxu0 %v5742
      %5833 = vmatpush1.bf16.msra.mxu0 %v5739
      %5834 = vmatprep.subr.bf16.mxu0 0
      %5835 = vmatpush1.bf16.msra.mxu0 0
      %5836 = vmatprep.subr.bf16.mxu0 0
      %5837 = vmatpush1.bf16.msra.mxu0 0
      %5838 = vmatprep.subr.bf16.mxu0 0
      %5839 = vmatpush1.bf16.msra.mxu0 0
      %5840 = vmatprep.subr.bf16.mxu0 0
      %5841 = vmatpush1.bf16.msra.mxu0 0
      %5842 = vmatprep.subr.bf16.mxu0 0
      %5843 = vmatpush1.bf16.msra.mxu0 0
      %5844 = vmatprep.subr.bf16.mxu0 0
      %5845 = vmatpush1.bf16.msra.mxu0 0
      %5846 = vmatprep.subr.bf16.mxu0 0
      %5847 = vmatpush1.bf16.msra.mxu0 0
      %5848 = vmatprep.subr.bf16.mxu0 0
      %5849 = vmatpush1.bf16.msra.mxu0 0
      %5850 = vmatprep.subr.bf16.mxu0 0
      %5851 = vmatpush1.bf16.msra.mxu0 0
      %5852 = vmatprep.subr.bf16.mxu0 0
      %5853 = vmatpush1.bf16.msra.mxu0 0
      %5854 = vmatprep.subr.bf16.mxu0 0
      %5855 = vmatpush1.bf16.msra.mxu0 0
      %5856 = vmatprep.subr.bf16.mxu0 0
      %5857 = vmatpush1.bf16.msra.mxu0 0
      %5858 = vmatprep.subr.bf16.mxu0 0
      %5859 = vmatpush1.bf16.msra.mxu0 0
      %5860 = vmatprep.subr.bf16.mxu0 0
      %5861 = vmatpush1.bf16.msra.mxu0 0
      %5862 = vmatprep.subr.bf16.mxu0 0
      %5863 = vmatpush1.bf16.msra.mxu0 0
      %5864 = vmatprep.mubr.bf16.mxu0 0
      %5865 = vmatmul.mubr.bf16.gmra.mrb[0].mxu0 %v5724
      %v5866 = vpop.f32.mrb[0].mxu0
      %v5867 = vadd.f32 0.0, %v5866
      %v5868 = vpop.f32.mrb[0].mxu0
      %v5869 = vadd.f32 0.0, %v5868
      %v5870 = vpop.f32.mrb[0].mxu0
      %v5871 = vpop.f32.mrb[0].mxu0
      %5872 = vdwg.mxu0
      %5873 = vmatprep.subr.bf16.mxu0 %v5748
      %5874 = vmatpush1.bf16.msra.mxu0 %v5745
      %5875 = vmatprep.subr.bf16.mxu0 0
      %5876 = vmatpush1.bf16.msra.mxu0 0
      %5877 = vmatprep.subr.bf16.mxu0 0
      %5878 = vmatpush1.bf16.msra.mxu0 0
      %5879 = vmatprep.subr.bf16.mxu0 0
      %5880 = vmatpush1.bf16.msra.mxu0 0
      %5881 = vmatprep.subr.bf16.mxu0 0
      %5882 = vmatpush1.bf16.msra.mxu0 0
      %5883 = vmatprep.subr.bf16.mxu0 0
      %5884 = vmatpush1.bf16.msra.mxu0 0
      %5885 = vmatprep.subr.bf16.mxu0 0
      %5886 = vmatpush1.bf16.msra.mxu0 0
      %5887 = vmatprep.subr.bf16.mxu0 0
      %5888 = vmatpush1.bf16.msra.mxu0 0
      %5889 = vmatprep.subr.bf16.mxu0 0
      %5890 = vmatpush1.bf16.msra.mxu0 0
      %5891 = vmatprep.subr.bf16.mxu0 0
      %5892 = vmatpush1.bf16.msra.mxu0 0
      %5893 = vmatprep.subr.bf16.mxu0 0
      %5894 = vmatpush1.bf16.msra.mxu0 0
      %5895 = vmatprep.subr.bf16.mxu0 0
      %5896 = vmatpush1.bf16.msra.mxu0 0
      %5897 = vmatprep.subr.bf16.mxu0 0
      %5898 = vmatpush1.bf16.msra.mxu0 0
      %5899 = vmatprep.subr.bf16.mxu0 0
      %5900 = vmatpush1.bf16.msra.mxu0 0
      %5901 = vmatprep.subr.bf16.mxu0 0
      %5902 = vmatpush1.bf16.msra.mxu0 0
      %5903 = vmatprep.subr.bf16.mxu0 0
      %5904 = vmatpush1.bf16.msra.mxu0 0
      %5905 = vmatprep.mubr.bf16.mxu0 0
      %5906 = vmatmul.mubr.bf16.gmra.mrb[0].mxu0 %v5724
      %v5907 = vpop.f32.mrb[0].mxu0
      %v5908 = vadd.f32 0.0, %v5907
      %v5909 = vpop.f32.mrb[0].mxu0
      %v5910 = vadd.f32 0.0, %v5909
      %v5911 = vpop.f32.mrb[0].mxu0
      %v5912 = vpop.f32.mrb[0].mxu0
      %5913 = vdwg.mxu0
      %v5914 = vadd.f32 %v5686, %v5785
      %v5915 = vadd.f32 %v5687, %v5787
      %v5916 = vadd.f32 %v5688, %v5826
      %v5917 = vadd.f32 %v5689, %v5828
      %v5918 = vadd.f32 %v5690, %v5867
      %v5919 = vadd.f32 %v5691, %v5869
      %v5920 = vadd.f32 %v5692, %v5908
      %v5921 = vadd.f32 %v5693, %v5910
      %s5922 = scalar_lea.vmem %s1, 100
      %v5923 = vld [vmem:[%s5922] sm:$0xf]
      %5924 = vrot.lane.b32.xlu0 %v4319, 35
      %v5925 = vpop.permute.xlu0 %5924
      %5926 = vrot.lane.b32.xlu0 %v4320, 35
      %v5927 = vpop.permute.xlu0 %5926
      %5928 = vrot.lane.b32.xlu0 %v4321, 35
      %v5929 = vpop.permute.xlu0 %5928
      %5930 = vrot.lane.b32.xlu0 %v4322, 35
      %v5931 = vpop.permute.xlu0 %5930
      %5932 = vrot.lane.b32.xlu0 %v4323, 35
      %v5933 = vpop.permute.xlu0 %5932
      %5934 = vrot.lane.b32.xlu0 %v4324, 35
      %v5935 = vpop.permute.xlu0 %5934
      %5936 = vrot.lane.b32.xlu0 %v4325, 35
      %v5937 = vpop.permute.xlu0 %5936
      %5938 = vrot.lane.b32.xlu0 %v4326, 35
      %v5939 = vpop.permute.xlu0 %5938
      %5940 = vrot.lane.b32.xlu0 %v4327, 35
      %v5941 = vpop.permute.xlu0 %5940
      %vm5942 = vcmask 285696
      %v5943 = vsel %vm5942, %v5925, %v5927
      %v5944 = vsel %vm5942, %v5927, %v5929
      %v5945 = vsel %vm5942, %v5929, %v5931
      %v5946 = vsel %vm5942, %v5931, %v5933
      %v5947 = vsel %vm5942, %v5933, %v5935
      %v5948 = vsel %vm5942, %v5935, %v5937
      %v5949 = vsel %vm5942, %v5937, %v5939
      %v5950 = vsel %vm5942, %v5939, %v5941
      %v5952 = vsel %vm266, %v5923, 0
      %v5955 = vsel %vm270, %v5943, 0
      %v5958 = vsel %vm270, %v5944, 0
      %v5961 = vsel %vm270, %v5945, 0
      %v5964 = vsel %vm270, %v5946, 0
      %v5967 = vsel %vm270, %v5947, 0
      %v5970 = vsel %vm270, %v5948, 0
      %v5973 = vsel %vm270, %v5949, 0
      %v5976 = vsel %vm270, %v5950, 0
      %5978 = vmatprep.subr.bf16.mxu0 %v5958
      %5979 = vmatpush1.bf16.msra.mxu0 %v5955
      %5980 = vmatprep.subr.bf16.mxu0 0
      %5981 = vmatpush1.bf16.msra.mxu0 0
      %5982 = vmatprep.subr.bf16.mxu0 0
      %5983 = vmatpush1.bf16.msra.mxu0 0
      %5984 = vmatprep.subr.bf16.mxu0 0
      %5985 = vmatpush1.bf16.msra.mxu0 0
      %5986 = vmatprep.subr.bf16.mxu0 0
      %5987 = vmatpush1.bf16.msra.mxu0 0
      %5988 = vmatprep.subr.bf16.mxu0 0
      %5989 = vmatpush1.bf16.msra.mxu0 0
      %5990 = vmatprep.subr.bf16.mxu0 0
      %5991 = vmatpush1.bf16.msra.mxu0 0
      %5992 = vmatprep.subr.bf16.mxu0 0
      %5993 = vmatpush1.bf16.msra.mxu0 0
      %5994 = vmatprep.subr.bf16.mxu0 0
      %5995 = vmatpush1.bf16.msra.mxu0 0
      %5996 = vmatprep.subr.bf16.mxu0 0
      %5997 = vmatpush1.bf16.msra.mxu0 0
      %5998 = vmatprep.subr.bf16.mxu0 0
      %5999 = vmatpush1.bf16.msra.mxu0 0
      %6000 = vmatprep.subr.bf16.mxu0 0
      %6001 = vmatpush1.bf16.msra.mxu0 0
      %6002 = vmatprep.subr.bf16.mxu0 0
      %6003 = vmatpush1.bf16.msra.mxu0 0
      %6004 = vmatprep.subr.bf16.mxu0 0
      %6005 = vmatpush1.bf16.msra.mxu0 0
      %6006 = vmatprep.subr.bf16.mxu0 0
      %6007 = vmatpush1.bf16.msra.mxu0 0
      %6008 = vmatprep.subr.bf16.mxu0 0
      %6009 = vmatpush1.bf16.msra.mxu0 0
      %6010 = vmatprep.mubr.bf16.mxu0 0
      %6011 = vmatmul.mubr.bf16.gmra.mrb[0].mxu0 %v5952
      %v6012 = vpop.f32.mrb[0].mxu0
      %v6013 = vadd.f32 0.0, %v6012
      %v6014 = vpop.f32.mrb[0].mxu0
      %v6015 = vadd.f32 0.0, %v6014
      %v6016 = vpop.f32.mrb[0].mxu0
      %v6017 = vpop.f32.mrb[0].mxu0
      %6018 = vdwg.mxu0
      %6019 = vmatprep.subr.bf16.mxu0 %v5964
      %6020 = vmatpush1.bf16.msra.mxu0 %v5961
      %6021 = vmatprep.subr.bf16.mxu0 0
      %6022 = vmatpush1.bf16.msra.mxu0 0
      %6023 = vmatprep.subr.bf16.mxu0 0
      %6024 = vmatpush1.bf16.msra.mxu0 0
      %6025 = vmatprep.subr.bf16.mxu0 0
      %6026 = vmatpush1.bf16.msra.mxu0 0
      %6027 = vmatprep.subr.bf16.mxu0 0
      %6028 = vmatpush1.bf16.msra.mxu0 0
      %6029 = vmatprep.subr.bf16.mxu0 0
      %6030 = vmatpush1.bf16.msra.mxu0 0
      %6031 = vmatprep.subr.bf16.mxu0 0
      %6032 = vmatpush1.bf16.msra.mxu0 0
      %6033 = vmatprep.subr.bf16.mxu0 0
      %6034 = vmatpush1.bf16.msra.mxu0 0
      %6035 = vmatprep.subr.bf16.mxu0 0
      %6036 = vmatpush1.bf16.msra.mxu0 0
      %6037 = vmatprep.subr.bf16.mxu0 0
      %6038 = vmatpush1.bf16.msra.mxu0 0
      %6039 = vmatprep.subr.bf16.mxu0 0
      %6040 = vmatpush1.bf16.msra.mxu0 0
      %6041 = vmatprep.subr.bf16.mxu0 0
      %6042 = vmatpush1.bf16.msra.mxu0 0
      %6043 = vmatprep.subr.bf16.mxu0 0
      %6044 = vmatpush1.bf16.msra.mxu0 0
      %6045 = vmatprep.subr.bf16.mxu0 0
      %6046 = vmatpush1.bf16.msra.mxu0 0
      %6047 = vmatprep.subr.bf16.mxu0 0
      %6048 = vmatpush1.bf16.msra.mxu0 0
      %6049 = vmatprep.subr.bf16.mxu0 0
      %6050 = vmatpush1.bf16.msra.mxu0 0
      %6051 = vmatprep.mubr.bf16.mxu0 0
      %6052 = vmatmul.mubr.bf16.gmra.mrb[0].mxu0 %v5952
      %v6053 = vpop.f32.mrb[0].mxu0
      %v6054 = vadd.f32 0.0, %v6053
      %v6055 = vpop.f32.mrb[0].mxu0
      %v6056 = vadd.f32 0.0, %v6055
      %v6057 = vpop.f32.mrb[0].mxu0
      %v6058 = vpop.f32.mrb[0].mxu0
      %6059 = vdwg.mxu0
      %6060 = vmatprep.subr.bf16.mxu0 %v5970
      %6061 = vmatpush1.bf16.msra.mxu0 %v5967
      %6062 = vmatprep.subr.bf16.mxu0 0
      %6063 = vmatpush1.bf16.msra.mxu0 0
      %6064 = vmatprep.subr.bf16.mxu0 0
      %6065 = vmatpush1.bf16.msra.mxu0 0
      %6066 = vmatprep.subr.bf16.mxu0 0
      %6067 = vmatpush1.bf16.msra.mxu0 0
      %6068 = vmatprep.subr.bf16.mxu0 0
      %6069 = vmatpush1.bf16.msra.mxu0 0
      %6070 = vmatprep.subr.bf16.mxu0 0
      %6071 = vmatpush1.bf16.msra.mxu0 0
      %6072 = vmatprep.subr.bf16.mxu0 0
      %6073 = vmatpush1.bf16.msra.mxu0 0
      %6074 = vmatprep.subr.bf16.mxu0 0
      %6075 = vmatpush1.bf16.msra.mxu0 0
      %6076 = vmatprep.subr.bf16.mxu0 0
      %6077 = vmatpush1.bf16.msra.mxu0 0
      %6078 = vmatprep.subr.bf16.mxu0 0
      %6079 = vmatpush1.bf16.msra.mxu0 0
      %6080 = vmatprep.subr.bf16.mxu0 0
      %6081 = vmatpush1.bf16.msra.mxu0 0
      %6082 = vmatprep.subr.bf16.mxu0 0
      %6083 = vmatpush1.bf16.msra.mxu0 0
      %6084 = vmatprep.subr.bf16.mxu0 0
      %6085 = vmatpush1.bf16.msra.mxu0 0
      %6086 = vmatprep.subr.bf16.mxu0 0
      %6087 = vmatpush1.bf16.msra.mxu0 0
      %6088 = vmatprep.subr.bf16.mxu0 0
      %6089 = vmatpush1.bf16.msra.mxu0 0
      %6090 = vmatprep.subr.bf16.mxu0 0
      %6091 = vmatpush1.bf16.msra.mxu0 0
      %6092 = vmatprep.mubr.bf16.mxu0 0
      %6093 = vmatmul.mubr.bf16.gmra.mrb[0].mxu0 %v5952
      %v6094 = vpop.f32.mrb[0].mxu0
      %v6095 = vadd.f32 0.0, %v6094
      %v6096 = vpop.f32.mrb[0].mxu0
      %v6097 = vadd.f32 0.0, %v6096
      %v6098 = vpop.f32.mrb[0].mxu0
      %v6099 = vpop.f32.mrb[0].mxu0
      %6100 = vdwg.mxu0
      %6101 = vmatprep.subr.bf16.mxu0 %v5976
      %6102 = vmatpush1.bf16.msra.mxu0 %v5973
      %6103 = vmatprep.subr.bf16.mxu0 0
      %6104 = vmatpush1.bf16.msra.mxu0 0
      %6105 = vmatprep.subr.bf16.mxu0 0
      %6106 = vmatpush1.bf16.msra.mxu0 0
      %6107 = vmatprep.subr.bf16.mxu0 0
      %6108 = vmatpush1.bf16.msra.mxu0 0
      %6109 = vmatprep.subr.bf16.mxu0 0
      %6110 = vmatpush1.bf16.msra.mxu0 0
      %6111 = vmatprep.subr.bf16.mxu0 0
      %6112 = vmatpush1.bf16.msra.mxu0 0
      %6113 = vmatprep.subr.bf16.mxu0 0
      %6114 = vmatpush1.bf16.msra.mxu0 0
      %6115 = vmatprep.subr.bf16.mxu0 0
      %6116 = vmatpush1.bf16.msra.mxu0 0
      %6117 = vmatprep.subr.bf16.mxu0 0
      %6118 = vmatpush1.bf16.msra.mxu0 0
      %6119 = vmatprep.subr.bf16.mxu0 0
      %6120 = vmatpush1.bf16.msra.mxu0 0
      %6121 = vmatprep.subr.bf16.mxu0 0
      %6122 = vmatpush1.bf16.msra.mxu0 0
      %6123 = vmatprep.subr.bf16.mxu0 0
      %6124 = vmatpush1.bf16.msra.mxu0 0
      %6125 = vmatprep.subr.bf16.mxu0 0
      %6126 = vmatpush1.bf16.msra.mxu0 0
      %6127 = vmatprep.subr.bf16.mxu0 0
      %6128 = vmatpush1.bf16.msra.mxu0 0
      %6129 = vmatprep.subr.bf16.mxu0 0
      %6130 = vmatpush1.bf16.msra.mxu0 0
      %6131 = vmatprep.subr.bf16.mxu0 0
      %6132 = vmatpush1.bf16.msra.mxu0 0
      %6133 = vmatprep.mubr.bf16.mxu0 0
      %6134 = vmatmul.mubr.bf16.gmra.mrb[0].mxu0 %v5952
      %v6135 = vpop.f32.mrb[0].mxu0
      %v6136 = vadd.f32 0.0, %v6135
      %v6137 = vpop.f32.mrb[0].mxu0
      %v6138 = vadd.f32 0.0, %v6137
      %v6139 = vpop.f32.mrb[0].mxu0
      %v6140 = vpop.f32.mrb[0].mxu0
      %6141 = vdwg.mxu0
      %v6142 = vadd.f32 %v5914, %v6013
      %v6143 = vadd.f32 %v5915, %v6015
      %v6144 = vadd.f32 %v5916, %v6054
      %v6145 = vadd.f32 %v5917, %v6056
      %v6146 = vadd.f32 %v5918, %v6095
      %v6147 = vadd.f32 %v5919, %v6097
      %v6148 = vadd.f32 %v5920, %v6136
      %v6149 = vadd.f32 %v5921, %v6138
      %s6150 = scalar_lea.vmem %s1, 104
      %v6151 = vld [vmem:[%s6150] sm:$0xf]
      %6152 = vrot.lane.b32.xlu0 %v4319, 34
      %v6153 = vpop.permute.xlu0 %6152
      %6154 = vrot.lane.b32.xlu0 %v4320, 34
      %v6155 = vpop.permute.xlu0 %6154
      %6156 = vrot.lane.b32.xlu0 %v4321, 34
      %v6157 = vpop.permute.xlu0 %6156
      %6158 = vrot.lane.b32.xlu0 %v4322, 34
      %v6159 = vpop.permute.xlu0 %6158
      %6160 = vrot.lane.b32.xlu0 %v4323, 34
      %v6161 = vpop.permute.xlu0 %6160
      %6162 = vrot.lane.b32.xlu0 %v4324, 34
      %v6163 = vpop.permute.xlu0 %6162
      %6164 = vrot.lane.b32.xlu0 %v4325, 34
      %v6165 = vpop.permute.xlu0 %6164
      %6166 = vrot.lane.b32.xlu0 %v4326, 34
      %v6167 = vpop.permute.xlu0 %6166
      %6168 = vrot.lane.b32.xlu0 %v4327, 34
      %v6169 = vpop.permute.xlu0 %6168
      %vm6170 = vcmask 277504
      %v6171 = vsel %vm6170, %v6153, %v6155
      %v6172 = vsel %vm6170, %v6155, %v6157
      %v6173 = vsel %vm6170, %v6157, %v6159
      %v6174 = vsel %vm6170, %v6159, %v6161
      %v6175 = vsel %vm6170, %v6161, %v6163
      %v6176 = vsel %vm6170, %v6163, %v6165
      %v6177 = vsel %vm6170, %v6165, %v6167
      %v6178 = vsel %vm6170, %v6167, %v6169
      %v6180 = vsel %vm266, %v6151, 0
      %v6183 = vsel %vm270, %v6171, 0
      %v6186 = vsel %vm270, %v6172, 0
      %v6189 = vsel %vm270, %v6173, 0
      %v6192 = vsel %vm270, %v6174, 0
      %v6195 = vsel %vm270, %v6175, 0
      %v6198 = vsel %vm270, %v6176, 0
      %v6201 = vsel %vm270, %v6177, 0
      %v6204 = vsel %vm270, %v6178, 0
      %6206 = vmatprep.subr.bf16.mxu0 %v6186
      %6207 = vmatpush1.bf16.msra.mxu0 %v6183
      %6208 = vmatprep.subr.bf16.mxu0 0
      %6209 = vmatpush1.bf16.msra.mxu0 0
      %6210 = vmatprep.subr.bf16.mxu0 0
      %6211 = vmatpush1.bf16.msra.mxu0 0
      %6212 = vmatprep.subr.bf16.mxu0 0
      %6213 = vmatpush1.bf16.msra.mxu0 0
      %6214 = vmatprep.subr.bf16.mxu0 0
      %6215 = vmatpush1.bf16.msra.mxu0 0
      %6216 = vmatprep.subr.bf16.mxu0 0
      %6217 = vmatpush1.bf16.msra.mxu0 0
      %6218 = vmatprep.subr.bf16.mxu0 0
      %6219 = vmatpush1.bf16.msra.mxu0 0
      %6220 = vmatprep.subr.bf16.mxu0 0
      %6221 = vmatpush1.bf16.msra.mxu0 0
      %6222 = vmatprep.subr.bf16.mxu0 0
      %6223 = vmatpush1.bf16.msra.mxu0 0
      %6224 = vmatprep.subr.bf16.mxu0 0
      %6225 = vmatpush1.bf16.msra.mxu0 0
      %6226 = vmatprep.subr.bf16.mxu0 0
      %6227 = vmatpush1.bf16.msra.mxu0 0
      %6228 = vmatprep.subr.bf16.mxu0 0
      %6229 = vmatpush1.bf16.msra.mxu0 0
      %6230 = vmatprep.subr.bf16.mxu0 0
      %6231 = vmatpush1.bf16.msra.mxu0 0
      %6232 = vmatprep.subr.bf16.mxu0 0
      %6233 = vmatpush1.bf16.msra.mxu0 0
      %6234 = vmatprep.subr.bf16.mxu0 0
      %6235 = vmatpush1.bf16.msra.mxu0 0
      %6236 = vmatprep.subr.bf16.mxu0 0
      %6237 = vmatpush1.bf16.msra.mxu0 0
      %6238 = vmatprep.mubr.bf16.mxu0 0
      %6239 = vmatmul.mubr.bf16.gmra.mrb[0].mxu0 %v6180
      %v6240 = vpop.f32.mrb[0].mxu0
      %v6241 = vadd.f32 0.0, %v6240
      %v6242 = vpop.f32.mrb[0].mxu0
      %v6243 = vadd.f32 0.0, %v6242
      %v6244 = vpop.f32.mrb[0].mxu0
      %v6245 = vpop.f32.mrb[0].mxu0
      %6246 = vdwg.mxu0
      %6247 = vmatprep.subr.bf16.mxu0 %v6192
      %6248 = vmatpush1.bf16.msra.mxu0 %v6189
      %6249 = vmatprep.subr.bf16.mxu0 0
      %6250 = vmatpush1.bf16.msra.mxu0 0
      %6251 = vmatprep.subr.bf16.mxu0 0
      %6252 = vmatpush1.bf16.msra.mxu0 0
      %6253 = vmatprep.subr.bf16.mxu0 0
      %6254 = vmatpush1.bf16.msra.mxu0 0
      %6255 = vmatprep.subr.bf16.mxu0 0
      %6256 = vmatpush1.bf16.msra.mxu0 0
      %6257 = vmatprep.subr.bf16.mxu0 0
      %6258 = vmatpush1.bf16.msra.mxu0 0
      %6259 = vmatprep.subr.bf16.mxu0 0
      %6260 = vmatpush1.bf16.msra.mxu0 0
      %6261 = vmatprep.subr.bf16.mxu0 0
      %6262 = vmatpush1.bf16.msra.mxu0 0
      %6263 = vmatprep.subr.bf16.mxu0 0
      %6264 = vmatpush1.bf16.msra.mxu0 0
      %6265 = vmatprep.subr.bf16.mxu0 0
      %6266 = vmatpush1.bf16.msra.mxu0 0
      %6267 = vmatprep.subr.bf16.mxu0 0
      %6268 = vmatpush1.bf16.msra.mxu0 0
      %6269 = vmatprep.subr.bf16.mxu0 0
      %6270 = vmatpush1.bf16.msra.mxu0 0
      %6271 = vmatprep.subr.bf16.mxu0 0
      %6272 = vmatpush1.bf16.msra.mxu0 0
      %6273 = vmatprep.subr.bf16.mxu0 0
      %6274 = vmatpush1.bf16.msra.mxu0 0
      %6275 = vmatprep.subr.bf16.mxu0 0
      %6276 = vmatpush1.bf16.msra.mxu0 0
      %6277 = vmatprep.subr.bf16.mxu0 0
      %6278 = vmatpush1.bf16.msra.mxu0 0
      %6279 = vmatprep.mubr.bf16.mxu0 0
      %6280 = vmatmul.mubr.bf16.gmra.mrb[0].mxu0 %v6180
      %v6281 = vpop.f32.mrb[0].mxu0
      %v6282 = vadd.f32 0.0, %v6281
      %v6283 = vpop.f32.mrb[0].mxu0
      %v6284 = vadd.f32 0.0, %v6283
      %v6285 = vpop.f32.mrb[0].mxu0
      %v6286 = vpop.f32.mrb[0].mxu0
      %6287 = vdwg.mxu0
      %6288 = vmatprep.subr.bf16.mxu0 %v6198
      %6289 = vmatpush1.bf16.msra.mxu0 %v6195
      %6290 = vmatprep.subr.bf16.mxu0 0
      %6291 = vmatpush1.bf16.msra.mxu0 0
      %6292 = vmatprep.subr.bf16.mxu0 0
      %6293 = vmatpush1.bf16.msra.mxu0 0
      %6294 = vmatprep.subr.bf16.mxu0 0
      %6295 = vmatpush1.bf16.msra.mxu0 0
      %6296 = vmatprep.subr.bf16.mxu0 0
      %6297 = vmatpush1.bf16.msra.mxu0 0
      %6298 = vmatprep.subr.bf16.mxu0 0
      %6299 = vmatpush1.bf16.msra.mxu0 0
      %6300 = vmatprep.subr.bf16.mxu0 0
      %6301 = vmatpush1.bf16.msra.mxu0 0
      %6302 = vmatprep.subr.bf16.mxu0 0
      %6303 = vmatpush1.bf16.msra.mxu0 0
      %6304 = vmatprep.subr.bf16.mxu0 0
      %6305 = vmatpush1.bf16.msra.mxu0 0
      %6306 = vmatprep.subr.bf16.mxu0 0
      %6307 = vmatpush1.bf16.msra.mxu0 0
      %6308 = vmatprep.subr.bf16.mxu0 0
      %6309 = vmatpush1.bf16.msra.mxu0 0
      %6310 = vmatprep.subr.bf16.mxu0 0
      %6311 = vmatpush1.bf16.msra.mxu0 0
      %6312 = vmatprep.subr.bf16.mxu0 0
      %6313 = vmatpush1.bf16.msra.mxu0 0
      %6314 = vmatprep.subr.bf16.mxu0 0
      %6315 = vmatpush1.bf16.msra.mxu0 0
      %6316 = vmatprep.subr.bf16.mxu0 0
      %6317 = vmatpush1.bf16.msra.mxu0 0
      %6318 = vmatprep.subr.bf16.mxu0 0
      %6319 = vmatpush1.bf16.msra.mxu0 0
      %6320 = vmatprep.mubr.bf16.mxu0 0
      %6321 = vmatmul.mubr.bf16.gmra.mrb[0].mxu0 %v6180
      %v6322 = vpop.f32.mrb[0].mxu0
      %v6323 = vadd.f32 0.0, %v6322
      %v6324 = vpop.f32.mrb[0].mxu0
      %v6325 = vadd.f32 0.0, %v6324
      %v6326 = vpop.f32.mrb[0].mxu0
      %v6327 = vpop.f32.mrb[0].mxu0
      %6328 = vdwg.mxu0
      %6329 = vmatprep.subr.bf16.mxu0 %v6204
      %6330 = vmatpush1.bf16.msra.mxu0 %v6201
      %6331 = vmatprep.subr.bf16.mxu0 0
      %6332 = vmatpush1.bf16.msra.mxu0 0
      %6333 = vmatprep.subr.bf16.mxu0 0
      %6334 = vmatpush1.bf16.msra.mxu0 0
      %6335 = vmatprep.subr.bf16.mxu0 0
      %6336 = vmatpush1.bf16.msra.mxu0 0
      %6337 = vmatprep.subr.bf16.mxu0 0
      %6338 = vmatpush1.bf16.msra.mxu0 0
      %6339 = vmatprep.subr.bf16.mxu0 0
      %6340 = vmatpush1.bf16.msra.mxu0 0
      %6341 = vmatprep.subr.bf16.mxu0 0
      %6342 = vmatpush1.bf16.msra.mxu0 0
      %6343 = vmatprep.subr.bf16.mxu0 0
      %6344 = vmatpush1.bf16.msra.mxu0 0
      %6345 = vmatprep.subr.bf16.mxu0 0
      %6346 = vmatpush1.bf16.msra.mxu0 0
      %6347 = vmatprep.subr.bf16.mxu0 0
      %6348 = vmatpush1.bf16.msra.mxu0 0
      %6349 = vmatprep.subr.bf16.mxu0 0
      %6350 = vmatpush1.bf16.msra.mxu0 0
      %6351 = vmatprep.subr.bf16.mxu0 0
      %6352 = vmatpush1.bf16.msra.mxu0 0
      %6353 = vmatprep.subr.bf16.mxu0 0
      %6354 = vmatpush1.bf16.msra.mxu0 0
      %6355 = vmatprep.subr.bf16.mxu0 0
      %6356 = vmatpush1.bf16.msra.mxu0 0
      %6357 = vmatprep.subr.bf16.mxu0 0
      %6358 = vmatpush1.bf16.msra.mxu0 0
      %6359 = vmatprep.subr.bf16.mxu0 0
      %6360 = vmatpush1.bf16.msra.mxu0 0
      %6361 = vmatprep.mubr.bf16.mxu0 0
      %6362 = vmatmul.mubr.bf16.gmra.mrb[0].mxu0 %v6180
      %v6363 = vpop.f32.mrb[0].mxu0
      %v6364 = vadd.f32 0.0, %v6363
      %v6365 = vpop.f32.mrb[0].mxu0
      %v6366 = vadd.f32 0.0, %v6365
      %v6367 = vpop.f32.mrb[0].mxu0
      %v6368 = vpop.f32.mrb[0].mxu0
      %6369 = vdwg.mxu0
      %v6370 = vadd.f32 %v6142, %v6241
      %v6371 = vadd.f32 %v6143, %v6243
      %v6372 = vadd.f32 %v6144, %v6282
      %v6373 = vadd.f32 %v6145, %v6284
      %v6374 = vadd.f32 %v6146, %v6323
      %v6375 = vadd.f32 %v6147, %v6325
      %v6376 = vadd.f32 %v6148, %v6364
      %v6377 = vadd.f32 %v6149, %v6366
      %v6378 = vld [vmem:[%s2] sm:$0xff]
      %v6380 = vlaneseq
      %v6381 = vshrl.u32 %v6380, 7
      %v6382 = vsub.s32 0, %v6381
      %v6383 = vrot.slane %v6378, %v6382
      %v6384 = vlaneseq
      %v6385 = vshrl.u32 %v6384, 7
      %v6386 = vsub.s32 1, %v6385
      %v6387 = vrot.slane %v6378, %v6386
      %v6388 = vlaneseq
      %v6389 = vshrl.u32 %v6388, 7
      %v6390 = vsub.s32 2, %v6389
      %v6391 = vrot.slane %v6378, %v6390
      %v6392 = vlaneseq
      %v6393 = vshrl.u32 %v6392, 7
      %v6394 = vsub.s32 3, %v6393
      %v6395 = vrot.slane %v6378, %v6394
      %v6396 = vlaneseq
      %v6397 = vshrl.u32 %v6396, 7
      %v6398 = vsub.s32 4, %v6397
      %v6399 = vrot.slane %v6378, %v6398
      %v6400 = vlaneseq
      %v6401 = vshrl.u32 %v6400, 7
      %v6402 = vsub.s32 5, %v6401
      %v6403 = vrot.slane %v6378, %v6402
      %v6404 = vlaneseq
      %v6405 = vshrl.u32 %v6404, 7
      %v6406 = vsub.s32 6, %v6405
      %v6407 = vrot.slane %v6378, %v6406
      %v6408 = vlaneseq
      %v6409 = vshrl.u32 %v6408, 7
      %v6410 = vsub.s32 7, %v6409
      %v6411 = vrot.slane %v6378, %v6410
      %v6420 = vmul.f32 %v6370, %v6383
      %v6421 = vmul.f32 %v6371, %v6387
      %v6422 = vmul.f32 %v6372, %v6391
      %v6423 = vmul.f32 %v6373, %v6395
      %v6424 = vmul.f32 %v6374, %v6399
      %v6425 = vmul.f32 %v6375, %v6403
      %v6426 = vmul.f32 %v6376, %v6407
      %v6427 = vmul.f32 %v6377, %v6411
      %v6428 = vadd.f32 %v6420, %v6421
      %v6429 = vadd.f32 %v6428, %v6422
      %v6430 = vadd.f32 %v6429, %v6423
      %v6431 = vadd.f32 %v6430, %v6424
      %v6432 = vadd.f32 %v6431, %v6425
      %v6433 = vadd.f32 %v6432, %v6426
      %v6434 = vadd.f32 %v6433, %v6427
      %6435 = vadd.xlane.f32.xlu0 %v6434
      %v6436 = vpop.xlane.xlu0 %6435
      %vm6437 = vcmask 7168
      %6438 = vst.msk [vmem:[%s202] sm:$0xff] %vm6437, %v6436
      %v6439 = vmul.f32 %v6420, %v6420
      %v6440 = vmul.f32 %v6421, %v6421
      %v6441 = vmul.f32 %v6422, %v6422
      %v6442 = vmul.f32 %v6423, %v6423
      %v6443 = vmul.f32 %v6424, %v6424
      %v6444 = vmul.f32 %v6425, %v6425
      %v6445 = vmul.f32 %v6426, %v6426
      %v6446 = vmul.f32 %v6427, %v6427
      %v6447 = vadd.f32 %v6439, %v6440
      %v6448 = vadd.f32 %v6447, %v6441
      %v6449 = vadd.f32 %v6448, %v6442
      %v6450 = vadd.f32 %v6449, %v6443
      %v6451 = vadd.f32 %v6450, %v6444
      %v6452 = vadd.f32 %v6451, %v6445
      %v6453 = vadd.f32 %v6452, %v6446
      %6454 = vadd.xlane.f32.xlu0 %v6453
      %v6455 = vpop.xlane.xlu0 %6454
      %6456 = vst.msk [vmem:[%s206] sm:$0xff] %vm6437, %v6455
      %p6457 = scmp.lt.s32.totalorder %s16, 1
      %s6458 = scalar_select %p6457, %s16, 1
      %s6459 = smul.addr %s6458, 8
      %s6460 = scalar_lea.vmem %s3, %s6459
      %p6461 = scmp.lt.s32.totalorder %s16, 1
      %s6462 = scalar_select %p6461, %s16, 1
      %s6463 = smul.addr %s6462, 8
      %s6464 = scalar_lea.vmem %s4, %s6463
      // Predicated region
      $region33: #{tpu_custom_call.1} parent=31 // pred_check
        %p6465 = pneg %p102
      $region34: #{tpu_custom_call.1} parent=31 // pred_check_branch
        %6467 = sbr.rel (%p6465) target = $region36
      $region35: #{tpu_custom_call.1} parent=31 // pred_region
        _
      $region36: #{tpu_custom_call.1} parent=31 // pred_fallthru
        _
      // Predicated region
      $region37: #{tpu_custom_call.1} parent=31 // pred_check
        %p6468 = pneg %p128
      $region38: #{tpu_custom_call.1} parent=31 // pred_check_branch
        %6470 = sbr.rel (%p6468) target = $region40
      $region39: #{tpu_custom_call.1} parent=31 // pred_region
        _
      $region40: #{tpu_custom_call.1} parent=31 // pred_fallthru
        _
    $region32: #{tpu_custom_call.1} parent=5 // pred_fallthru
      _
    %p6471 = scmp.le.s32.totalorder 2, %s11
    // Predicated region
    $region41: #{tpu_custom_call.1} parent=5 // pred_check
      %p6472 = pneg %p6471
    $region42: #{tpu_custom_call.1} parent=5 // pred_check_branch
      %6474 = sbr.rel (%p6472) target = $region44
    $region43: #{tpu_custom_call.1} parent=5 // pred_region
      %s6475 = ssub.s32 %s11, 2
      // Predicated region
      $region45: #{tpu_custom_call.1} parent=43 // pred_check
        %p6476 = pneg %p108
      $region46: #{tpu_custom_call.1} parent=43 // pred_check_branch
        %6478 = sbr.rel (%p6476) target = $region48
      $region47: #{tpu_custom_call.1} parent=43 // pred_region
        %p6479 = scmp.lt.s32.totalorder %s17, 1
        %s6480 = scalar_select %p6479, %s17, 1
        %s6481 = smul.addr %s6480, 8
        %s6482 = scalar_lea.vmem %s3, %s6481
      $region48: #{tpu_custom_call.1} parent=43 // pred_fallthru
        _
      // Predicated region
      $region49: #{tpu_custom_call.1} parent=43 // pred_check
        %p6483 = pneg %p134
      $region50: #{tpu_custom_call.1} parent=43 // pred_check_branch
        %6485 = sbr.rel (%p6483) target = $region52
      $region51: #{tpu_custom_call.1} parent=43 // pred_region
        %p6486 = scmp.lt.s32.totalorder %s17, 1
        %s6487 = scalar_select %p6486, %s17, 1
        %s6488 = smul.addr %s6487, 8
        %s6489 = scalar_lea.vmem %s4, %s6488
      $region52: #{tpu_custom_call.1} parent=43 // pred_fallthru
        _
    $region44: #{tpu_custom_call.1} parent=5 // pred_fallthru
      _
  $region6: #{tpu_custom_call.1} parent=0 // loop_footer
    %s15 = sadd.s32 1, %s11
  $region7: #{tpu_custom_call.1} parent=0 // loop_footer_branch
    %10 = sbr.rel target = $region3
  $region8: #{tpu_custom_call.1} parent=0 // loop_exit
    _

</llo_original>
